<compile_context>
chip_gen: v7x
topology: tpu7x:2x2x1
jax: 0.10.0
libtpu: 0.0.40
codegen_flags: <defaults>
</compile_context>

<pallas_src>
import functools

import jax
import jax.numpy as jnp
from jax.experimental import pallas as pl
from jax.experimental.pallas import tpu as pltpu

_LANE = 128
_MIB = 1024 * 1024


def _round_up(x, m):
    return ((x + m - 1) // m) * m


# --------------------------------------------------------------------------
# Kernel 1: batched key/value projection (h-independent, fully parallel).
# --------------------------------------------------------------------------
def _kv_proj_kernel(x_ref, wk_ref, wv_ref, key_ref, val_ref):
    x = x_ref[...]                                    # [TM, C] bf16
    key_ref[...] = jnp.dot(x, wk_ref[...],
                           preferred_element_type=jnp.float32).astype(key_ref.dtype)
    val_ref[...] = jnp.dot(x, wv_ref[...],
                           preferred_element_type=jnp.float32).astype(val_ref.dtype)


def _project_kv(feat2d, wk, wv):
    """feat2d: [M, C] bf16 (M = L*B*Npad, multiple of 128) -> key, val [M, H] bf16."""
    M, C = feat2d.shape
    H = wk.shape[1]
    tile_m = M
    for cand in (512, 256, 128):                      # biggest tile that divides M
        if M % cand == 0:
            tile_m = cand
            break
    return pl.pallas_call(
        _kv_proj_kernel,
        out_shape=(jax.ShapeDtypeStruct((M, H), jnp.bfloat16),
                   jax.ShapeDtypeStruct((M, H), jnp.bfloat16)),
        grid_spec=pltpu.PrefetchScalarGridSpec(
            num_scalar_prefetch=0,
            grid=(M // tile_m,),
            in_specs=[pl.BlockSpec((tile_m, C), lambda i: (i, 0)),
                      pl.BlockSpec((C, H), lambda i: (0, 0)),
                      pl.BlockSpec((C, H), lambda i: (0, 0))],
            out_specs=[pl.BlockSpec((tile_m, H), lambda i: (i, 0)),
                       pl.BlockSpec((tile_m, H), lambda i: (i, 0))]),
        compiler_params=pltpu.CompilerParams(
            dimension_semantics=("parallel",)),
    )(feat2d, wk, wv)


# --------------------------------------------------------------------------
# Kernel 2: attention + LSTM recurrence, gridded over (batch blocks, L chunks).
# --------------------------------------------------------------------------
def _recurrent_kernel(
    n_valid,     # static python int: number of real spatial locations
    key_ref,     # [Lc, Bb, N, H] bf16   precomputed feat @ Wk
    val_ref,     # [Lc, Bb, N, H] bf16   precomputed feat @ Wv
    prior_ref,   # [Lc, Bb, N]    f32
    h0_ref,      # [Bb, H]
    c0_ref,      # [Bb, H]
    wh_ref,      # [H, H]
    v_ref,       # [1, H]
    wih_t_ref,   # [C, 4H]  (C == H)
    whh_t_ref,   # [H, 4H]
    b_ref,       # [1, 4H]  (b_ih + b_hh)
    hseq_ref,    # [Lc, Bb, H] out  per-step hidden states
    h_out_ref,   # [Bb, H]     out
    c_out_ref,   # [Bb, H]     out
    h_sc,        # VMEM scratch carry
    c_sc,        # VMEM scratch carry
):
    Lc, Bb, N, H = key_ref.shape
    l_blk = pl.program_id(1)

    @pl.when(l_blk == 0)
    def _():                                   # (re-)init carry per batch block
        h_sc[...] = h0_ref[...]
        c_sc[...] = c0_ref[...]

    # Hoist loop-invariant weight reads / broadcasts out of the recurrence.
    wh = wh_ref[...]
    v_row = v_ref[...].reshape(1, 1, H)
    wih_t = wih_t_ref[...]
    whh_t = whh_t_ref[...]
    bias = b_ref[...]
    valid = jax.lax.broadcasted_iota(jnp.int32, (1, N), 1) < n_valid

    def step(i, carry):
        h, c = carry
        key = key_ref[i].astype(jnp.float32)          # [Bb, N, H]
        value = val_ref[i].astype(jnp.float32)        # [Bb, N, H]
        prior = prior_ref[i]                          # [Bb, N]

        # ---------------- visual attention --------------------------------
        query = jnp.dot(h, wh, preferred_element_type=jnp.float32)   # [Bb, H]
        scores = jnp.tanh(query[:, None, :] + key)                   # [Bb, N, H]
        s = jnp.sum(scores * v_row, axis=-1)                         # [Bb, N]
        s = jnp.where(valid, s, -1e30)                # mask padded locations
        s = s - jnp.max(s, axis=-1, keepdims=True)
        e = jnp.exp(s)
        sm = e * pl.reciprocal(jnp.sum(e, axis=-1, keepdims=True), approx=True)

        attn_w = sm * prior                                          # [Bb, N]
        # weighted sum over N on the MXU (avoids a [Bb,N,H] temporary)
        context = jnp.einsum('bqn,bnh->bqh', attn_w[:, None, :], value,
                             preferred_element_type=jnp.float32)[:, 0, :]
        sum_w = jnp.maximum(jnp.sum(attn_w, axis=-1, keepdims=True), 1e-5)
        x = context * pl.reciprocal(sum_w, approx=True)              # [Bb, H]

        # ---------------- LSTM cell (PyTorch gate order i, f, g, o) -------
        # NOTE: gate slices are lane-aligned when H % 128 == 0 (prod configs).
        gates = (jnp.dot(x, wih_t, preferred_element_type=jnp.float32)
                 + jnp.dot(h, whh_t, preferred_element_type=jnp.float32)
                 + bias)                                             # [Bb, 4H]
        i_g = jax.nn.sigmoid(gates[:, 0:H])
        f_g = jax.nn.sigmoid(gates[:, H:2 * H])
        g_g = jnp.tanh(gates[:, 2 * H:3 * H])
        o_g = jax.nn.sigmoid(gates[:, 3 * H:4 * H])
        c_new = f_g * c + i_g * g_g
        h_new = o_g * jnp.tanh(c_new)

        hseq_ref[pl.ds(i, 1)] = h_new[None]
        return h_new, c_new

    h_fin, c_fin = jax.lax.fori_loop(
        0, Lc, step, (h_sc[...], c_sc[...]), unroll=(Lc <= 8))
    h_sc[...] = h_fin
    c_sc[...] = c_fin

    @pl.when(l_blk == pl.num_programs(1) - 1)
    def _():
        h_out_ref[...] = h_fin
        c_out_ref[...] = c_fin


def _pick_l_chunk(L, Bb, N, H, budget_bytes=12 * _MIB):
    """Largest divisor of L such that 2x double-buffered chunks fit the budget."""
    frame = Bb * N * (2 * 2 * H + 4)      # bf16 key + bf16 val + f32 prior / frame
    max_lc = max(1, budget_bytes // (2 * max(frame, 1)))
    max_lc = int(min(max_lc, 16, L))
    for lc in range(max_lc, 0, -1):
        if L % lc == 0:
            return lc
    return 1


def _recurrence_vmem_limit(Lc, Bb, N, H):
    chunk_in = Lc * Bb * N * (2 * 2 * H + 4)
    chunk_out = Lc * Bb * H * 4
    weights = (H * H + H + 2 * H * 4 * H + 4 * H) * 4
    small = 8 * Bb * H * 4
    need = 2 * (chunk_in + chunk_out) + weights + small
    # leave headroom, clamp so it is valid on v7x (64 MiB physical VMEM)
    return int(min(56 * _MIB, max(32 * _MIB, 2 * need)))


def _run_recurrence(key_all, val_all, prior, h0, c0, prep, n_valid):
    L_eff, B, N, H = key_all.shape
    Bb = B // 2 if (B % 16 == 0) else B        # split batch across v7x's 2 TCs
    Lc = _pick_l_chunk(L_eff, Bb, N, H)
    grid = (B // Bb, L_eff // Lc)
    kern = functools.partial(_recurrent_kernel, n_valid)
    return pl.pallas_call(
        kern,
        out_shape=(jax.ShapeDtypeStruct((L_eff, B, H), jnp.float32),
                   jax.ShapeDtypeStruct((B, H), jnp.float32),
                   jax.ShapeDtypeStruct((B, H), jnp.float32)),
        grid_spec=pltpu.PrefetchScalarGridSpec(
            num_scalar_prefetch=0,
            grid=grid,
            in_specs=[
                pl.BlockSpec((Lc, Bb, N, H), lambda b, l: (l, b, 0, 0)),
                pl.BlockSpec((Lc, Bb, N, H), lambda b, l: (l, b, 0, 0)),
                pl.BlockSpec((Lc, Bb, N), lambda b, l: (l, b, 0)),
                pl.BlockSpec((Bb, H), lambda b, l: (b, 0)),
                pl.BlockSpec((Bb, H), lambda b, l: (b, 0)),
                pl.BlockSpec((H, H), lambda b, l: (0, 0)),
                pl.BlockSpec((1, H), lambda b, l: (0, 0)),
                pl.BlockSpec((H, 4 * H), lambda b, l: (0, 0)),
                pl.BlockSpec((H, 4 * H), lambda b, l: (0, 0)),
                pl.BlockSpec((1, 4 * H), lambda b, l: (0, 0)),
            ],
            out_specs=[
                pl.BlockSpec((Lc, Bb, H), lambda b, l: (l, b, 0)),
                pl.BlockSpec((Bb, H), lambda b, l: (b, 0)),
                pl.BlockSpec((Bb, H), lambda b, l: (b, 0)),
            ],
            scratch_shapes=[pltpu.VMEM((Bb, H), jnp.float32),
                            pltpu.VMEM((Bb, H), jnp.float32)]),
        compiler_params=pltpu.CompilerParams(
            dimension_semantics=("parallel", "arbitrary"),
            vmem_limit_bytes=_recurrence_vmem_limit(Lc, Bb, N, H)),
    )(key_all, val_all, prior, h0, c0,
      prep["Wh"], prep["v_row"], prep["wih_t"], prep["whh_t"], prep["bias"])


# --------------------------------------------------------------------------
# Kernel 3: batched classifier + class softmax (hoisted out of the loop).
# --------------------------------------------------------------------------
def _classifier_kernel(o_valid, h_ref, wfc_t_ref, bfc_ref, probs_ref):
    logits = (jnp.dot(h_ref[...], wfc_t_ref[...],
                      preferred_element_type=jnp.float32) + bfc_ref[...])
    opad = logits.shape[-1]
    valid = jax.lax.broadcasted_iota(jnp.int32, (1, opad), 1) < o_valid
    logits = jnp.where(valid, logits, -1e30)
    logits = logits - jnp.max(logits, axis=-1, keepdims=True)
    e = jnp.exp(logits)
    probs_ref[...] = e / jnp.sum(e, axis=-1, keepdims=True)


def _run_classifier(hseq, prep):
    L_eff, B, H = hseq.shape
    rows = L_eff * B
    O = prep["O"]
    Opad = prep["wfc_t_pad"].shape[1]
    h2d = hseq.reshape(rows, H)
    tile_r = rows
    for cand in (512, 256, 128, 64, 32, 16, 8):
        if rows % cand == 0:
            tile_r = cand
            break
    probs2d = pl.pallas_call(
        functools.partial(_classifier_kernel, O),
        out_shape=jax.ShapeDtypeStruct((rows, Opad), jnp.float32),
        grid_spec=pltpu.PrefetchScalarGridSpec(
            num_scalar_prefetch=0,
            grid=(rows // tile_r,),
            in_specs=[pl.BlockSpec((tile_r, H), lambda i: (i, 0)),
                      pl.BlockSpec((H, Opad), lambda i: (0, 0)),
                      pl.BlockSpec((1, Opad), lambda i: (0, 0))],
            out_specs=pl.BlockSpec((tile_r, Opad), lambda i: (i, 0))),
        compiler_params=pltpu.CompilerParams(
            dimension_semantics=("parallel",)),
    )(h2d, prep["wfc_t_pad"], prep["bfc_pad"])
    return probs2d[:, :O].reshape(L_eff, B, O)


# --------------------------------------------------------------------------
# Parameter prep (done ONCE, not per forward call) and forward wrapper.
# --------------------------------------------------------------------------
def prepare_params(params):
    H = params["Wh"].shape[0]
    C = params["Wk"].shape[0]
    O = params["W_fc"].shape[0]
    # MiCTRANet reuses the H-wide attention context as the C-wide LSTM input.
    assert H == C, "MiCTRANet requires hidden_size == attn_size"
    Opad = _round_up(O, _LANE)
    wfc_t = params["W_fc"].T.astype(jnp.float32)                 # [H, O]
    return {
        "H": H, "C": C, "O": O,
        "Wh": params["Wh"].astype(jnp.float32),
        "v_row": params["v"].reshape(1, H).astype(jnp.float32),
        "wk_bf16": params["Wk"].astype(jnp.bfloat16),
        "wv_bf16": params["Wv"].astype(jnp.bfloat16),
        "wih_t": params["W_ih"].T.astype(jnp.float32),           # [C, 4H]
        "whh_t": params["W_hh"].T.astype(jnp.float32),           # [H, 4H]
        "bias": (params["b_ih"] + params["b_hh"]).reshape(1, 4 * H).astype(jnp.float32),
        "wfc_t_pad": jnp.pad(wfc_t, ((0, 0), (0, Opad - O))),
        "bfc_pad": jnp.pad(params["b_fc"].astype(jnp.float32),
                           (0, Opad - O)).reshape(1, Opad),
    }


def mictranet_forward(prep, feat_maps, h0, prior_maps, mode="online",
                      feat_idx=None):
    """
    feat_maps : [B, C, L, h_map, w_map]   (output of the CNN backbone)
    h0        : [2, B, hidden_size]       (h, c)
    prior_maps: [B, D, h_map, w_map]      (D == 1 online, D == L offline)
    returns   : (probs [B, L_eff, n_classes], (h, c))
    """
    B, C, L, hm, wm = feat_maps.shape
    N = hm * wm
    H = prep["H"]
    assert C == prep["C"]
    Npad = _round_up(N, _LANE)

    # [B, C, L, hm, wm] -> [L, B, N, C]  (layout plumbing, done once)
    fm = jnp.transpose(feat_maps, (2, 0, 3, 4, 1)).reshape(L, B, N, C)
    h0_, c0_ = h0[0].astype(jnp.float32), h0[1].astype(jnp.float32)

    if mode == "online":
        i = L // 2 if feat_idx is None else feat_idx
        fm_sel = fm[i:i + 1]                                         # [1,B,N,C]
        pm = jnp.transpose(prior_maps, (1, 0, 2, 3)).reshape(1, B, N)
    elif mode == "offline":
        fm_sel = fm
        pm = jnp.transpose(prior_maps, (1, 0, 2, 3)).reshape(L, B, N)
    else:
        raise ValueError("Invalid value for parameter `mode`: {}".format(mode))

    L_eff = fm_sel.shape[0]

    # Pad spatial locations to a lane multiple (padded positions masked in-kernel).
    if Npad != N:
        fm_sel = jnp.pad(fm_sel, ((0, 0), (0, 0), (0, Npad - N), (0, 0)))
        pm = jnp.pad(pm, ((0, 0), (0, 0), (0, Npad - N)))
    pm = pm.astype(jnp.float32)

    # Hoisted key/value projections (bf16 operands, bf16 outputs, no kv split).
    feat2d = fm_sel.astype(jnp.bfloat16).reshape(L_eff * B * Npad, C)
    key2d, val2d = _project_kv(feat2d, prep["wk_bf16"], prep["wv_bf16"])
    key_all = key2d.reshape(L_eff, B, Npad, H)
    val_all = val2d.reshape(L_eff, B, Npad, H)

    # Pipelined, L-chunked attention + LSTM recurrence.
    hseq, h_out, c_out = _run_recurrence(key_all, val_all, pm, h0_, c0_,
                                         prep, n_valid=N)

    # Batched classifier + class softmax over all emitted hidden states.
    probs_lbo = _run_classifier(hseq, prep)                          # [L,B,O]
    probs = jnp.transpose(probs_lbo, (1, 0, 2))                      # [B,L,O]
    return probs, (h_out, c_out)


# --------------------------------------------------------------------------
# Pure-JAX reference (mirrors the PyTorch code) for verification.
# --------------------------------------------------------------------------
def _attn_cell_ref(p, h, c, feat, prior):
    H = p["Wh"].shape[0]
    N, B, C = feat.shape
    query = h @ p["Wh"]
    key = (feat.reshape(-1, C) @ p["Wk"]).reshape(N, B, H)
    value = (feat.reshape(-1, C) @ p["Wv"]).reshape(N, B, C)
    scores = jnp.tanh(query + key).reshape(-1, H)
    scores = (scores @ p["v"].reshape(H, 1)).reshape(N, B)
    scores = jax.nn.softmax(scores, axis=0)
    aw = scores * prior
    context = (aw[:, :, None] * value).sum(0)
    sw = jnp.maximum(aw.sum(0), 1e-5)[:, None]
    x = context / sw
    gates = x @ p["W_ih"].T + p["b_ih"] + h @ p["W_hh"].T + p["b_hh"]
    i_g, f_g, g_g, o_g = jnp.split(gates, 4, axis=-1)
    c_new = jax.nn.sigmoid(f_g) * c + jax.nn.sigmoid(i_g) * jnp.tanh(g_g)
    h_new = jax.nn.sigmoid(o_g) * jnp.tanh(c_new)
    return h_new, c_new


def _reference_forward(params, feat_maps, h0, prior_maps, mode="online",
                       feat_idx=None):
    B, C, L, hm, wm = feat_maps.shape
    N = hm * wm
    fm = jnp.transpose(feat_maps, (2, 0, 3, 4, 1)).reshape(L, B, N, C)
    fm = jnp.swapaxes(fm, 1, 2)
    h, c = h0[0], h0[1]
    outs = []
    if mode == "online":
        i = L // 2 if feat_idx is None else feat_idx
        pm = jnp.swapaxes(
            jnp.transpose(prior_maps, (1, 0, 2, 3)).reshape(1, B, -1), 1, 2)
        h, c = _attn_cell_ref(params, h, c, fm[i], pm[0])
        outs.append(h)
    else:
        pm = jnp.swapaxes(
            jnp.transpose(prior_maps, (1, 0, 2, 3)).reshape(L, B, N), 1, 2)
        for i in range(L):
            h, c = _attn_cell_ref(params, h, c, fm[i], pm[i])
            outs.append(h)
    stacked = jnp.stack(outs, 0)                       # [L_eff, B, H]
    logits = stacked @ params["W_fc"].T + params["b_fc"]
    probs = jax.nn.softmax(logits, axis=-1)
    return jnp.transpose(probs, (1, 0, 2)), (h, c)


# --------------------------------------------------------------------------
# Deterministic parameter / input construction and smoke test.
# --------------------------------------------------------------------------
def _init_params(key, hidden_size, attn_size, output_size):
    H, C, O = hidden_size, attn_size, output_size
    ks = jax.random.split(key, 10)
    scale = 0.1
    return {
        "Wh": scale * jax.random.normal(ks[0], (H, H), jnp.float32),
        "Wk": scale * jax.random.normal(ks[1], (C, H), jnp.float32),
        "Wv": scale * jax.random.normal(ks[2], (C, H), jnp.float32),
        "v": scale * jax.random.normal(ks[3], (H,), jnp.float32),
        "W_ih": scale * jax.random.normal(ks[4], (4 * H, C), jnp.float32),
        "W_hh": scale * jax.random.normal(ks[5], (4 * H, H), jnp.float32),
        "b_ih": scale * jax.random.normal(ks[6], (4 * H,), jnp.float32),
        "b_hh": scale * jax.random.normal(ks[7], (4 * H,), jnp.float32),
        "W_fc": scale * jax.random.normal(ks[8], (O, H), jnp.float32),
        "b_fc": scale * jax.random.normal(ks[9], (O,), jnp.float32),
    }


if __name__ == "__main__":
    # small shapes: B=2, C=attn_size=hidden_size=32, L=4, 4x4 feature maps, 8 classes
    B, H, C, O = 2, 32, 32, 8
    L, hm, wm = 4, 4, 4

    key = jax.random.PRNGKey(0)
    k_p, k_f, k_h, k_pm = jax.random.split(key, 4)
    params = _init_params(k_p, hidden_size=H, attn_size=C, output_size=O)
    prep = prepare_params(params)          # transposes / padding done once

    feat_maps = 0.5 * jax.random.normal(k_f, (B, C, L, hm, wm), jnp.float32)
    h0 = 0.1 * jax.random.normal(k_h, (2, B, H), jnp.float32)
    prior_offline = jax.random.uniform(k_pm, (B, L, hm, wm), jnp.float32)
    prior_online = prior_offline[:, :1]                 # D == 1 for online mode

    fwd_offline = jax.jit(functools.partial(mictranet_forward, prep, mode="offline"))
    fwd_online = jax.jit(functools.partial(mictranet_forward, prep, mode="online"))

    # offline mode: full recurrent loop over L frames inside the kernel
    probs_off, (h_off, c_off) = fwd_offline(feat_maps, h0, prior_offline)
    jax.block_until_ready((probs_off, h_off, c_off))

    # online mode (module default): single attention/LSTM step on frame L//2
    probs_on, (h_on, c_on) = fwd_online(feat_maps, h0, prior_online)
    jax.block_until_ready((probs_on, h_on, c_on))

    # verify against the pure-JAX f32 reference (tolerance accounts for the
    # bf16 storage/operands of the key/value projections)
    r_probs_off, (r_h_off, r_c_off) = _reference_forward(
        params, feat_maps, h0, prior_offline, mode="offline")
    r_probs_on, (r_h_on, r_c_on) = _reference_forward(
        params, feat_maps, h0, prior_online, mode="online")

    assert probs_off.shape == (B, L, O) and probs_on.shape == (B, 1, O)
    tol = dict(atol=1e-2, rtol=1e-2)
    assert jnp.allclose(probs_off, r_probs_off, **tol)
    assert jnp.allclose(h_off, r_h_off, **tol)
    assert jnp.allclose(c_off, r_c_off, **tol)
    assert jnp.allclose(probs_on, r_probs_on, **tol)
    assert jnp.allclose(h_on, r_h_on, **tol)
    assert jnp.allclose(c_on, r_c_on, **tol)

    print("KERNEL_OK")
</pallas_src>

<mosaic_0001>
module attributes {stable_mosaic.version = 11 : i64} {
  func.func @_kv_proj_kernel(%arg0: i32, %arg1: memref<512x32xbf16, #tpu.memory_space<vmem>>, %arg2: memref<32x32xbf16, #tpu.memory_space<vmem>>, %arg3: memref<32x32xbf16, #tpu.memory_space<vmem>>, %arg4: memref<512x32xbf16, #tpu.memory_space<vmem>>, %arg5: memref<512x32xbf16, #tpu.memory_space<vmem>>) attributes {dimension_semantics = [#tpu.dimension_semantics<parallel>], iteration_bounds = array<i64: 2>, scalar_prefetch = 0 : i64, scratch_operands = 0 : i64, tpu.core_type = #tpu.core_type<tc>, window_params = [{transform_indices = @transform_0, window_bounds = array<i64: 512, 32>}, {pipeline_mode = #tpu.pipeline_mode<synchronous>, transform_indices = @transform_1, window_bounds = array<i64: 32, 32>}, {pipeline_mode = #tpu.pipeline_mode<synchronous>, transform_indices = @transform_2, window_bounds = array<i64: 32, 32>}, {transform_indices = @transform_3, window_bounds = array<i64: 512, 32>}, {transform_indices = @transform_4, window_bounds = array<i64: 512, 32>}]} {
    %c0 = arith.constant 0 : index
    %c0_0 = arith.constant 0 : index
    %0 = vector.load %arg1[%c0, %c0_0] : memref<512x32xbf16, #tpu.memory_space<vmem>>, vector<512x32xbf16>
    %c0_1 = arith.constant 0 : index
    %c0_2 = arith.constant 0 : index
    %1 = vector.load %arg2[%c0_1, %c0_2] : memref<32x32xbf16, #tpu.memory_space<vmem>>, vector<32x32xbf16>
    %cst = arith.constant dense<0.000000e+00> : vector<512x32xf32>
    %2 = tpu.matmul %0, %1, %cst {dimension_numbers = #tpu.dot_dimension_numbers<[1], [0], [0], [1], [0, 0, 1, 1], [], []>} : vector<512x32xbf16>, vector<32x32xbf16>, vector<512x32xf32> -> vector<512x32xf32>
    %3 = arith.truncf %2 : vector<512x32xf32> to vector<512x32xbf16>
    %c0_3 = arith.constant 0 : index
    %c0_4 = arith.constant 0 : index
    %4 = vector.load %arg4[%c0_3, %c0_4] : memref<512x32xbf16, #tpu.memory_space<vmem>>, vector<512x32xbf16>
    tpu.vector_store %arg4[%c0_3, %c0_4], %3 {strides = array<i32>} : memref<512x32xbf16, #tpu.memory_space<vmem>>, vector<512x32xbf16>,
    %c0_5 = arith.constant 0 : index
    %c0_6 = arith.constant 0 : index
    %5 = vector.load %arg3[%c0_5, %c0_6] : memref<32x32xbf16, #tpu.memory_space<vmem>>, vector<32x32xbf16>
    %cst_7 = arith.constant dense<0.000000e+00> : vector<512x32xf32>
    %6 = tpu.matmul %0, %5, %cst_7 {dimension_numbers = #tpu.dot_dimension_numbers<[1], [0], [0], [1], [0, 0, 1, 1], [], []>} : vector<512x32xbf16>, vector<32x32xbf16>, vector<512x32xf32> -> vector<512x32xf32>
    %7 = arith.truncf %6 : vector<512x32xf32> to vector<512x32xbf16>
    %c0_8 = arith.constant 0 : index
    %c0_9 = arith.constant 0 : index
    %8 = vector.load %arg5[%c0_8, %c0_9] : memref<512x32xbf16, #tpu.memory_space<vmem>>, vector<512x32xbf16>
    tpu.vector_store %arg5[%c0_8, %c0_9], %7 {strides = array<i32>} : memref<512x32xbf16, #tpu.memory_space<vmem>>, vector<512x32xbf16>,
    return
  }
  func.func @transform_0(%arg0: i32) -> (i32, i32) {
    %c0_i32 = arith.constant 0 : i32
    %c0_i32_0 = arith.constant 0 : i32
    return %arg0, %c0_i32 : i32, i32
  }
  func.func @transform_1(%arg0: i32) -> (i32, i32) {
    %c0_i32 = arith.constant 0 : i32
    %c0_i32_0 = arith.constant 0 : i32
    %c0_i32_1 = arith.constant 0 : i32
    return %c0_i32, %c0_i32_0 : i32, i32
  }
  func.func @transform_2(%arg0: i32) -> (i32, i32) {
    %c0_i32 = arith.constant 0 : i32
    %c0_i32_0 = arith.constant 0 : i32
    %c0_i32_1 = arith.constant 0 : i32
    return %c0_i32, %c0_i32_0 : i32, i32
  }
  func.func @transform_3(%arg0: i32) -> (i32, i32) {
    %c0_i32 = arith.constant 0 : i32
    %c0_i32_0 = arith.constant 0 : i32
    return %arg0, %c0_i32 : i32, i32
  }
  func.func @transform_4(%arg0: i32) -> (i32, i32) {
    %c0_i32 = arith.constant 0 : i32
    %c0_i32_0 = arith.constant 0 : i32
    return %arg0, %c0_i32 : i32, i32
  }
}

module attributes {stable_mosaic.version = 11 : i64} {
  func.func @_classifier_kernel(%arg0: i32, %arg1: memref<8x32xf32, #tpu.memory_space<vmem>>, %arg2: memref<32x128xf32, #tpu.memory_space<vmem>>, %arg3: memref<1x128xf32, #tpu.memory_space<vmem>>, %arg4: memref<8x128xf32, #tpu.memory_space<vmem>>) attributes {dimension_semantics = [#tpu.dimension_semantics<parallel>], iteration_bounds = array<i64: 1>, scalar_prefetch = 0 : i64, scratch_operands = 0 : i64, tpu.core_type = #tpu.core_type<tc>, window_params = [{transform_indices = @transform_0, window_bounds = array<i64: 8, 32>}, {pipeline_mode = #tpu.pipeline_mode<synchronous>, transform_indices = @transform_1, window_bounds = array<i64: 32, 128>}, {pipeline_mode = #tpu.pipeline_mode<synchronous>, transform_indices = @transform_2, window_bounds = array<i64: 1, 128>}, {transform_indices = @transform_3, window_bounds = array<i64: 8, 128>}]} {
    %c0 = arith.constant 0 : index
    %c0_0 = arith.constant 0 : index
    %0 = vector.load %arg1[%c0, %c0_0] : memref<8x32xf32, #tpu.memory_space<vmem>>, vector<8x32xf32>
    %c0_1 = arith.constant 0 : index
    %c0_2 = arith.constant 0 : index
    %1 = vector.load %arg2[%c0_1, %c0_2] : memref<32x128xf32, #tpu.memory_space<vmem>>, vector<32x128xf32>
    %cst = arith.constant dense<0.000000e+00> : vector<8x128xf32>
    %2 = tpu.matmul %0, %1, %cst {dimension_numbers = #tpu.dot_dimension_numbers<[1], [0], [0], [1], [0, 0, 1, 1], [], []>} : vector<8x32xf32>, vector<32x128xf32>, vector<8x128xf32> -> vector<8x128xf32>
    %c0_3 = arith.constant 0 : index
    %c0_4 = arith.constant 0 : index
    %3 = vector.load %arg3[%c0_3, %c0_4] : memref<1x128xf32, #tpu.memory_space<vmem>>, vector<1x128xf32>
    %4 = vector.broadcast %3 : vector<1x128xf32> to vector<8x128xf32>
    %5 = arith.addf %2, %4 : vector<8x128xf32>
    %6 = tpu.iota {dimensions = array<i32: 1>} : vector<1x128xi32>
    %c8_i32 = arith.constant 8 : i32
    %7 = vector.broadcast %c8_i32 : i32 to vector<1x128xi32>
    %8 = arith.cmpi slt, %6, %7 : vector<1x128xi32>
    %cst_5 = arith.constant -1.000000e+30 : f32
    %9 = vector.shape_cast %8 : vector<1x128xi1> to vector<1x128xi1>
    %10 = vector.broadcast %9 : vector<1x128xi1> to vector<8x128xi1>
    %11 = vector.broadcast %cst_5 : f32 to vector<8x128xf32>
    %12 = arith.select %10, %5, %11 : vector<8x128xi1>, vector<8x128xf32>
    %cst_6 = arith.constant dense<0xFF800000> : vector<8xf32>
    %13 = vector.multi_reduction <maximumf>, %12, %cst_6 [1] : vector<8x128xf32> to vector<8xf32>
    %14 = vector.shape_cast %13 : vector<8xf32> to vector<8x1xf32>
    %15 = vector.broadcast %14 : vector<8x1xf32> to vector<8x128xf32>
    %16 = arith.subf %12, %15 : vector<8x128xf32>
    %17 = math.exp %16 : vector<8x128xf32>
    %cst_7 = arith.constant dense<0.000000e+00> : vector<8xf32>
    %18 = vector.multi_reduction <add>, %17, %cst_7 [1] : vector<8x128xf32> to vector<8xf32>
    %19 = vector.shape_cast %18 : vector<8xf32> to vector<8x1xf32>
    %20 = vector.broadcast %19 : vector<8x1xf32> to vector<8x128xf32>
    %21 = arith.divf %17, %20 : vector<8x128xf32>
    %c0_8 = arith.constant 0 : index
    %c0_9 = arith.constant 0 : index
    %22 = vector.load %arg4[%c0_8, %c0_9] : memref<8x128xf32, #tpu.memory_space<vmem>>, vector<8x128xf32>
    tpu.vector_store %arg4[%c0_8, %c0_9], %21 {strides = array<i32>} : memref<8x128xf32, #tpu.memory_space<vmem>>, vector<8x128xf32>,
    return
  }
  func.func @transform_0(%arg0: i32) -> (i32, i32) {
    %c0_i32 = arith.constant 0 : i32
    %c0_i32_0 = arith.constant 0 : i32
    return %arg0, %c0_i32 : i32, i32
  }
  func.func @transform_1(%arg0: i32) -> (i32, i32) {
    %c0_i32 = arith.constant 0 : i32
    %c0_i32_0 = arith.constant 0 : i32
    %c0_i32_1 = arith.constant 0 : i32
    return %c0_i32, %c0_i32_0 : i32, i32
  }
  func.func @transform_2(%arg0: i32) -> (i32, i32) {
    %c0_i32 = arith.constant 0 : i32
    %c0_i32_0 = arith.constant 0 : i32
    %c0_i32_1 = arith.constant 0 : i32
    return %c0_i32, %c0_i32_0 : i32, i32
  }
  func.func @transform_3(%arg0: i32) -> (i32, i32) {
    %c0_i32 = arith.constant 0 : i32
    %c0_i32_0 = arith.constant 0 : i32
    return %arg0, %c0_i32 : i32, i32
  }
}

module attributes {stable_mosaic.version = 11 : i64} {
  func.func @_recurrent_kernel(%arg0: i32, %arg1: i32, %arg2: memref<4x2x128x32xbf16, #tpu.memory_space<vmem>>, %arg3: memref<4x2x128x32xbf16, #tpu.memory_space<vmem>>, %arg4: memref<4x2x128xf32, #tpu.memory_space<vmem>>, %arg5: memref<2x32xf32, #tpu.memory_space<vmem>>, %arg6: memref<2x32xf32, #tpu.memory_space<vmem>>, %arg7: memref<32x32xf32, #tpu.memory_space<vmem>>, %arg8: memref<1x32xf32, #tpu.memory_space<vmem>>, %arg9: memref<32x128xf32, #tpu.memory_space<vmem>>, %arg10: memref<32x128xf32, #tpu.memory_space<vmem>>, %arg11: memref<1x128xf32, #tpu.memory_space<vmem>>, %arg12: memref<4x2x32xf32, #tpu.memory_space<vmem>>, %arg13: memref<2x32xf32, #tpu.memory_space<vmem>>, %arg14: memref<2x32xf32, #tpu.memory_space<vmem>>, %arg15: memref<2x32xf32, #tpu.memory_space<vmem>>, %arg16: memref<2x32xf32, #tpu.memory_space<vmem>>) attributes {dimension_semantics = [#tpu.dimension_semantics<parallel>, #tpu.dimension_semantics<arbitrary>], iteration_bounds = array<i64: 1, 1>, scalar_prefetch = 0 : i64, scratch_operands = 2 : i64, tpu.core_type = #tpu.core_type<tc>, window_params = [{transform_indices = @transform_0, window_bounds = array<i64: 4, 2, 128, 32>}, {transform_indices = @transform_1, window_bounds = array<i64: 4, 2, 128, 32>}, {transform_indices = @transform_2, window_bounds = array<i64: 4, 2, 128>}, {transform_indices = @transform_3, window_bounds = array<i64: 2, 32>}, {transform_indices = @transform_4, window_bounds = array<i64: 2, 32>}, {pipeline_mode = #tpu.pipeline_mode<synchronous>, transform_indices = @transform_5, window_bounds = array<i64: 32, 32>}, {pipeline_mode = #tpu.pipeline_mode<synchronous>, transform_indices = @transform_6, window_bounds = array<i64: 1, 32>}, {pipeline_mode = #tpu.pipeline_mode<synchronous>, transform_indices = @transform_7, window_bounds = array<i64: 32, 128>}, {pipeline_mode = #tpu.pipeline_mode<synchronous>, transform_indices = @transform_8, window_bounds = array<i64: 32, 128>}, {pipeline_mode = #tpu.pipeline_mode<synchronous>, transform_indices = @transform_9, window_bounds = array<i64: 1, 128>}, {transform_indices = @transform_10, window_bounds = array<i64: 4, 2, 32>}, {transform_indices = @transform_11, window_bounds = array<i64: 2, 32>}, {transform_indices = @transform_12, window_bounds = array<i64: 2, 32>}]} {
    %c0_i32 = arith.constant 0 : i32
    %0 = arith.cmpi eq, %arg1, %c0_i32 : i32
    %1 = arith.extui %0 : i1 to i32
    %c0_i32_0 = arith.constant 0 : i32
    %2 = arith.cmpi ne, %1, %c0_i32_0 : i32
    scf.if %2 {
      %c0_112 = arith.constant 0 : index
      %c0_113 = arith.constant 0 : index
      %327 = vector.load %arg5[%c0_112, %c0_113] : memref<2x32xf32, #tpu.memory_space<vmem>>, vector<2x32xf32>
      %c0_114 = arith.constant 0 : index
      %c0_115 = arith.constant 0 : index
      %328 = vector.load %arg15[%c0_114, %c0_115] : memref<2x32xf32, #tpu.memory_space<vmem>>, vector<2x32xf32>
      tpu.vector_store %arg15[%c0_114, %c0_115], %327 {strides = array<i32>} : memref<2x32xf32, #tpu.memory_space<vmem>>, vector<2x32xf32>,
      %c0_116 = arith.constant 0 : index
      %c0_117 = arith.constant 0 : index
      %329 = vector.load %arg6[%c0_116, %c0_117] : memref<2x32xf32, #tpu.memory_space<vmem>>, vector<2x32xf32>
      %c0_118 = arith.constant 0 : index
      %c0_119 = arith.constant 0 : index
      %330 = vector.load %arg16[%c0_118, %c0_119] : memref<2x32xf32, #tpu.memory_space<vmem>>, vector<2x32xf32>
      tpu.vector_store %arg16[%c0_118, %c0_119], %329 {strides = array<i32>} : memref<2x32xf32, #tpu.memory_space<vmem>>, vector<2x32xf32>,
    } else {
    }
    %c0 = arith.constant 0 : index
    %c0_1 = arith.constant 0 : index
    %3 = vector.load %arg7[%c0, %c0_1] : memref<32x32xf32, #tpu.memory_space<vmem>>, vector<32x32xf32>
    %c0_2 = arith.constant 0 : index
    %c0_3 = arith.constant 0 : index
    %4 = vector.load %arg8[%c0_2, %c0_3] : memref<1x32xf32, #tpu.memory_space<vmem>>, vector<1x32xf32>
    %5 = vector.shape_cast %4 : vector<1x32xf32> to vector<1x1x32xf32>
    %c0_4 = arith.constant 0 : index
    %c0_5 = arith.constant 0 : index
    %6 = vector.load %arg9[%c0_4, %c0_5] : memref<32x128xf32, #tpu.memory_space<vmem>>, vector<32x128xf32>
    %c0_6 = arith.constant 0 : index
    %c0_7 = arith.constant 0 : index
    %7 = vector.load %arg10[%c0_6, %c0_7] : memref<32x128xf32, #tpu.memory_space<vmem>>, vector<32x128xf32>
    %c0_8 = arith.constant 0 : index
    %c0_9 = arith.constant 0 : index
    %8 = vector.load %arg11[%c0_8, %c0_9] : memref<1x128xf32, #tpu.memory_space<vmem>>, vector<1x128xf32>
    %9 = tpu.iota {dimensions = array<i32: 1>} : vector<1x128xi32>
    %c16_i32 = arith.constant 16 : i32
    %10 = vector.broadcast %c16_i32 : i32 to vector<1x128xi32>
    %11 = arith.cmpi slt, %9, %10 : vector<1x128xi32>
    %c0_10 = arith.constant 0 : index
    %c0_11 = arith.constant 0 : index
    %12 = vector.load %arg15[%c0_10, %c0_11] : memref<2x32xf32, #tpu.memory_space<vmem>>, vector<2x32xf32>
    %c0_12 = arith.constant 0 : index
    %c0_13 = arith.constant 0 : index
    %13 = vector.load %arg16[%c0_12, %c0_13] : memref<2x32xf32, #tpu.memory_space<vmem>>, vector<2x32xf32>
    %c0_i32_14 = arith.constant 0 : i32
    %14 = arith.index_cast %c0_i32_14 : i32 to index
    %c0_15 = arith.constant 0 : index
    %c0_16 = arith.constant 0 : index
    %c0_17 = arith.constant 0 : index
    %15 = vector.load %arg2[%14, %c0_15, %c0_16, %c0_17] : memref<4x2x128x32xbf16, #tpu.memory_space<vmem>>, vector<1x2x128x32xbf16>
    %16 = vector.shape_cast %15 : vector<1x2x128x32xbf16> to vector<2x128x32xbf16>
    %17 = arith.extf %16 : vector<2x128x32xbf16> to vector<2x128x32xf32>
    %18 = arith.index_cast %c0_i32_14 : i32 to index
    %c0_18 = arith.constant 0 : index
    %c0_19 = arith.constant 0 : index
    %c0_20 = arith.constant 0 : index
    %19 = vector.load %arg3[%18, %c0_18, %c0_19, %c0_20] : memref<4x2x128x32xbf16, #tpu.memory_space<vmem>>, vector<1x2x128x32xbf16>
    %20 = vector.shape_cast %19 : vector<1x2x128x32xbf16> to vector<2x128x32xbf16>
    %21 = arith.extf %20 : vector<2x128x32xbf16> to vector<2x128x32xf32>
    %22 = arith.index_cast %c0_i32_14 : i32 to index
    %c0_21 = arith.constant 0 : index
    %c0_22 = arith.constant 0 : index
    %23 = vector.load %arg4[%22, %c0_21, %c0_22] : memref<4x2x128xf32, #tpu.memory_space<vmem>>, vector<1x2x128xf32>
    %24 = vector.shape_cast %23 : vector<1x2x128xf32> to vector<2x128xf32>
    %cst = arith.constant dense<0.000000e+00> : vector<2x32xf32>
    %25 = tpu.matmul %12, %3, %cst {dimension_numbers = #tpu.dot_dimension_numbers<[1], [0], [0], [1], [0, 0, 1, 1], [], []>} : vector<2x32xf32>, vector<32x32xf32>, vector<2x32xf32> -> vector<2x32xf32>
    %26 = vector.shape_cast %25 : vector<2x32xf32> to vector<2x1x32xf32>
    %27 = vector.broadcast %26 : vector<2x1x32xf32> to vector<2x128x32xf32>
    %28 = arith.addf %27, %17 : vector<2x128x32xf32>
    %29 = math.tanh %28 : vector<2x128x32xf32>
    %30 = vector.broadcast %5 : vector<1x1x32xf32> to vector<2x128x32xf32>
    %31 = arith.mulf %29, %30 : vector<2x128x32xf32>
    %cst_23 = arith.constant dense<0.000000e+00> : vector<2x128xf32>
    %32 = vector.multi_reduction <add>, %31, %cst_23 [2] : vector<2x128x32xf32> to vector<2x128xf32>
    %cst_24 = arith.constant -1.000000e+30 : f32
    %33 = vector.shape_cast %11 : vector<1x128xi1> to vector<1x128xi1>
    %34 = vector.broadcast %33 : vector<1x128xi1> to vector<2x128xi1>
    %35 = vector.broadcast %cst_24 : f32 to vector<2x128xf32>
    %36 = arith.select %34, %32, %35 : vector<2x128xi1>, vector<2x128xf32>
    %cst_25 = arith.constant dense<0xFF800000> : vector<2xf32>
    %37 = vector.multi_reduction <maximumf>, %36, %cst_25 [1] : vector<2x128xf32> to vector<2xf32>
    %38 = vector.shape_cast %37 : vector<2xf32> to vector<2x1xf32>
    %39 = vector.broadcast %38 : vector<2x1xf32> to vector<2x128xf32>
    %40 = arith.subf %36, %39 : vector<2x128xf32>
    %41 = math.exp %40 : vector<2x128xf32>
    %cst_26 = arith.constant dense<0.000000e+00> : vector<2xf32>
    %42 = vector.multi_reduction <add>, %41, %cst_26 [1] : vector<2x128xf32> to vector<2xf32>
    %43 = vector.shape_cast %42 : vector<2xf32> to vector<2x1xf32>
    %44 = tpu.reciprocal %43 {approx = true} : vector<2x1xf32> -> vector<2x1xf32>
    %45 = vector.broadcast %44 : vector<2x1xf32> to vector<2x128xf32>
    %46 = arith.mulf %41, %45 : vector<2x128xf32>
    %47 = arith.mulf %46, %24 : vector<2x128xf32>
    %48 = vector.shape_cast %47 : vector<2x128xf32> to vector<2x1x128xf32>
    "tpu.trace_start"() <{level = 10 : i32, message = "bqn,bnh->bqh"}> : () -> ()
    %cst_27 = arith.constant dense<0.000000e+00> : vector<2x1x32xf32>
    %49 = tpu.matmul %48, %21, %cst_27 {dimension_numbers = #tpu.dot_dimension_numbers<[2], [1], [1], [2], [0, 0, 0, 1, 1, 2], [0], [0]>} : vector<2x1x128xf32>, vector<2x128x32xf32>, vector<2x1x32xf32> -> vector<2x1x32xf32>
    "tpu.trace_stop"() : () -> ()
    %50 = vector.shape_cast %49 : vector<2x1x32xf32> to vector<2x32xf32>
    %cst_28 = arith.constant dense<0.000000e+00> : vector<2xf32>
    %51 = vector.multi_reduction <add>, %47, %cst_28 [1] : vector<2x128xf32> to vector<2xf32>
    %52 = vector.shape_cast %51 : vector<2xf32> to vector<2x1xf32>
    %cst_29 = arith.constant 9.99999974E-6 : f32
    %53 = vector.broadcast %cst_29 : f32 to vector<2x1xf32>
    %54 = arith.maximumf %52, %53 : vector<2x1xf32>
    %55 = tpu.reciprocal %54 {approx = true} : vector<2x1xf32> -> vector<2x1xf32>
    %56 = vector.broadcast %55 : vector<2x1xf32> to vector<2x32xf32>
    %57 = arith.mulf %50, %56 : vector<2x32xf32>
    %cst_30 = arith.constant dense<0.000000e+00> : vector<2x128xf32>
    %58 = tpu.matmul %57, %6, %cst_30 {dimension_numbers = #tpu.dot_dimension_numbers<[1], [0], [0], [1], [0, 0, 1, 1], [], []>} : vector<2x32xf32>, vector<32x128xf32>, vector<2x128xf32> -> vector<2x128xf32>
    %cst_31 = arith.constant dense<0.000000e+00> : vector<2x128xf32>
    %59 = tpu.matmul %12, %7, %cst_31 {dimension_numbers = #tpu.dot_dimension_numbers<[1], [0], [0], [1], [0, 0, 1, 1], [], []>} : vector<2x32xf32>, vector<32x128xf32>, vector<2x128xf32> -> vector<2x128xf32>
    %60 = arith.addf %58, %59 : vector<2x128xf32>
    %61 = vector.broadcast %8 : vector<1x128xf32> to vector<2x128xf32>
    %62 = arith.addf %60, %61 : vector<2x128xf32>
    %63 = vector.extract_strided_slice %62 {offsets = [0, 0], sizes = [2, 32], strides = [1, 1]} : vector<2x128xf32> to vector<2x32xf32>
    %64 = arith.negf %63 : vector<2x32xf32>
    %65 = math.exp %64 : vector<2x32xf32>
    %cst_32 = arith.constant 1.000000e+00 : f32
    %66 = vector.broadcast %cst_32 : f32 to vector<2x32xf32>
    %67 = arith.addf %66, %65 : vector<2x32xf32>
    %68 = arith.divf %66, %67 : vector<2x32xf32>
    %69 = vector.extract_strided_slice %62 {offsets = [0, 32], sizes = [2, 32], strides = [1, 1]} : vector<2x128xf32> to vector<2x32xf32>
    %70 = arith.negf %69 : vector<2x32xf32>
    %71 = math.exp %70 : vector<2x32xf32>
    %cst_33 = arith.constant 1.000000e+00 : f32
    %72 = vector.broadcast %cst_33 : f32 to vector<2x32xf32>
    %73 = arith.addf %72, %71 : vector<2x32xf32>
    %74 = arith.divf %72, %73 : vector<2x32xf32>
    %75 = vector.extract_strided_slice %62 {offsets = [0, 64], sizes = [2, 32], strides = [1, 1]} : vector<2x128xf32> to vector<2x32xf32>
    %76 = math.tanh %75 : vector<2x32xf32>
    %77 = vector.extract_strided_slice %62 {offsets = [0, 96], sizes = [2, 32], strides = [1, 1]} : vector<2x128xf32> to vector<2x32xf32>
    %78 = arith.negf %77 : vector<2x32xf32>
    %79 = math.exp %78 : vector<2x32xf32>
    %cst_34 = arith.constant 1.000000e+00 : f32
    %80 = vector.broadcast %cst_34 : f32 to vector<2x32xf32>
    %81 = arith.addf %80, %79 : vector<2x32xf32>
    %82 = arith.divf %80, %81 : vector<2x32xf32>
    %83 = arith.mulf %74, %13 : vector<2x32xf32>
    %84 = arith.mulf %68, %76 : vector<2x32xf32>
    %85 = arith.addf %83, %84 : vector<2x32xf32>
    %86 = math.tanh %85 : vector<2x32xf32>
    %87 = arith.mulf %82, %86 : vector<2x32xf32>
    %88 = vector.shape_cast %87 : vector<2x32xf32> to vector<1x2x32xf32>
    %89 = arith.index_cast %c0_i32_14 : i32 to index
    %c0_35 = arith.constant 0 : index
    %c0_36 = arith.constant 0 : index
    %90 = vector.load %arg12[%89, %c0_35, %c0_36] : memref<4x2x32xf32, #tpu.memory_space<vmem>>, vector<1x2x32xf32>
    tpu.vector_store %arg12[%89, %c0_35, %c0_36], %88 {strides = array<i32>} : memref<4x2x32xf32, #tpu.memory_space<vmem>>, vector<1x2x32xf32>,
    %c1_i32 = arith.constant 1 : i32
    %91 = arith.index_cast %c1_i32 : i32 to index
    %c0_37 = arith.constant 0 : index
    %c0_38 = arith.constant 0 : index
    %c0_39 = arith.constant 0 : index
    %92 = vector.load %arg2[%91, %c0_37, %c0_38, %c0_39] : memref<4x2x128x32xbf16, #tpu.memory_space<vmem>>, vector<1x2x128x32xbf16>
    %93 = vector.shape_cast %92 : vector<1x2x128x32xbf16> to vector<2x128x32xbf16>
    %94 = arith.extf %93 : vector<2x128x32xbf16> to vector<2x128x32xf32>
    %95 = arith.index_cast %c1_i32 : i32 to index
    %c0_40 = arith.constant 0 : index
    %c0_41 = arith.constant 0 : index
    %c0_42 = arith.constant 0 : index
    %96 = vector.load %arg3[%95, %c0_40, %c0_41, %c0_42] : memref<4x2x128x32xbf16, #tpu.memory_space<vmem>>, vector<1x2x128x32xbf16>
    %97 = vector.shape_cast %96 : vector<1x2x128x32xbf16> to vector<2x128x32xbf16>
    %98 = arith.extf %97 : vector<2x128x32xbf16> to vector<2x128x32xf32>
    %99 = arith.index_cast %c1_i32 : i32 to index
    %c0_43 = arith.constant 0 : index
    %c0_44 = arith.constant 0 : index
    %100 = vector.load %arg4[%99, %c0_43, %c0_44] : memref<4x2x128xf32, #tpu.memory_space<vmem>>, vector<1x2x128xf32>
    %101 = vector.shape_cast %100 : vector<1x2x128xf32> to vector<2x128xf32>
    %cst_45 = arith.constant dense<0.000000e+00> : vector<2x32xf32>
    %102 = tpu.matmul %87, %3, %cst_45 {dimension_numbers = #tpu.dot_dimension_numbers<[1], [0], [0], [1], [0, 0, 1, 1], [], []>} : vector<2x32xf32>, vector<32x32xf32>, vector<2x32xf32> -> vector<2x32xf32>
    %103 = vector.shape_cast %102 : vector<2x32xf32> to vector<2x1x32xf32>
    %104 = vector.broadcast %103 : vector<2x1x32xf32> to vector<2x128x32xf32>
    %105 = arith.addf %104, %94 : vector<2x128x32xf32>
    %106 = math.tanh %105 : vector<2x128x32xf32>
    %107 = vector.broadcast %5 : vector<1x1x32xf32> to vector<2x128x32xf32>
    %108 = arith.mulf %106, %107 : vector<2x128x32xf32>
    %cst_46 = arith.constant dense<0.000000e+00> : vector<2x128xf32>
    %109 = vector.multi_reduction <add>, %108, %cst_46 [2] : vector<2x128x32xf32> to vector<2x128xf32>
    %cst_47 = arith.constant -1.000000e+30 : f32
    %110 = vector.shape_cast %11 : vector<1x128xi1> to vector<1x128xi1>
    %111 = vector.broadcast %110 : vector<1x128xi1> to vector<2x128xi1>
    %112 = vector.broadcast %cst_47 : f32 to vector<2x128xf32>
    %113 = arith.select %111, %109, %112 : vector<2x128xi1>, vector<2x128xf32>
    %cst_48 = arith.constant dense<0xFF800000> : vector<2xf32>
    %114 = vector.multi_reduction <maximumf>, %113, %cst_48 [1] : vector<2x128xf32> to vector<2xf32>
    %115 = vector.shape_cast %114 : vector<2xf32> to vector<2x1xf32>
    %116 = vector.broadcast %115 : vector<2x1xf32> to vector<2x128xf32>
    %117 = arith.subf %113, %116 : vector<2x128xf32>
    %118 = math.exp %117 : vector<2x128xf32>
    %cst_49 = arith.constant dense<0.000000e+00> : vector<2xf32>
    %119 = vector.multi_reduction <add>, %118, %cst_49 [1] : vector<2x128xf32> to vector<2xf32>
    %120 = vector.shape_cast %119 : vector<2xf32> to vector<2x1xf32>
    %121 = tpu.reciprocal %120 {approx = true} : vector<2x1xf32> -> vector<2x1xf32>
    %122 = vector.broadcast %121 : vector<2x1xf32> to vector<2x128xf32>
    %123 = arith.mulf %118, %122 : vector<2x128xf32>
    %124 = arith.mulf %123, %101 : vector<2x128xf32>
    %125 = vector.shape_cast %124 : vector<2x128xf32> to vector<2x1x128xf32>
    "tpu.trace_start"() <{level = 10 : i32, message = "bqn,bnh->bqh"}> : () -> ()
    %cst_50 = arith.constant dense<0.000000e+00> : vector<2x1x32xf32>
    %126 = tpu.matmul %125, %98, %cst_50 {dimension_numbers = #tpu.dot_dimension_numbers<[2], [1], [1], [2], [0, 0, 0, 1, 1, 2], [0], [0]>} : vector<2x1x128xf32>, vector<2x128x32xf32>, vector<2x1x32xf32> -> vector<2x1x32xf32>
    "tpu.trace_stop"() : () -> ()
    %127 = vector.shape_cast %126 : vector<2x1x32xf32> to vector<2x32xf32>
    %cst_51 = arith.constant dense<0.000000e+00> : vector<2xf32>
    %128 = vector.multi_reduction <add>, %124, %cst_51 [1] : vector<2x128xf32> to vector<2xf32>
    %129 = vector.shape_cast %128 : vector<2xf32> to vector<2x1xf32>
    %cst_52 = arith.constant 9.99999974E-6 : f32
    %130 = vector.broadcast %cst_52 : f32 to vector<2x1xf32>
    %131 = arith.maximumf %129, %130 : vector<2x1xf32>
    %132 = tpu.reciprocal %131 {approx = true} : vector<2x1xf32> -> vector<2x1xf32>
    %133 = vector.broadcast %132 : vector<2x1xf32> to vector<2x32xf32>
    %134 = arith.mulf %127, %133 : vector<2x32xf32>
    %cst_53 = arith.constant dense<0.000000e+00> : vector<2x128xf32>
    %135 = tpu.matmul %134, %6, %cst_53 {dimension_numbers = #tpu.dot_dimension_numbers<[1], [0], [0], [1], [0, 0, 1, 1], [], []>} : vector<2x32xf32>, vector<32x128xf32>, vector<2x128xf32> -> vector<2x128xf32>
    %cst_54 = arith.constant dense<0.000000e+00> : vector<2x128xf32>
    %136 = tpu.matmul %87, %7, %cst_54 {dimension_numbers = #tpu.dot_dimension_numbers<[1], [0], [0], [1], [0, 0, 1, 1], [], []>} : vector<2x32xf32>, vector<32x128xf32>, vector<2x128xf32> -> vector<2x128xf32>
    %137 = arith.addf %135, %136 : vector<2x128xf32>
    %138 = vector.broadcast %8 : vector<1x128xf32> to vector<2x128xf32>
    %139 = arith.addf %137, %138 : vector<2x128xf32>
    %140 = vector.extract_strided_slice %139 {offsets = [0, 0], sizes = [2, 32], strides = [1, 1]} : vector<2x128xf32> to vector<2x32xf32>
    %141 = arith.negf %140 : vector<2x32xf32>
    %142 = math.exp %141 : vector<2x32xf32>
    %cst_55 = arith.constant 1.000000e+00 : f32
    %143 = vector.broadcast %cst_55 : f32 to vector<2x32xf32>
    %144 = arith.addf %143, %142 : vector<2x32xf32>
    %145 = arith.divf %143, %144 : vector<2x32xf32>
    %146 = vector.extract_strided_slice %139 {offsets = [0, 32], sizes = [2, 32], strides = [1, 1]} : vector<2x128xf32> to vector<2x32xf32>
    %147 = arith.negf %146 : vector<2x32xf32>
    %148 = math.exp %147 : vector<2x32xf32>
    %cst_56 = arith.constant 1.000000e+00 : f32
    %149 = vector.broadcast %cst_56 : f32 to vector<2x32xf32>
    %150 = arith.addf %149, %148 : vector<2x32xf32>
    %151 = arith.divf %149, %150 : vector<2x32xf32>
    %152 = vector.extract_strided_slice %139 {offsets = [0, 64], sizes = [2, 32], strides = [1, 1]} : vector<2x128xf32> to vector<2x32xf32>
    %153 = math.tanh %152 : vector<2x32xf32>
    %154 = vector.extract_strided_slice %139 {offsets = [0, 96], sizes = [2, 32], strides = [1, 1]} : vector<2x128xf32> to vector<2x32xf32>
    %155 = arith.negf %154 : vector<2x32xf32>
    %156 = math.exp %155 : vector<2x32xf32>
    %cst_57 = arith.constant 1.000000e+00 : f32
    %157 = vector.broadcast %cst_57 : f32 to vector<2x32xf32>
    %158 = arith.addf %157, %156 : vector<2x32xf32>
    %159 = arith.divf %157, %158 : vector<2x32xf32>
    %160 = arith.mulf %151, %85 : vector<2x32xf32>
    %161 = arith.mulf %145, %153 : vector<2x32xf32>
    %162 = arith.addf %160, %161 : vector<2x32xf32>
    %163 = math.tanh %162 : vector<2x32xf32>
    %164 = arith.mulf %159, %163 : vector<2x32xf32>
    %165 = vector.shape_cast %164 : vector<2x32xf32> to vector<1x2x32xf32>
    %166 = arith.index_cast %c1_i32 : i32 to index
    %c0_58 = arith.constant 0 : index
    %c0_59 = arith.constant 0 : index
    %167 = vector.load %arg12[%166, %c0_58, %c0_59] : memref<4x2x32xf32, #tpu.memory_space<vmem>>, vector<1x2x32xf32>
    tpu.vector_store %arg12[%166, %c0_58, %c0_59], %165 {strides = array<i32>} : memref<4x2x32xf32, #tpu.memory_space<vmem>>, vector<1x2x32xf32>,
    %c2_i32 = arith.constant 2 : i32
    %168 = arith.index_cast %c2_i32 : i32 to index
    %c0_60 = arith.constant 0 : index
    %c0_61 = arith.constant 0 : index
    %c0_62 = arith.constant 0 : index
    %169 = vector.load %arg2[%168, %c0_60, %c0_61, %c0_62] : memref<4x2x128x32xbf16, #tpu.memory_space<vmem>>, vector<1x2x128x32xbf16>
    %170 = vector.shape_cast %169 : vector<1x2x128x32xbf16> to vector<2x128x32xbf16>
    %171 = arith.extf %170 : vector<2x128x32xbf16> to vector<2x128x32xf32>
    %172 = arith.index_cast %c2_i32 : i32 to index
    %c0_63 = arith.constant 0 : index
    %c0_64 = arith.constant 0 : index
    %c0_65 = arith.constant 0 : index
    %173 = vector.load %arg3[%172, %c0_63, %c0_64, %c0_65] : memref<4x2x128x32xbf16, #tpu.memory_space<vmem>>, vector<1x2x128x32xbf16>
    %174 = vector.shape_cast %173 : vector<1x2x128x32xbf16> to vector<2x128x32xbf16>
    %175 = arith.extf %174 : vector<2x128x32xbf16> to vector<2x128x32xf32>
    %176 = arith.index_cast %c2_i32 : i32 to index
    %c0_66 = arith.constant 0 : index
    %c0_67 = arith.constant 0 : index
    %177 = vector.load %arg4[%176, %c0_66, %c0_67] : memref<4x2x128xf32, #tpu.memory_space<vmem>>, vector<1x2x128xf32>
    %178 = vector.shape_cast %177 : vector<1x2x128xf32> to vector<2x128xf32>
    %cst_68 = arith.constant dense<0.000000e+00> : vector<2x32xf32>
    %179 = tpu.matmul %164, %3, %cst_68 {dimension_numbers = #tpu.dot_dimension_numbers<[1], [0], [0], [1], [0, 0, 1, 1], [], []>} : vector<2x32xf32>, vector<32x32xf32>, vector<2x32xf32> -> vector<2x32xf32>
    %180 = vector.shape_cast %179 : vector<2x32xf32> to vector<2x1x32xf32>
    %181 = vector.broadcast %180 : vector<2x1x32xf32> to vector<2x128x32xf32>
    %182 = arith.addf %181, %171 : vector<2x128x32xf32>
    %183 = math.tanh %182 : vector<2x128x32xf32>
    %184 = vector.broadcast %5 : vector<1x1x32xf32> to vector<2x128x32xf32>
    %185 = arith.mulf %183, %184 : vector<2x128x32xf32>
    %cst_69 = arith.constant dense<0.000000e+00> : vector<2x128xf32>
    %186 = vector.multi_reduction <add>, %185, %cst_69 [2] : vector<2x128x32xf32> to vector<2x128xf32>
    %cst_70 = arith.constant -1.000000e+30 : f32
    %187 = vector.shape_cast %11 : vector<1x128xi1> to vector<1x128xi1>
    %188 = vector.broadcast %187 : vector<1x128xi1> to vector<2x128xi1>
    %189 = vector.broadcast %cst_70 : f32 to vector<2x128xf32>
    %190 = arith.select %188, %186, %189 : vector<2x128xi1>, vector<2x128xf32>
    %cst_71 = arith.constant dense<0xFF800000> : vector<2xf32>
    %191 = vector.multi_reduction <maximumf>, %190, %cst_71 [1] : vector<2x128xf32> to vector<2xf32>
    %192 = vector.shape_cast %191 : vector<2xf32> to vector<2x1xf32>
    %193 = vector.broadcast %192 : vector<2x1xf32> to vector<2x128xf32>
    %194 = arith.subf %190, %193 : vector<2x128xf32>
    %195 = math.exp %194 : vector<2x128xf32>
    %cst_72 = arith.constant dense<0.000000e+00> : vector<2xf32>
    %196 = vector.multi_reduction <add>, %195, %cst_72 [1] : vector<2x128xf32> to vector<2xf32>
    %197 = vector.shape_cast %196 : vector<2xf32> to vector<2x1xf32>
    %198 = tpu.reciprocal %197 {approx = true} : vector<2x1xf32> -> vector<2x1xf32>
    %199 = vector.broadcast %198 : vector<2x1xf32> to vector<2x128xf32>
    %200 = arith.mulf %195, %199 : vector<2x128xf32>
    %201 = arith.mulf %200, %178 : vector<2x128xf32>
    %202 = vector.shape_cast %201 : vector<2x128xf32> to vector<2x1x128xf32>
    "tpu.trace_start"() <{level = 10 : i32, message = "bqn,bnh->bqh"}> : () -> ()
    %cst_73 = arith.constant dense<0.000000e+00> : vector<2x1x32xf32>
    %203 = tpu.matmul %202, %175, %cst_73 {dimension_numbers = #tpu.dot_dimension_numbers<[2], [1], [1], [2], [0, 0, 0, 1, 1, 2], [0], [0]>} : vector<2x1x128xf32>, vector<2x128x32xf32>, vector<2x1x32xf32> -> vector<2x1x32xf32>
    "tpu.trace_stop"() : () -> ()
    %204 = vector.shape_cast %203 : vector<2x1x32xf32> to vector<2x32xf32>
    %cst_74 = arith.constant dense<0.000000e+00> : vector<2xf32>
    %205 = vector.multi_reduction <add>, %201, %cst_74 [1] : vector<2x128xf32> to vector<2xf32>
    %206 = vector.shape_cast %205 : vector<2xf32> to vector<2x1xf32>
    %cst_75 = arith.constant 9.99999974E-6 : f32
    %207 = vector.broadcast %cst_75 : f32 to vector<2x1xf32>
    %208 = arith.maximumf %206, %207 : vector<2x1xf32>
    %209 = tpu.reciprocal %208 {approx = true} : vector<2x1xf32> -> vector<2x1xf32>
    %210 = vector.broadcast %209 : vector<2x1xf32> to vector<2x32xf32>
    %211 = arith.mulf %204, %210 : vector<2x32xf32>
    %cst_76 = arith.constant dense<0.000000e+00> : vector<2x128xf32>
    %212 = tpu.matmul %211, %6, %cst_76 {dimension_numbers = #tpu.dot_dimension_numbers<[1], [0], [0], [1], [0, 0, 1, 1], [], []>} : vector<2x32xf32>, vector<32x128xf32>, vector<2x128xf32> -> vector<2x128xf32>
    %cst_77 = arith.constant dense<0.000000e+00> : vector<2x128xf32>
    %213 = tpu.matmul %164, %7, %cst_77 {dimension_numbers = #tpu.dot_dimension_numbers<[1], [0], [0], [1], [0, 0, 1, 1], [], []>} : vector<2x32xf32>, vector<32x128xf32>, vector<2x128xf32> -> vector<2x128xf32>
    %214 = arith.addf %212, %213 : vector<2x128xf32>
    %215 = vector.broadcast %8 : vector<1x128xf32> to vector<2x128xf32>
    %216 = arith.addf %214, %215 : vector<2x128xf32>
    %217 = vector.extract_strided_slice %216 {offsets = [0, 0], sizes = [2, 32], strides = [1, 1]} : vector<2x128xf32> to vector<2x32xf32>
    %218 = arith.negf %217 : vector<2x32xf32>
    %219 = math.exp %218 : vector<2x32xf32>
    %cst_78 = arith.constant 1.000000e+00 : f32
    %220 = vector.broadcast %cst_78 : f32 to vector<2x32xf32>
    %221 = arith.addf %220, %219 : vector<2x32xf32>
    %222 = arith.divf %220, %221 : vector<2x32xf32>
    %223 = vector.extract_strided_slice %216 {offsets = [0, 32], sizes = [2, 32], strides = [1, 1]} : vector<2x128xf32> to vector<2x32xf32>
    %224 = arith.negf %223 : vector<2x32xf32>
    %225 = math.exp %224 : vector<2x32xf32>
    %cst_79 = arith.constant 1.000000e+00 : f32
    %226 = vector.broadcast %cst_79 : f32 to vector<2x32xf32>
    %227 = arith.addf %226, %225 : vector<2x32xf32>
    %228 = arith.divf %226, %227 : vector<2x32xf32>
    %229 = vector.extract_strided_slice %216 {offsets = [0, 64], sizes = [2, 32], strides = [1, 1]} : vector<2x128xf32> to vector<2x32xf32>
    %230 = math.tanh %229 : vector<2x32xf32>
    %231 = vector.extract_strided_slice %216 {offsets = [0, 96], sizes = [2, 32], strides = [1, 1]} : vector<2x128xf32> to vector<2x32xf32>
    %232 = arith.negf %231 : vector<2x32xf32>
    %233 = math.exp %232 : vector<2x32xf32>
    %cst_80 = arith.constant 1.000000e+00 : f32
    %234 = vector.broadcast %cst_80 : f32 to vector<2x32xf32>
    %235 = arith.addf %234, %233 : vector<2x32xf32>
    %236 = arith.divf %234, %235 : vector<2x32xf32>
    %237 = arith.mulf %228, %162 : vector<2x32xf32>
    %238 = arith.mulf %222, %230 : vector<2x32xf32>
    %239 = arith.addf %237, %238 : vector<2x32xf32>
    %240 = math.tanh %239 : vector<2x32xf32>
    %241 = arith.mulf %236, %240 : vector<2x32xf32>
    %242 = vector.shape_cast %241 : vector<2x32xf32> to vector<1x2x32xf32>
    %243 = arith.index_cast %c2_i32 : i32 to index
    %c0_81 = arith.constant 0 : index
    %c0_82 = arith.constant 0 : index
    %244 = vector.load %arg12[%243, %c0_81, %c0_82] : memref<4x2x32xf32, #tpu.memory_space<vmem>>, vector<1x2x32xf32>
    tpu.vector_store %arg12[%243, %c0_81, %c0_82], %242 {strides = array<i32>} : memref<4x2x32xf32, #tpu.memory_space<vmem>>, vector<1x2x32xf32>,
    %c3_i32 = arith.constant 3 : i32
    %245 = arith.index_cast %c3_i32 : i32 to index
    %c0_83 = arith.constant 0 : index
    %c0_84 = arith.constant 0 : index
    %c0_85 = arith.constant 0 : index
    %246 = vector.load %arg2[%245, %c0_83, %c0_84, %c0_85] : memref<4x2x128x32xbf16, #tpu.memory_space<vmem>>, vector<1x2x128x32xbf16>
    %247 = vector.shape_cast %246 : vector<1x2x128x32xbf16> to vector<2x128x32xbf16>
    %248 = arith.extf %247 : vector<2x128x32xbf16> to vector<2x128x32xf32>
    %249 = arith.index_cast %c3_i32 : i32 to index
    %c0_86 = arith.constant 0 : index
    %c0_87 = arith.constant 0 : index
    %c0_88 = arith.constant 0 : index
    %250 = vector.load %arg3[%249, %c0_86, %c0_87, %c0_88] : memref<4x2x128x32xbf16, #tpu.memory_space<vmem>>, vector<1x2x128x32xbf16>
    %251 = vector.shape_cast %250 : vector<1x2x128x32xbf16> to vector<2x128x32xbf16>
    %252 = arith.extf %251 : vector<2x128x32xbf16> to vector<2x128x32xf32>
    %253 = arith.index_cast %c3_i32 : i32 to index
    %c0_89 = arith.constant 0 : index
    %c0_90 = arith.constant 0 : index
    %254 = vector.load %arg4[%253, %c0_89, %c0_90] : memref<4x2x128xf32, #tpu.memory_space<vmem>>, vector<1x2x128xf32>
    %255 = vector.shape_cast %254 : vector<1x2x128xf32> to vector<2x128xf32>
    %cst_91 = arith.constant dense<0.000000e+00> : vector<2x32xf32>
    %256 = tpu.matmul %241, %3, %cst_91 {dimension_numbers = #tpu.dot_dimension_numbers<[1], [0], [0], [1], [0, 0, 1, 1], [], []>} : vector<2x32xf32>, vector<32x32xf32>, vector<2x32xf32> -> vector<2x32xf32>
    %257 = vector.shape_cast %256 : vector<2x32xf32> to vector<2x1x32xf32>
    %258 = vector.broadcast %257 : vector<2x1x32xf32> to vector<2x128x32xf32>
    %259 = arith.addf %258, %248 : vector<2x128x32xf32>
    %260 = math.tanh %259 : vector<2x128x32xf32>
    %261 = vector.broadcast %5 : vector<1x1x32xf32> to vector<2x128x32xf32>
    %262 = arith.mulf %260, %261 : vector<2x128x32xf32>
    %cst_92 = arith.constant dense<0.000000e+00> : vector<2x128xf32>
    %263 = vector.multi_reduction <add>, %262, %cst_92 [2] : vector<2x128x32xf32> to vector<2x128xf32>
    %cst_93 = arith.constant -1.000000e+30 : f32
    %264 = vector.shape_cast %11 : vector<1x128xi1> to vector<1x128xi1>
    %265 = vector.broadcast %264 : vector<1x128xi1> to vector<2x128xi1>
    %266 = vector.broadcast %cst_93 : f32 to vector<2x128xf32>
    %267 = arith.select %265, %263, %266 : vector<2x128xi1>, vector<2x128xf32>
    %cst_94 = arith.constant dense<0xFF800000> : vector<2xf32>
    %268 = vector.multi_reduction <maximumf>, %267, %cst_94 [1] : vector<2x128xf32> to vector<2xf32>
    %269 = vector.shape_cast %268 : vector<2xf32> to vector<2x1xf32>
    %270 = vector.broadcast %269 : vector<2x1xf32> to vector<2x128xf32>
    %271 = arith.subf %267, %270 : vector<2x128xf32>
    %272 = math.exp %271 : vector<2x128xf32>
    %cst_95 = arith.constant dense<0.000000e+00> : vector<2xf32>
    %273 = vector.multi_reduction <add>, %272, %cst_95 [1] : vector<2x128xf32> to vector<2xf32>
    %274 = vector.shape_cast %273 : vector<2xf32> to vector<2x1xf32>
    %275 = tpu.reciprocal %274 {approx = true} : vector<2x1xf32> -> vector<2x1xf32>
    %276 = vector.broadcast %275 : vector<2x1xf32> to vector<2x128xf32>
    %277 = arith.mulf %272, %276 : vector<2x128xf32>
    %278 = arith.mulf %277, %255 : vector<2x128xf32>
    %279 = vector.shape_cast %278 : vector<2x128xf32> to vector<2x1x128xf32>
    "tpu.trace_start"() <{level = 10 : i32, message = "bqn,bnh->bqh"}> : () -> ()
    %cst_96 = arith.constant dense<0.000000e+00> : vector<2x1x32xf32>
    %280 = tpu.matmul %279, %252, %cst_96 {dimension_numbers = #tpu.dot_dimension_numbers<[2], [1], [1], [2], [0, 0, 0, 1, 1, 2], [0], [0]>} : vector<2x1x128xf32>, vector<2x128x32xf32>, vector<2x1x32xf32> -> vector<2x1x32xf32>
    "tpu.trace_stop"() : () -> ()
    %281 = vector.shape_cast %280 : vector<2x1x32xf32> to vector<2x32xf32>
    %cst_97 = arith.constant dense<0.000000e+00> : vector<2xf32>
    %282 = vector.multi_reduction <add>, %278, %cst_97 [1] : vector<2x128xf32> to vector<2xf32>
    %283 = vector.shape_cast %282 : vector<2xf32> to vector<2x1xf32>
    %cst_98 = arith.constant 9.99999974E-6 : f32
    %284 = vector.broadcast %cst_98 : f32 to vector<2x1xf32>
    %285 = arith.maximumf %283, %284 : vector<2x1xf32>
    %286 = tpu.reciprocal %285 {approx = true} : vector<2x1xf32> -> vector<2x1xf32>
    %287 = vector.broadcast %286 : vector<2x1xf32> to vector<2x32xf32>
    %288 = arith.mulf %281, %287 : vector<2x32xf32>
    %cst_99 = arith.constant dense<0.000000e+00> : vector<2x128xf32>
    %289 = tpu.matmul %288, %6, %cst_99 {dimension_numbers = #tpu.dot_dimension_numbers<[1], [0], [0], [1], [0, 0, 1, 1], [], []>} : vector<2x32xf32>, vector<32x128xf32>, vector<2x128xf32> -> vector<2x128xf32>
    %cst_100 = arith.constant dense<0.000000e+00> : vector<2x128xf32>
    %290 = tpu.matmul %241, %7, %cst_100 {dimension_numbers = #tpu.dot_dimension_numbers<[1], [0], [0], [1], [0, 0, 1, 1], [], []>} : vector<2x32xf32>, vector<32x128xf32>, vector<2x128xf32> -> vector<2x128xf32>
    %291 = arith.addf %289, %290 : vector<2x128xf32>
    %292 = vector.broadcast %8 : vector<1x128xf32> to vector<2x128xf32>
    %293 = arith.addf %291, %292 : vector<2x128xf32>
    %294 = vector.extract_strided_slice %293 {offsets = [0, 0], sizes = [2, 32], strides = [1, 1]} : vector<2x128xf32> to vector<2x32xf32>
    %295 = arith.negf %294 : vector<2x32xf32>
    %296 = math.exp %295 : vector<2x32xf32>
    %cst_101 = arith.constant 1.000000e+00 : f32
    %297 = vector.broadcast %cst_101 : f32 to vector<2x32xf32>
    %298 = arith.addf %297, %296 : vector<2x32xf32>
    %299 = arith.divf %297, %298 : vector<2x32xf32>
    %300 = vector.extract_strided_slice %293 {offsets = [0, 32], sizes = [2, 32], strides = [1, 1]} : vector<2x128xf32> to vector<2x32xf32>
    %301 = arith.negf %300 : vector<2x32xf32>
    %302 = math.exp %301 : vector<2x32xf32>
    %cst_102 = arith.constant 1.000000e+00 : f32
    %303 = vector.broadcast %cst_102 : f32 to vector<2x32xf32>
    %304 = arith.addf %303, %302 : vector<2x32xf32>
    %305 = arith.divf %303, %304 : vector<2x32xf32>
    %306 = vector.extract_strided_slice %293 {offsets = [0, 64], sizes = [2, 32], strides = [1, 1]} : vector<2x128xf32> to vector<2x32xf32>
    %307 = math.tanh %306 : vector<2x32xf32>
    %308 = vector.extract_strided_slice %293 {offsets = [0, 96], sizes = [2, 32], strides = [1, 1]} : vector<2x128xf32> to vector<2x32xf32>
    %309 = arith.negf %308 : vector<2x32xf32>
    %310 = math.exp %309 : vector<2x32xf32>
    %cst_103 = arith.constant 1.000000e+00 : f32
    %311 = vector.broadcast %cst_103 : f32 to vector<2x32xf32>
    %312 = arith.addf %311, %310 : vector<2x32xf32>
    %313 = arith.divf %311, %312 : vector<2x32xf32>
    %314 = arith.mulf %305, %239 : vector<2x32xf32>
    %315 = arith.mulf %299, %307 : vector<2x32xf32>
    %316 = arith.addf %314, %315 : vector<2x32xf32>
    %317 = math.tanh %316 : vector<2x32xf32>
    %318 = arith.mulf %313, %317 : vector<2x32xf32>
    %319 = vector.shape_cast %318 : vector<2x32xf32> to vector<1x2x32xf32>
    %320 = arith.index_cast %c3_i32 : i32 to index
    %c0_104 = arith.constant 0 : index
    %c0_105 = arith.constant 0 : index
    %321 = vector.load %arg12[%320, %c0_104, %c0_105] : memref<4x2x32xf32, #tpu.memory_space<vmem>>, vector<1x2x32xf32>
    tpu.vector_store %arg12[%320, %c0_104, %c0_105], %319 {strides = array<i32>} : memref<4x2x32xf32, #tpu.memory_space<vmem>>, vector<1x2x32xf32>,
    %c4_i32 = arith.constant 4 : i32
    %c0_106 = arith.constant 0 : index
    %c0_107 = arith.constant 0 : index
    %322 = vector.load %arg15[%c0_106, %c0_107] : memref<2x32xf32, #tpu.memory_space<vmem>>, vector<2x32xf32>
    tpu.vector_store %arg15[%c0_106, %c0_107], %318 {strides = array<i32>} : memref<2x32xf32, #tpu.memory_space<vmem>>, vector<2x32xf32>,
    %c0_108 = arith.constant 0 : index
    %c0_109 = arith.constant 0 : index
    %323 = vector.load %arg16[%c0_108, %c0_109] : memref<2x32xf32, #tpu.memory_space<vmem>>, vector<2x32xf32>
    tpu.vector_store %arg16[%c0_108, %c0_109], %316 {strides = array<i32>} : memref<2x32xf32, #tpu.memory_space<vmem>>, vector<2x32xf32>,
    %c0_i32_110 = arith.constant 0 : i32
    %324 = arith.cmpi eq, %arg1, %c0_i32_110 : i32
    %325 = arith.extui %324 : i1 to i32
    %c0_i32_111 = arith.constant 0 : i32
    %326 = arith.cmpi ne, %325, %c0_i32_111 : i32
    scf.if %326 {
      %c0_112 = arith.constant 0 : index
      %c0_113 = arith.constant 0 : index
      %327 = vector.load %arg13[%c0_112, %c0_113] : memref<2x32xf32, #tpu.memory_space<vmem>>, vector<2x32xf32>
      tpu.vector_store %arg13[%c0_112, %c0_113], %318 {strides = array<i32>} : memref<2x32xf32, #tpu.memory_space<vmem>>, vector<2x32xf32>,
      %c0_114 = arith.constant 0 : index
      %c0_115 = arith.constant 0 : index
      %328 = vector.load %arg14[%c0_114, %c0_115] : memref<2x32xf32, #tpu.memory_space<vmem>>, vector<2x32xf32>
      tpu.vector_store %arg14[%c0_114, %c0_115], %316 {strides = array<i32>} : memref<2x32xf32, #tpu.memory_space<vmem>>, vector<2x32xf32>,
    } else {
    }
    return
  }
  func.func @transform_0(%arg0: i32, %arg1: i32) -> (i32, i32, i32, i32) {
    %c0_i32 = arith.constant 0 : i32
    %c0_i32_0 = arith.constant 0 : i32
    %c0_i32_1 = arith.constant 0 : i32
    return %arg1, %arg0, %c0_i32, %c0_i32_0 : i32, i32, i32, i32
  }
  func.func @transform_1(%arg0: i32, %arg1: i32) -> (i32, i32, i32, i32) {
    %c0_i32 = arith.constant 0 : i32
    %c0_i32_0 = arith.constant 0 : i32
    %c0_i32_1 = arith.constant 0 : i32
    return %arg1, %arg0, %c0_i32, %c0_i32_0 : i32, i32, i32, i32
  }
  func.func @transform_2(%arg0: i32, %arg1: i32) -> (i32, i32, i32) {
    %c0_i32 = arith.constant 0 : i32
    %c0_i32_0 = arith.constant 0 : i32
    return %arg1, %arg0, %c0_i32 : i32, i32, i32
  }
  func.func @transform_3(%arg0: i32, %arg1: i32) -> (i32, i32) {
    %c0_i32 = arith.constant 0 : i32
    %c0_i32_0 = arith.constant 0 : i32
    return %arg0, %c0_i32 : i32, i32
  }
  func.func @transform_4(%arg0: i32, %arg1: i32) -> (i32, i32) {
    %c0_i32 = arith.constant 0 : i32
    %c0_i32_0 = arith.constant 0 : i32
    return %arg0, %c0_i32 : i32, i32
  }
  func.func @transform_5(%arg0: i32, %arg1: i32) -> (i32, i32) {
    %c0_i32 = arith.constant 0 : i32
    %c0_i32_0 = arith.constant 0 : i32
    %c0_i32_1 = arith.constant 0 : i32
    return %c0_i32, %c0_i32_0 : i32, i32
  }
  func.func @transform_6(%arg0: i32, %arg1: i32) -> (i32, i32) {
    %c0_i32 = arith.constant 0 : i32
    %c0_i32_0 = arith.constant 0 : i32
    %c0_i32_1 = arith.constant 0 : i32
    return %c0_i32, %c0_i32_0 : i32, i32
  }
  func.func @transform_7(%arg0: i32, %arg1: i32) -> (i32, i32) {
    %c0_i32 = arith.constant 0 : i32
    %c0_i32_0 = arith.constant 0 : i32
    %c0_i32_1 = arith.constant 0 : i32
    return %c0_i32, %c0_i32_0 : i32, i32
  }
  func.func @transform_8(%arg0: i32, %arg1: i32) -> (i32, i32) {
    %c0_i32 = arith.constant 0 : i32
    %c0_i32_0 = arith.constant 0 : i32
    %c0_i32_1 = arith.constant 0 : i32
    return %c0_i32, %c0_i32_0 : i32, i32
  }
  func.func @transform_9(%arg0: i32, %arg1: i32) -> (i32, i32) {
    %c0_i32 = arith.constant 0 : i32
    %c0_i32_0 = arith.constant 0 : i32
    %c0_i32_1 = arith.constant 0 : i32
    return %c0_i32, %c0_i32_0 : i32, i32
  }
  func.func @transform_10(%arg0: i32, %arg1: i32) -> (i32, i32, i32) {
    %c0_i32 = arith.constant 0 : i32
    %c0_i32_0 = arith.constant 0 : i32
    return %arg1, %arg0, %c0_i32 : i32, i32, i32
  }
  func.func @transform_11(%arg0: i32, %arg1: i32) -> (i32, i32) {
    %c0_i32 = arith.constant 0 : i32
    %c0_i32_0 = arith.constant 0 : i32
    return %arg0, %c0_i32 : i32, i32
  }
  func.func @transform_12(%arg0: i32, %arg1: i32) -> (i32, i32) {
    %c0_i32 = arith.constant 0 : i32
    %c0_i32_0 = arith.constant 0 : i32
    return %arg0, %c0_i32 : i32, i32
  }
}

</mosaic_0001>

<llo_original>
// kernel: mictranet_forward.5
$region0: #{mictranet_forward.5}
  #allocation0 [shape = 'u32[]', space=smem, size = 0x4, offset = 0x4, fixed_abs, tag = 'smem constant byte address 0x4 - core index']
  #allocation1 [shape = 'u32[144,128]{1,0:T(1,128)}', space=vmem, size = 0x12000, scoped, tag = 'internal scratch']
  %s0 = inlined_call_operand.vmem [shape: f32[8,32], index: 0, kind: input, shape index: {}]
  %s1 = inlined_call_operand.vmem [shape: f32[32,128], index: 1, kind: input, shape index: {}]
  %s2 = inlined_call_operand.vmem [shape: f32[1,128], index: 2, kind: input, shape index: {}]
  %s3 = inlined_call_operand.vmem [shape: f32[8,128], index: 3, kind: output, shape index: {}]
  %s4 = sld [smem:[#allocation0]]
  $region22: #{mictranet_forward.5} parent=0
    _
  %s6 = ssub.s32 1, %s4
  %s7 = scalar_select 0, %s6, %s4
  // Predicated region
  $region2: #{mictranet_forward.5} parent=0 // pred_check
    _
  $region3: #{mictranet_forward.5} parent=0 // pred_check_branch
    %9 = sbr.rel (0) target = $region5
  $region4: #{mictranet_forward.5} parent=0 // pred_region
    _
  $region5: #{mictranet_forward.5} parent=0 // pred_fallthru
    _
  // Predicated region
  $region6: #{mictranet_forward.5} parent=0 // pred_check
    _
  $region7: #{mictranet_forward.5} parent=0 // pred_check_branch
    %11 = sbr.rel (0) target = $region9
  $region8: #{mictranet_forward.5} parent=0 // pred_region
    _
  $region9: #{mictranet_forward.5} parent=0 // pred_fallthru
    _
  // Predicated region
  $region10: #{mictranet_forward.5} parent=0 // pred_check
    _
  $region11: #{mictranet_forward.5} parent=0 // pred_check_branch
    %13 = sbr.rel (0) target = $region13
  $region12: #{mictranet_forward.5} parent=0 // pred_region
    _
  $region13: #{mictranet_forward.5} parent=0 // pred_fallthru
    _
  %v14 = vld [vmem:[%s0] sm:$0xff]
  %v15 = vld [vmem:[%s1] sm:$0xff]
  %v16 = vld [vmem:[%s1 + $0x8] sm:$0xff]
  %v17 = vld [vmem:[%s1 + $0x10] sm:$0xff]
  %v18 = vld [vmem:[%s1 + $0x18] sm:$0xff]
  %v19 = vld [vmem:[%s2] sm:$0x1]
  %v21 = vlaneseq
  %v22 = vshrl.u32 %v21, 7
  %v23 = vsub.s32 0, %v22
  %v24 = vrot.slane %v19, %v23
  %vm26 = vcmask 261120
  %v28 = vsel %vm26, %v14, 0
  %30 = vmatprep.subr.mxu0 0.0
  %31 = vmatpush1.msra.mxu0 %v15
  %32 = vmatprep.subr.mxu0 0.0
  %33 = vmatpush1.msra.mxu0 %v16
  %34 = vmatprep.subr.mxu0 0.0
  %35 = vmatpush1.msra.mxu0 %v17
  %36 = vmatprep.subr.mxu0 0.0
  %37 = vmatpush1.msra.mxu0 %v18
  %38 = vmatprep.subr.mxu0 0.0
  %39 = vmatpush1.msra.mxu0 0.0
  %40 = vmatprep.subr.mxu0 0.0
  %41 = vmatpush1.msra.mxu0 0.0
  %42 = vmatprep.subr.mxu0 0.0
  %43 = vmatpush1.msra.mxu0 0.0
  %44 = vmatprep.subr.mxu0 0.0
  %45 = vmatpush1.msra.mxu0 0.0
  %46 = vmatprep.subr.mxu0 0.0
  %47 = vmatpush1.msra.mxu0 0.0
  %48 = vmatprep.subr.mxu0 0.0
  %49 = vmatpush1.msra.mxu0 0.0
  %50 = vmatprep.subr.mxu0 0.0
  %51 = vmatpush1.msra.mxu0 0.0
  %52 = vmatprep.subr.mxu0 0.0
  %53 = vmatpush1.msra.mxu0 0.0
  %54 = vmatprep.subr.mxu0 0.0
  %55 = vmatpush1.msra.mxu0 0.0
  %56 = vmatprep.subr.mxu0 0.0
  %57 = vmatpush1.msra.mxu0 0.0
  %58 = vmatprep.subr.mxu0 0.0
  %59 = vmatpush1.msra.mxu0 0.0
  %60 = vmatprep.subr.mxu0 0.0
  %61 = vmatpush1.msra.mxu0 0.0
  %62 = vmatprep.subr.mxu0 0.0
  %63 = vmatpush1.msra.mxu0 0.0
  %64 = vmatprep.subr.mxu0 0.0
  %65 = vmatpush1.msra.mxu0 0.0
  %66 = vmatprep.subr.mxu0 0.0
  %67 = vmatpush1.msra.mxu0 0.0
  %68 = vmatprep.subr.mxu0 0.0
  %69 = vmatpush1.msra.mxu0 0.0
  %70 = vmatprep.subr.mxu0 0.0
  %71 = vmatpush1.msra.mxu0 0.0
  %72 = vmatprep.subr.mxu0 0.0
  %73 = vmatpush1.msra.mxu0 0.0
  %74 = vmatprep.subr.mxu0 0.0
  %75 = vmatpush1.msra.mxu0 0.0
  %76 = vmatprep.subr.mxu0 0.0
  %77 = vmatpush1.msra.mxu0 0.0
  %78 = vmatprep.subr.mxu0 0.0
  %79 = vmatpush1.msra.mxu0 0.0
  %80 = vmatprep.subr.mxu0 0.0
  %81 = vmatpush1.msra.mxu0 0.0
  %82 = vmatprep.subr.mxu0 0.0
  %83 = vmatpush1.msra.mxu0 0.0
  %84 = vmatprep.subr.mxu0 0.0
  %85 = vmatpush1.msra.mxu0 0.0
  %86 = vmatprep.subr.mxu0 0.0
  %87 = vmatpush1.msra.mxu0 0.0
  %88 = vmatprep.subr.mxu0 0.0
  %89 = vmatpush1.msra.mxu0 0.0
  %90 = vmatprep.subr.mxu0 0.0
  %91 = vmatpush1.msra.mxu0 0.0
  %92 = vmatprep.subr.mxu0 0.0
  %93 = vmatpush1.msra.mxu0 0.0
  %94 = vmatprep.mubr.f32.mxu0 0.0
  %95 = vmatmul.mubr.f32.gmra.mrb[0].mxu0 %v28
  %v96 = vpop.f32.mrb[0].mxu0
  %v97 = vadd.f32 %v24, %v96
  %v98 = vpop.f32.mrb[0].mxu0
  %99 = vdwg.mxu0
  %v100 = vlaneseq
  %v101 = vand.u32 %v100, 127
  %vm102 = vcmp.lt.s32.totalorder %v101, 8
  %v103 = vsel %vm102, 1, 0
  %vm104 = vcmp.eq.s32.totalorder %v103, 1
  %v105 = vsel %vm104, %v97, -1e+30
  %106 = vmax.xlane.f32.xlu0 %v105
  %v107 = vpop.xlane.xlu0 %106
  %v108 = vsub.f32 %v105, %v107
  %v109 = vmul.f32 %v108, 1.442695
  %v110 = vpow.pop %v109
  %111 = vadd.xlane.f32.xlu0 %v110
  %v112 = vpop.xlane.xlu0 %111
  %v113 = vrcp.pop %v112
  %v114 = vmul.f32 %v110, %v113
  %115 = vst [vmem:[%s3] sm:$0xff] %v114
  // Predicated region
  $region14: #{mictranet_forward.5} parent=0 // pred_check
    _
  $region15: #{mictranet_forward.5} parent=0 // pred_check_branch
    %117 = sbr.rel (0) target = $region17
  $region16: #{mictranet_forward.5} parent=0 // pred_region
    _
  $region17: #{mictranet_forward.5} parent=0 // pred_fallthru
    _
  // Predicated region
  $region18: #{mictranet_forward.5} parent=0 // pred_check
    _
  $region19: #{mictranet_forward.5} parent=0 // pred_check_branch
    %119 = sbr.rel (0) target = $region21
  $region20: #{mictranet_forward.5} parent=0 // pred_region
    _
  $region21: #{mictranet_forward.5} parent=0 // pred_fallthru
    _

// kernel: mictranet_forward.3
$region0: #{mictranet_forward.3}
  #allocation0 [shape = 'u32[]', space=smem, size = 0x4, offset = 0x4, fixed_abs, tag = 'smem constant byte address 0x4 - core index']
  #allocation1 [shape = 'u32[144,128]{1,0:T(1,128)}', space=vmem, size = 0x12000, scoped, tag = 'internal scratch']
  %s0 = inlined_call_operand.vmem [shape: bf16[1024,32], index: 0, kind: input, shape index: {}]
  %s1 = inlined_call_operand.vmem [shape: bf16[32,32], index: 1, kind: input, shape index: {}]
  %s2 = inlined_call_operand.vmem [shape: bf16[32,32], index: 2, kind: input, shape index: {}]
  %s3 = inlined_call_operand.vmem [shape: bf16[1024,32], index: 3, kind: output, shape index: {0}]
  %s4 = inlined_call_operand.vmem [shape: bf16[1024,32], index: 4, kind: output, shape index: {1}]
  %5 = xla_tuple %s3, %s4
  %s6 = sld [smem:[#allocation0]]
  $region53: #{mictranet_forward.3} parent=0
    _
  %s8 = ssub.s32 1, %s6
  %s9 = scalar_select 0, %s8, %s6
  loop: start=0, step=1, limit=4
  $region2: #{mictranet_forward.3} parent=0 // loop_pre_header
    _
  $region3: #{mictranet_forward.3} parent=0 // loop_header
    %s11 = sphi 0, %s15
    %p12 = scmp.ge.s32.totalorder %s11, 4
    %s21 = sphi 0, %s23
    %s24 = sphi 0, %s21
    %s25 = sphi 0, %s24
    %s41 = sphi 0, %s25
    %s45 = sphi 0, %s45
    %s47 = sphi 0, %s45
    %s48 = sphi 0, %s47
    %s62 = sphi 0, %s48
    %s66 = sphi 0, %s66
    %s68 = sphi 0, %s66
    %s69 = sphi 0, %s68
    %s83 = sphi 0, %s69
    %s89 = sphi 0, %s91
    %s92 = sphi 0, %s89
    %s93 = sphi 0, %s92
    %s109 = sphi 0, %s93
    %s115 = sphi 0, %s117
    %s118 = sphi 0, %s115
    %s119 = sphi 0, %s118
    %s135 = sphi 0, %s119
  $region4: #{mictranet_forward.3} parent=0 // loop_header_branch
    %14 = sbr.rel (%p12) target = $region8
  $region5: #{mictranet_forward.3} parent=0 // loop_body
    %s16 = ssub.s32 %s11, 1
    %s17 = ssub.s32 %s11, 2
    %s18 = sadd.s32 %s11, 1
    %s19 = ssub.s32 %s11, %s18
    %p20 = scmp.eq.s32.totalorder %s19, 0
    %s22 = sadd.s32 %s21, 1
    %s23 = scalar_select %p20, %s21, %s22
    %p26 = pneg %p20
    %p27 = scmp.eq.s32.totalorder %s11, 1
    %p28 = por %p26, %p27
    %p29 = scmp.ne.s32.totalorder %s21, %s24
    %p30 = scmp.eq.s32.totalorder %s11, 0
    %p31 = por %p29, %p30
    %p32 = scmp.ne.s32.totalorder %s21, %s24
    %p33 = scmp.eq.s32.totalorder %s16, 1
    %p34 = por %p32, %p33
    %p35 = scmp.ne.s32.totalorder %s24, %s25
    %p36 = scmp.eq.s32.totalorder %s16, 0
    %p37 = por %p35, %p36
    %p38 = scmp.ne.s32.totalorder %s24, %s25
    %p39 = scmp.eq.s32.totalorder %s17, 1
    %p40 = por %p38, %p39
    %p42 = scmp.ne.s32.totalorder %s25, %s41
    %p43 = scmp.eq.s32.totalorder %s17, 0
    %p44 = por %p42, %p43
    %s46 = sadd.s32 %s45, 1
    %p49 = scmp.eq.s32.totalorder %s11, 1
    %p50 = scmp.ne.s32.totalorder %s45, %s47
    %p51 = scmp.eq.s32.totalorder %s11, 0
    %p52 = por %p50, %p51
    %p53 = scmp.ne.s32.totalorder %s45, %s47
    %p54 = scmp.eq.s32.totalorder %s16, 1
    %p55 = por %p53, %p54
    %p56 = scmp.ne.s32.totalorder %s47, %s48
    %p57 = scmp.eq.s32.totalorder %s16, 0
    %p58 = por %p56, %p57
    %p59 = scmp.ne.s32.totalorder %s47, %s48
    %p60 = scmp.eq.s32.totalorder %s17, 1
    %p61 = por %p59, %p60
    %p63 = scmp.ne.s32.totalorder %s48, %s62
    %p64 = scmp.eq.s32.totalorder %s17, 0
    %p65 = por %p63, %p64
    %s67 = sadd.s32 %s66, 1
    %p70 = scmp.eq.s32.totalorder %s11, 1
    %p71 = scmp.ne.s32.totalorder %s66, %s68
    %p72 = scmp.eq.s32.totalorder %s11, 0
    %p73 = por %p71, %p72
    %p74 = scmp.ne.s32.totalorder %s66, %s68
    %p75 = scmp.eq.s32.totalorder %s16, 1
    %p76 = por %p74, %p75
    %p77 = scmp.ne.s32.totalorder %s68, %s69
    %p78 = scmp.eq.s32.totalorder %s16, 0
    %p79 = por %p77, %p78
    %p80 = scmp.ne.s32.totalorder %s68, %s69
    %p81 = scmp.eq.s32.totalorder %s17, 1
    %p82 = por %p80, %p81
    %p84 = scmp.ne.s32.totalorder %s69, %s83
    %p85 = scmp.eq.s32.totalorder %s17, 0
    %p86 = por %p84, %p85
    %s87 = ssub.s32 %s11, %s18
    %p88 = scmp.eq.s32.totalorder %s87, 0
    %s90 = sadd.s32 %s89, 1
    %s91 = scalar_select %p88, %s89, %s90
    %p94 = pneg %p88
    %p95 = scmp.eq.s32.totalorder %s11, 1
    %p96 = por %p94, %p95
    %p97 = scmp.ne.s32.totalorder %s89, %s92
    %p98 = scmp.eq.s32.totalorder %s11, 0
    %p99 = por %p97, %p98
    %p100 = scmp.ne.s32.totalorder %s89, %s92
    %p101 = scmp.eq.s32.totalorder %s16, 1
    %p102 = por %p100, %p101
    %p103 = scmp.ne.s32.totalorder %s92, %s93
    %p104 = scmp.eq.s32.totalorder %s16, 0
    %p105 = por %p103, %p104
    %p106 = scmp.ne.s32.totalorder %s92, %s93
    %p107 = scmp.eq.s32.totalorder %s17, 1
    %p108 = por %p106, %p107
    %p110 = scmp.ne.s32.totalorder %s93, %s109
    %p111 = scmp.eq.s32.totalorder %s17, 0
    %p112 = por %p110, %p111
    %s113 = ssub.s32 %s11, %s18
    %p114 = scmp.eq.s32.totalorder %s113, 0
    %s116 = sadd.s32 %s115, 1
    %s117 = scalar_select %p114, %s115, %s116
    %p120 = pneg %p114
    %p121 = scmp.eq.s32.totalorder %s11, 1
    %p122 = por %p120, %p121
    %p123 = scmp.ne.s32.totalorder %s115, %s118
    %p124 = scmp.eq.s32.totalorder %s11, 0
    %p125 = por %p123, %p124
    %p126 = scmp.ne.s32.totalorder %s115, %s118
    %p127 = scmp.eq.s32.totalorder %s16, 1
    %p128 = por %p126, %p127
    %p129 = scmp.ne.s32.totalorder %s118, %s119
    %p130 = scmp.eq.s32.totalorder %s16, 0
    %p131 = por %p129, %p130
    %p132 = scmp.ne.s32.totalorder %s118, %s119
    %p133 = scmp.eq.s32.totalorder %s17, 1
    %p134 = por %p132, %p133
    %p136 = scmp.ne.s32.totalorder %s119, %s135
    %p137 = scmp.eq.s32.totalorder %s17, 0
    %p138 = por %p136, %p137
    %p139 = scmp.le.s32.totalorder 1, %s11
    %p140 = scmp.lt.s32.totalorder %s11, 3
    %p141 = pnand %p139, %p140
    %p142 = pneg %p141
    // Predicated region
    $region9: #{mictranet_forward.3} parent=5 // pred_check
      _
    $region10: #{mictranet_forward.3} parent=5 // pred_check_branch
      %144 = sbr.rel (%p141) target = $region12
    $region11: #{mictranet_forward.3} parent=5 // pred_region
      %s145 = ssub.s32 %s11, 1
      // Predicated region
      $region13: #{mictranet_forward.3} parent=11 // pred_check
        %p146 = pneg %p58
      $region14: #{mictranet_forward.3} parent=11 // pred_check_branch
        %148 = sbr.rel (%p146) target = $region16
      $region15: #{mictranet_forward.3} parent=11 // pred_region
        _
      $region16: #{mictranet_forward.3} parent=11 // pred_fallthru
        _
      // Predicated region
      $region17: #{mictranet_forward.3} parent=11 // pred_check
        %p149 = pneg %p79
      $region18: #{mictranet_forward.3} parent=11 // pred_check_branch
        %151 = sbr.rel (%p149) target = $region20
      $region19: #{mictranet_forward.3} parent=11 // pred_region
        _
      $region20: #{mictranet_forward.3} parent=11 // pred_fallthru
        _
    $region12: #{mictranet_forward.3} parent=5 // pred_fallthru
      _
    %p152 = scmp.lt.s32.totalorder %s11, 2
    // Predicated region
    $region21: #{mictranet_forward.3} parent=5 // pred_check
      %p153 = pneg %p152
    $region22: #{mictranet_forward.3} parent=5 // pred_check_branch
      %155 = sbr.rel (%p153) target = $region24
    $region23: #{mictranet_forward.3} parent=5 // pred_region
      // Predicated region
      $region25: #{mictranet_forward.3} parent=23 // pred_check
        %p156 = pneg %p31
      $region26: #{mictranet_forward.3} parent=23 // pred_check_branch
        %158 = sbr.rel (%p156) target = $region28
      $region27: #{mictranet_forward.3} parent=23 // pred_region
        %s159 = smul.u32 64, %s11
        %p160 = scmp.lt.s32.totalorder %s159, 127
        %s161 = scalar_select %p160, %s159, 127
        %s162 = smul.addr %s161, 4
        %s163 = scalar_lea.vmem %s0, %s162
        %s164 = smul.u32 64, %s11
      $region28: #{mictranet_forward.3} parent=23 // pred_fallthru
        _
    $region24: #{mictranet_forward.3} parent=5 // pred_fallthru
      _
    %p165 = scmp.le.s32.totalorder 1, %s11
    %p166 = scmp.lt.s32.totalorder %s11, 3
    %p167 = pnand %p165, %p166
    %p168 = pneg %p167
    // Predicated region
    $region29: #{mictranet_forward.3} parent=5 // pred_check
      _
    $region30: #{mictranet_forward.3} parent=5 // pred_check_branch
      %170 = sbr.rel (%p167) target = $region32
    $region31: #{mictranet_forward.3} parent=5 // pred_region
      %s171 = ssub.s32 %s11, 1
      %s172 = smul.u32 64, %s16
      %p173 = scmp.lt.s32.totalorder %s172, 127
      %s174 = scalar_select %p173, %s172, 127
      %s175 = smul.addr %s174, 4
      %s176 = scalar_lea.vmem %s0, %s175
      %p177 = pneg %p37
      %p178 = pneg %p34
      %p179 = pneg %p58
      %p180 = pneg %p55
      %p181 = pneg %p79
      %p182 = pneg %p76
      %p183 = pneg %p105
      %p184 = pneg %p102
      %s185 = smul.u32 64, %s16
      %p186 = scmp.lt.s32.totalorder %s185, 127
      %s187 = scalar_select %p186, %s185, 127
      %s188 = smul.addr %s187, 4
      %s189 = scalar_lea.vmem %s3, %s188
      %p190 = pneg %p131
      %p191 = pneg %p128
      %s192 = smul.u32 64, %s16
      %p193 = scmp.lt.s32.totalorder %s192, 127
      %s194 = scalar_select %p193, %s192, 127
      %s195 = smul.addr %s194, 4
      %s196 = scalar_lea.vmem %s4, %s195
      %s197 = smul.u32 64, %s16
      %p198 = scmp.lt.s32.totalorder %s197, 127
      %s199 = scalar_select %p198, %s197, 127
      %s200 = smul.addr %s199, 4
      %s201 = scalar_lea.vmem %s0, %s200
      %s202 = smul.u32 64, %s16
      %s203 = smul.u32 64, %s16
      %p204 = scmp.lt.s32.totalorder %s203, 127
      %s205 = scalar_select %p204, %s203, 127
      %s206 = smul.addr %s205, 4
      %s207 = scalar_lea.vmem %s3, %s206
      %s208 = smul.u32 64, %s16
      %s209 = smul.u32 64, %s16
      %p210 = scmp.lt.s32.totalorder %s209, 127
      %s211 = scalar_select %p210, %s209, 127
      %s212 = smul.addr %s211, 4
      %s213 = scalar_lea.vmem %s4, %s212
      %s214 = smul.u32 64, %s16
      %v216 = vld [vmem:[%s201] sm:$0xf]
      %v217 = vld [vmem:[%s201 + $0x4] sm:$0xf]
      %v218 = vld [vmem:[%s201 + $0x8] sm:$0xf]
      %v219 = vld [vmem:[%s201 + $0xc] sm:$0xf]
      %v220 = vld [vmem:[%s201 + $0x10] sm:$0xf]
      %v221 = vld [vmem:[%s201 + $0x14] sm:$0xf]
      %v222 = vld [vmem:[%s201 + $0x18] sm:$0xf]
      %v223 = vld [vmem:[%s201 + $0x1c] sm:$0xf]
      %v224 = vld [vmem:[%s201 + $0x20] sm:$0xf]
      %v225 = vld [vmem:[%s201 + $0x24] sm:$0xf]
      %v226 = vld [vmem:[%s201 + $0x28] sm:$0xf]
      %v227 = vld [vmem:[%s201 + $0x2c] sm:$0xf]
      %v228 = vld [vmem:[%s201 + $0x30] sm:$0xf]
      %v229 = vld [vmem:[%s201 + $0x34] sm:$0xf]
      %v230 = vld [vmem:[%s201 + $0x38] sm:$0xf]
      %v231 = vld [vmem:[%s201 + $0x3c] sm:$0xf]
      %v232 = vld [vmem:[%s201 + $0x40] sm:$0xf]
      %v233 = vld [vmem:[%s201 + $0x44] sm:$0xf]
      %v234 = vld [vmem:[%s201 + $0x48] sm:$0xf]
      %v235 = vld [vmem:[%s201 + $0x4c] sm:$0xf]
      %v236 = vld [vmem:[%s201 + $0x50] sm:$0xf]
      %v237 = vld [vmem:[%s201 + $0x54] sm:$0xf]
      %v238 = vld [vmem:[%s201 + $0x58] sm:$0xf]
      %v239 = vld [vmem:[%s201 + $0x5c] sm:$0xf]
      %v240 = vld [vmem:[%s201 + $0x60] sm:$0xf]
      %v241 = vld [vmem:[%s201 + $0x64] sm:$0xf]
      %v242 = vld [vmem:[%s201 + $0x68] sm:$0xf]
      %v243 = vld [vmem:[%s201 + $0x6c] sm:$0xf]
      %v244 = vld [vmem:[%s201 + $0x70] sm:$0xf]
      %v245 = vld [vmem:[%s201 + $0x74] sm:$0xf]
      %v246 = vld [vmem:[%s201 + $0x78] sm:$0xf]
      %v247 = vld [vmem:[%s201 + $0x7c] sm:$0xf]
      %v248 = vld [vmem:[%s201 + $0x80] sm:$0xf]
      %v249 = vld [vmem:[%s201 + $0x84] sm:$0xf]
      %v250 = vld [vmem:[%s201 + $0x88] sm:$0xf]
      %v251 = vld [vmem:[%s201 + $0x8c] sm:$0xf]
      %v252 = vld [vmem:[%s201 + $0x90] sm:$0xf]
      %v253 = vld [vmem:[%s201 + $0x94] sm:$0xf]
      %v254 = vld [vmem:[%s201 + $0x98] sm:$0xf]
      %v255 = vld [vmem:[%s201 + $0x9c] sm:$0xf]
      %v256 = vld [vmem:[%s201 + $0xa0] sm:$0xf]
      %v257 = vld [vmem:[%s201 + $0xa4] sm:$0xf]
      %v258 = vld [vmem:[%s201 + $0xa8] sm:$0xf]
      %v259 = vld [vmem:[%s201 + $0xac] sm:$0xf]
      %v260 = vld [vmem:[%s201 + $0xb0] sm:$0xf]
      %v261 = vld [vmem:[%s201 + $0xb4] sm:$0xf]
      %v262 = vld [vmem:[%s201 + $0xb8] sm:$0xf]
      %v263 = vld [vmem:[%s201 + $0xbc] sm:$0xf]
      %v264 = vld [vmem:[%s201 + $0xc0] sm:$0xf]
      %v265 = vld [vmem:[%s201 + $0xc4] sm:$0xf]
      %v266 = vld [vmem:[%s201 + $0xc8] sm:$0xf]
      %v267 = vld [vmem:[%s201 + $0xcc] sm:$0xf]
      %v268 = vld [vmem:[%s201 + $0xd0] sm:$0xf]
      %v269 = vld [vmem:[%s201 + $0xd4] sm:$0xf]
      %v270 = vld [vmem:[%s201 + $0xd8] sm:$0xf]
      %v271 = vld [vmem:[%s201 + $0xdc] sm:$0xf]
      %v272 = vld [vmem:[%s201 + $0xe0] sm:$0xf]
      %v273 = vld [vmem:[%s201 + $0xe4] sm:$0xf]
      %v274 = vld [vmem:[%s201 + $0xe8] sm:$0xf]
      %v275 = vld [vmem:[%s201 + $0xec] sm:$0xf]
      %v276 = vld [vmem:[%s201 + $0xf0] sm:$0xf]
      %v277 = vld [vmem:[%s201 + $0xf4] sm:$0xf]
      %v278 = vld [vmem:[%s201 + $0xf8] sm:$0xf]
      %v279 = vld [vmem:[%s201 + $0xfc] sm:$0xf]
      %v280 = vld [vmem:[%s1] sm:$0xf]
      %v281 = vld [vmem:[%s1 + $0x4] sm:$0xf]
      %v282 = vld [vmem:[%s1 + $0x8] sm:$0xf]
      %v283 = vld [vmem:[%s1 + $0xc] sm:$0xf]
      %v348 = vunpack.c.l.b16 %v216
      %v349 = vunpack.c.l.b16 %v217
      %v350 = vunpack.c.l.b16 %v218
      %v351 = vunpack.c.l.b16 %v219
      %v352 = vunpack.c.l.b16 %v220
      %v353 = vunpack.c.l.b16 %v221
      %v354 = vunpack.c.l.b16 %v222
      %v355 = vunpack.c.l.b16 %v223
      %v356 = vunpack.c.l.b16 %v224
      %v357 = vunpack.c.l.b16 %v225
      %v358 = vunpack.c.l.b16 %v226
      %v359 = vunpack.c.l.b16 %v227
      %v360 = vunpack.c.l.b16 %v228
      %v361 = vunpack.c.l.b16 %v229
      %v362 = vunpack.c.l.b16 %v230
      %v363 = vunpack.c.l.b16 %v231
      %v364 = vunpack.c.l.b16 %v232
      %v365 = vunpack.c.l.b16 %v233
      %v366 = vunpack.c.l.b16 %v234
      %v367 = vunpack.c.l.b16 %v235
      %v368 = vunpack.c.l.b16 %v236
      %v369 = vunpack.c.l.b16 %v237
      %v370 = vunpack.c.l.b16 %v238
      %v371 = vunpack.c.l.b16 %v239
      %v372 = vunpack.c.l.b16 %v240
      %v373 = vunpack.c.l.b16 %v241
      %v374 = vunpack.c.l.b16 %v242
      %v375 = vunpack.c.l.b16 %v243
      %v376 = vunpack.c.l.b16 %v244
      %v377 = vunpack.c.l.b16 %v245
      %v378 = vunpack.c.l.b16 %v246
      %v379 = vunpack.c.l.b16 %v247
      %v380 = vunpack.c.l.b16 %v248
      %v381 = vunpack.c.l.b16 %v249
      %v382 = vunpack.c.l.b16 %v250
      %v383 = vunpack.c.l.b16 %v251
      %v384 = vunpack.c.l.b16 %v252
      %v385 = vunpack.c.l.b16 %v253
      %v386 = vunpack.c.l.b16 %v254
      %v387 = vunpack.c.l.b16 %v255
      %v388 = vunpack.c.l.b16 %v256
      %v389 = vunpack.c.l.b16 %v257
      %v390 = vunpack.c.l.b16 %v258
      %v391 = vunpack.c.l.b16 %v259
      %v392 = vunpack.c.l.b16 %v260
      %v393 = vunpack.c.l.b16 %v261
      %v394 = vunpack.c.l.b16 %v262
      %v395 = vunpack.c.l.b16 %v263
      %v396 = vunpack.c.l.b16 %v264
      %v397 = vunpack.c.l.b16 %v265
      %v398 = vunpack.c.l.b16 %v266
      %v399 = vunpack.c.l.b16 %v267
      %v400 = vunpack.c.l.b16 %v268
      %v401 = vunpack.c.l.b16 %v269
      %v402 = vunpack.c.l.b16 %v270
      %v403 = vunpack.c.l.b16 %v271
      %v404 = vunpack.c.l.b16 %v272
      %v405 = vunpack.c.l.b16 %v273
      %v406 = vunpack.c.l.b16 %v274
      %v407 = vunpack.c.l.b16 %v275
      %v408 = vunpack.c.l.b16 %v276
      %v409 = vunpack.c.l.b16 %v277
      %v410 = vunpack.c.l.b16 %v278
      %v411 = vunpack.c.l.b16 %v279
      %v412 = vpack.c.b16 %v349, %v348
      %v413 = vpack.c.b16 %v351, %v350
      %v414 = vpack.c.b16 %v353, %v352
      %v415 = vpack.c.b16 %v355, %v354
      %v416 = vpack.c.b16 %v357, %v356
      %v417 = vpack.c.b16 %v359, %v358
      %v418 = vpack.c.b16 %v361, %v360
      %v419 = vpack.c.b16 %v363, %v362
      %v420 = vpack.c.b16 %v365, %v364
      %v421 = vpack.c.b16 %v367, %v366
      %v422 = vpack.c.b16 %v369, %v368
      %v423 = vpack.c.b16 %v371, %v370
      %v424 = vpack.c.b16 %v373, %v372
      %v425 = vpack.c.b16 %v375, %v374
      %v426 = vpack.c.b16 %v377, %v376
      %v427 = vpack.c.b16 %v379, %v378
      %v428 = vpack.c.b16 %v381, %v380
      %v429 = vpack.c.b16 %v383, %v382
      %v430 = vpack.c.b16 %v385, %v384
      %v431 = vpack.c.b16 %v387, %v386
      %v432 = vpack.c.b16 %v389, %v388
      %v433 = vpack.c.b16 %v391, %v390
      %v434 = vpack.c.b16 %v393, %v392
      %v435 = vpack.c.b16 %v395, %v394
      %v436 = vpack.c.b16 %v397, %v396
      %v437 = vpack.c.b16 %v399, %v398
      %v438 = vpack.c.b16 %v401, %v400
      %v439 = vpack.c.b16 %v403, %v402
      %v440 = vpack.c.b16 %v405, %v404
      %v441 = vpack.c.b16 %v407, %v406
      %v442 = vpack.c.b16 %v409, %v408
      %v443 = vpack.c.b16 %v411, %v410
      %v448 = vunpack.c.l.b16 %v280
      %v449 = vunpack.c.l.b16 %v281
      %v450 = vunpack.c.l.b16 %v282
      %v451 = vunpack.c.l.b16 %v283
      %v452 = vpack.c.b16 %v449, %v448
      %v453 = vpack.c.b16 %v451, %v450
      %vm456 = vcmask 261120
      %v458 = vsel %vm456, %v412, 0
      %v461 = vsel %vm456, %v413, 0
      %v464 = vsel %vm456, %v414, 0
      %v467 = vsel %vm456, %v415, 0
      %v470 = vsel %vm456, %v416, 0
      %v473 = vsel %vm456, %v417, 0
      %v476 = vsel %vm456, %v418, 0
      %v479 = vsel %vm456, %v419, 0
      %v482 = vsel %vm456, %v420, 0
      %v485 = vsel %vm456, %v421, 0
      %v488 = vsel %vm456, %v422, 0
      %v491 = vsel %vm456, %v423, 0
      %v494 = vsel %vm456, %v424, 0
      %v497 = vsel %vm456, %v425, 0
      %v500 = vsel %vm456, %v426, 0
      %v503 = vsel %vm456, %v427, 0
      %v506 = vsel %vm456, %v428, 0
      %v509 = vsel %vm456, %v429, 0
      %v512 = vsel %vm456, %v430, 0
      %v515 = vsel %vm456, %v431, 0
      %v518 = vsel %vm456, %v432, 0
      %v521 = vsel %vm456, %v433, 0
      %v524 = vsel %vm456, %v434, 0
      %v527 = vsel %vm456, %v435, 0
      %v530 = vsel %vm456, %v436, 0
      %v533 = vsel %vm456, %v437, 0
      %v536 = vsel %vm456, %v438, 0
      %v539 = vsel %vm456, %v439, 0
      %v542 = vsel %vm456, %v440, 0
      %v545 = vsel %vm456, %v441, 0
      %v548 = vsel %vm456, %v442, 0
      %v551 = vsel %vm456, %v443, 0
      %553 = vmatprep.subr.bf16.mxu0 0
      %554 = vmatpush1.bf16.msra.mxu0 %v452
      %555 = vmatprep.subr.bf16.mxu0 0
      %556 = vmatpush1.bf16.msra.mxu0 %v453
      %557 = vmatprep.subr.bf16.mxu0 0
      %558 = vmatpush1.bf16.msra.mxu0 0
      %559 = vmatprep.subr.bf16.mxu0 0
      %560 = vmatpush1.bf16.msra.mxu0 0
      %561 = vmatprep.subr.bf16.mxu0 0
      %562 = vmatpush1.bf16.msra.mxu0 0
      %563 = vmatprep.subr.bf16.mxu0 0
      %564 = vmatpush1.bf16.msra.mxu0 0
      %565 = vmatprep.subr.bf16.mxu0 0
      %566 = vmatpush1.bf16.msra.mxu0 0
      %567 = vmatprep.subr.bf16.mxu0 0
      %568 = vmatpush1.bf16.msra.mxu0 0
      %569 = vmatprep.subr.bf16.mxu0 0
      %570 = vmatpush1.bf16.msra.mxu0 0
      %571 = vmatprep.subr.bf16.mxu0 0
      %572 = vmatpush1.bf16.msra.mxu0 0
      %573 = vmatprep.subr.bf16.mxu0 0
      %574 = vmatpush1.bf16.msra.mxu0 0
      %575 = vmatprep.subr.bf16.mxu0 0
      %576 = vmatpush1.bf16.msra.mxu0 0
      %577 = vmatprep.subr.bf16.mxu0 0
      %578 = vmatpush1.bf16.msra.mxu0 0
      %579 = vmatprep.subr.bf16.mxu0 0
      %580 = vmatpush1.bf16.msra.mxu0 0
      %581 = vmatprep.subr.bf16.mxu0 0
      %582 = vmatpush1.bf16.msra.mxu0 0
      %583 = vmatprep.subr.bf16.mxu0 0
      %584 = vmatpush1.bf16.msra.mxu0 0
      %585 = vmatprep.mubr.bf16.mxu0 0
      %586 = vmatmul.mubr.bf16.gmra.mrb[0].mxu0 %v458
      %v587 = vpop.f32.mrb[0].mxu0
      %v588 = vadd.f32 0.0, %v587
      %v589 = vpop.f32.mrb[0].mxu0
      %v590 = vpop.f32.mrb[0].mxu0
      %v591 = vadd.f32 0.0, %v590
      %v592 = vpop.f32.mrb[0].mxu0
      %593 = vmatprep.mubr.bf16.mxu0 0
      %594 = vmatmul.mubr.bf16.gmra.mrb[0].mxu0 %v461
      %v595 = vpop.f32.mrb[0].mxu0
      %v596 = vadd.f32 0.0, %v595
      %v597 = vpop.f32.mrb[0].mxu0
      %v598 = vpop.f32.mrb[0].mxu0
      %v599 = vadd.f32 0.0, %v598
      %v600 = vpop.f32.mrb[0].mxu0
      %601 = vmatprep.mubr.bf16.mxu0 0
      %602 = vmatmul.mubr.bf16.gmra.mrb[0].mxu0 %v464
      %v603 = vpop.f32.mrb[0].mxu0
      %v604 = vadd.f32 0.0, %v603
      %v605 = vpop.f32.mrb[0].mxu0
      %v606 = vpop.f32.mrb[0].mxu0
      %v607 = vadd.f32 0.0, %v606
      %v608 = vpop.f32.mrb[0].mxu0
      %609 = vmatprep.mubr.bf16.mxu0 0
      %610 = vmatmul.mubr.bf16.gmra.mrb[0].mxu0 %v467
      %v611 = vpop.f32.mrb[0].mxu0
      %v612 = vadd.f32 0.0, %v611
      %v613 = vpop.f32.mrb[0].mxu0
      %v614 = vpop.f32.mrb[0].mxu0
      %v615 = vadd.f32 0.0, %v614
      %v616 = vpop.f32.mrb[0].mxu0
      %617 = vmatprep.mubr.bf16.mxu0 0
      %618 = vmatmul.mubr.bf16.gmra.mrb[0].mxu0 %v470
      %v619 = vpop.f32.mrb[0].mxu0
      %v620 = vadd.f32 0.0, %v619
      %v621 = vpop.f32.mrb[0].mxu0
      %v622 = vpop.f32.mrb[0].mxu0
      %v623 = vadd.f32 0.0, %v622
      %v624 = vpop.f32.mrb[0].mxu0
      %625 = vmatprep.mubr.bf16.mxu0 0
      %626 = vmatmul.mubr.bf16.gmra.mrb[0].mxu0 %v473
      %v627 = vpop.f32.mrb[0].mxu0
      %v628 = vadd.f32 0.0, %v627
      %v629 = vpop.f32.mrb[0].mxu0
      %v630 = vpop.f32.mrb[0].mxu0
      %v631 = vadd.f32 0.0, %v630
      %v632 = vpop.f32.mrb[0].mxu0
      %633 = vmatprep.mubr.bf16.mxu0 0
      %634 = vmatmul.mubr.bf16.gmra.mrb[0].mxu0 %v476
      %v635 = vpop.f32.mrb[0].mxu0
      %v636 = vadd.f32 0.0, %v635
      %v637 = vpop.f32.mrb[0].mxu0
      %v638 = vpop.f32.mrb[0].mxu0
      %v639 = vadd.f32 0.0, %v638
      %v640 = vpop.f32.mrb[0].mxu0
      %641 = vmatprep.mubr.bf16.mxu0 0
      %642 = vmatmul.mubr.bf16.gmra.mrb[0].mxu0 %v479
      %v643 = vpop.f32.mrb[0].mxu0
      %v644 = vadd.f32 0.0, %v643
      %v645 = vpop.f32.mrb[0].mxu0
      %v646 = vpop.f32.mrb[0].mxu0
      %v647 = vadd.f32 0.0, %v646
      %v648 = vpop.f32.mrb[0].mxu0
      %649 = vmatprep.mubr.bf16.mxu0 0
      %650 = vmatmul.mubr.bf16.gmra.mrb[0].mxu0 %v482
      %v651 = vpop.f32.mrb[0].mxu0
      %v652 = vadd.f32 0.0, %v651
      %v653 = vpop.f32.mrb[0].mxu0
      %v654 = vpop.f32.mrb[0].mxu0
      %v655 = vadd.f32 0.0, %v654
      %v656 = vpop.f32.mrb[0].mxu0
      %657 = vmatprep.mubr.bf16.mxu0 0
      %658 = vmatmul.mubr.bf16.gmra.mrb[0].mxu0 %v485
      %v659 = vpop.f32.mrb[0].mxu0
      %v660 = vadd.f32 0.0, %v659
      %v661 = vpop.f32.mrb[0].mxu0
      %v662 = vpop.f32.mrb[0].mxu0
      %v663 = vadd.f32 0.0, %v662
      %v664 = vpop.f32.mrb[0].mxu0
      %665 = vmatprep.mubr.bf16.mxu0 0
      %666 = vmatmul.mubr.bf16.gmra.mrb[0].mxu0 %v488
      %v667 = vpop.f32.mrb[0].mxu0
      %v668 = vadd.f32 0.0, %v667
      %v669 = vpop.f32.mrb[0].mxu0
      %v670 = vpop.f32.mrb[0].mxu0
      %v671 = vadd.f32 0.0, %v670
      %v672 = vpop.f32.mrb[0].mxu0
      %673 = vmatprep.mubr.bf16.mxu0 0
      %674 = vmatmul.mubr.bf16.gmra.mrb[0].mxu0 %v491
      %v675 = vpop.f32.mrb[0].mxu0
      %v676 = vadd.f32 0.0, %v675
      %v677 = vpop.f32.mrb[0].mxu0
      %v678 = vpop.f32.mrb[0].mxu0
      %v679 = vadd.f32 0.0, %v678
      %v680 = vpop.f32.mrb[0].mxu0
      %681 = vmatprep.mubr.bf16.mxu0 0
      %682 = vmatmul.mubr.bf16.gmra.mrb[0].mxu0 %v494
      %v683 = vpop.f32.mrb[0].mxu0
      %v684 = vadd.f32 0.0, %v683
      %v685 = vpop.f32.mrb[0].mxu0
      %v686 = vpop.f32.mrb[0].mxu0
      %v687 = vadd.f32 0.0, %v686
      %v688 = vpop.f32.mrb[0].mxu0
      %689 = vmatprep.mubr.bf16.mxu0 0
      %690 = vmatmul.mubr.bf16.gmra.mrb[0].mxu0 %v497
      %v691 = vpop.f32.mrb[0].mxu0
      %v692 = vadd.f32 0.0, %v691
      %v693 = vpop.f32.mrb[0].mxu0
      %v694 = vpop.f32.mrb[0].mxu0
      %v695 = vadd.f32 0.0, %v694
      %v696 = vpop.f32.mrb[0].mxu0
      %697 = vmatprep.mubr.bf16.mxu0 0
      %698 = vmatmul.mubr.bf16.gmra.mrb[0].mxu0 %v500
      %v699 = vpop.f32.mrb[0].mxu0
      %v700 = vadd.f32 0.0, %v699
      %v701 = vpop.f32.mrb[0].mxu0
      %v702 = vpop.f32.mrb[0].mxu0
      %v703 = vadd.f32 0.0, %v702
      %v704 = vpop.f32.mrb[0].mxu0
      %705 = vmatprep.mubr.bf16.mxu0 0
      %706 = vmatmul.mubr.bf16.gmra.mrb[0].mxu0 %v503
      %v707 = vpop.f32.mrb[0].mxu0
      %v708 = vadd.f32 0.0, %v707
      %v709 = vpop.f32.mrb[0].mxu0
      %v710 = vpop.f32.mrb[0].mxu0
      %v711 = vadd.f32 0.0, %v710
      %v712 = vpop.f32.mrb[0].mxu0
      %713 = vmatprep.mubr.bf16.mxu0 0
      %714 = vmatmul.mubr.bf16.gmra.mrb[0].mxu0 %v506
      %v715 = vpop.f32.mrb[0].mxu0
      %v716 = vadd.f32 0.0, %v715
      %v717 = vpop.f32.mrb[0].mxu0
      %v718 = vpop.f32.mrb[0].mxu0
      %v719 = vadd.f32 0.0, %v718
      %v720 = vpop.f32.mrb[0].mxu0
      %721 = vmatprep.mubr.bf16.mxu0 0
      %722 = vmatmul.mubr.bf16.gmra.mrb[0].mxu0 %v509
      %v723 = vpop.f32.mrb[0].mxu0
      %v724 = vadd.f32 0.0, %v723
      %v725 = vpop.f32.mrb[0].mxu0
      %v726 = vpop.f32.mrb[0].mxu0
      %v727 = vadd.f32 0.0, %v726
      %v728 = vpop.f32.mrb[0].mxu0
      %729 = vmatprep.mubr.bf16.mxu0 0
      %730 = vmatmul.mubr.bf16.gmra.mrb[0].mxu0 %v512
      %v731 = vpop.f32.mrb[0].mxu0
      %v732 = vadd.f32 0.0, %v731
      %v733 = vpop.f32.mrb[0].mxu0
      %v734 = vpop.f32.mrb[0].mxu0
      %v735 = vadd.f32 0.0, %v734
      %v736 = vpop.f32.mrb[0].mxu0
      %737 = vmatprep.mubr.bf16.mxu0 0
      %738 = vmatmul.mubr.bf16.gmra.mrb[0].mxu0 %v515
      %v739 = vpop.f32.mrb[0].mxu0
      %v740 = vadd.f32 0.0, %v739
      %v741 = vpop.f32.mrb[0].mxu0
      %v742 = vpop.f32.mrb[0].mxu0
      %v743 = vadd.f32 0.0, %v742
      %v744 = vpop.f32.mrb[0].mxu0
      %745 = vmatprep.mubr.bf16.mxu0 0
      %746 = vmatmul.mubr.bf16.gmra.mrb[0].mxu0 %v518
      %v747 = vpop.f32.mrb[0].mxu0
      %v748 = vadd.f32 0.0, %v747
      %v749 = vpop.f32.mrb[0].mxu0
      %v750 = vpop.f32.mrb[0].mxu0
      %v751 = vadd.f32 0.0, %v750
      %v752 = vpop.f32.mrb[0].mxu0
      %753 = vmatprep.mubr.bf16.mxu0 0
      %754 = vmatmul.mubr.bf16.gmra.mrb[0].mxu0 %v521
      %v755 = vpop.f32.mrb[0].mxu0
      %v756 = vadd.f32 0.0, %v755
      %v757 = vpop.f32.mrb[0].mxu0
      %v758 = vpop.f32.mrb[0].mxu0
      %v759 = vadd.f32 0.0, %v758
      %v760 = vpop.f32.mrb[0].mxu0
      %761 = vmatprep.mubr.bf16.mxu0 0
      %762 = vmatmul.mubr.bf16.gmra.mrb[0].mxu0 %v524
      %v763 = vpop.f32.mrb[0].mxu0
      %v764 = vadd.f32 0.0, %v763
      %v765 = vpop.f32.mrb[0].mxu0
      %v766 = vpop.f32.mrb[0].mxu0
      %v767 = vadd.f32 0.0, %v766
      %v768 = vpop.f32.mrb[0].mxu0
      %769 = vmatprep.mubr.bf16.mxu0 0
      %770 = vmatmul.mubr.bf16.gmra.mrb[0].mxu0 %v527
      %v771 = vpop.f32.mrb[0].mxu0
      %v772 = vadd.f32 0.0, %v771
      %v773 = vpop.f32.mrb[0].mxu0
      %v774 = vpop.f32.mrb[0].mxu0
      %v775 = vadd.f32 0.0, %v774
      %v776 = vpop.f32.mrb[0].mxu0
      %777 = vmatprep.mubr.bf16.mxu0 0
      %778 = vmatmul.mubr.bf16.gmra.mrb[0].mxu0 %v530
      %v779 = vpop.f32.mrb[0].mxu0
      %v780 = vadd.f32 0.0, %v779
      %v781 = vpop.f32.mrb[0].mxu0
      %v782 = vpop.f32.mrb[0].mxu0
      %v783 = vadd.f32 0.0, %v782
      %v784 = vpop.f32.mrb[0].mxu0
      %785 = vmatprep.mubr.bf16.mxu0 0
      %786 = vmatmul.mubr.bf16.gmra.mrb[0].mxu0 %v533
      %v787 = vpop.f32.mrb[0].mxu0
      %v788 = vadd.f32 0.0, %v787
      %v789 = vpop.f32.mrb[0].mxu0
      %v790 = vpop.f32.mrb[0].mxu0
      %v791 = vadd.f32 0.0, %v790
      %v792 = vpop.f32.mrb[0].mxu0
      %793 = vmatprep.mubr.bf16.mxu0 0
      %794 = vmatmul.mubr.bf16.gmra.mrb[0].mxu0 %v536
      %v795 = vpop.f32.mrb[0].mxu0
      %v796 = vadd.f32 0.0, %v795
      %v797 = vpop.f32.mrb[0].mxu0
      %v798 = vpop.f32.mrb[0].mxu0
      %v799 = vadd.f32 0.0, %v798
      %v800 = vpop.f32.mrb[0].mxu0
      %801 = vmatprep.mubr.bf16.mxu0 0
      %802 = vmatmul.mubr.bf16.gmra.mrb[0].mxu0 %v539
      %v803 = vpop.f32.mrb[0].mxu0
      %v804 = vadd.f32 0.0, %v803
      %v805 = vpop.f32.mrb[0].mxu0
      %v806 = vpop.f32.mrb[0].mxu0
      %v807 = vadd.f32 0.0, %v806
      %v808 = vpop.f32.mrb[0].mxu0
      %809 = vmatprep.mubr.bf16.mxu0 0
      %810 = vmatmul.mubr.bf16.gmra.mrb[0].mxu0 %v542
      %v811 = vpop.f32.mrb[0].mxu0
      %v812 = vadd.f32 0.0, %v811
      %v813 = vpop.f32.mrb[0].mxu0
      %v814 = vpop.f32.mrb[0].mxu0
      %v815 = vadd.f32 0.0, %v814
      %v816 = vpop.f32.mrb[0].mxu0
      %817 = vmatprep.mubr.bf16.mxu0 0
      %818 = vmatmul.mubr.bf16.gmra.mrb[0].mxu0 %v545
      %v819 = vpop.f32.mrb[0].mxu0
      %v820 = vadd.f32 0.0, %v819
      %v821 = vpop.f32.mrb[0].mxu0
      %v822 = vpop.f32.mrb[0].mxu0
      %v823 = vadd.f32 0.0, %v822
      %v824 = vpop.f32.mrb[0].mxu0
      %825 = vmatprep.mubr.bf16.mxu0 0
      %826 = vmatmul.mubr.bf16.gmra.mrb[0].mxu0 %v548
      %v827 = vpop.f32.mrb[0].mxu0
      %v828 = vadd.f32 0.0, %v827
      %v829 = vpop.f32.mrb[0].mxu0
      %v830 = vpop.f32.mrb[0].mxu0
      %v831 = vadd.f32 0.0, %v830
      %v832 = vpop.f32.mrb[0].mxu0
      %833 = vmatprep.mubr.bf16.mxu0 0
      %834 = vmatmul.mubr.bf16.gmra.mrb[0].mxu0 %v551
      %v835 = vpop.f32.mrb[0].mxu0
      %v836 = vadd.f32 0.0, %v835
      %v837 = vpop.f32.mrb[0].mxu0
      %v838 = vpop.f32.mrb[0].mxu0
      %v839 = vadd.f32 0.0, %v838
      %v840 = vpop.f32.mrb[0].mxu0
      %841 = vdwg.mxu0
      %v842 = vpack.c.bf16 %v591, %v588
      %v843 = vpack.c.bf16 %v599, %v596
      %v844 = vpack.c.bf16 %v607, %v604
      %v845 = vpack.c.bf16 %v615, %v612
      %v846 = vpack.c.bf16 %v623, %v620
      %v847 = vpack.c.bf16 %v631, %v628
      %v848 = vpack.c.bf16 %v639, %v636
      %v849 = vpack.c.bf16 %v647, %v644
      %v850 = vpack.c.bf16 %v655, %v652
      %v851 = vpack.c.bf16 %v663, %v660
      %v852 = vpack.c.bf16 %v671, %v668
      %v853 = vpack.c.bf16 %v679, %v676
      %v854 = vpack.c.bf16 %v687, %v684
      %v855 = vpack.c.bf16 %v695, %v692
      %v856 = vpack.c.bf16 %v703, %v700
      %v857 = vpack.c.bf16 %v711, %v708
      %v858 = vpack.c.bf16 %v719, %v716
      %v859 = vpack.c.bf16 %v727, %v724
      %v860 = vpack.c.bf16 %v735, %v732
      %v861 = vpack.c.bf16 %v743, %v740
      %v862 = vpack.c.bf16 %v751, %v748
      %v863 = vpack.c.bf16 %v759, %v756
      %v864 = vpack.c.bf16 %v767, %v764
      %v865 = vpack.c.bf16 %v775, %v772
      %v866 = vpack.c.bf16 %v783, %v780
      %v867 = vpack.c.bf16 %v791, %v788
      %v868 = vpack.c.bf16 %v799, %v796
      %v869 = vpack.c.bf16 %v807, %v804
      %v870 = vpack.c.bf16 %v815, %v812
      %v871 = vpack.c.bf16 %v823, %v820
      %v872 = vpack.c.bf16 %v831, %v828
      %v873 = vpack.c.bf16 %v839, %v836
      %v906 = vunpack.c.l.b16 %v842
      %v907 = vunpack.c.h.b16 %v842
      %v908 = vunpack.c.l.b16 %v843
      %v909 = vunpack.c.h.b16 %v843
      %v910 = vunpack.c.l.b16 %v844
      %v911 = vunpack.c.h.b16 %v844
      %v912 = vunpack.c.l.b16 %v845
      %v913 = vunpack.c.h.b16 %v845
      %v914 = vunpack.c.l.b16 %v846
      %v915 = vunpack.c.h.b16 %v846
      %v916 = vunpack.c.l.b16 %v847
      %v917 = vunpack.c.h.b16 %v847
      %v918 = vunpack.c.l.b16 %v848
      %v919 = vunpack.c.h.b16 %v848
      %v920 = vunpack.c.l.b16 %v849
      %v921 = vunpack.c.h.b16 %v849
      %v922 = vunpack.c.l.b16 %v850
      %v923 = vunpack.c.h.b16 %v850
      %v924 = vunpack.c.l.b16 %v851
      %v925 = vunpack.c.h.b16 %v851
      %v926 = vunpack.c.l.b16 %v852
      %v927 = vunpack.c.h.b16 %v852
      %v928 = vunpack.c.l.b16 %v853
      %v929 = vunpack.c.h.b16 %v853
      %v930 = vunpack.c.l.b16 %v854
      %v931 = vunpack.c.h.b16 %v854
      %v932 = vunpack.c.l.b16 %v855
      %v933 = vunpack.c.h.b16 %v855
      %v934 = vunpack.c.l.b16 %v856
      %v935 = vunpack.c.h.b16 %v856
      %v936 = vunpack.c.l.b16 %v857
      %v937 = vunpack.c.h.b16 %v857
      %v938 = vunpack.c.l.b16 %v858
      %v939 = vunpack.c.h.b16 %v858
      %v940 = vunpack.c.l.b16 %v859
      %v941 = vunpack.c.h.b16 %v859
      %v942 = vunpack.c.l.b16 %v860
      %v943 = vunpack.c.h.b16 %v860
      %v944 = vunpack.c.l.b16 %v861
      %v945 = vunpack.c.h.b16 %v861
      %v946 = vunpack.c.l.b16 %v862
      %v947 = vunpack.c.h.b16 %v862
      %v948 = vunpack.c.l.b16 %v863
      %v949 = vunpack.c.h.b16 %v863
      %v950 = vunpack.c.l.b16 %v864
      %v951 = vunpack.c.h.b16 %v864
      %v952 = vunpack.c.l.b16 %v865
      %v953 = vunpack.c.h.b16 %v865
      %v954 = vunpack.c.l.b16 %v866
      %v955 = vunpack.c.h.b16 %v866
      %v956 = vunpack.c.l.b16 %v867
      %v957 = vunpack.c.h.b16 %v867
      %v958 = vunpack.c.l.b16 %v868
      %v959 = vunpack.c.h.b16 %v868
      %v960 = vunpack.c.l.b16 %v869
      %v961 = vunpack.c.h.b16 %v869
      %v962 = vunpack.c.l.b16 %v870
      %v963 = vunpack.c.h.b16 %v870
      %v964 = vunpack.c.l.b16 %v871
      %v965 = vunpack.c.h.b16 %v871
      %v966 = vunpack.c.l.b16 %v872
      %v967 = vunpack.c.h.b16 %v872
      %v968 = vunpack.c.l.b16 %v873
      %v969 = vunpack.c.h.b16 %v873
      %v970 = vpack.c.b16 %v906, %v906
      %v971 = vpack.c.b16 %v907, %v907
      %v972 = vpack.c.b16 %v908, %v908
      %v973 = vpack.c.b16 %v909, %v909
      %v974 = vpack.c.b16 %v910, %v910
      %v975 = vpack.c.b16 %v911, %v911
      %v976 = vpack.c.b16 %v912, %v912
      %v977 = vpack.c.b16 %v913, %v913
      %v978 = vpack.c.b16 %v914, %v914
      %v979 = vpack.c.b16 %v915, %v915
      %v980 = vpack.c.b16 %v916, %v916
      %v981 = vpack.c.b16 %v917, %v917
      %v982 = vpack.c.b16 %v918, %v918
      %v983 = vpack.c.b16 %v919, %v919
      %v984 = vpack.c.b16 %v920, %v920
      %v985 = vpack.c.b16 %v921, %v921
      %v986 = vpack.c.b16 %v922, %v922
      %v987 = vpack.c.b16 %v923, %v923
      %v988 = vpack.c.b16 %v924, %v924
      %v989 = vpack.c.b16 %v925, %v925
      %v990 = vpack.c.b16 %v926, %v926
      %v991 = vpack.c.b16 %v927, %v927
      %v992 = vpack.c.b16 %v928, %v928
      %v993 = vpack.c.b16 %v929, %v929
      %v994 = vpack.c.b16 %v930, %v930
      %v995 = vpack.c.b16 %v931, %v931
      %v996 = vpack.c.b16 %v932, %v932
      %v997 = vpack.c.b16 %v933, %v933
      %v998 = vpack.c.b16 %v934, %v934
      %v999 = vpack.c.b16 %v935, %v935
      %v1000 = vpack.c.b16 %v936, %v936
      %v1001 = vpack.c.b16 %v937, %v937
      %v1002 = vpack.c.b16 %v938, %v938
      %v1003 = vpack.c.b16 %v939, %v939
      %v1004 = vpack.c.b16 %v940, %v940
      %v1005 = vpack.c.b16 %v941, %v941
      %v1006 = vpack.c.b16 %v942, %v942
      %v1007 = vpack.c.b16 %v943, %v943
      %v1008 = vpack.c.b16 %v944, %v944
      %v1009 = vpack.c.b16 %v945, %v945
      %v1010 = vpack.c.b16 %v946, %v946
      %v1011 = vpack.c.b16 %v947, %v947
      %v1012 = vpack.c.b16 %v948, %v948
      %v1013 = vpack.c.b16 %v949, %v949
      %v1014 = vpack.c.b16 %v950, %v950
      %v1015 = vpack.c.b16 %v951, %v951
      %v1016 = vpack.c.b16 %v952, %v952
      %v1017 = vpack.c.b16 %v953, %v953
      %v1018 = vpack.c.b16 %v954, %v954
      %v1019 = vpack.c.b16 %v955, %v955
      %v1020 = vpack.c.b16 %v956, %v956
      %v1021 = vpack.c.b16 %v957, %v957
      %v1022 = vpack.c.b16 %v958, %v958
      %v1023 = vpack.c.b16 %v959, %v959
      %v1024 = vpack.c.b16 %v960, %v960
      %v1025 = vpack.c.b16 %v961, %v961
      %v1026 = vpack.c.b16 %v962, %v962
      %v1027 = vpack.c.b16 %v963, %v963
      %v1028 = vpack.c.b16 %v964, %v964
      %v1029 = vpack.c.b16 %v965, %v965
      %v1030 = vpack.c.b16 %v966, %v966
      %v1031 = vpack.c.b16 %v967, %v967
      %v1032 = vpack.c.b16 %v968, %v968
      %v1033 = vpack.c.b16 %v969, %v969
      %vm1098 = vcmask 257024
      %1099 = vst.msk [vmem:[%s207] sm:$0xf] %vm1098, %v970
      %1100 = vst.msk [vmem:[%s207 + $0x4] sm:$0xf] %vm1098, %v971
      %1101 = vst.msk [vmem:[%s207 + $0x8] sm:$0xf] %vm1098, %v972
      %1102 = vst.msk [vmem:[%s207 + $0xc] sm:$0xf] %vm1098, %v973
      %1103 = vst.msk [vmem:[%s207 + $0x10] sm:$0xf] %vm1098, %v974
      %1104 = vst.msk [vmem:[%s207 + $0x14] sm:$0xf] %vm1098, %v975
      %1105 = vst.msk [vmem:[%s207 + $0x18] sm:$0xf] %vm1098, %v976
      %1106 = vst.msk [vmem:[%s207 + $0x1c] sm:$0xf] %vm1098, %v977
      %1107 = vst.msk [vmem:[%s207 + $0x20] sm:$0xf] %vm1098, %v978
      %1108 = vst.msk [vmem:[%s207 + $0x24] sm:$0xf] %vm1098, %v979
      %1109 = vst.msk [vmem:[%s207 + $0x28] sm:$0xf] %vm1098, %v980
      %1110 = vst.msk [vmem:[%s207 + $0x2c] sm:$0xf] %vm1098, %v981
      %1111 = vst.msk [vmem:[%s207 + $0x30] sm:$0xf] %vm1098, %v982
      %1112 = vst.msk [vmem:[%s207 + $0x34] sm:$0xf] %vm1098, %v983
      %1113 = vst.msk [vmem:[%s207 + $0x38] sm:$0xf] %vm1098, %v984
      %1114 = vst.msk [vmem:[%s207 + $0x3c] sm:$0xf] %vm1098, %v985
      %1115 = vst.msk [vmem:[%s207 + $0x40] sm:$0xf] %vm1098, %v986
      %1116 = vst.msk [vmem:[%s207 + $0x44] sm:$0xf] %vm1098, %v987
      %1117 = vst.msk [vmem:[%s207 + $0x48] sm:$0xf] %vm1098, %v988
      %1118 = vst.msk [vmem:[%s207 + $0x4c] sm:$0xf] %vm1098, %v989
      %1119 = vst.msk [vmem:[%s207 + $0x50] sm:$0xf] %vm1098, %v990
      %1120 = vst.msk [vmem:[%s207 + $0x54] sm:$0xf] %vm1098, %v991
      %1121 = vst.msk [vmem:[%s207 + $0x58] sm:$0xf] %vm1098, %v992
      %1122 = vst.msk [vmem:[%s207 + $0x5c] sm:$0xf] %vm1098, %v993
      %1123 = vst.msk [vmem:[%s207 + $0x60] sm:$0xf] %vm1098, %v994
      %1124 = vst.msk [vmem:[%s207 + $0x64] sm:$0xf] %vm1098, %v995
      %1125 = vst.msk [vmem:[%s207 + $0x68] sm:$0xf] %vm1098, %v996
      %1126 = vst.msk [vmem:[%s207 + $0x6c] sm:$0xf] %vm1098, %v997
      %1127 = vst.msk [vmem:[%s207 + $0x70] sm:$0xf] %vm1098, %v998
      %1128 = vst.msk [vmem:[%s207 + $0x74] sm:$0xf] %vm1098, %v999
      %1129 = vst.msk [vmem:[%s207 + $0x78] sm:$0xf] %vm1098, %v1000
      %1130 = vst.msk [vmem:[%s207 + $0x7c] sm:$0xf] %vm1098, %v1001
      %1131 = vst.msk [vmem:[%s207 + $0x80] sm:$0xf] %vm1098, %v1002
      %1132 = vst.msk [vmem:[%s207 + $0x84] sm:$0xf] %vm1098, %v1003
      %1133 = vst.msk [vmem:[%s207 + $0x88] sm:$0xf] %vm1098, %v1004
      %1134 = vst.msk [vmem:[%s207 + $0x8c] sm:$0xf] %vm1098, %v1005
      %1135 = vst.msk [vmem:[%s207 + $0x90] sm:$0xf] %vm1098, %v1006
      %1136 = vst.msk [vmem:[%s207 + $0x94] sm:$0xf] %vm1098, %v1007
      %1137 = vst.msk [vmem:[%s207 + $0x98] sm:$0xf] %vm1098, %v1008
      %1138 = vst.msk [vmem:[%s207 + $0x9c] sm:$0xf] %vm1098, %v1009
      %1139 = vst.msk [vmem:[%s207 + $0xa0] sm:$0xf] %vm1098, %v1010
      %1140 = vst.msk [vmem:[%s207 + $0xa4] sm:$0xf] %vm1098, %v1011
      %1141 = vst.msk [vmem:[%s207 + $0xa8] sm:$0xf] %vm1098, %v1012
      %1142 = vst.msk [vmem:[%s207 + $0xac] sm:$0xf] %vm1098, %v1013
      %1143 = vst.msk [vmem:[%s207 + $0xb0] sm:$0xf] %vm1098, %v1014
      %1144 = vst.msk [vmem:[%s207 + $0xb4] sm:$0xf] %vm1098, %v1015
      %1145 = vst.msk [vmem:[%s207 + $0xb8] sm:$0xf] %vm1098, %v1016
      %1146 = vst.msk [vmem:[%s207 + $0xbc] sm:$0xf] %vm1098, %v1017
      %1147 = vst.msk [vmem:[%s207 + $0xc0] sm:$0xf] %vm1098, %v1018
      %1148 = vst.msk [vmem:[%s207 + $0xc4] sm:$0xf] %vm1098, %v1019
      %1149 = vst.msk [vmem:[%s207 + $0xc8] sm:$0xf] %vm1098, %v1020
      %1150 = vst.msk [vmem:[%s207 + $0xcc] sm:$0xf] %vm1098, %v1021
      %1151 = vst.msk [vmem:[%s207 + $0xd0] sm:$0xf] %vm1098, %v1022
      %1152 = vst.msk [vmem:[%s207 + $0xd4] sm:$0xf] %vm1098, %v1023
      %1153 = vst.msk [vmem:[%s207 + $0xd8] sm:$0xf] %vm1098, %v1024
      %1154 = vst.msk [vmem:[%s207 + $0xdc] sm:$0xf] %vm1098, %v1025
      %1155 = vst.msk [vmem:[%s207 + $0xe0] sm:$0xf] %vm1098, %v1026
      %1156 = vst.msk [vmem:[%s207 + $0xe4] sm:$0xf] %vm1098, %v1027
      %1157 = vst.msk [vmem:[%s207 + $0xe8] sm:$0xf] %vm1098, %v1028
      %1158 = vst.msk [vmem:[%s207 + $0xec] sm:$0xf] %vm1098, %v1029
      %1159 = vst.msk [vmem:[%s207 + $0xf0] sm:$0xf] %vm1098, %v1030
      %1160 = vst.msk [vmem:[%s207 + $0xf4] sm:$0xf] %vm1098, %v1031
      %1161 = vst.msk [vmem:[%s207 + $0xf8] sm:$0xf] %vm1098, %v1032
      %1162 = vst.msk [vmem:[%s207 + $0xfc] sm:$0xf] %vm1098, %v1033
      %v1163 = vld [vmem:[%s2] sm:$0xf]
      %v1164 = vld [vmem:[%s2 + $0x4] sm:$0xf]
      %v1165 = vld [vmem:[%s2 + $0x8] sm:$0xf]
      %v1166 = vld [vmem:[%s2 + $0xc] sm:$0xf]
      %v1171 = vunpack.c.l.b16 %v1163
      %v1172 = vunpack.c.l.b16 %v1164
      %v1173 = vunpack.c.l.b16 %v1165
      %v1174 = vunpack.c.l.b16 %v1166
      %v1175 = vpack.c.b16 %v1172, %v1171
      %v1176 = vpack.c.b16 %v1174, %v1173
      %1179 = vmatprep.subr.bf16.mxu0 0
      %1180 = vmatpush1.bf16.msra.mxu0 %v1175
      %1181 = vmatprep.subr.bf16.mxu0 0
      %1182 = vmatpush1.bf16.msra.mxu0 %v1176
      %1183 = vmatprep.subr.bf16.mxu0 0
      %1184 = vmatpush1.bf16.msra.mxu0 0
      %1185 = vmatprep.subr.bf16.mxu0 0
      %1186 = vmatpush1.bf16.msra.mxu0 0
      %1187 = vmatprep.subr.bf16.mxu0 0
      %1188 = vmatpush1.bf16.msra.mxu0 0
      %1189 = vmatprep.subr.bf16.mxu0 0
      %1190 = vmatpush1.bf16.msra.mxu0 0
      %1191 = vmatprep.subr.bf16.mxu0 0
      %1192 = vmatpush1.bf16.msra.mxu0 0
      %1193 = vmatprep.subr.bf16.mxu0 0
      %1194 = vmatpush1.bf16.msra.mxu0 0
      %1195 = vmatprep.subr.bf16.mxu0 0
      %1196 = vmatpush1.bf16.msra.mxu0 0
      %1197 = vmatprep.subr.bf16.mxu0 0
      %1198 = vmatpush1.bf16.msra.mxu0 0
      %1199 = vmatprep.subr.bf16.mxu0 0
      %1200 = vmatpush1.bf16.msra.mxu0 0
      %1201 = vmatprep.subr.bf16.mxu0 0
      %1202 = vmatpush1.bf16.msra.mxu0 0
      %1203 = vmatprep.subr.bf16.mxu0 0
      %1204 = vmatpush1.bf16.msra.mxu0 0
      %1205 = vmatprep.subr.bf16.mxu0 0
      %1206 = vmatpush1.bf16.msra.mxu0 0
      %1207 = vmatprep.subr.bf16.mxu0 0
      %1208 = vmatpush1.bf16.msra.mxu0 0
      %1209 = vmatprep.subr.bf16.mxu0 0
      %1210 = vmatpush1.bf16.msra.mxu0 0
      %1211 = vmatprep.mubr.bf16.mxu0 0
      %1212 = vmatmul.mubr.bf16.gmra.mrb[0].mxu0 %v458
      %v1213 = vpop.f32.mrb[0].mxu0
      %v1214 = vadd.f32 0.0, %v1213
      %v1215 = vpop.f32.mrb[0].mxu0
      %v1216 = vpop.f32.mrb[0].mxu0
      %v1217 = vadd.f32 0.0, %v1216
      %v1218 = vpop.f32.mrb[0].mxu0
      %1219 = vmatprep.mubr.bf16.mxu0 0
      %1220 = vmatmul.mubr.bf16.gmra.mrb[0].mxu0 %v461
      %v1221 = vpop.f32.mrb[0].mxu0
      %v1222 = vadd.f32 0.0, %v1221
      %v1223 = vpop.f32.mrb[0].mxu0
      %v1224 = vpop.f32.mrb[0].mxu0
      %v1225 = vadd.f32 0.0, %v1224
      %v1226 = vpop.f32.mrb[0].mxu0
      %1227 = vmatprep.mubr.bf16.mxu0 0
      %1228 = vmatmul.mubr.bf16.gmra.mrb[0].mxu0 %v464
      %v1229 = vpop.f32.mrb[0].mxu0
      %v1230 = vadd.f32 0.0, %v1229
      %v1231 = vpop.f32.mrb[0].mxu0
      %v1232 = vpop.f32.mrb[0].mxu0
      %v1233 = vadd.f32 0.0, %v1232
      %v1234 = vpop.f32.mrb[0].mxu0
      %1235 = vmatprep.mubr.bf16.mxu0 0
      %1236 = vmatmul.mubr.bf16.gmra.mrb[0].mxu0 %v467
      %v1237 = vpop.f32.mrb[0].mxu0
      %v1238 = vadd.f32 0.0, %v1237
      %v1239 = vpop.f32.mrb[0].mxu0
      %v1240 = vpop.f32.mrb[0].mxu0
      %v1241 = vadd.f32 0.0, %v1240
      %v1242 = vpop.f32.mrb[0].mxu0
      %1243 = vmatprep.mubr.bf16.mxu0 0
      %1244 = vmatmul.mubr.bf16.gmra.mrb[0].mxu0 %v470
      %v1245 = vpop.f32.mrb[0].mxu0
      %v1246 = vadd.f32 0.0, %v1245
      %v1247 = vpop.f32.mrb[0].mxu0
      %v1248 = vpop.f32.mrb[0].mxu0
      %v1249 = vadd.f32 0.0, %v1248
      %v1250 = vpop.f32.mrb[0].mxu0
      %1251 = vmatprep.mubr.bf16.mxu0 0
      %1252 = vmatmul.mubr.bf16.gmra.mrb[0].mxu0 %v473
      %v1253 = vpop.f32.mrb[0].mxu0
      %v1254 = vadd.f32 0.0, %v1253
      %v1255 = vpop.f32.mrb[0].mxu0
      %v1256 = vpop.f32.mrb[0].mxu0
      %v1257 = vadd.f32 0.0, %v1256
      %v1258 = vpop.f32.mrb[0].mxu0
      %1259 = vmatprep.mubr.bf16.mxu0 0
      %1260 = vmatmul.mubr.bf16.gmra.mrb[0].mxu0 %v476
      %v1261 = vpop.f32.mrb[0].mxu0
      %v1262 = vadd.f32 0.0, %v1261
      %v1263 = vpop.f32.mrb[0].mxu0
      %v1264 = vpop.f32.mrb[0].mxu0
      %v1265 = vadd.f32 0.0, %v1264
      %v1266 = vpop.f32.mrb[0].mxu0
      %1267 = vmatprep.mubr.bf16.mxu0 0
      %1268 = vmatmul.mubr.bf16.gmra.mrb[0].mxu0 %v479
      %v1269 = vpop.f32.mrb[0].mxu0
      %v1270 = vadd.f32 0.0, %v1269
      %v1271 = vpop.f32.mrb[0].mxu0
      %v1272 = vpop.f32.mrb[0].mxu0
      %v1273 = vadd.f32 0.0, %v1272
      %v1274 = vpop.f32.mrb[0].mxu0
      %1275 = vmatprep.mubr.bf16.mxu0 0
      %1276 = vmatmul.mubr.bf16.gmra.mrb[0].mxu0 %v482
      %v1277 = vpop.f32.mrb[0].mxu0
      %v1278 = vadd.f32 0.0, %v1277
      %v1279 = vpop.f32.mrb[0].mxu0
      %v1280 = vpop.f32.mrb[0].mxu0
      %v1281 = vadd.f32 0.0, %v1280
      %v1282 = vpop.f32.mrb[0].mxu0
      %1283 = vmatprep.mubr.bf16.mxu0 0
      %1284 = vmatmul.mubr.bf16.gmra.mrb[0].mxu0 %v485
      %v1285 = vpop.f32.mrb[0].mxu0
      %v1286 = vadd.f32 0.0, %v1285
      %v1287 = vpop.f32.mrb[0].mxu0
      %v1288 = vpop.f32.mrb[0].mxu0
      %v1289 = vadd.f32 0.0, %v1288
      %v1290 = vpop.f32.mrb[0].mxu0
      %1291 = vmatprep.mubr.bf16.mxu0 0
      %1292 = vmatmul.mubr.bf16.gmra.mrb[0].mxu0 %v488
      %v1293 = vpop.f32.mrb[0].mxu0
      %v1294 = vadd.f32 0.0, %v1293
      %v1295 = vpop.f32.mrb[0].mxu0
      %v1296 = vpop.f32.mrb[0].mxu0
      %v1297 = vadd.f32 0.0, %v1296
      %v1298 = vpop.f32.mrb[0].mxu0
      %1299 = vmatprep.mubr.bf16.mxu0 0
      %1300 = vmatmul.mubr.bf16.gmra.mrb[0].mxu0 %v491
      %v1301 = vpop.f32.mrb[0].mxu0
      %v1302 = vadd.f32 0.0, %v1301
      %v1303 = vpop.f32.mrb[0].mxu0
      %v1304 = vpop.f32.mrb[0].mxu0
      %v1305 = vadd.f32 0.0, %v1304
      %v1306 = vpop.f32.mrb[0].mxu0
      %1307 = vmatprep.mubr.bf16.mxu0 0
      %1308 = vmatmul.mubr.bf16.gmra.mrb[0].mxu0 %v494
      %v1309 = vpop.f32.mrb[0].mxu0
      %v1310 = vadd.f32 0.0, %v1309
      %v1311 = vpop.f32.mrb[0].mxu0
      %v1312 = vpop.f32.mrb[0].mxu0
      %v1313 = vadd.f32 0.0, %v1312
      %v1314 = vpop.f32.mrb[0].mxu0
      %1315 = vmatprep.mubr.bf16.mxu0 0
      %1316 = vmatmul.mubr.bf16.gmra.mrb[0].mxu0 %v497
      %v1317 = vpop.f32.mrb[0].mxu0
      %v1318 = vadd.f32 0.0, %v1317
      %v1319 = vpop.f32.mrb[0].mxu0
      %v1320 = vpop.f32.mrb[0].mxu0
      %v1321 = vadd.f32 0.0, %v1320
      %v1322 = vpop.f32.mrb[0].mxu0
      %1323 = vmatprep.mubr.bf16.mxu0 0
      %1324 = vmatmul.mubr.bf16.gmra.mrb[0].mxu0 %v500
      %v1325 = vpop.f32.mrb[0].mxu0
      %v1326 = vadd.f32 0.0, %v1325
      %v1327 = vpop.f32.mrb[0].mxu0
      %v1328 = vpop.f32.mrb[0].mxu0
      %v1329 = vadd.f32 0.0, %v1328
      %v1330 = vpop.f32.mrb[0].mxu0
      %1331 = vmatprep.mubr.bf16.mxu0 0
      %1332 = vmatmul.mubr.bf16.gmra.mrb[0].mxu0 %v503
      %v1333 = vpop.f32.mrb[0].mxu0
      %v1334 = vadd.f32 0.0, %v1333
      %v1335 = vpop.f32.mrb[0].mxu0
      %v1336 = vpop.f32.mrb[0].mxu0
      %v1337 = vadd.f32 0.0, %v1336
      %v1338 = vpop.f32.mrb[0].mxu0
      %1339 = vmatprep.mubr.bf16.mxu0 0
      %1340 = vmatmul.mubr.bf16.gmra.mrb[0].mxu0 %v506
      %v1341 = vpop.f32.mrb[0].mxu0
      %v1342 = vadd.f32 0.0, %v1341
      %v1343 = vpop.f32.mrb[0].mxu0
      %v1344 = vpop.f32.mrb[0].mxu0
      %v1345 = vadd.f32 0.0, %v1344
      %v1346 = vpop.f32.mrb[0].mxu0
      %1347 = vmatprep.mubr.bf16.mxu0 0
      %1348 = vmatmul.mubr.bf16.gmra.mrb[0].mxu0 %v509
      %v1349 = vpop.f32.mrb[0].mxu0
      %v1350 = vadd.f32 0.0, %v1349
      %v1351 = vpop.f32.mrb[0].mxu0
      %v1352 = vpop.f32.mrb[0].mxu0
      %v1353 = vadd.f32 0.0, %v1352
      %v1354 = vpop.f32.mrb[0].mxu0
      %1355 = vmatprep.mubr.bf16.mxu0 0
      %1356 = vmatmul.mubr.bf16.gmra.mrb[0].mxu0 %v512
      %v1357 = vpop.f32.mrb[0].mxu0
      %v1358 = vadd.f32 0.0, %v1357
      %v1359 = vpop.f32.mrb[0].mxu0
      %v1360 = vpop.f32.mrb[0].mxu0
      %v1361 = vadd.f32 0.0, %v1360
      %v1362 = vpop.f32.mrb[0].mxu0
      %1363 = vmatprep.mubr.bf16.mxu0 0
      %1364 = vmatmul.mubr.bf16.gmra.mrb[0].mxu0 %v515
      %v1365 = vpop.f32.mrb[0].mxu0
      %v1366 = vadd.f32 0.0, %v1365
      %v1367 = vpop.f32.mrb[0].mxu0
      %v1368 = vpop.f32.mrb[0].mxu0
      %v1369 = vadd.f32 0.0, %v1368
      %v1370 = vpop.f32.mrb[0].mxu0
      %1371 = vmatprep.mubr.bf16.mxu0 0
      %1372 = vmatmul.mubr.bf16.gmra.mrb[0].mxu0 %v518
      %v1373 = vpop.f32.mrb[0].mxu0
      %v1374 = vadd.f32 0.0, %v1373
      %v1375 = vpop.f32.mrb[0].mxu0
      %v1376 = vpop.f32.mrb[0].mxu0
      %v1377 = vadd.f32 0.0, %v1376
      %v1378 = vpop.f32.mrb[0].mxu0
      %1379 = vmatprep.mubr.bf16.mxu0 0
      %1380 = vmatmul.mubr.bf16.gmra.mrb[0].mxu0 %v521
      %v1381 = vpop.f32.mrb[0].mxu0
      %v1382 = vadd.f32 0.0, %v1381
      %v1383 = vpop.f32.mrb[0].mxu0
      %v1384 = vpop.f32.mrb[0].mxu0
      %v1385 = vadd.f32 0.0, %v1384
      %v1386 = vpop.f32.mrb[0].mxu0
      %1387 = vmatprep.mubr.bf16.mxu0 0
      %1388 = vmatmul.mubr.bf16.gmra.mrb[0].mxu0 %v524
      %v1389 = vpop.f32.mrb[0].mxu0
      %v1390 = vadd.f32 0.0, %v1389
      %v1391 = vpop.f32.mrb[0].mxu0
      %v1392 = vpop.f32.mrb[0].mxu0
      %v1393 = vadd.f32 0.0, %v1392
      %v1394 = vpop.f32.mrb[0].mxu0
      %1395 = vmatprep.mubr.bf16.mxu0 0
      %1396 = vmatmul.mubr.bf16.gmra.mrb[0].mxu0 %v527
      %v1397 = vpop.f32.mrb[0].mxu0
      %v1398 = vadd.f32 0.0, %v1397
      %v1399 = vpop.f32.mrb[0].mxu0
      %v1400 = vpop.f32.mrb[0].mxu0
      %v1401 = vadd.f32 0.0, %v1400
      %v1402 = vpop.f32.mrb[0].mxu0
      %1403 = vmatprep.mubr.bf16.mxu0 0
      %1404 = vmatmul.mubr.bf16.gmra.mrb[0].mxu0 %v530
      %v1405 = vpop.f32.mrb[0].mxu0
      %v1406 = vadd.f32 0.0, %v1405
      %v1407 = vpop.f32.mrb[0].mxu0
      %v1408 = vpop.f32.mrb[0].mxu0
      %v1409 = vadd.f32 0.0, %v1408
      %v1410 = vpop.f32.mrb[0].mxu0
      %1411 = vmatprep.mubr.bf16.mxu0 0
      %1412 = vmatmul.mubr.bf16.gmra.mrb[0].mxu0 %v533
      %v1413 = vpop.f32.mrb[0].mxu0
      %v1414 = vadd.f32 0.0, %v1413
      %v1415 = vpop.f32.mrb[0].mxu0
      %v1416 = vpop.f32.mrb[0].mxu0
      %v1417 = vadd.f32 0.0, %v1416
      %v1418 = vpop.f32.mrb[0].mxu0
      %1419 = vmatprep.mubr.bf16.mxu0 0
      %1420 = vmatmul.mubr.bf16.gmra.mrb[0].mxu0 %v536
      %v1421 = vpop.f32.mrb[0].mxu0
      %v1422 = vadd.f32 0.0, %v1421
      %v1423 = vpop.f32.mrb[0].mxu0
      %v1424 = vpop.f32.mrb[0].mxu0
      %v1425 = vadd.f32 0.0, %v1424
      %v1426 = vpop.f32.mrb[0].mxu0
      %1427 = vmatprep.mubr.bf16.mxu0 0
      %1428 = vmatmul.mubr.bf16.gmra.mrb[0].mxu0 %v539
      %v1429 = vpop.f32.mrb[0].mxu0
      %v1430 = vadd.f32 0.0, %v1429
      %v1431 = vpop.f32.mrb[0].mxu0
      %v1432 = vpop.f32.mrb[0].mxu0
      %v1433 = vadd.f32 0.0, %v1432
      %v1434 = vpop.f32.mrb[0].mxu0
      %1435 = vmatprep.mubr.bf16.mxu0 0
      %1436 = vmatmul.mubr.bf16.gmra.mrb[0].mxu0 %v542
      %v1437 = vpop.f32.mrb[0].mxu0
      %v1438 = vadd.f32 0.0, %v1437
      %v1439 = vpop.f32.mrb[0].mxu0
      %v1440 = vpop.f32.mrb[0].mxu0
      %v1441 = vadd.f32 0.0, %v1440
      %v1442 = vpop.f32.mrb[0].mxu0
      %1443 = vmatprep.mubr.bf16.mxu0 0
      %1444 = vmatmul.mubr.bf16.gmra.mrb[0].mxu0 %v545
      %v1445 = vpop.f32.mrb[0].mxu0
      %v1446 = vadd.f32 0.0, %v1445
      %v1447 = vpop.f32.mrb[0].mxu0
      %v1448 = vpop.f32.mrb[0].mxu0
      %v1449 = vadd.f32 0.0, %v1448
      %v1450 = vpop.f32.mrb[0].mxu0
      %1451 = vmatprep.mubr.bf16.mxu0 0
      %1452 = vmatmul.mubr.bf16.gmra.mrb[0].mxu0 %v548
      %v1453 = vpop.f32.mrb[0].mxu0
      %v1454 = vadd.f32 0.0, %v1453
      %v1455 = vpop.f32.mrb[0].mxu0
      %v1456 = vpop.f32.mrb[0].mxu0
      %v1457 = vadd.f32 0.0, %v1456
      %v1458 = vpop.f32.mrb[0].mxu0
      %1459 = vmatprep.mubr.bf16.mxu0 0
      %1460 = vmatmul.mubr.bf16.gmra.mrb[0].mxu0 %v551
      %v1461 = vpop.f32.mrb[0].mxu0
      %v1462 = vadd.f32 0.0, %v1461
      %v1463 = vpop.f32.mrb[0].mxu0
      %v1464 = vpop.f32.mrb[0].mxu0
      %v1465 = vadd.f32 0.0, %v1464
      %v1466 = vpop.f32.mrb[0].mxu0
      %1467 = vdwg.mxu0
      %v1468 = vpack.c.bf16 %v1217, %v1214
      %v1469 = vpack.c.bf16 %v1225, %v1222
      %v1470 = vpack.c.bf16 %v1233, %v1230
      %v1471 = vpack.c.bf16 %v1241, %v1238
      %v1472 = vpack.c.bf16 %v1249, %v1246
      %v1473 = vpack.c.bf16 %v1257, %v1254
      %v1474 = vpack.c.bf16 %v1265, %v1262
      %v1475 = vpack.c.bf16 %v1273, %v1270
      %v1476 = vpack.c.bf16 %v1281, %v1278
      %v1477 = vpack.c.bf16 %v1289, %v1286
      %v1478 = vpack.c.bf16 %v1297, %v1294
      %v1479 = vpack.c.bf16 %v1305, %v1302
      %v1480 = vpack.c.bf16 %v1313, %v1310
      %v1481 = vpack.c.bf16 %v1321, %v1318
      %v1482 = vpack.c.bf16 %v1329, %v1326
      %v1483 = vpack.c.bf16 %v1337, %v1334
      %v1484 = vpack.c.bf16 %v1345, %v1342
      %v1485 = vpack.c.bf16 %v1353, %v1350
      %v1486 = vpack.c.bf16 %v1361, %v1358
      %v1487 = vpack.c.bf16 %v1369, %v1366
      %v1488 = vpack.c.bf16 %v1377, %v1374
      %v1489 = vpack.c.bf16 %v1385, %v1382
      %v1490 = vpack.c.bf16 %v1393, %v1390
      %v1491 = vpack.c.bf16 %v1401, %v1398
      %v1492 = vpack.c.bf16 %v1409, %v1406
      %v1493 = vpack.c.bf16 %v1417, %v1414
      %v1494 = vpack.c.bf16 %v1425, %v1422
      %v1495 = vpack.c.bf16 %v1433, %v1430
      %v1496 = vpack.c.bf16 %v1441, %v1438
      %v1497 = vpack.c.bf16 %v1449, %v1446
      %v1498 = vpack.c.bf16 %v1457, %v1454
      %v1499 = vpack.c.bf16 %v1465, %v1462
      %v1532 = vunpack.c.l.b16 %v1468
      %v1533 = vunpack.c.h.b16 %v1468
      %v1534 = vunpack.c.l.b16 %v1469
      %v1535 = vunpack.c.h.b16 %v1469
      %v1536 = vunpack.c.l.b16 %v1470
      %v1537 = vunpack.c.h.b16 %v1470
      %v1538 = vunpack.c.l.b16 %v1471
      %v1539 = vunpack.c.h.b16 %v1471
      %v1540 = vunpack.c.l.b16 %v1472
      %v1541 = vunpack.c.h.b16 %v1472
      %v1542 = vunpack.c.l.b16 %v1473
      %v1543 = vunpack.c.h.b16 %v1473
      %v1544 = vunpack.c.l.b16 %v1474
      %v1545 = vunpack.c.h.b16 %v1474
      %v1546 = vunpack.c.l.b16 %v1475
      %v1547 = vunpack.c.h.b16 %v1475
      %v1548 = vunpack.c.l.b16 %v1476
      %v1549 = vunpack.c.h.b16 %v1476
      %v1550 = vunpack.c.l.b16 %v1477
      %v1551 = vunpack.c.h.b16 %v1477
      %v1552 = vunpack.c.l.b16 %v1478
      %v1553 = vunpack.c.h.b16 %v1478
      %v1554 = vunpack.c.l.b16 %v1479
      %v1555 = vunpack.c.h.b16 %v1479
      %v1556 = vunpack.c.l.b16 %v1480
      %v1557 = vunpack.c.h.b16 %v1480
      %v1558 = vunpack.c.l.b16 %v1481
      %v1559 = vunpack.c.h.b16 %v1481
      %v1560 = vunpack.c.l.b16 %v1482
      %v1561 = vunpack.c.h.b16 %v1482
      %v1562 = vunpack.c.l.b16 %v1483
      %v1563 = vunpack.c.h.b16 %v1483
      %v1564 = vunpack.c.l.b16 %v1484
      %v1565 = vunpack.c.h.b16 %v1484
      %v1566 = vunpack.c.l.b16 %v1485
      %v1567 = vunpack.c.h.b16 %v1485
      %v1568 = vunpack.c.l.b16 %v1486
      %v1569 = vunpack.c.h.b16 %v1486
      %v1570 = vunpack.c.l.b16 %v1487
      %v1571 = vunpack.c.h.b16 %v1487
      %v1572 = vunpack.c.l.b16 %v1488
      %v1573 = vunpack.c.h.b16 %v1488
      %v1574 = vunpack.c.l.b16 %v1489
      %v1575 = vunpack.c.h.b16 %v1489
      %v1576 = vunpack.c.l.b16 %v1490
      %v1577 = vunpack.c.h.b16 %v1490
      %v1578 = vunpack.c.l.b16 %v1491
      %v1579 = vunpack.c.h.b16 %v1491
      %v1580 = vunpack.c.l.b16 %v1492
      %v1581 = vunpack.c.h.b16 %v1492
      %v1582 = vunpack.c.l.b16 %v1493
      %v1583 = vunpack.c.h.b16 %v1493
      %v1584 = vunpack.c.l.b16 %v1494
      %v1585 = vunpack.c.h.b16 %v1494
      %v1586 = vunpack.c.l.b16 %v1495
      %v1587 = vunpack.c.h.b16 %v1495
      %v1588 = vunpack.c.l.b16 %v1496
      %v1589 = vunpack.c.h.b16 %v1496
      %v1590 = vunpack.c.l.b16 %v1497
      %v1591 = vunpack.c.h.b16 %v1497
      %v1592 = vunpack.c.l.b16 %v1498
      %v1593 = vunpack.c.h.b16 %v1498
      %v1594 = vunpack.c.l.b16 %v1499
      %v1595 = vunpack.c.h.b16 %v1499
      %v1596 = vpack.c.b16 %v1532, %v1532
      %v1597 = vpack.c.b16 %v1533, %v1533
      %v1598 = vpack.c.b16 %v1534, %v1534
      %v1599 = vpack.c.b16 %v1535, %v1535
      %v1600 = vpack.c.b16 %v1536, %v1536
      %v1601 = vpack.c.b16 %v1537, %v1537
      %v1602 = vpack.c.b16 %v1538, %v1538
      %v1603 = vpack.c.b16 %v1539, %v1539
      %v1604 = vpack.c.b16 %v1540, %v1540
      %v1605 = vpack.c.b16 %v1541, %v1541
      %v1606 = vpack.c.b16 %v1542, %v1542
      %v1607 = vpack.c.b16 %v1543, %v1543
      %v1608 = vpack.c.b16 %v1544, %v1544
      %v1609 = vpack.c.b16 %v1545, %v1545
      %v1610 = vpack.c.b16 %v1546, %v1546
      %v1611 = vpack.c.b16 %v1547, %v1547
      %v1612 = vpack.c.b16 %v1548, %v1548
      %v1613 = vpack.c.b16 %v1549, %v1549
      %v1614 = vpack.c.b16 %v1550, %v1550
      %v1615 = vpack.c.b16 %v1551, %v1551
      %v1616 = vpack.c.b16 %v1552, %v1552
      %v1617 = vpack.c.b16 %v1553, %v1553
      %v1618 = vpack.c.b16 %v1554, %v1554
      %v1619 = vpack.c.b16 %v1555, %v1555
      %v1620 = vpack.c.b16 %v1556, %v1556
      %v1621 = vpack.c.b16 %v1557, %v1557
      %v1622 = vpack.c.b16 %v1558, %v1558
      %v1623 = vpack.c.b16 %v1559, %v1559
      %v1624 = vpack.c.b16 %v1560, %v1560
      %v1625 = vpack.c.b16 %v1561, %v1561
      %v1626 = vpack.c.b16 %v1562, %v1562
      %v1627 = vpack.c.b16 %v1563, %v1563
      %v1628 = vpack.c.b16 %v1564, %v1564
      %v1629 = vpack.c.b16 %v1565, %v1565
      %v1630 = vpack.c.b16 %v1566, %v1566
      %v1631 = vpack.c.b16 %v1567, %v1567
      %v1632 = vpack.c.b16 %v1568, %v1568
      %v1633 = vpack.c.b16 %v1569, %v1569
      %v1634 = vpack.c.b16 %v1570, %v1570
      %v1635 = vpack.c.b16 %v1571, %v1571
      %v1636 = vpack.c.b16 %v1572, %v1572
      %v1637 = vpack.c.b16 %v1573, %v1573
      %v1638 = vpack.c.b16 %v1574, %v1574
      %v1639 = vpack.c.b16 %v1575, %v1575
      %v1640 = vpack.c.b16 %v1576, %v1576
      %v1641 = vpack.c.b16 %v1577, %v1577
      %v1642 = vpack.c.b16 %v1578, %v1578
      %v1643 = vpack.c.b16 %v1579, %v1579
      %v1644 = vpack.c.b16 %v1580, %v1580
      %v1645 = vpack.c.b16 %v1581, %v1581
      %v1646 = vpack.c.b16 %v1582, %v1582
      %v1647 = vpack.c.b16 %v1583, %v1583
      %v1648 = vpack.c.b16 %v1584, %v1584
      %v1649 = vpack.c.b16 %v1585, %v1585
      %v1650 = vpack.c.b16 %v1586, %v1586
      %v1651 = vpack.c.b16 %v1587, %v1587
      %v1652 = vpack.c.b16 %v1588, %v1588
      %v1653 = vpack.c.b16 %v1589, %v1589
      %v1654 = vpack.c.b16 %v1590, %v1590
      %v1655 = vpack.c.b16 %v1591, %v1591
      %v1656 = vpack.c.b16 %v1592, %v1592
      %v1657 = vpack.c.b16 %v1593, %v1593
      %v1658 = vpack.c.b16 %v1594, %v1594
      %v1659 = vpack.c.b16 %v1595, %v1595
      %1724 = vst.msk [vmem:[%s213] sm:$0xf] %vm1098, %v1596
      %1725 = vst.msk [vmem:[%s213 + $0x4] sm:$0xf] %vm1098, %v1597
      %1726 = vst.msk [vmem:[%s213 + $0x8] sm:$0xf] %vm1098, %v1598
      %1727 = vst.msk [vmem:[%s213 + $0xc] sm:$0xf] %vm1098, %v1599
      %1728 = vst.msk [vmem:[%s213 + $0x10] sm:$0xf] %vm1098, %v1600
      %1729 = vst.msk [vmem:[%s213 + $0x14] sm:$0xf] %vm1098, %v1601
      %1730 = vst.msk [vmem:[%s213 + $0x18] sm:$0xf] %vm1098, %v1602
      %1731 = vst.msk [vmem:[%s213 + $0x1c] sm:$0xf] %vm1098, %v1603
      %1732 = vst.msk [vmem:[%s213 + $0x20] sm:$0xf] %vm1098, %v1604
      %1733 = vst.msk [vmem:[%s213 + $0x24] sm:$0xf] %vm1098, %v1605
      %1734 = vst.msk [vmem:[%s213 + $0x28] sm:$0xf] %vm1098, %v1606
      %1735 = vst.msk [vmem:[%s213 + $0x2c] sm:$0xf] %vm1098, %v1607
      %1736 = vst.msk [vmem:[%s213 + $0x30] sm:$0xf] %vm1098, %v1608
      %1737 = vst.msk [vmem:[%s213 + $0x34] sm:$0xf] %vm1098, %v1609
      %1738 = vst.msk [vmem:[%s213 + $0x38] sm:$0xf] %vm1098, %v1610
      %1739 = vst.msk [vmem:[%s213 + $0x3c] sm:$0xf] %vm1098, %v1611
      %1740 = vst.msk [vmem:[%s213 + $0x40] sm:$0xf] %vm1098, %v1612
      %1741 = vst.msk [vmem:[%s213 + $0x44] sm:$0xf] %vm1098, %v1613
      %1742 = vst.msk [vmem:[%s213 + $0x48] sm:$0xf] %vm1098, %v1614
      %1743 = vst.msk [vmem:[%s213 + $0x4c] sm:$0xf] %vm1098, %v1615
      %1744 = vst.msk [vmem:[%s213 + $0x50] sm:$0xf] %vm1098, %v1616
      %1745 = vst.msk [vmem:[%s213 + $0x54] sm:$0xf] %vm1098, %v1617
      %1746 = vst.msk [vmem:[%s213 + $0x58] sm:$0xf] %vm1098, %v1618
      %1747 = vst.msk [vmem:[%s213 + $0x5c] sm:$0xf] %vm1098, %v1619
      %1748 = vst.msk [vmem:[%s213 + $0x60] sm:$0xf] %vm1098, %v1620
      %1749 = vst.msk [vmem:[%s213 + $0x64] sm:$0xf] %vm1098, %v1621
      %1750 = vst.msk [vmem:[%s213 + $0x68] sm:$0xf] %vm1098, %v1622
      %1751 = vst.msk [vmem:[%s213 + $0x6c] sm:$0xf] %vm1098, %v1623
      %1752 = vst.msk [vmem:[%s213 + $0x70] sm:$0xf] %vm1098, %v1624
      %1753 = vst.msk [vmem:[%s213 + $0x74] sm:$0xf] %vm1098, %v1625
      %1754 = vst.msk [vmem:[%s213 + $0x78] sm:$0xf] %vm1098, %v1626
      %1755 = vst.msk [vmem:[%s213 + $0x7c] sm:$0xf] %vm1098, %v1627
      %1756 = vst.msk [vmem:[%s213 + $0x80] sm:$0xf] %vm1098, %v1628
      %1757 = vst.msk [vmem:[%s213 + $0x84] sm:$0xf] %vm1098, %v1629
      %1758 = vst.msk [vmem:[%s213 + $0x88] sm:$0xf] %vm1098, %v1630
      %1759 = vst.msk [vmem:[%s213 + $0x8c] sm:$0xf] %vm1098, %v1631
      %1760 = vst.msk [vmem:[%s213 + $0x90] sm:$0xf] %vm1098, %v1632
      %1761 = vst.msk [vmem:[%s213 + $0x94] sm:$0xf] %vm1098, %v1633
      %1762 = vst.msk [vmem:[%s213 + $0x98] sm:$0xf] %vm1098, %v1634
      %1763 = vst.msk [vmem:[%s213 + $0x9c] sm:$0xf] %vm1098, %v1635
      %1764 = vst.msk [vmem:[%s213 + $0xa0] sm:$0xf] %vm1098, %v1636
      %1765 = vst.msk [vmem:[%s213 + $0xa4] sm:$0xf] %vm1098, %v1637
      %1766 = vst.msk [vmem:[%s213 + $0xa8] sm:$0xf] %vm1098, %v1638
      %1767 = vst.msk [vmem:[%s213 + $0xac] sm:$0xf] %vm1098, %v1639
      %1768 = vst.msk [vmem:[%s213 + $0xb0] sm:$0xf] %vm1098, %v1640
      %1769 = vst.msk [vmem:[%s213 + $0xb4] sm:$0xf] %vm1098, %v1641
      %1770 = vst.msk [vmem:[%s213 + $0xb8] sm:$0xf] %vm1098, %v1642
      %1771 = vst.msk [vmem:[%s213 + $0xbc] sm:$0xf] %vm1098, %v1643
      %1772 = vst.msk [vmem:[%s213 + $0xc0] sm:$0xf] %vm1098, %v1644
      %1773 = vst.msk [vmem:[%s213 + $0xc4] sm:$0xf] %vm1098, %v1645
      %1774 = vst.msk [vmem:[%s213 + $0xc8] sm:$0xf] %vm1098, %v1646
      %1775 = vst.msk [vmem:[%s213 + $0xcc] sm:$0xf] %vm1098, %v1647
      %1776 = vst.msk [vmem:[%s213 + $0xd0] sm:$0xf] %vm1098, %v1648
      %1777 = vst.msk [vmem:[%s213 + $0xd4] sm:$0xf] %vm1098, %v1649
      %1778 = vst.msk [vmem:[%s213 + $0xd8] sm:$0xf] %vm1098, %v1650
      %1779 = vst.msk [vmem:[%s213 + $0xdc] sm:$0xf] %vm1098, %v1651
      %1780 = vst.msk [vmem:[%s213 + $0xe0] sm:$0xf] %vm1098, %v1652
      %1781 = vst.msk [vmem:[%s213 + $0xe4] sm:$0xf] %vm1098, %v1653
      %1782 = vst.msk [vmem:[%s213 + $0xe8] sm:$0xf] %vm1098, %v1654
      %1783 = vst.msk [vmem:[%s213 + $0xec] sm:$0xf] %vm1098, %v1655
      %1784 = vst.msk [vmem:[%s213 + $0xf0] sm:$0xf] %vm1098, %v1656
      %1785 = vst.msk [vmem:[%s213 + $0xf4] sm:$0xf] %vm1098, %v1657
      %1786 = vst.msk [vmem:[%s213 + $0xf8] sm:$0xf] %vm1098, %v1658
      %1787 = vst.msk [vmem:[%s213 + $0xfc] sm:$0xf] %vm1098, %v1659
      %s1788 = smul.u32 64, %s16
      %p1789 = scmp.lt.s32.totalorder %s1788, 127
      %s1790 = scalar_select %p1789, %s1788, 127
      %s1791 = smul.addr %s1790, 4
      %s1792 = scalar_lea.vmem %s3, %s1791
      %s1793 = smul.u32 64, %s16
      %p1794 = scmp.lt.s32.totalorder %s1793, 127
      %s1795 = scalar_select %p1794, %s1793, 127
      %s1796 = smul.addr %s1795, 4
      %s1797 = scalar_lea.vmem %s4, %s1796
      // Predicated region
      $region33: #{mictranet_forward.3} parent=31 // pred_check
        %p1798 = pneg %p102
      $region34: #{mictranet_forward.3} parent=31 // pred_check_branch
        %1800 = sbr.rel (%p1798) target = $region36
      $region35: #{mictranet_forward.3} parent=31 // pred_region
        %s1801 = smul.u32 64, %s16
      $region36: #{mictranet_forward.3} parent=31 // pred_fallthru
        _
      // Predicated region
      $region37: #{mictranet_forward.3} parent=31 // pred_check
        %p1802 = pneg %p128
      $region38: #{mictranet_forward.3} parent=31 // pred_check_branch
        %1804 = sbr.rel (%p1802) target = $region40
      $region39: #{mictranet_forward.3} parent=31 // pred_region
        %s1805 = smul.u32 64, %s16
      $region40: #{mictranet_forward.3} parent=31 // pred_fallthru
        _
    $region32: #{mictranet_forward.3} parent=5 // pred_fallthru
      _
    %p1806 = scmp.le.s32.totalorder 2, %s11
    // Predicated region
    $region41: #{mictranet_forward.3} parent=5 // pred_check
      %p1807 = pneg %p1806
    $region42: #{mictranet_forward.3} parent=5 // pred_check_branch
      %1809 = sbr.rel (%p1807) target = $region44
    $region43: #{mictranet_forward.3} parent=5 // pred_region
      %s1810 = ssub.s32 %s11, 2
      // Predicated region
      $region45: #{mictranet_forward.3} parent=43 // pred_check
        %p1811 = pneg %p108
      $region46: #{mictranet_forward.3} parent=43 // pred_check_branch
        %1813 = sbr.rel (%p1811) target = $region48
      $region47: #{mictranet_forward.3} parent=43 // pred_region
        %s1814 = smul.u32 64, %s17
        %p1815 = scmp.lt.s32.totalorder %s1814, 127
        %s1816 = scalar_select %p1815, %s1814, 127
        %s1817 = smul.addr %s1816, 4
        %s1818 = scalar_lea.vmem %s3, %s1817
      $region48: #{mictranet_forward.3} parent=43 // pred_fallthru
        _
      // Predicated region
      $region49: #{mictranet_forward.3} parent=43 // pred_check
        %p1819 = pneg %p134
      $region50: #{mictranet_forward.3} parent=43 // pred_check_branch
        %1821 = sbr.rel (%p1819) target = $region52
      $region51: #{mictranet_forward.3} parent=43 // pred_region
        %s1822 = smul.u32 64, %s17
        %p1823 = scmp.lt.s32.totalorder %s1822, 127
        %s1824 = scalar_select %p1823, %s1822, 127
        %s1825 = smul.addr %s1824, 4
        %s1826 = scalar_lea.vmem %s4, %s1825
      $region52: #{mictranet_forward.3} parent=43 // pred_fallthru
        _
    $region44: #{mictranet_forward.3} parent=5 // pred_fallthru
      _
  $region6: #{mictranet_forward.3} parent=0 // loop_footer
    %s15 = sadd.s32 1, %s11
  $region7: #{mictranet_forward.3} parent=0 // loop_footer_branch
    %10 = sbr.rel target = $region3
  $region8: #{mictranet_forward.3} parent=0 // loop_exit
    _

// kernel: mictranet_forward.4
$region0: #{mictranet_forward.4}
  #allocation0 [shape = 'u32[]', space=smem, size = 0x4, offset = 0x4, fixed_abs, tag = 'smem constant byte address 0x4 - core index']
  #allocation1 [shape = 'u32[144,128]{1,0:T(1,128)}', space=vmem, size = 0x12000, scoped, tag = 'internal scratch']
  #allocation2 [shape = 'f32[2,32]{1,0:T(2,128)}', space=vmem, size = 0x400, scoped, tag = 'scratch operand']
  #allocation3 [shape = 'f32[2,32]{1,0:T(2,128)}', space=vmem, size = 0x400, scoped, tag = 'scratch operand']
  %s0 = inlined_call_operand.vmem [shape: bf16[4,2,128,32], index: 0, kind: input, shape index: {}]
  %s1 = inlined_call_operand.vmem [shape: bf16[4,2,128,32], index: 1, kind: input, shape index: {}]
  %s2 = inlined_call_operand.vmem [shape: f32[4,2,128], index: 2, kind: input, shape index: {}]
  %s3 = inlined_call_operand.vmem [shape: f32[2,32], index: 3, kind: input, shape index: {}]
  %s4 = inlined_call_operand.vmem [shape: f32[2,32], index: 4, kind: input, shape index: {}]
  %s5 = inlined_call_operand.vmem [shape: f32[32,32], index: 5, kind: input, shape index: {}]
  %s6 = inlined_call_operand.vmem [shape: f32[1,32], index: 6, kind: input, shape index: {}]
  %s7 = inlined_call_operand.vmem [shape: f32[32,128], index: 7, kind: input, shape index: {}]
  %s8 = inlined_call_operand.vmem [shape: f32[32,128], index: 8, kind: input, shape index: {}]
  %s9 = inlined_call_operand.vmem [shape: f32[1,128], index: 9, kind: input, shape index: {}]
  %s10 = inlined_call_operand.vmem [shape: f32[4,2,32], index: 10, kind: output, shape index: {0}]
  %s11 = inlined_call_operand.hbm [shape: f32[2,32], index: 11, kind: output, shape index: {1}]
  %s12 = inlined_call_operand.hbm [shape: f32[2,32], index: 12, kind: output, shape index: {2}]
  %13 = xla_tuple %s10, %s11, %s12
  %s14 = sld [smem:[#allocation0]]
  $region74: #{mictranet_forward.4} parent=0
    _
  %s16 = ssub.s32 1, %s14
  %s17 = scalar_select 0, %s16, %s14
  $region1: #{mictranet_forward.4} parent=0
    #allocation4 [shape = 'u8[1024]{0}', space=vmem, size = 0x400, scoped, tag = 'output window, operand 1, single buffered']
    #allocation5 [shape = 's32[1]{0}', space=sflag, size = 0x4, scoped, tag = 'scoped memory for mictranet_forward.4']
    #allocation6 [shape = 'u8[1024]{0}', space=vmem, size = 0x400, scoped, tag = 'output window, operand 2, single buffered']
    #allocation7 [shape = 's32[1]{0}', space=sflag, size = 0x4, scoped, tag = 'scoped memory for mictranet_forward.4']
    %18 = vsyncpa [#allocation5], 0
    %19 = vsyncpa [#allocation7], 0
    // Predicated region
    $region2: #{mictranet_forward.4} parent=1 // pred_check
      _
    $region3: #{mictranet_forward.4} parent=1 // pred_check_branch
      %21 = sbr.rel (0) target = $region5
    $region4: #{mictranet_forward.4} parent=1 // pred_region
      _
    $region5: #{mictranet_forward.4} parent=1 // pred_fallthru
      _
    // Predicated region
    $region6: #{mictranet_forward.4} parent=1 // pred_check
      _
    $region7: #{mictranet_forward.4} parent=1 // pred_check_branch
      %23 = sbr.rel (0) target = $region9
    $region8: #{mictranet_forward.4} parent=1 // pred_region
      _
    $region9: #{mictranet_forward.4} parent=1 // pred_fallthru
      _
    // Predicated region
    $region10: #{mictranet_forward.4} parent=1 // pred_check
      _
    $region11: #{mictranet_forward.4} parent=1 // pred_check_branch
      %25 = sbr.rel (0) target = $region13
    $region12: #{mictranet_forward.4} parent=1 // pred_region
      _
    $region13: #{mictranet_forward.4} parent=1 // pred_fallthru
      _
    // Predicated region
    $region14: #{mictranet_forward.4} parent=1 // pred_check
      _
    $region15: #{mictranet_forward.4} parent=1 // pred_check_branch
      %27 = sbr.rel (0) target = $region17
    $region16: #{mictranet_forward.4} parent=1 // pred_region
      _
    $region17: #{mictranet_forward.4} parent=1 // pred_fallthru
      _
    // Predicated region
    $region18: #{mictranet_forward.4} parent=1 // pred_check
      _
    $region19: #{mictranet_forward.4} parent=1 // pred_check_branch
      %29 = sbr.rel (0) target = $region21
    $region20: #{mictranet_forward.4} parent=1 // pred_region
      _
    $region21: #{mictranet_forward.4} parent=1 // pred_fallthru
      _
    // Predicated region
    $region22: #{mictranet_forward.4} parent=1 // pred_check
      _
    $region23: #{mictranet_forward.4} parent=1 // pred_check_branch
      %31 = sbr.rel (0) target = $region25
    $region24: #{mictranet_forward.4} parent=1 // pred_region
      _
    $region25: #{mictranet_forward.4} parent=1 // pred_fallthru
      _
    // Predicated region
    $region26: #{mictranet_forward.4} parent=1 // pred_check
      _
    $region27: #{mictranet_forward.4} parent=1 // pred_check_branch
      %33 = sbr.rel (0) target = $region29
    $region28: #{mictranet_forward.4} parent=1 // pred_region
      _
    $region29: #{mictranet_forward.4} parent=1 // pred_fallthru
      _
    // Predicated region
    $region30: #{mictranet_forward.4} parent=1 // pred_check
      _
    $region31: #{mictranet_forward.4} parent=1 // pred_check_branch
      %35 = sbr.rel (0) target = $region33
    $region32: #{mictranet_forward.4} parent=1 // pred_region
      _
    $region33: #{mictranet_forward.4} parent=1 // pred_fallthru
      _
    // Predicated region
    $region34: #{mictranet_forward.4} parent=1 // pred_check
      _
    $region35: #{mictranet_forward.4} parent=1 // pred_check_branch
      %37 = sbr.rel (0) target = $region37
    $region36: #{mictranet_forward.4} parent=1 // pred_region
      _
    $region37: #{mictranet_forward.4} parent=1 // pred_fallthru
      _
    // Predicated region
    $region38: #{mictranet_forward.4} parent=1 // pred_check
      _
    $region39: #{mictranet_forward.4} parent=1 // pred_check_branch
      %39 = sbr.rel (0) target = $region41
    $region40: #{mictranet_forward.4} parent=1 // pred_region
      _
    $region41: #{mictranet_forward.4} parent=1 // pred_fallthru
      _
    %p40 = scmp.eq.s32.totalorder 0, 0
    // Predicated region
    $region42: #{mictranet_forward.4} parent=1 // pred_check
      %p41 = pneg %p40
    $region43: #{mictranet_forward.4} parent=1 // pred_check_branch
      %43 = sbr.rel (%p41) target = $region45
    $region44: #{mictranet_forward.4} parent=1 // pred_region
      %v44 = vld [vmem:[%s3] sm:$0x3]
      %vm45 = vcmask 254976
      %46 = vst.msk [vmem:[#allocation2] sm:$0x3] %vm45, %v44
      %v47 = vld [vmem:[%s4] sm:$0x3]
      %48 = vst.msk [vmem:[#allocation3] sm:$0x3] %vm45, %v47
    $region45: #{mictranet_forward.4} parent=1 // pred_fallthru
      _
    %v49 = vld [vmem:[%s5] sm:$0xff]
    %v50 = vld [vmem:[%s5 + $0x8] sm:$0xff]
    %v51 = vld [vmem:[%s5 + $0x10] sm:$0xff]
    %v52 = vld [vmem:[%s5 + $0x18] sm:$0xff]
    %v53 = vld [vmem:[%s6] sm:$0x1]
    %v54 = vld [vmem:[%s7] sm:$0xff]
    %v55 = vld [vmem:[%s7 + $0x8] sm:$0xff]
    %v56 = vld [vmem:[%s7 + $0x10] sm:$0xff]
    %v57 = vld [vmem:[%s7 + $0x18] sm:$0xff]
    %v58 = vld [vmem:[%s8] sm:$0xff]
    %v59 = vld [vmem:[%s8 + $0x8] sm:$0xff]
    %v60 = vld [vmem:[%s8 + $0x10] sm:$0xff]
    %v61 = vld [vmem:[%s8 + $0x18] sm:$0xff]
    %v62 = vld [vmem:[%s9] sm:$0x1]
    %v63 = vlaneseq
    %v64 = vand.u32 %v63, 127
    %vm65 = vcmp.lt.s32.totalorder %v64, 16
    %v66 = vld [vmem:[#allocation2] sm:$0x3]
    %v67 = vld [vmem:[#allocation3] sm:$0x3]
    %v68 = vld [vmem:[%s0] sm:$0xf]
    %v69 = vld [vmem:[%s0 + $0x4] sm:$0xf]
    %v70 = vld [vmem:[%s0 + $0x8] sm:$0xf]
    %v71 = vld [vmem:[%s0 + $0xc] sm:$0xf]
    %v72 = vld [vmem:[%s0 + $0x10] sm:$0xf]
    %v73 = vld [vmem:[%s0 + $0x14] sm:$0xf]
    %v74 = vld [vmem:[%s0 + $0x18] sm:$0xf]
    %v75 = vld [vmem:[%s0 + $0x1c] sm:$0xf]
    %v76 = vld [vmem:[%s0 + $0x20] sm:$0xf]
    %v77 = vld [vmem:[%s0 + $0x24] sm:$0xf]
    %v78 = vld [vmem:[%s0 + $0x28] sm:$0xf]
    %v79 = vld [vmem:[%s0 + $0x2c] sm:$0xf]
    %v80 = vld [vmem:[%s0 + $0x30] sm:$0xf]
    %v81 = vld [vmem:[%s0 + $0x34] sm:$0xf]
    %v82 = vld [vmem:[%s0 + $0x38] sm:$0xf]
    %v83 = vld [vmem:[%s0 + $0x3c] sm:$0xf]
    %v84 = vld [vmem:[%s0 + $0x40] sm:$0xf]
    %v85 = vld [vmem:[%s0 + $0x44] sm:$0xf]
    %v86 = vld [vmem:[%s0 + $0x48] sm:$0xf]
    %v87 = vld [vmem:[%s0 + $0x4c] sm:$0xf]
    %v88 = vld [vmem:[%s0 + $0x50] sm:$0xf]
    %v89 = vld [vmem:[%s0 + $0x54] sm:$0xf]
    %v90 = vld [vmem:[%s0 + $0x58] sm:$0xf]
    %v91 = vld [vmem:[%s0 + $0x5c] sm:$0xf]
    %v92 = vld [vmem:[%s0 + $0x60] sm:$0xf]
    %v93 = vld [vmem:[%s0 + $0x64] sm:$0xf]
    %v94 = vld [vmem:[%s0 + $0x68] sm:$0xf]
    %v95 = vld [vmem:[%s0 + $0x6c] sm:$0xf]
    %v96 = vld [vmem:[%s0 + $0x70] sm:$0xf]
    %v97 = vld [vmem:[%s0 + $0x74] sm:$0xf]
    %v98 = vld [vmem:[%s0 + $0x78] sm:$0xf]
    %v99 = vld [vmem:[%s0 + $0x7c] sm:$0xf]
    %v100 = vunpack.c.l.bf16 %v68
    %v101 = vunpack.c.l.bf16 %v69
    %v102 = vunpack.c.l.bf16 %v70
    %v103 = vunpack.c.l.bf16 %v71
    %v104 = vunpack.c.l.bf16 %v72
    %v105 = vunpack.c.l.bf16 %v73
    %v106 = vunpack.c.l.bf16 %v74
    %v107 = vunpack.c.l.bf16 %v75
    %v108 = vunpack.c.l.bf16 %v76
    %v109 = vunpack.c.l.bf16 %v77
    %v110 = vunpack.c.l.bf16 %v78
    %v111 = vunpack.c.l.bf16 %v79
    %v112 = vunpack.c.l.bf16 %v80
    %v113 = vunpack.c.l.bf16 %v81
    %v114 = vunpack.c.l.bf16 %v82
    %v115 = vunpack.c.l.bf16 %v83
    %v116 = vunpack.c.l.bf16 %v84
    %v117 = vunpack.c.l.bf16 %v85
    %v118 = vunpack.c.l.bf16 %v86
    %v119 = vunpack.c.l.bf16 %v87
    %v120 = vunpack.c.l.bf16 %v88
    %v121 = vunpack.c.l.bf16 %v89
    %v122 = vunpack.c.l.bf16 %v90
    %v123 = vunpack.c.l.bf16 %v91
    %v124 = vunpack.c.l.bf16 %v92
    %v125 = vunpack.c.l.bf16 %v93
    %v126 = vunpack.c.l.bf16 %v94
    %v127 = vunpack.c.l.bf16 %v95
    %v128 = vunpack.c.l.bf16 %v96
    %v129 = vunpack.c.l.bf16 %v97
    %v130 = vunpack.c.l.bf16 %v98
    %v131 = vunpack.c.l.bf16 %v99
    %v132 = vld [vmem:[%s1] sm:$0xf]
    %v133 = vld [vmem:[%s1 + $0x4] sm:$0xf]
    %v134 = vld [vmem:[%s1 + $0x8] sm:$0xf]
    %v135 = vld [vmem:[%s1 + $0xc] sm:$0xf]
    %v136 = vld [vmem:[%s1 + $0x10] sm:$0xf]
    %v137 = vld [vmem:[%s1 + $0x14] sm:$0xf]
    %v138 = vld [vmem:[%s1 + $0x18] sm:$0xf]
    %v139 = vld [vmem:[%s1 + $0x1c] sm:$0xf]
    %v140 = vld [vmem:[%s1 + $0x20] sm:$0xf]
    %v141 = vld [vmem:[%s1 + $0x24] sm:$0xf]
    %v142 = vld [vmem:[%s1 + $0x28] sm:$0xf]
    %v143 = vld [vmem:[%s1 + $0x2c] sm:$0xf]
    %v144 = vld [vmem:[%s1 + $0x30] sm:$0xf]
    %v145 = vld [vmem:[%s1 + $0x34] sm:$0xf]
    %v146 = vld [vmem:[%s1 + $0x38] sm:$0xf]
    %v147 = vld [vmem:[%s1 + $0x3c] sm:$0xf]
    %v148 = vld [vmem:[%s1 + $0x40] sm:$0xf]
    %v149 = vld [vmem:[%s1 + $0x44] sm:$0xf]
    %v150 = vld [vmem:[%s1 + $0x48] sm:$0xf]
    %v151 = vld [vmem:[%s1 + $0x4c] sm:$0xf]
    %v152 = vld [vmem:[%s1 + $0x50] sm:$0xf]
    %v153 = vld [vmem:[%s1 + $0x54] sm:$0xf]
    %v154 = vld [vmem:[%s1 + $0x58] sm:$0xf]
    %v155 = vld [vmem:[%s1 + $0x5c] sm:$0xf]
    %v156 = vld [vmem:[%s1 + $0x60] sm:$0xf]
    %v157 = vld [vmem:[%s1 + $0x64] sm:$0xf]
    %v158 = vld [vmem:[%s1 + $0x68] sm:$0xf]
    %v159 = vld [vmem:[%s1 + $0x6c] sm:$0xf]
    %v160 = vld [vmem:[%s1 + $0x70] sm:$0xf]
    %v161 = vld [vmem:[%s1 + $0x74] sm:$0xf]
    %v162 = vld [vmem:[%s1 + $0x78] sm:$0xf]
    %v163 = vld [vmem:[%s1 + $0x7c] sm:$0xf]
    %v164 = vunpack.c.l.bf16 %v132
    %v165 = vunpack.c.l.bf16 %v133
    %v166 = vunpack.c.l.bf16 %v134
    %v167 = vunpack.c.l.bf16 %v135
    %v168 = vunpack.c.l.bf16 %v136
    %v169 = vunpack.c.l.bf16 %v137
    %v170 = vunpack.c.l.bf16 %v138
    %v171 = vunpack.c.l.bf16 %v139
    %v172 = vunpack.c.l.bf16 %v140
    %v173 = vunpack.c.l.bf16 %v141
    %v174 = vunpack.c.l.bf16 %v142
    %v175 = vunpack.c.l.bf16 %v143
    %v176 = vunpack.c.l.bf16 %v144
    %v177 = vunpack.c.l.bf16 %v145
    %v178 = vunpack.c.l.bf16 %v146
    %v179 = vunpack.c.l.bf16 %v147
    %v180 = vunpack.c.l.bf16 %v148
    %v181 = vunpack.c.l.bf16 %v149
    %v182 = vunpack.c.l.bf16 %v150
    %v183 = vunpack.c.l.bf16 %v151
    %v184 = vunpack.c.l.bf16 %v152
    %v185 = vunpack.c.l.bf16 %v153
    %v186 = vunpack.c.l.bf16 %v154
    %v187 = vunpack.c.l.bf16 %v155
    %v188 = vunpack.c.l.bf16 %v156
    %v189 = vunpack.c.l.bf16 %v157
    %v190 = vunpack.c.l.bf16 %v158
    %v191 = vunpack.c.l.bf16 %v159
    %v192 = vunpack.c.l.bf16 %v160
    %v193 = vunpack.c.l.bf16 %v161
    %v194 = vunpack.c.l.bf16 %v162
    %v195 = vunpack.c.l.bf16 %v163
    %v196 = vld [vmem:[%s2] sm:$0x3]
    %vm197 = vcmask 261120
    %v199 = vsel %vm197, %v66, 0
    %201 = vmatprep.subr.mxu0 0.0
    %202 = vmatpush1.msra.mxu0 %v49
    %203 = vmatprep.subr.mxu0 0.0
    %204 = vmatpush1.msra.mxu0 %v50
    %205 = vmatprep.subr.mxu0 0.0
    %206 = vmatpush1.msra.mxu0 %v51
    %207 = vmatprep.subr.mxu0 0.0
    %208 = vmatpush1.msra.mxu0 %v52
    %209 = vmatprep.subr.mxu0 0.0
    %210 = vmatpush1.msra.mxu0 0.0
    %211 = vmatprep.subr.mxu0 0.0
    %212 = vmatpush1.msra.mxu0 0.0
    %213 = vmatprep.subr.mxu0 0.0
    %214 = vmatpush1.msra.mxu0 0.0
    %215 = vmatprep.subr.mxu0 0.0
    %216 = vmatpush1.msra.mxu0 0.0
    %217 = vmatprep.subr.mxu0 0.0
    %218 = vmatpush1.msra.mxu0 0.0
    %219 = vmatprep.subr.mxu0 0.0
    %220 = vmatpush1.msra.mxu0 0.0
    %221 = vmatprep.subr.mxu0 0.0
    %222 = vmatpush1.msra.mxu0 0.0
    %223 = vmatprep.subr.mxu0 0.0
    %224 = vmatpush1.msra.mxu0 0.0
    %225 = vmatprep.subr.mxu0 0.0
    %226 = vmatpush1.msra.mxu0 0.0
    %227 = vmatprep.subr.mxu0 0.0
    %228 = vmatpush1.msra.mxu0 0.0
    %229 = vmatprep.subr.mxu0 0.0
    %230 = vmatpush1.msra.mxu0 0.0
    %231 = vmatprep.subr.mxu0 0.0
    %232 = vmatpush1.msra.mxu0 0.0
    %233 = vmatprep.subr.mxu0 0.0
    %234 = vmatpush1.msra.mxu0 0.0
    %235 = vmatprep.subr.mxu0 0.0
    %236 = vmatpush1.msra.mxu0 0.0
    %237 = vmatprep.subr.mxu0 0.0
    %238 = vmatpush1.msra.mxu0 0.0
    %239 = vmatprep.subr.mxu0 0.0
    %240 = vmatpush1.msra.mxu0 0.0
    %241 = vmatprep.subr.mxu0 0.0
    %242 = vmatpush1.msra.mxu0 0.0
    %243 = vmatprep.subr.mxu0 0.0
    %244 = vmatpush1.msra.mxu0 0.0
    %245 = vmatprep.subr.mxu0 0.0
    %246 = vmatpush1.msra.mxu0 0.0
    %247 = vmatprep.subr.mxu0 0.0
    %248 = vmatpush1.msra.mxu0 0.0
    %249 = vmatprep.subr.mxu0 0.0
    %250 = vmatpush1.msra.mxu0 0.0
    %251 = vmatprep.subr.mxu0 0.0
    %252 = vmatpush1.msra.mxu0 0.0
    %253 = vmatprep.subr.mxu0 0.0
    %254 = vmatpush1.msra.mxu0 0.0
    %255 = vmatprep.subr.mxu0 0.0
    %256 = vmatpush1.msra.mxu0 0.0
    %257 = vmatprep.subr.mxu0 0.0
    %258 = vmatpush1.msra.mxu0 0.0
    %259 = vmatprep.subr.mxu0 0.0
    %260 = vmatpush1.msra.mxu0 0.0
    %261 = vmatprep.subr.mxu0 0.0
    %262 = vmatpush1.msra.mxu0 0.0
    %263 = vmatprep.subr.mxu0 0.0
    %264 = vmatpush1.msra.mxu0 0.0
    %265 = vmatprep.mubr.f32.mxu0 0.0
    %266 = vmatmul.mubr.f32.gmra.mrb[0].mxu0 %v199
    %v267 = vpop.f32.mrb[0].mxu0
    %v268 = vadd.f32 0.0, %v267
    %v269 = vpop.f32.mrb[0].mxu0
    %270 = vdwg.mxu0
    %v273 = vunpack.c.l.s4 1966171168
    %v274 = vunpack.c.0.s8 %v273
    %v275 = vlaneseq
    %v276 = vshrl.u32 %v275, 7
    %v277 = vsub.s32 %v274, %v276
    %v278 = vrot.slane %v268, %v277
    %v279 = vcombine.high %v278, %v278
    %v281 = vunpack.c.l.s4 1966171168
    %v282 = vunpack.c.0.s8 %v281
    %v283 = vlaneseq
    %v284 = vshrl.u32 %v283, 7
    %v285 = vsub.s32 %v282, %v284
    %v286 = vrot.slane %v278, %v285
    %v288 = vunpack.c.l.s4 1966171168
    %v289 = vunpack.c.0.s8 %v288
    %v290 = vlaneseq
    %v291 = vshrl.u32 %v290, 7
    %v292 = vsub.s32 %v289, %v291
    %v293 = vrot.slane %v279, %v292
    %v294 = vlaneseq
    %v295 = vshrl.u32 %v294, 7
    %v296 = vsub.s32 0, %v295
    %v297 = vrot.slane %v286, %v296
    %v298 = vlaneseq
    %v299 = vshrl.u32 %v298, 7
    %v300 = vsub.s32 0, %v299
    %v301 = vrot.slane %v293, %v300
    %v304 = vadd.f32 %v297, %v100
    %v305 = vadd.f32 %v297, %v101
    %v306 = vadd.f32 %v297, %v102
    %v307 = vadd.f32 %v297, %v103
    %v308 = vadd.f32 %v297, %v104
    %v309 = vadd.f32 %v297, %v105
    %v310 = vadd.f32 %v297, %v106
    %v311 = vadd.f32 %v297, %v107
    %v312 = vadd.f32 %v297, %v108
    %v313 = vadd.f32 %v297, %v109
    %v314 = vadd.f32 %v297, %v110
    %v315 = vadd.f32 %v297, %v111
    %v316 = vadd.f32 %v297, %v112
    %v317 = vadd.f32 %v297, %v113
    %v318 = vadd.f32 %v297, %v114
    %v319 = vadd.f32 %v297, %v115
    %v320 = vadd.f32 %v301, %v116
    %v321 = vadd.f32 %v301, %v117
    %v322 = vadd.f32 %v301, %v118
    %v323 = vadd.f32 %v301, %v119
    %v324 = vadd.f32 %v301, %v120
    %v325 = vadd.f32 %v301, %v121
    %v326 = vadd.f32 %v301, %v122
    %v327 = vadd.f32 %v301, %v123
    %v328 = vadd.f32 %v301, %v124
    %v329 = vadd.f32 %v301, %v125
    %v330 = vadd.f32 %v301, %v126
    %v331 = vadd.f32 %v301, %v127
    %v332 = vadd.f32 %v301, %v128
    %v333 = vadd.f32 %v301, %v129
    %v334 = vadd.f32 %v301, %v130
    %v335 = vadd.f32 %v301, %v131
    %v336 = vtanh.pop %v304
    %v337 = vtanh.pop %v305
    %v338 = vtanh.pop %v306
    %v339 = vtanh.pop %v307
    %v340 = vtanh.pop %v308
    %v341 = vtanh.pop %v309
    %v342 = vtanh.pop %v310
    %v343 = vtanh.pop %v311
    %v344 = vtanh.pop %v312
    %v345 = vtanh.pop %v313
    %v346 = vtanh.pop %v314
    %v347 = vtanh.pop %v315
    %v348 = vtanh.pop %v316
    %v349 = vtanh.pop %v317
    %v350 = vtanh.pop %v318
    %v351 = vtanh.pop %v319
    %v352 = vtanh.pop %v320
    %v353 = vtanh.pop %v321
    %v354 = vtanh.pop %v322
    %v355 = vtanh.pop %v323
    %v356 = vtanh.pop %v324
    %v357 = vtanh.pop %v325
    %v358 = vtanh.pop %v326
    %v359 = vtanh.pop %v327
    %v360 = vtanh.pop %v328
    %v361 = vtanh.pop %v329
    %v362 = vtanh.pop %v330
    %v363 = vtanh.pop %v331
    %v364 = vtanh.pop %v332
    %v365 = vtanh.pop %v333
    %v366 = vtanh.pop %v334
    %v367 = vtanh.pop %v335
    %v369 = vlaneseq
    %v370 = vshrl.u32 %v369, 7
    %v371 = vsub.s32 0, %v370
    %v372 = vrot.slane %v53, %v371
    %v374 = vmul.f32 %v336, %v372
    %v375 = vmul.f32 %v337, %v372
    %v376 = vmul.f32 %v338, %v372
    %v377 = vmul.f32 %v339, %v372
    %v378 = vmul.f32 %v340, %v372
    %v379 = vmul.f32 %v341, %v372
    %v380 = vmul.f32 %v342, %v372
    %v381 = vmul.f32 %v343, %v372
    %v382 = vmul.f32 %v344, %v372
    %v383 = vmul.f32 %v345, %v372
    %v384 = vmul.f32 %v346, %v372
    %v385 = vmul.f32 %v347, %v372
    %v386 = vmul.f32 %v348, %v372
    %v387 = vmul.f32 %v349, %v372
    %v388 = vmul.f32 %v350, %v372
    %v389 = vmul.f32 %v351, %v372
    %v390 = vmul.f32 %v352, %v372
    %v391 = vmul.f32 %v353, %v372
    %v392 = vmul.f32 %v354, %v372
    %v393 = vmul.f32 %v355, %v372
    %v394 = vmul.f32 %v356, %v372
    %v395 = vmul.f32 %v357, %v372
    %v396 = vmul.f32 %v358, %v372
    %v397 = vmul.f32 %v359, %v372
    %v398 = vmul.f32 %v360, %v372
    %v399 = vmul.f32 %v361, %v372
    %v400 = vmul.f32 %v362, %v372
    %v401 = vmul.f32 %v363, %v372
    %v402 = vmul.f32 %v364, %v372
    %v403 = vmul.f32 %v365, %v372
    %v404 = vmul.f32 %v366, %v372
    %v405 = vmul.f32 %v367, %v372
    %v406 = vsel %vm197, %v374, 0.0
    %407 = vadd.xlane.f32.xlu0 %v406
    %v408 = vpop.xlane.xlu0 %407
    %v409 = vsel %vm197, %v375, 0.0
    %410 = vadd.xlane.f32.xlu0 %v409
    %v411 = vpop.xlane.xlu0 %410
    %v412 = vsel %vm197, %v376, 0.0
    %413 = vadd.xlane.f32.xlu0 %v412
    %v414 = vpop.xlane.xlu0 %413
    %v415 = vsel %vm197, %v377, 0.0
    %416 = vadd.xlane.f32.xlu0 %v415
    %v417 = vpop.xlane.xlu0 %416
    %v418 = vsel %vm197, %v378, 0.0
    %419 = vadd.xlane.f32.xlu0 %v418
    %v420 = vpop.xlane.xlu0 %419
    %v421 = vsel %vm197, %v379, 0.0
    %422 = vadd.xlane.f32.xlu0 %v421
    %v423 = vpop.xlane.xlu0 %422
    %v424 = vsel %vm197, %v380, 0.0
    %425 = vadd.xlane.f32.xlu0 %v424
    %v426 = vpop.xlane.xlu0 %425
    %v427 = vsel %vm197, %v381, 0.0
    %428 = vadd.xlane.f32.xlu0 %v427
    %v429 = vpop.xlane.xlu0 %428
    %v430 = vsel %vm197, %v382, 0.0
    %431 = vadd.xlane.f32.xlu0 %v430
    %v432 = vpop.xlane.xlu0 %431
    %v433 = vsel %vm197, %v383, 0.0
    %434 = vadd.xlane.f32.xlu0 %v433
    %v435 = vpop.xlane.xlu0 %434
    %v436 = vsel %vm197, %v384, 0.0
    %437 = vadd.xlane.f32.xlu0 %v436
    %v438 = vpop.xlane.xlu0 %437
    %v439 = vsel %vm197, %v385, 0.0
    %440 = vadd.xlane.f32.xlu0 %v439
    %v441 = vpop.xlane.xlu0 %440
    %v442 = vsel %vm197, %v386, 0.0
    %443 = vadd.xlane.f32.xlu0 %v442
    %v444 = vpop.xlane.xlu0 %443
    %v445 = vsel %vm197, %v387, 0.0
    %446 = vadd.xlane.f32.xlu0 %v445
    %v447 = vpop.xlane.xlu0 %446
    %v448 = vsel %vm197, %v388, 0.0
    %449 = vadd.xlane.f32.xlu0 %v448
    %v450 = vpop.xlane.xlu0 %449
    %v451 = vsel %vm197, %v389, 0.0
    %452 = vadd.xlane.f32.xlu0 %v451
    %v453 = vpop.xlane.xlu0 %452
    %v454 = vsel %vm197, %v390, 0.0
    %455 = vadd.xlane.f32.xlu0 %v454
    %v456 = vpop.xlane.xlu0 %455
    %v457 = vsel %vm197, %v391, 0.0
    %458 = vadd.xlane.f32.xlu0 %v457
    %v459 = vpop.xlane.xlu0 %458
    %v460 = vsel %vm197, %v392, 0.0
    %461 = vadd.xlane.f32.xlu0 %v460
    %v462 = vpop.xlane.xlu0 %461
    %v463 = vsel %vm197, %v393, 0.0
    %464 = vadd.xlane.f32.xlu0 %v463
    %v465 = vpop.xlane.xlu0 %464
    %v466 = vsel %vm197, %v394, 0.0
    %467 = vadd.xlane.f32.xlu0 %v466
    %v468 = vpop.xlane.xlu0 %467
    %v469 = vsel %vm197, %v395, 0.0
    %470 = vadd.xlane.f32.xlu0 %v469
    %v471 = vpop.xlane.xlu0 %470
    %v472 = vsel %vm197, %v396, 0.0
    %473 = vadd.xlane.f32.xlu0 %v472
    %v474 = vpop.xlane.xlu0 %473
    %v475 = vsel %vm197, %v397, 0.0
    %476 = vadd.xlane.f32.xlu0 %v475
    %v477 = vpop.xlane.xlu0 %476
    %v478 = vsel %vm197, %v398, 0.0
    %479 = vadd.xlane.f32.xlu0 %v478
    %v480 = vpop.xlane.xlu0 %479
    %v481 = vsel %vm197, %v399, 0.0
    %482 = vadd.xlane.f32.xlu0 %v481
    %v483 = vpop.xlane.xlu0 %482
    %v484 = vsel %vm197, %v400, 0.0
    %485 = vadd.xlane.f32.xlu0 %v484
    %v486 = vpop.xlane.xlu0 %485
    %v487 = vsel %vm197, %v401, 0.0
    %488 = vadd.xlane.f32.xlu0 %v487
    %v489 = vpop.xlane.xlu0 %488
    %v490 = vsel %vm197, %v402, 0.0
    %491 = vadd.xlane.f32.xlu0 %v490
    %v492 = vpop.xlane.xlu0 %491
    %v493 = vsel %vm197, %v403, 0.0
    %494 = vadd.xlane.f32.xlu0 %v493
    %v495 = vpop.xlane.xlu0 %494
    %v496 = vsel %vm197, %v404, 0.0
    %497 = vadd.xlane.f32.xlu0 %v496
    %v498 = vpop.xlane.xlu0 %497
    %v499 = vsel %vm197, %v405, 0.0
    %500 = vadd.xlane.f32.xlu0 %v499
    %v501 = vpop.xlane.xlu0 %500
    %v502 = vsel %vm65, 1, 0
    %vm503 = vcmp.eq.s32.totalorder %v502, 1
    %v536 = vlaneseq
    %v537 = vshrl.u32 %v536, 7
    %v538 = vsub.s32 %v64, %v537
    %v539 = vrot.slane %v408, %v538
    %v540 = vadd.s32 %v64, 4294967288
    %v541 = vlaneseq
    %v542 = vshrl.u32 %v541, 7
    %v543 = vsub.s32 %v540, %v542
    %v544 = vrot.slane %v411, %v543
    %vm545 = vcmask 130112
    %v546 = vsel %vm545, %v544, %v539
    %v547 = vadd.s32 %v64, 4294967280
    %v548 = vlaneseq
    %v549 = vshrl.u32 %v548, 7
    %v550 = vsub.s32 %v547, %v549
    %v551 = vrot.slane %v414, %v550
    %vm552 = vcmask 195712
    %v553 = vsel %vm552, %v551, %v546
    %v554 = vadd.s32 %v64, 4294967272
    %v555 = vlaneseq
    %v556 = vshrl.u32 %v555, 7
    %v557 = vsub.s32 %v554, %v556
    %v558 = vrot.slane %v417, %v557
    %vm559 = vcmask 261312
    %v560 = vsel %vm559, %v558, %v553
    %v561 = vadd.s32 %v64, 4294967264
    %v562 = vlaneseq
    %v563 = vshrl.u32 %v562, 7
    %v564 = vsub.s32 %v561, %v563
    %v565 = vrot.slane %v420, %v564
    %vm566 = vcmask 326912
    %v567 = vsel %vm566, %v565, %v560
    %v568 = vadd.s32 %v64, 4294967256
    %v569 = vlaneseq
    %v570 = vshrl.u32 %v569, 7
    %v571 = vsub.s32 %v568, %v570
    %v572 = vrot.slane %v423, %v571
    %vm573 = vcmask 392512
    %v574 = vsel %vm573, %v572, %v567
    %v575 = vadd.s32 %v64, 4294967248
    %v576 = vlaneseq
    %v577 = vshrl.u32 %v576, 7
    %v578 = vsub.s32 %v575, %v577
    %v579 = vrot.slane %v426, %v578
    %vm580 = vcmask 458112
    %v581 = vsel %vm580, %v579, %v574
    %v582 = vadd.s32 %v64, 4294967240
    %v583 = vlaneseq
    %v584 = vshrl.u32 %v583, 7
    %v585 = vsub.s32 %v582, %v584
    %v586 = vrot.slane %v429, %v585
    %vm587 = vcmask 523712
    %v588 = vsel %vm587, %v586, %v581
    %v589 = vadd.s32 %v64, 4294967232
    %v590 = vlaneseq
    %v591 = vshrl.u32 %v590, 7
    %v592 = vsub.s32 %v589, %v591
    %v593 = vrot.slane %v432, %v592
    %vm594 = vcmask 589312
    %v595 = vsel %vm594, %v593, %v588
    %v596 = vadd.s32 %v64, 4294967224
    %v597 = vlaneseq
    %v598 = vshrl.u32 %v597, 7
    %v599 = vsub.s32 %v596, %v598
    %v600 = vrot.slane %v435, %v599
    %vm601 = vcmask 654912
    %v602 = vsel %vm601, %v600, %v595
    %v603 = vadd.s32 %v64, 4294967216
    %v604 = vlaneseq
    %v605 = vshrl.u32 %v604, 7
    %v606 = vsub.s32 %v603, %v605
    %v607 = vrot.slane %v438, %v606
    %vm608 = vcmask 720512
    %v609 = vsel %vm608, %v607, %v602
    %v610 = vadd.s32 %v64, 4294967208
    %v611 = vlaneseq
    %v612 = vshrl.u32 %v611, 7
    %v613 = vsub.s32 %v610, %v612
    %v614 = vrot.slane %v441, %v613
    %vm615 = vcmask 786112
    %v616 = vsel %vm615, %v614, %v609
    %v617 = vadd.s32 %v64, 4294967200
    %v618 = vlaneseq
    %v619 = vshrl.u32 %v618, 7
    %v620 = vsub.s32 %v617, %v619
    %v621 = vrot.slane %v444, %v620
    %vm622 = vcmask 851712
    %v623 = vsel %vm622, %v621, %v616
    %v624 = vadd.s32 %v64, 4294967192
    %v625 = vlaneseq
    %v626 = vshrl.u32 %v625, 7
    %v627 = vsub.s32 %v624, %v626
    %v628 = vrot.slane %v447, %v627
    %vm629 = vcmask 917312
    %v630 = vsel %vm629, %v628, %v623
    %v631 = vadd.s32 %v64, 4294967184
    %v632 = vlaneseq
    %v633 = vshrl.u32 %v632, 7
    %v634 = vsub.s32 %v631, %v633
    %v635 = vrot.slane %v450, %v634
    %vm636 = vcmask 982912
    %v637 = vsel %vm636, %v635, %v630
    %v638 = vadd.s32 %v64, 4294967176
    %v639 = vlaneseq
    %v640 = vshrl.u32 %v639, 7
    %v641 = vsub.s32 %v638, %v640
    %v642 = vrot.slane %v453, %v641
    %vm643 = vcmask 1048512
    %v644 = vsel %vm643, %v642, %v637
    %v645 = vlaneseq
    %v646 = vshrl.u32 %v645, 7
    %v647 = vsub.s32 %v64, %v646
    %v648 = vrot.slane %v456, %v647
    %v649 = vlaneseq
    %v650 = vshrl.u32 %v649, 7
    %v651 = vsub.s32 %v540, %v650
    %v652 = vrot.slane %v459, %v651
    %v653 = vsel %vm545, %v652, %v648
    %v654 = vlaneseq
    %v655 = vshrl.u32 %v654, 7
    %v656 = vsub.s32 %v547, %v655
    %v657 = vrot.slane %v462, %v656
    %v658 = vsel %vm552, %v657, %v653
    %v659 = vlaneseq
    %v660 = vshrl.u32 %v659, 7
    %v661 = vsub.s32 %v554, %v660
    %v662 = vrot.slane %v465, %v661
    %v663 = vsel %vm559, %v662, %v658
    %v664 = vlaneseq
    %v665 = vshrl.u32 %v664, 7
    %v666 = vsub.s32 %v561, %v665
    %v667 = vrot.slane %v468, %v666
    %v668 = vsel %vm566, %v667, %v663
    %v669 = vlaneseq
    %v670 = vshrl.u32 %v669, 7
    %v671 = vsub.s32 %v568, %v670
    %v672 = vrot.slane %v471, %v671
    %v673 = vsel %vm573, %v672, %v668
    %v674 = vlaneseq
    %v675 = vshrl.u32 %v674, 7
    %v676 = vsub.s32 %v575, %v675
    %v677 = vrot.slane %v474, %v676
    %v678 = vsel %vm580, %v677, %v673
    %v679 = vlaneseq
    %v680 = vshrl.u32 %v679, 7
    %v681 = vsub.s32 %v582, %v680
    %v682 = vrot.slane %v477, %v681
    %v683 = vsel %vm587, %v682, %v678
    %v684 = vlaneseq
    %v685 = vshrl.u32 %v684, 7
    %v686 = vsub.s32 %v589, %v685
    %v687 = vrot.slane %v480, %v686
    %v688 = vsel %vm594, %v687, %v683
    %v689 = vlaneseq
    %v690 = vshrl.u32 %v689, 7
    %v691 = vsub.s32 %v596, %v690
    %v692 = vrot.slane %v483, %v691
    %v693 = vsel %vm601, %v692, %v688
    %v694 = vlaneseq
    %v695 = vshrl.u32 %v694, 7
    %v696 = vsub.s32 %v603, %v695
    %v697 = vrot.slane %v486, %v696
    %v698 = vsel %vm608, %v697, %v693
    %v699 = vlaneseq
    %v700 = vshrl.u32 %v699, 7
    %v701 = vsub.s32 %v610, %v700
    %v702 = vrot.slane %v489, %v701
    %v703 = vsel %vm615, %v702, %v698
    %v704 = vlaneseq
    %v705 = vshrl.u32 %v704, 7
    %v706 = vsub.s32 %v617, %v705
    %v707 = vrot.slane %v492, %v706
    %v708 = vsel %vm622, %v707, %v703
    %v709 = vlaneseq
    %v710 = vshrl.u32 %v709, 7
    %v711 = vsub.s32 %v624, %v710
    %v712 = vrot.slane %v495, %v711
    %v713 = vsel %vm629, %v712, %v708
    %v714 = vlaneseq
    %v715 = vshrl.u32 %v714, 7
    %v716 = vsub.s32 %v631, %v715
    %v717 = vrot.slane %v498, %v716
    %v718 = vsel %vm636, %v717, %v713
    %v719 = vlaneseq
    %v720 = vshrl.u32 %v719, 7
    %v721 = vsub.s32 %v638, %v720
    %v722 = vrot.slane %v501, %v721
    %v723 = vsel %vm643, %v722, %v718
    %vm724 = vcmask 1041409
    %v725 = vsel %vm724, %v723, %v644
    %v727 = vsel %vm503, %v725, -1e+30
    %vm728 = vcmask 1041408
    %v729 = vsel %vm728, %v727, -inf
    %730 = vmax.xlane.f32.xlu0 %v729
    %v731 = vpop.xlane.xlu0 %730
    %v732 = vsub.f32 %v727, %v731
    %v733 = vmul.f32 %v732, 1.442695
    %v734 = vpow.pop %v733
    %v735 = vsel %vm728, %v734, 0.0
    %736 = vadd.xlane.f32.xlu0 %v735
    %v737 = vpop.xlane.xlu0 %736
    %v738 = vrcp.pop %v737
    %v739 = vmul.f32 %v734, %v738
    %v740 = vmul.f32 %v739, %v196
    %v743 = vunpack.c.l.s4 1966171168
    %v744 = vunpack.c.0.s8 %v743
    %v745 = vlaneseq
    %v746 = vshrl.u32 %v745, 7
    %v747 = vsub.s32 %v744, %v746
    %v748 = vrot.slane %v740, %v747
    %v749 = vcombine.high %v748, %v748
    %v751 = vunpack.c.l.s4 1966171168
    %v752 = vunpack.c.0.s8 %v751
    %v753 = vlaneseq
    %v754 = vshrl.u32 %v753, 7
    %v755 = vsub.s32 %v752, %v754
    %v756 = vrot.slane %v748, %v755
    %v758 = vunpack.c.l.s4 1966171168
    %v759 = vunpack.c.0.s8 %v758
    %v760 = vlaneseq
    %v761 = vshrl.u32 %v760, 7
    %v762 = vsub.s32 %v759, %v761
    %v763 = vrot.slane %v749, %v762
    %766 = vmatprep.subr.mxu0 0.0
    %767 = vmatpush1.msra.mxu0 %v164
    %768 = vmatprep.subr.mxu0 0.0
    %769 = vmatpush1.msra.mxu0 %v165
    %770 = vmatprep.subr.mxu0 0.0
    %771 = vmatpush1.msra.mxu0 %v166
    %772 = vmatprep.subr.mxu0 0.0
    %773 = vmatpush1.msra.mxu0 %v167
    %774 = vmatprep.subr.mxu0 0.0
    %775 = vmatpush1.msra.mxu0 %v168
    %776 = vmatprep.subr.mxu0 0.0
    %777 = vmatpush1.msra.mxu0 %v169
    %778 = vmatprep.subr.mxu0 0.0
    %779 = vmatpush1.msra.mxu0 %v170
    %780 = vmatprep.subr.mxu0 0.0
    %781 = vmatpush1.msra.mxu0 %v171
    %782 = vmatprep.subr.mxu0 0.0
    %783 = vmatpush1.msra.mxu0 %v172
    %784 = vmatprep.subr.mxu0 0.0
    %785 = vmatpush1.msra.mxu0 %v173
    %786 = vmatprep.subr.mxu0 0.0
    %787 = vmatpush1.msra.mxu0 %v174
    %788 = vmatprep.subr.mxu0 0.0
    %789 = vmatpush1.msra.mxu0 %v175
    %790 = vmatprep.subr.mxu0 0.0
    %791 = vmatpush1.msra.mxu0 %v176
    %792 = vmatprep.subr.mxu0 0.0
    %793 = vmatpush1.msra.mxu0 %v177
    %794 = vmatprep.subr.mxu0 0.0
    %795 = vmatpush1.msra.mxu0 %v178
    %796 = vmatprep.subr.mxu0 0.0
    %797 = vmatpush1.msra.mxu0 %v179
    %798 = vmatprep.subr.mxu0 0.0
    %799 = vmatpush1.msra.mxu0 0.0
    %800 = vmatprep.subr.mxu0 0.0
    %801 = vmatpush1.msra.mxu0 0.0
    %802 = vmatprep.subr.mxu0 0.0
    %803 = vmatpush1.msra.mxu0 0.0
    %804 = vmatprep.subr.mxu0 0.0
    %805 = vmatpush1.msra.mxu0 0.0
    %806 = vmatprep.subr.mxu0 0.0
    %807 = vmatpush1.msra.mxu0 0.0
    %808 = vmatprep.subr.mxu0 0.0
    %809 = vmatpush1.msra.mxu0 0.0
    %810 = vmatprep.subr.mxu0 0.0
    %811 = vmatpush1.msra.mxu0 0.0
    %812 = vmatprep.subr.mxu0 0.0
    %813 = vmatpush1.msra.mxu0 0.0
    %814 = vmatprep.subr.mxu0 0.0
    %815 = vmatpush1.msra.mxu0 0.0
    %816 = vmatprep.subr.mxu0 0.0
    %817 = vmatpush1.msra.mxu0 0.0
    %818 = vmatprep.subr.mxu0 0.0
    %819 = vmatpush1.msra.mxu0 0.0
    %820 = vmatprep.subr.mxu0 0.0
    %821 = vmatpush1.msra.mxu0 0.0
    %822 = vmatprep.subr.mxu0 0.0
    %823 = vmatpush1.msra.mxu0 0.0
    %824 = vmatprep.subr.mxu0 0.0
    %825 = vmatpush1.msra.mxu0 0.0
    %826 = vmatprep.subr.mxu0 0.0
    %827 = vmatpush1.msra.mxu0 0.0
    %828 = vmatprep.subr.mxu0 0.0
    %829 = vmatpush1.msra.mxu0 0.0
    %830 = vmatprep.mubr.f32.mxu0 0.0
    %831 = vmatmul.mubr.f32.gmra.mrb[0].mxu0 %v756
    %v832 = vpop.f32.mrb[0].mxu0
    %v833 = vadd.f32 0.0, %v832
    %v834 = vpop.f32.mrb[0].mxu0
    %835 = vdwg.mxu0
    %836 = vmatprep.subr.mxu0 0.0
    %837 = vmatpush1.msra.mxu0 %v180
    %838 = vmatprep.subr.mxu0 0.0
    %839 = vmatpush1.msra.mxu0 %v181
    %840 = vmatprep.subr.mxu0 0.0
    %841 = vmatpush1.msra.mxu0 %v182
    %842 = vmatprep.subr.mxu0 0.0
    %843 = vmatpush1.msra.mxu0 %v183
    %844 = vmatprep.subr.mxu0 0.0
    %845 = vmatpush1.msra.mxu0 %v184
    %846 = vmatprep.subr.mxu0 0.0
    %847 = vmatpush1.msra.mxu0 %v185
    %848 = vmatprep.subr.mxu0 0.0
    %849 = vmatpush1.msra.mxu0 %v186
    %850 = vmatprep.subr.mxu0 0.0
    %851 = vmatpush1.msra.mxu0 %v187
    %852 = vmatprep.subr.mxu0 0.0
    %853 = vmatpush1.msra.mxu0 %v188
    %854 = vmatprep.subr.mxu0 0.0
    %855 = vmatpush1.msra.mxu0 %v189
    %856 = vmatprep.subr.mxu0 0.0
    %857 = vmatpush1.msra.mxu0 %v190
    %858 = vmatprep.subr.mxu0 0.0
    %859 = vmatpush1.msra.mxu0 %v191
    %860 = vmatprep.subr.mxu0 0.0
    %861 = vmatpush1.msra.mxu0 %v192
    %862 = vmatprep.subr.mxu0 0.0
    %863 = vmatpush1.msra.mxu0 %v193
    %864 = vmatprep.subr.mxu0 0.0
    %865 = vmatpush1.msra.mxu0 %v194
    %866 = vmatprep.subr.mxu0 0.0
    %867 = vmatpush1.msra.mxu0 %v195
    %868 = vmatprep.subr.mxu0 0.0
    %869 = vmatpush1.msra.mxu0 0.0
    %870 = vmatprep.subr.mxu0 0.0
    %871 = vmatpush1.msra.mxu0 0.0
    %872 = vmatprep.subr.mxu0 0.0
    %873 = vmatpush1.msra.mxu0 0.0
    %874 = vmatprep.subr.mxu0 0.0
    %875 = vmatpush1.msra.mxu0 0.0
    %876 = vmatprep.subr.mxu0 0.0
    %877 = vmatpush1.msra.mxu0 0.0
    %878 = vmatprep.subr.mxu0 0.0
    %879 = vmatpush1.msra.mxu0 0.0
    %880 = vmatprep.subr.mxu0 0.0
    %881 = vmatpush1.msra.mxu0 0.0
    %882 = vmatprep.subr.mxu0 0.0
    %883 = vmatpush1.msra.mxu0 0.0
    %884 = vmatprep.subr.mxu0 0.0
    %885 = vmatpush1.msra.mxu0 0.0
    %886 = vmatprep.subr.mxu0 0.0
    %887 = vmatpush1.msra.mxu0 0.0
    %888 = vmatprep.subr.mxu0 0.0
    %889 = vmatpush1.msra.mxu0 0.0
    %890 = vmatprep.subr.mxu0 0.0
    %891 = vmatpush1.msra.mxu0 0.0
    %892 = vmatprep.subr.mxu0 0.0
    %893 = vmatpush1.msra.mxu0 0.0
    %894 = vmatprep.subr.mxu0 0.0
    %895 = vmatpush1.msra.mxu0 0.0
    %896 = vmatprep.subr.mxu0 0.0
    %897 = vmatpush1.msra.mxu0 0.0
    %898 = vmatprep.subr.mxu0 0.0
    %899 = vmatpush1.msra.mxu0 0.0
    %900 = vmatprep.mubr.f32.mxu0 0.0
    %901 = vmatmul.mubr.f32.gmra.mrb[0].mxu0 %v763
    %v902 = vpop.f32.mrb[0].mxu0
    %v903 = vadd.f32 0.0, %v902
    %v904 = vpop.f32.mrb[0].mxu0
    %905 = vdwg.mxu0
    %v906 = vsel %vm728, %v740, 0.0
    %907 = vadd.xlane.f32.xlu0 %v906
    %v908 = vpop.xlane.xlu0 %907
    %v909 = vmax.f32 %v908, 1e-05
    %v910 = vrcp.pop %v909
    %v912 = vrot.slane %v910, 1
    %v915 = vmul.f32 %v833, %v910
    %v916 = vmul.f32 %v903, %v912
    %917 = vmatprep.subr.mxu0 0.0
    %918 = vmatpush1.msra.mxu0 %v58
    %919 = vmatprep.subr.mxu0 0.0
    %920 = vmatpush1.msra.mxu0 %v59
    %921 = vmatprep.subr.mxu0 0.0
    %922 = vmatpush1.msra.mxu0 %v60
    %923 = vmatprep.subr.mxu0 0.0
    %924 = vmatpush1.msra.mxu0 %v61
    %925 = vmatprep.subr.mxu0 0.0
    %926 = vmatpush1.msra.mxu0 0.0
    %927 = vmatprep.subr.mxu0 0.0
    %928 = vmatpush1.msra.mxu0 0.0
    %929 = vmatprep.subr.mxu0 0.0
    %930 = vmatpush1.msra.mxu0 0.0
    %931 = vmatprep.subr.mxu0 0.0
    %932 = vmatpush1.msra.mxu0 0.0
    %933 = vmatprep.subr.mxu0 0.0
    %934 = vmatpush1.msra.mxu0 0.0
    %935 = vmatprep.subr.mxu0 0.0
    %936 = vmatpush1.msra.mxu0 0.0
    %937 = vmatprep.subr.mxu0 0.0
    %938 = vmatpush1.msra.mxu0 0.0
    %939 = vmatprep.subr.mxu0 0.0
    %940 = vmatpush1.msra.mxu0 0.0
    %941 = vmatprep.subr.mxu0 0.0
    %942 = vmatpush1.msra.mxu0 0.0
    %943 = vmatprep.subr.mxu0 0.0
    %944 = vmatpush1.msra.mxu0 0.0
    %945 = vmatprep.subr.mxu0 0.0
    %946 = vmatpush1.msra.mxu0 0.0
    %947 = vmatprep.subr.mxu0 0.0
    %948 = vmatpush1.msra.mxu0 0.0
    %949 = vmatprep.subr.mxu0 0.0
    %950 = vmatpush1.msra.mxu0 0.0
    %951 = vmatprep.subr.mxu0 0.0
    %952 = vmatpush1.msra.mxu0 0.0
    %953 = vmatprep.subr.mxu0 0.0
    %954 = vmatpush1.msra.mxu0 0.0
    %955 = vmatprep.subr.mxu0 0.0
    %956 = vmatpush1.msra.mxu0 0.0
    %957 = vmatprep.subr.mxu0 0.0
    %958 = vmatpush1.msra.mxu0 0.0
    %959 = vmatprep.subr.mxu0 0.0
    %960 = vmatpush1.msra.mxu0 0.0
    %961 = vmatprep.subr.mxu0 0.0
    %962 = vmatpush1.msra.mxu0 0.0
    %963 = vmatprep.subr.mxu0 0.0
    %964 = vmatpush1.msra.mxu0 0.0
    %965 = vmatprep.subr.mxu0 0.0
    %966 = vmatpush1.msra.mxu0 0.0
    %967 = vmatprep.subr.mxu0 0.0
    %968 = vmatpush1.msra.mxu0 0.0
    %969 = vmatprep.subr.mxu0 0.0
    %970 = vmatpush1.msra.mxu0 0.0
    %971 = vmatprep.subr.mxu0 0.0
    %972 = vmatpush1.msra.mxu0 0.0
    %973 = vmatprep.subr.mxu0 0.0
    %974 = vmatpush1.msra.mxu0 0.0
    %975 = vmatprep.subr.mxu0 0.0
    %976 = vmatpush1.msra.mxu0 0.0
    %977 = vmatprep.subr.mxu0 0.0
    %978 = vmatpush1.msra.mxu0 0.0
    %979 = vmatprep.subr.mxu0 0.0
    %980 = vmatpush1.msra.mxu0 0.0
    %981 = vmatprep.mubr.f32.mxu0 0.0
    %982 = vmatmul.mubr.f32.gmra.mrb[0].mxu0 %v199
    %v983 = vpop.f32.mrb[0].mxu0
    %v984 = vadd.f32 0.0, %v983
    %v985 = vpop.f32.mrb[0].mxu0
    %986 = vdwg.mxu0
    %v989 = vrot.slane %v916, 7
    %v990 = vsel %vm724, %v989, %v915
    %v991 = vsel %vm197, %v990, 0
    %993 = vmatprep.subr.mxu0 0.0
    %994 = vmatpush1.msra.mxu0 %v54
    %995 = vmatprep.subr.mxu0 0.0
    %996 = vmatpush1.msra.mxu0 %v55
    %997 = vmatprep.subr.mxu0 0.0
    %998 = vmatpush1.msra.mxu0 %v56
    %999 = vmatprep.subr.mxu0 0.0
    %1000 = vmatpush1.msra.mxu0 %v57
    %1001 = vmatprep.subr.mxu0 0.0
    %1002 = vmatpush1.msra.mxu0 0.0
    %1003 = vmatprep.subr.mxu0 0.0
    %1004 = vmatpush1.msra.mxu0 0.0
    %1005 = vmatprep.subr.mxu0 0.0
    %1006 = vmatpush1.msra.mxu0 0.0
    %1007 = vmatprep.subr.mxu0 0.0
    %1008 = vmatpush1.msra.mxu0 0.0
    %1009 = vmatprep.subr.mxu0 0.0
    %1010 = vmatpush1.msra.mxu0 0.0
    %1011 = vmatprep.subr.mxu0 0.0
    %1012 = vmatpush1.msra.mxu0 0.0
    %1013 = vmatprep.subr.mxu0 0.0
    %1014 = vmatpush1.msra.mxu0 0.0
    %1015 = vmatprep.subr.mxu0 0.0
    %1016 = vmatpush1.msra.mxu0 0.0
    %1017 = vmatprep.subr.mxu0 0.0
    %1018 = vmatpush1.msra.mxu0 0.0
    %1019 = vmatprep.subr.mxu0 0.0
    %1020 = vmatpush1.msra.mxu0 0.0
    %1021 = vmatprep.subr.mxu0 0.0
    %1022 = vmatpush1.msra.mxu0 0.0
    %1023 = vmatprep.subr.mxu0 0.0
    %1024 = vmatpush1.msra.mxu0 0.0
    %1025 = vmatprep.subr.mxu0 0.0
    %1026 = vmatpush1.msra.mxu0 0.0
    %1027 = vmatprep.subr.mxu0 0.0
    %1028 = vmatpush1.msra.mxu0 0.0
    %1029 = vmatprep.subr.mxu0 0.0
    %1030 = vmatpush1.msra.mxu0 0.0
    %1031 = vmatprep.subr.mxu0 0.0
    %1032 = vmatpush1.msra.mxu0 0.0
    %1033 = vmatprep.subr.mxu0 0.0
    %1034 = vmatpush1.msra.mxu0 0.0
    %1035 = vmatprep.subr.mxu0 0.0
    %1036 = vmatpush1.msra.mxu0 0.0
    %1037 = vmatprep.subr.mxu0 0.0
    %1038 = vmatpush1.msra.mxu0 0.0
    %1039 = vmatprep.subr.mxu0 0.0
    %1040 = vmatpush1.msra.mxu0 0.0
    %1041 = vmatprep.subr.mxu0 0.0
    %1042 = vmatpush1.msra.mxu0 0.0
    %1043 = vmatprep.subr.mxu0 0.0
    %1044 = vmatpush1.msra.mxu0 0.0
    %1045 = vmatprep.subr.mxu0 0.0
    %1046 = vmatpush1.msra.mxu0 0.0
    %1047 = vmatprep.subr.mxu0 0.0
    %1048 = vmatpush1.msra.mxu0 0.0
    %1049 = vmatprep.subr.mxu0 0.0
    %1050 = vmatpush1.msra.mxu0 0.0
    %1051 = vmatprep.subr.mxu0 0.0
    %1052 = vmatpush1.msra.mxu0 0.0
    %1053 = vmatprep.subr.mxu0 0.0
    %1054 = vmatpush1.msra.mxu0 0.0
    %1055 = vmatprep.subr.mxu0 0.0
    %1056 = vmatpush1.msra.mxu0 0.0
    %1057 = vmatprep.mubr.f32.mxu0 0.0
    %1058 = vmatmul.mubr.f32.gmra.mrb[0].mxu0 %v991
    %v1059 = vpop.f32.mrb[0].mxu0
    %v1060 = vadd.f32 %v984, %v1059
    %v1061 = vpop.f32.mrb[0].mxu0
    %1062 = vdwg.mxu0
    %v1064 = vlaneseq
    %v1065 = vshrl.u32 %v1064, 7
    %v1066 = vsub.s32 0, %v1065
    %v1067 = vrot.slane %v62, %v1066
    %v1069 = vadd.f32 %v1060, %v1067
    %v1070 = vxor.u32 %v1069, 2147483648
    %v1071 = vmul.f32 %v1070, 1.442695
    %v1072 = vpow.pop %v1071
    %v1073 = vadd.f32 %v1072, 1.0
    %v1074 = vrcp.pop %v1073
    %v1075 = vmul.f32 1.0, %v1074
    %v1076 = vtanh.pop %v1069
    %1078 = vrot.lane.b32.xlu0 %v67, 32
    %v1079 = vpop.permute.xlu0 %1078
    %v1081 = vmul.f32 %v1075, %v1079
    %1083 = vrot.lane.b32.xlu0 %v1076, 64
    %v1084 = vpop.permute.xlu0 %1083
    %v1086 = vmul.f32 %v1075, %v1084
    %1088 = vrot.lane.b32.xlu0 %v1086, 32
    %v1089 = vpop.permute.xlu0 %1088
    %v1091 = vadd.f32 %v1081, %v1089
    %v1092 = vtanh.pop %v1091
    %1094 = vrot.lane.b32.xlu0 %v1092, 64
    %v1095 = vpop.permute.xlu0 %1094
    %v1097 = vmul.f32 %v1075, %v1095
    %1099 = vrot.lane.b32.xlu0 %v1097, 32
    %v1100 = vpop.permute.xlu0 %1099
    %vm1102 = vcmask 254976
    %1103 = vst.msk [vmem:[%s10] sm:$0x3] %vm1102, %v1100
    %s1104 = scalar_lea.vmem %s0, 128
    %v1105 = vld [vmem:[%s1104] sm:$0xf]
    %v1106 = vld [vmem:[%s1104 + $0x4] sm:$0xf]
    %v1107 = vld [vmem:[%s1104 + $0x8] sm:$0xf]
    %v1108 = vld [vmem:[%s1104 + $0xc] sm:$0xf]
    %v1109 = vld [vmem:[%s1104 + $0x10] sm:$0xf]
    %v1110 = vld [vmem:[%s1104 + $0x14] sm:$0xf]
    %v1111 = vld [vmem:[%s1104 + $0x18] sm:$0xf]
    %v1112 = vld [vmem:[%s1104 + $0x1c] sm:$0xf]
    %v1113 = vld [vmem:[%s1104 + $0x20] sm:$0xf]
    %v1114 = vld [vmem:[%s1104 + $0x24] sm:$0xf]
    %v1115 = vld [vmem:[%s1104 + $0x28] sm:$0xf]
    %v1116 = vld [vmem:[%s1104 + $0x2c] sm:$0xf]
    %v1117 = vld [vmem:[%s1104 + $0x30] sm:$0xf]
    %v1118 = vld [vmem:[%s1104 + $0x34] sm:$0xf]
    %v1119 = vld [vmem:[%s1104 + $0x38] sm:$0xf]
    %v1120 = vld [vmem:[%s1104 + $0x3c] sm:$0xf]
    %v1121 = vld [vmem:[%s1104 + $0x40] sm:$0xf]
    %v1122 = vld [vmem:[%s1104 + $0x44] sm:$0xf]
    %v1123 = vld [vmem:[%s1104 + $0x48] sm:$0xf]
    %v1124 = vld [vmem:[%s1104 + $0x4c] sm:$0xf]
    %v1125 = vld [vmem:[%s1104 + $0x50] sm:$0xf]
    %v1126 = vld [vmem:[%s1104 + $0x54] sm:$0xf]
    %v1127 = vld [vmem:[%s1104 + $0x58] sm:$0xf]
    %v1128 = vld [vmem:[%s1104 + $0x5c] sm:$0xf]
    %v1129 = vld [vmem:[%s1104 + $0x60] sm:$0xf]
    %v1130 = vld [vmem:[%s1104 + $0x64] sm:$0xf]
    %v1131 = vld [vmem:[%s1104 + $0x68] sm:$0xf]
    %v1132 = vld [vmem:[%s1104 + $0x6c] sm:$0xf]
    %v1133 = vld [vmem:[%s1104 + $0x70] sm:$0xf]
    %v1134 = vld [vmem:[%s1104 + $0x74] sm:$0xf]
    %v1135 = vld [vmem:[%s1104 + $0x78] sm:$0xf]
    %v1136 = vld [vmem:[%s1104 + $0x7c] sm:$0xf]
    %v1137 = vunpack.c.l.bf16 %v1105
    %v1138 = vunpack.c.l.bf16 %v1106
    %v1139 = vunpack.c.l.bf16 %v1107
    %v1140 = vunpack.c.l.bf16 %v1108
    %v1141 = vunpack.c.l.bf16 %v1109
    %v1142 = vunpack.c.l.bf16 %v1110
    %v1143 = vunpack.c.l.bf16 %v1111
    %v1144 = vunpack.c.l.bf16 %v1112
    %v1145 = vunpack.c.l.bf16 %v1113
    %v1146 = vunpack.c.l.bf16 %v1114
    %v1147 = vunpack.c.l.bf16 %v1115
    %v1148 = vunpack.c.l.bf16 %v1116
    %v1149 = vunpack.c.l.bf16 %v1117
    %v1150 = vunpack.c.l.bf16 %v1118
    %v1151 = vunpack.c.l.bf16 %v1119
    %v1152 = vunpack.c.l.bf16 %v1120
    %v1153 = vunpack.c.l.bf16 %v1121
    %v1154 = vunpack.c.l.bf16 %v1122
    %v1155 = vunpack.c.l.bf16 %v1123
    %v1156 = vunpack.c.l.bf16 %v1124
    %v1157 = vunpack.c.l.bf16 %v1125
    %v1158 = vunpack.c.l.bf16 %v1126
    %v1159 = vunpack.c.l.bf16 %v1127
    %v1160 = vunpack.c.l.bf16 %v1128
    %v1161 = vunpack.c.l.bf16 %v1129
    %v1162 = vunpack.c.l.bf16 %v1130
    %v1163 = vunpack.c.l.bf16 %v1131
    %v1164 = vunpack.c.l.bf16 %v1132
    %v1165 = vunpack.c.l.bf16 %v1133
    %v1166 = vunpack.c.l.bf16 %v1134
    %v1167 = vunpack.c.l.bf16 %v1135
    %v1168 = vunpack.c.l.bf16 %v1136
    %s1169 = scalar_lea.vmem %s1, 128
    %v1170 = vld [vmem:[%s1169] sm:$0xf]
    %v1171 = vld [vmem:[%s1169 + $0x4] sm:$0xf]
    %v1172 = vld [vmem:[%s1169 + $0x8] sm:$0xf]
    %v1173 = vld [vmem:[%s1169 + $0xc] sm:$0xf]
    %v1174 = vld [vmem:[%s1169 + $0x10] sm:$0xf]
    %v1175 = vld [vmem:[%s1169 + $0x14] sm:$0xf]
    %v1176 = vld [vmem:[%s1169 + $0x18] sm:$0xf]
    %v1177 = vld [vmem:[%s1169 + $0x1c] sm:$0xf]
    %v1178 = vld [vmem:[%s1169 + $0x20] sm:$0xf]
    %v1179 = vld [vmem:[%s1169 + $0x24] sm:$0xf]
    %v1180 = vld [vmem:[%s1169 + $0x28] sm:$0xf]
    %v1181 = vld [vmem:[%s1169 + $0x2c] sm:$0xf]
    %v1182 = vld [vmem:[%s1169 + $0x30] sm:$0xf]
    %v1183 = vld [vmem:[%s1169 + $0x34] sm:$0xf]
    %v1184 = vld [vmem:[%s1169 + $0x38] sm:$0xf]
    %v1185 = vld [vmem:[%s1169 + $0x3c] sm:$0xf]
    %v1186 = vld [vmem:[%s1169 + $0x40] sm:$0xf]
    %v1187 = vld [vmem:[%s1169 + $0x44] sm:$0xf]
    %v1188 = vld [vmem:[%s1169 + $0x48] sm:$0xf]
    %v1189 = vld [vmem:[%s1169 + $0x4c] sm:$0xf]
    %v1190 = vld [vmem:[%s1169 + $0x50] sm:$0xf]
    %v1191 = vld [vmem:[%s1169 + $0x54] sm:$0xf]
    %v1192 = vld [vmem:[%s1169 + $0x58] sm:$0xf]
    %v1193 = vld [vmem:[%s1169 + $0x5c] sm:$0xf]
    %v1194 = vld [vmem:[%s1169 + $0x60] sm:$0xf]
    %v1195 = vld [vmem:[%s1169 + $0x64] sm:$0xf]
    %v1196 = vld [vmem:[%s1169 + $0x68] sm:$0xf]
    %v1197 = vld [vmem:[%s1169 + $0x6c] sm:$0xf]
    %v1198 = vld [vmem:[%s1169 + $0x70] sm:$0xf]
    %v1199 = vld [vmem:[%s1169 + $0x74] sm:$0xf]
    %v1200 = vld [vmem:[%s1169 + $0x78] sm:$0xf]
    %v1201 = vld [vmem:[%s1169 + $0x7c] sm:$0xf]
    %v1202 = vunpack.c.l.bf16 %v1170
    %v1203 = vunpack.c.l.bf16 %v1171
    %v1204 = vunpack.c.l.bf16 %v1172
    %v1205 = vunpack.c.l.bf16 %v1173
    %v1206 = vunpack.c.l.bf16 %v1174
    %v1207 = vunpack.c.l.bf16 %v1175
    %v1208 = vunpack.c.l.bf16 %v1176
    %v1209 = vunpack.c.l.bf16 %v1177
    %v1210 = vunpack.c.l.bf16 %v1178
    %v1211 = vunpack.c.l.bf16 %v1179
    %v1212 = vunpack.c.l.bf16 %v1180
    %v1213 = vunpack.c.l.bf16 %v1181
    %v1214 = vunpack.c.l.bf16 %v1182
    %v1215 = vunpack.c.l.bf16 %v1183
    %v1216 = vunpack.c.l.bf16 %v1184
    %v1217 = vunpack.c.l.bf16 %v1185
    %v1218 = vunpack.c.l.bf16 %v1186
    %v1219 = vunpack.c.l.bf16 %v1187
    %v1220 = vunpack.c.l.bf16 %v1188
    %v1221 = vunpack.c.l.bf16 %v1189
    %v1222 = vunpack.c.l.bf16 %v1190
    %v1223 = vunpack.c.l.bf16 %v1191
    %v1224 = vunpack.c.l.bf16 %v1192
    %v1225 = vunpack.c.l.bf16 %v1193
    %v1226 = vunpack.c.l.bf16 %v1194
    %v1227 = vunpack.c.l.bf16 %v1195
    %v1228 = vunpack.c.l.bf16 %v1196
    %v1229 = vunpack.c.l.bf16 %v1197
    %v1230 = vunpack.c.l.bf16 %v1198
    %v1231 = vunpack.c.l.bf16 %v1199
    %v1232 = vunpack.c.l.bf16 %v1200
    %v1233 = vunpack.c.l.bf16 %v1201
    %s1234 = scalar_lea.vmem %s2, 2
    %v1235 = vld [vmem:[%s1234] sm:$0x3]
    %v1236 = vsel %vm197, %v1100, 0
    %1238 = vmatprep.subr.mxu0 0.0
    %1239 = vmatpush1.msra.mxu0 %v49
    %1240 = vmatprep.subr.mxu0 0.0
    %1241 = vmatpush1.msra.mxu0 %v50
    %1242 = vmatprep.subr.mxu0 0.0
    %1243 = vmatpush1.msra.mxu0 %v51
    %1244 = vmatprep.subr.mxu0 0.0
    %1245 = vmatpush1.msra.mxu0 %v52
    %1246 = vmatprep.subr.mxu0 0.0
    %1247 = vmatpush1.msra.mxu0 0.0
    %1248 = vmatprep.subr.mxu0 0.0
    %1249 = vmatpush1.msra.mxu0 0.0
    %1250 = vmatprep.subr.mxu0 0.0
    %1251 = vmatpush1.msra.mxu0 0.0
    %1252 = vmatprep.subr.mxu0 0.0
    %1253 = vmatpush1.msra.mxu0 0.0
    %1254 = vmatprep.subr.mxu0 0.0
    %1255 = vmatpush1.msra.mxu0 0.0
    %1256 = vmatprep.subr.mxu0 0.0
    %1257 = vmatpush1.msra.mxu0 0.0
    %1258 = vmatprep.subr.mxu0 0.0
    %1259 = vmatpush1.msra.mxu0 0.0
    %1260 = vmatprep.subr.mxu0 0.0
    %1261 = vmatpush1.msra.mxu0 0.0
    %1262 = vmatprep.subr.mxu0 0.0
    %1263 = vmatpush1.msra.mxu0 0.0
    %1264 = vmatprep.subr.mxu0 0.0
    %1265 = vmatpush1.msra.mxu0 0.0
    %1266 = vmatprep.subr.mxu0 0.0
    %1267 = vmatpush1.msra.mxu0 0.0
    %1268 = vmatprep.subr.mxu0 0.0
    %1269 = vmatpush1.msra.mxu0 0.0
    %1270 = vmatprep.subr.mxu0 0.0
    %1271 = vmatpush1.msra.mxu0 0.0
    %1272 = vmatprep.subr.mxu0 0.0
    %1273 = vmatpush1.msra.mxu0 0.0
    %1274 = vmatprep.subr.mxu0 0.0
    %1275 = vmatpush1.msra.mxu0 0.0
    %1276 = vmatprep.subr.mxu0 0.0
    %1277 = vmatpush1.msra.mxu0 0.0
    %1278 = vmatprep.subr.mxu0 0.0
    %1279 = vmatpush1.msra.mxu0 0.0
    %1280 = vmatprep.subr.mxu0 0.0
    %1281 = vmatpush1.msra.mxu0 0.0
    %1282 = vmatprep.subr.mxu0 0.0
    %1283 = vmatpush1.msra.mxu0 0.0
    %1284 = vmatprep.subr.mxu0 0.0
    %1285 = vmatpush1.msra.mxu0 0.0
    %1286 = vmatprep.subr.mxu0 0.0
    %1287 = vmatpush1.msra.mxu0 0.0
    %1288 = vmatprep.subr.mxu0 0.0
    %1289 = vmatpush1.msra.mxu0 0.0
    %1290 = vmatprep.subr.mxu0 0.0
    %1291 = vmatpush1.msra.mxu0 0.0
    %1292 = vmatprep.subr.mxu0 0.0
    %1293 = vmatpush1.msra.mxu0 0.0
    %1294 = vmatprep.subr.mxu0 0.0
    %1295 = vmatpush1.msra.mxu0 0.0
    %1296 = vmatprep.subr.mxu0 0.0
    %1297 = vmatpush1.msra.mxu0 0.0
    %1298 = vmatprep.subr.mxu0 0.0
    %1299 = vmatpush1.msra.mxu0 0.0
    %1300 = vmatprep.subr.mxu0 0.0
    %1301 = vmatpush1.msra.mxu0 0.0
    %1302 = vmatprep.mubr.f32.mxu0 0.0
    %1303 = vmatmul.mubr.f32.gmra.mrb[0].mxu0 %v1236
    %v1304 = vpop.f32.mrb[0].mxu0
    %v1305 = vadd.f32 0.0, %v1304
    %v1306 = vpop.f32.mrb[0].mxu0
    %1307 = vdwg.mxu0
    %v1310 = vunpack.c.l.s4 1966171168
    %v1311 = vunpack.c.0.s8 %v1310
    %v1312 = vlaneseq
    %v1313 = vshrl.u32 %v1312, 7
    %v1314 = vsub.s32 %v1311, %v1313
    %v1315 = vrot.slane %v1305, %v1314
    %v1316 = vcombine.high %v1315, %v1315
    %v1318 = vunpack.c.l.s4 1966171168
    %v1319 = vunpack.c.0.s8 %v1318
    %v1320 = vlaneseq
    %v1321 = vshrl.u32 %v1320, 7
    %v1322 = vsub.s32 %v1319, %v1321
    %v1323 = vrot.slane %v1315, %v1322
    %v1325 = vunpack.c.l.s4 1966171168
    %v1326 = vunpack.c.0.s8 %v1325
    %v1327 = vlaneseq
    %v1328 = vshrl.u32 %v1327, 7
    %v1329 = vsub.s32 %v1326, %v1328
    %v1330 = vrot.slane %v1316, %v1329
    %v1331 = vlaneseq
    %v1332 = vshrl.u32 %v1331, 7
    %v1333 = vsub.s32 0, %v1332
    %v1334 = vrot.slane %v1323, %v1333
    %v1335 = vlaneseq
    %v1336 = vshrl.u32 %v1335, 7
    %v1337 = vsub.s32 0, %v1336
    %v1338 = vrot.slane %v1330, %v1337
    %v1341 = vadd.f32 %v1334, %v1137
    %v1342 = vadd.f32 %v1334, %v1138
    %v1343 = vadd.f32 %v1334, %v1139
    %v1344 = vadd.f32 %v1334, %v1140
    %v1345 = vadd.f32 %v1334, %v1141
    %v1346 = vadd.f32 %v1334, %v1142
    %v1347 = vadd.f32 %v1334, %v1143
    %v1348 = vadd.f32 %v1334, %v1144
    %v1349 = vadd.f32 %v1334, %v1145
    %v1350 = vadd.f32 %v1334, %v1146
    %v1351 = vadd.f32 %v1334, %v1147
    %v1352 = vadd.f32 %v1334, %v1148
    %v1353 = vadd.f32 %v1334, %v1149
    %v1354 = vadd.f32 %v1334, %v1150
    %v1355 = vadd.f32 %v1334, %v1151
    %v1356 = vadd.f32 %v1334, %v1152
    %v1357 = vadd.f32 %v1338, %v1153
    %v1358 = vadd.f32 %v1338, %v1154
    %v1359 = vadd.f32 %v1338, %v1155
    %v1360 = vadd.f32 %v1338, %v1156
    %v1361 = vadd.f32 %v1338, %v1157
    %v1362 = vadd.f32 %v1338, %v1158
    %v1363 = vadd.f32 %v1338, %v1159
    %v1364 = vadd.f32 %v1338, %v1160
    %v1365 = vadd.f32 %v1338, %v1161
    %v1366 = vadd.f32 %v1338, %v1162
    %v1367 = vadd.f32 %v1338, %v1163
    %v1368 = vadd.f32 %v1338, %v1164
    %v1369 = vadd.f32 %v1338, %v1165
    %v1370 = vadd.f32 %v1338, %v1166
    %v1371 = vadd.f32 %v1338, %v1167
    %v1372 = vadd.f32 %v1338, %v1168
    %v1373 = vtanh.pop %v1341
    %v1374 = vtanh.pop %v1342
    %v1375 = vtanh.pop %v1343
    %v1376 = vtanh.pop %v1344
    %v1377 = vtanh.pop %v1345
    %v1378 = vtanh.pop %v1346
    %v1379 = vtanh.pop %v1347
    %v1380 = vtanh.pop %v1348
    %v1381 = vtanh.pop %v1349
    %v1382 = vtanh.pop %v1350
    %v1383 = vtanh.pop %v1351
    %v1384 = vtanh.pop %v1352
    %v1385 = vtanh.pop %v1353
    %v1386 = vtanh.pop %v1354
    %v1387 = vtanh.pop %v1355
    %v1388 = vtanh.pop %v1356
    %v1389 = vtanh.pop %v1357
    %v1390 = vtanh.pop %v1358
    %v1391 = vtanh.pop %v1359
    %v1392 = vtanh.pop %v1360
    %v1393 = vtanh.pop %v1361
    %v1394 = vtanh.pop %v1362
    %v1395 = vtanh.pop %v1363
    %v1396 = vtanh.pop %v1364
    %v1397 = vtanh.pop %v1365
    %v1398 = vtanh.pop %v1366
    %v1399 = vtanh.pop %v1367
    %v1400 = vtanh.pop %v1368
    %v1401 = vtanh.pop %v1369
    %v1402 = vtanh.pop %v1370
    %v1403 = vtanh.pop %v1371
    %v1404 = vtanh.pop %v1372
    %v1405 = vmul.f32 %v1373, %v372
    %v1406 = vmul.f32 %v1374, %v372
    %v1407 = vmul.f32 %v1375, %v372
    %v1408 = vmul.f32 %v1376, %v372
    %v1409 = vmul.f32 %v1377, %v372
    %v1410 = vmul.f32 %v1378, %v372
    %v1411 = vmul.f32 %v1379, %v372
    %v1412 = vmul.f32 %v1380, %v372
    %v1413 = vmul.f32 %v1381, %v372
    %v1414 = vmul.f32 %v1382, %v372
    %v1415 = vmul.f32 %v1383, %v372
    %v1416 = vmul.f32 %v1384, %v372
    %v1417 = vmul.f32 %v1385, %v372
    %v1418 = vmul.f32 %v1386, %v372
    %v1419 = vmul.f32 %v1387, %v372
    %v1420 = vmul.f32 %v1388, %v372
    %v1421 = vmul.f32 %v1389, %v372
    %v1422 = vmul.f32 %v1390, %v372
    %v1423 = vmul.f32 %v1391, %v372
    %v1424 = vmul.f32 %v1392, %v372
    %v1425 = vmul.f32 %v1393, %v372
    %v1426 = vmul.f32 %v1394, %v372
    %v1427 = vmul.f32 %v1395, %v372
    %v1428 = vmul.f32 %v1396, %v372
    %v1429 = vmul.f32 %v1397, %v372
    %v1430 = vmul.f32 %v1398, %v372
    %v1431 = vmul.f32 %v1399, %v372
    %v1432 = vmul.f32 %v1400, %v372
    %v1433 = vmul.f32 %v1401, %v372
    %v1434 = vmul.f32 %v1402, %v372
    %v1435 = vmul.f32 %v1403, %v372
    %v1436 = vmul.f32 %v1404, %v372
    %v1437 = vsel %vm197, %v1405, 0.0
    %1438 = vadd.xlane.f32.xlu0 %v1437
    %v1439 = vpop.xlane.xlu0 %1438
    %v1440 = vsel %vm197, %v1406, 0.0
    %1441 = vadd.xlane.f32.xlu0 %v1440
    %v1442 = vpop.xlane.xlu0 %1441
    %v1443 = vsel %vm197, %v1407, 0.0
    %1444 = vadd.xlane.f32.xlu0 %v1443
    %v1445 = vpop.xlane.xlu0 %1444
    %v1446 = vsel %vm197, %v1408, 0.0
    %1447 = vadd.xlane.f32.xlu0 %v1446
    %v1448 = vpop.xlane.xlu0 %1447
    %v1449 = vsel %vm197, %v1409, 0.0
    %1450 = vadd.xlane.f32.xlu0 %v1449
    %v1451 = vpop.xlane.xlu0 %1450
    %v1452 = vsel %vm197, %v1410, 0.0
    %1453 = vadd.xlane.f32.xlu0 %v1452
    %v1454 = vpop.xlane.xlu0 %1453
    %v1455 = vsel %vm197, %v1411, 0.0
    %1456 = vadd.xlane.f32.xlu0 %v1455
    %v1457 = vpop.xlane.xlu0 %1456
    %v1458 = vsel %vm197, %v1412, 0.0
    %1459 = vadd.xlane.f32.xlu0 %v1458
    %v1460 = vpop.xlane.xlu0 %1459
    %v1461 = vsel %vm197, %v1413, 0.0
    %1462 = vadd.xlane.f32.xlu0 %v1461
    %v1463 = vpop.xlane.xlu0 %1462
    %v1464 = vsel %vm197, %v1414, 0.0
    %1465 = vadd.xlane.f32.xlu0 %v1464
    %v1466 = vpop.xlane.xlu0 %1465
    %v1467 = vsel %vm197, %v1415, 0.0
    %1468 = vadd.xlane.f32.xlu0 %v1467
    %v1469 = vpop.xlane.xlu0 %1468
    %v1470 = vsel %vm197, %v1416, 0.0
    %1471 = vadd.xlane.f32.xlu0 %v1470
    %v1472 = vpop.xlane.xlu0 %1471
    %v1473 = vsel %vm197, %v1417, 0.0
    %1474 = vadd.xlane.f32.xlu0 %v1473
    %v1475 = vpop.xlane.xlu0 %1474
    %v1476 = vsel %vm197, %v1418, 0.0
    %1477 = vadd.xlane.f32.xlu0 %v1476
    %v1478 = vpop.xlane.xlu0 %1477
    %v1479 = vsel %vm197, %v1419, 0.0
    %1480 = vadd.xlane.f32.xlu0 %v1479
    %v1481 = vpop.xlane.xlu0 %1480
    %v1482 = vsel %vm197, %v1420, 0.0
    %1483 = vadd.xlane.f32.xlu0 %v1482
    %v1484 = vpop.xlane.xlu0 %1483
    %v1485 = vsel %vm197, %v1421, 0.0
    %1486 = vadd.xlane.f32.xlu0 %v1485
    %v1487 = vpop.xlane.xlu0 %1486
    %v1488 = vsel %vm197, %v1422, 0.0
    %1489 = vadd.xlane.f32.xlu0 %v1488
    %v1490 = vpop.xlane.xlu0 %1489
    %v1491 = vsel %vm197, %v1423, 0.0
    %1492 = vadd.xlane.f32.xlu0 %v1491
    %v1493 = vpop.xlane.xlu0 %1492
    %v1494 = vsel %vm197, %v1424, 0.0
    %1495 = vadd.xlane.f32.xlu0 %v1494
    %v1496 = vpop.xlane.xlu0 %1495
    %v1497 = vsel %vm197, %v1425, 0.0
    %1498 = vadd.xlane.f32.xlu0 %v1497
    %v1499 = vpop.xlane.xlu0 %1498
    %v1500 = vsel %vm197, %v1426, 0.0
    %1501 = vadd.xlane.f32.xlu0 %v1500
    %v1502 = vpop.xlane.xlu0 %1501
    %v1503 = vsel %vm197, %v1427, 0.0
    %1504 = vadd.xlane.f32.xlu0 %v1503
    %v1505 = vpop.xlane.xlu0 %1504
    %v1506 = vsel %vm197, %v1428, 0.0
    %1507 = vadd.xlane.f32.xlu0 %v1506
    %v1508 = vpop.xlane.xlu0 %1507
    %v1509 = vsel %vm197, %v1429, 0.0
    %1510 = vadd.xlane.f32.xlu0 %v1509
    %v1511 = vpop.xlane.xlu0 %1510
    %v1512 = vsel %vm197, %v1430, 0.0
    %1513 = vadd.xlane.f32.xlu0 %v1512
    %v1514 = vpop.xlane.xlu0 %1513
    %v1515 = vsel %vm197, %v1431, 0.0
    %1516 = vadd.xlane.f32.xlu0 %v1515
    %v1517 = vpop.xlane.xlu0 %1516
    %v1518 = vsel %vm197, %v1432, 0.0
    %1519 = vadd.xlane.f32.xlu0 %v1518
    %v1520 = vpop.xlane.xlu0 %1519
    %v1521 = vsel %vm197, %v1433, 0.0
    %1522 = vadd.xlane.f32.xlu0 %v1521
    %v1523 = vpop.xlane.xlu0 %1522
    %v1524 = vsel %vm197, %v1434, 0.0
    %1525 = vadd.xlane.f32.xlu0 %v1524
    %v1526 = vpop.xlane.xlu0 %1525
    %v1527 = vsel %vm197, %v1435, 0.0
    %1528 = vadd.xlane.f32.xlu0 %v1527
    %v1529 = vpop.xlane.xlu0 %1528
    %v1530 = vsel %vm197, %v1436, 0.0
    %1531 = vadd.xlane.f32.xlu0 %v1530
    %v1532 = vpop.xlane.xlu0 %1531
    %v1565 = vlaneseq
    %v1566 = vshrl.u32 %v1565, 7
    %v1567 = vsub.s32 %v64, %v1566
    %v1568 = vrot.slane %v1439, %v1567
    %v1569 = vlaneseq
    %v1570 = vshrl.u32 %v1569, 7
    %v1571 = vsub.s32 %v540, %v1570
    %v1572 = vrot.slane %v1442, %v1571
    %v1573 = vsel %vm545, %v1572, %v1568
    %v1574 = vlaneseq
    %v1575 = vshrl.u32 %v1574, 7
    %v1576 = vsub.s32 %v547, %v1575
    %v1577 = vrot.slane %v1445, %v1576
    %v1578 = vsel %vm552, %v1577, %v1573
    %v1579 = vlaneseq
    %v1580 = vshrl.u32 %v1579, 7
    %v1581 = vsub.s32 %v554, %v1580
    %v1582 = vrot.slane %v1448, %v1581
    %v1583 = vsel %vm559, %v1582, %v1578
    %v1584 = vlaneseq
    %v1585 = vshrl.u32 %v1584, 7
    %v1586 = vsub.s32 %v561, %v1585
    %v1587 = vrot.slane %v1451, %v1586
    %v1588 = vsel %vm566, %v1587, %v1583
    %v1589 = vlaneseq
    %v1590 = vshrl.u32 %v1589, 7
    %v1591 = vsub.s32 %v568, %v1590
    %v1592 = vrot.slane %v1454, %v1591
    %v1593 = vsel %vm573, %v1592, %v1588
    %v1594 = vlaneseq
    %v1595 = vshrl.u32 %v1594, 7
    %v1596 = vsub.s32 %v575, %v1595
    %v1597 = vrot.slane %v1457, %v1596
    %v1598 = vsel %vm580, %v1597, %v1593
    %v1599 = vlaneseq
    %v1600 = vshrl.u32 %v1599, 7
    %v1601 = vsub.s32 %v582, %v1600
    %v1602 = vrot.slane %v1460, %v1601
    %v1603 = vsel %vm587, %v1602, %v1598
    %v1604 = vlaneseq
    %v1605 = vshrl.u32 %v1604, 7
    %v1606 = vsub.s32 %v589, %v1605
    %v1607 = vrot.slane %v1463, %v1606
    %v1608 = vsel %vm594, %v1607, %v1603
    %v1609 = vlaneseq
    %v1610 = vshrl.u32 %v1609, 7
    %v1611 = vsub.s32 %v596, %v1610
    %v1612 = vrot.slane %v1466, %v1611
    %v1613 = vsel %vm601, %v1612, %v1608
    %v1614 = vlaneseq
    %v1615 = vshrl.u32 %v1614, 7
    %v1616 = vsub.s32 %v603, %v1615
    %v1617 = vrot.slane %v1469, %v1616
    %v1618 = vsel %vm608, %v1617, %v1613
    %v1619 = vlaneseq
    %v1620 = vshrl.u32 %v1619, 7
    %v1621 = vsub.s32 %v610, %v1620
    %v1622 = vrot.slane %v1472, %v1621
    %v1623 = vsel %vm615, %v1622, %v1618
    %v1624 = vlaneseq
    %v1625 = vshrl.u32 %v1624, 7
    %v1626 = vsub.s32 %v617, %v1625
    %v1627 = vrot.slane %v1475, %v1626
    %v1628 = vsel %vm622, %v1627, %v1623
    %v1629 = vlaneseq
    %v1630 = vshrl.u32 %v1629, 7
    %v1631 = vsub.s32 %v624, %v1630
    %v1632 = vrot.slane %v1478, %v1631
    %v1633 = vsel %vm629, %v1632, %v1628
    %v1634 = vlaneseq
    %v1635 = vshrl.u32 %v1634, 7
    %v1636 = vsub.s32 %v631, %v1635
    %v1637 = vrot.slane %v1481, %v1636
    %v1638 = vsel %vm636, %v1637, %v1633
    %v1639 = vlaneseq
    %v1640 = vshrl.u32 %v1639, 7
    %v1641 = vsub.s32 %v638, %v1640
    %v1642 = vrot.slane %v1484, %v1641
    %v1643 = vsel %vm643, %v1642, %v1638
    %v1644 = vlaneseq
    %v1645 = vshrl.u32 %v1644, 7
    %v1646 = vsub.s32 %v64, %v1645
    %v1647 = vrot.slane %v1487, %v1646
    %v1648 = vlaneseq
    %v1649 = vshrl.u32 %v1648, 7
    %v1650 = vsub.s32 %v540, %v1649
    %v1651 = vrot.slane %v1490, %v1650
    %v1652 = vsel %vm545, %v1651, %v1647
    %v1653 = vlaneseq
    %v1654 = vshrl.u32 %v1653, 7
    %v1655 = vsub.s32 %v547, %v1654
    %v1656 = vrot.slane %v1493, %v1655
    %v1657 = vsel %vm552, %v1656, %v1652
    %v1658 = vlaneseq
    %v1659 = vshrl.u32 %v1658, 7
    %v1660 = vsub.s32 %v554, %v1659
    %v1661 = vrot.slane %v1496, %v1660
    %v1662 = vsel %vm559, %v1661, %v1657
    %v1663 = vlaneseq
    %v1664 = vshrl.u32 %v1663, 7
    %v1665 = vsub.s32 %v561, %v1664
    %v1666 = vrot.slane %v1499, %v1665
    %v1667 = vsel %vm566, %v1666, %v1662
    %v1668 = vlaneseq
    %v1669 = vshrl.u32 %v1668, 7
    %v1670 = vsub.s32 %v568, %v1669
    %v1671 = vrot.slane %v1502, %v1670
    %v1672 = vsel %vm573, %v1671, %v1667
    %v1673 = vlaneseq
    %v1674 = vshrl.u32 %v1673, 7
    %v1675 = vsub.s32 %v575, %v1674
    %v1676 = vrot.slane %v1505, %v1675
    %v1677 = vsel %vm580, %v1676, %v1672
    %v1678 = vlaneseq
    %v1679 = vshrl.u32 %v1678, 7
    %v1680 = vsub.s32 %v582, %v1679
    %v1681 = vrot.slane %v1508, %v1680
    %v1682 = vsel %vm587, %v1681, %v1677
    %v1683 = vlaneseq
    %v1684 = vshrl.u32 %v1683, 7
    %v1685 = vsub.s32 %v589, %v1684
    %v1686 = vrot.slane %v1511, %v1685
    %v1687 = vsel %vm594, %v1686, %v1682
    %v1688 = vlaneseq
    %v1689 = vshrl.u32 %v1688, 7
    %v1690 = vsub.s32 %v596, %v1689
    %v1691 = vrot.slane %v1514, %v1690
    %v1692 = vsel %vm601, %v1691, %v1687
    %v1693 = vlaneseq
    %v1694 = vshrl.u32 %v1693, 7
    %v1695 = vsub.s32 %v603, %v1694
    %v1696 = vrot.slane %v1517, %v1695
    %v1697 = vsel %vm608, %v1696, %v1692
    %v1698 = vlaneseq
    %v1699 = vshrl.u32 %v1698, 7
    %v1700 = vsub.s32 %v610, %v1699
    %v1701 = vrot.slane %v1520, %v1700
    %v1702 = vsel %vm615, %v1701, %v1697
    %v1703 = vlaneseq
    %v1704 = vshrl.u32 %v1703, 7
    %v1705 = vsub.s32 %v617, %v1704
    %v1706 = vrot.slane %v1523, %v1705
    %v1707 = vsel %vm622, %v1706, %v1702
    %v1708 = vlaneseq
    %v1709 = vshrl.u32 %v1708, 7
    %v1710 = vsub.s32 %v624, %v1709
    %v1711 = vrot.slane %v1526, %v1710
    %v1712 = vsel %vm629, %v1711, %v1707
    %v1713 = vlaneseq
    %v1714 = vshrl.u32 %v1713, 7
    %v1715 = vsub.s32 %v631, %v1714
    %v1716 = vrot.slane %v1529, %v1715
    %v1717 = vsel %vm636, %v1716, %v1712
    %v1718 = vlaneseq
    %v1719 = vshrl.u32 %v1718, 7
    %v1720 = vsub.s32 %v638, %v1719
    %v1721 = vrot.slane %v1532, %v1720
    %v1722 = vsel %vm643, %v1721, %v1717
    %v1723 = vsel %vm724, %v1722, %v1643
    %v1725 = vsel %vm503, %v1723, -1e+30
    %v1726 = vsel %vm728, %v1725, -inf
    %1727 = vmax.xlane.f32.xlu0 %v1726
    %v1728 = vpop.xlane.xlu0 %1727
    %v1729 = vsub.f32 %v1725, %v1728
    %v1730 = vmul.f32 %v1729, 1.442695
    %v1731 = vpow.pop %v1730
    %v1732 = vsel %vm728, %v1731, 0.0
    %1733 = vadd.xlane.f32.xlu0 %v1732
    %v1734 = vpop.xlane.xlu0 %1733
    %v1735 = vrcp.pop %v1734
    %v1736 = vmul.f32 %v1731, %v1735
    %v1737 = vmul.f32 %v1736, %v1235
    %v1740 = vunpack.c.l.s4 1966171168
    %v1741 = vunpack.c.0.s8 %v1740
    %v1742 = vlaneseq
    %v1743 = vshrl.u32 %v1742, 7
    %v1744 = vsub.s32 %v1741, %v1743
    %v1745 = vrot.slane %v1737, %v1744
    %v1746 = vcombine.high %v1745, %v1745
    %v1748 = vunpack.c.l.s4 1966171168
    %v1749 = vunpack.c.0.s8 %v1748
    %v1750 = vlaneseq
    %v1751 = vshrl.u32 %v1750, 7
    %v1752 = vsub.s32 %v1749, %v1751
    %v1753 = vrot.slane %v1745, %v1752
    %v1755 = vunpack.c.l.s4 1966171168
    %v1756 = vunpack.c.0.s8 %v1755
    %v1757 = vlaneseq
    %v1758 = vshrl.u32 %v1757, 7
    %v1759 = vsub.s32 %v1756, %v1758
    %v1760 = vrot.slane %v1746, %v1759
    %1763 = vmatprep.subr.mxu0 0.0
    %1764 = vmatpush1.msra.mxu0 %v1202
    %1765 = vmatprep.subr.mxu0 0.0
    %1766 = vmatpush1.msra.mxu0 %v1203
    %1767 = vmatprep.subr.mxu0 0.0
    %1768 = vmatpush1.msra.mxu0 %v1204
    %1769 = vmatprep.subr.mxu0 0.0
    %1770 = vmatpush1.msra.mxu0 %v1205
    %1771 = vmatprep.subr.mxu0 0.0
    %1772 = vmatpush1.msra.mxu0 %v1206
    %1773 = vmatprep.subr.mxu0 0.0
    %1774 = vmatpush1.msra.mxu0 %v1207
    %1775 = vmatprep.subr.mxu0 0.0
    %1776 = vmatpush1.msra.mxu0 %v1208
    %1777 = vmatprep.subr.mxu0 0.0
    %1778 = vmatpush1.msra.mxu0 %v1209
    %1779 = vmatprep.subr.mxu0 0.0
    %1780 = vmatpush1.msra.mxu0 %v1210
    %1781 = vmatprep.subr.mxu0 0.0
    %1782 = vmatpush1.msra.mxu0 %v1211
    %1783 = vmatprep.subr.mxu0 0.0
    %1784 = vmatpush1.msra.mxu0 %v1212
    %1785 = vmatprep.subr.mxu0 0.0
    %1786 = vmatpush1.msra.mxu0 %v1213
    %1787 = vmatprep.subr.mxu0 0.0
    %1788 = vmatpush1.msra.mxu0 %v1214
    %1789 = vmatprep.subr.mxu0 0.0
    %1790 = vmatpush1.msra.mxu0 %v1215
    %1791 = vmatprep.subr.mxu0 0.0
    %1792 = vmatpush1.msra.mxu0 %v1216
    %1793 = vmatprep.subr.mxu0 0.0
    %1794 = vmatpush1.msra.mxu0 %v1217
    %1795 = vmatprep.subr.mxu0 0.0
    %1796 = vmatpush1.msra.mxu0 0.0
    %1797 = vmatprep.subr.mxu0 0.0
    %1798 = vmatpush1.msra.mxu0 0.0
    %1799 = vmatprep.subr.mxu0 0.0
    %1800 = vmatpush1.msra.mxu0 0.0
    %1801 = vmatprep.subr.mxu0 0.0
    %1802 = vmatpush1.msra.mxu0 0.0
    %1803 = vmatprep.subr.mxu0 0.0
    %1804 = vmatpush1.msra.mxu0 0.0
    %1805 = vmatprep.subr.mxu0 0.0
    %1806 = vmatpush1.msra.mxu0 0.0
    %1807 = vmatprep.subr.mxu0 0.0
    %1808 = vmatpush1.msra.mxu0 0.0
    %1809 = vmatprep.subr.mxu0 0.0
    %1810 = vmatpush1.msra.mxu0 0.0
    %1811 = vmatprep.subr.mxu0 0.0
    %1812 = vmatpush1.msra.mxu0 0.0
    %1813 = vmatprep.subr.mxu0 0.0
    %1814 = vmatpush1.msra.mxu0 0.0
    %1815 = vmatprep.subr.mxu0 0.0
    %1816 = vmatpush1.msra.mxu0 0.0
    %1817 = vmatprep.subr.mxu0 0.0
    %1818 = vmatpush1.msra.mxu0 0.0
    %1819 = vmatprep.subr.mxu0 0.0
    %1820 = vmatpush1.msra.mxu0 0.0
    %1821 = vmatprep.subr.mxu0 0.0
    %1822 = vmatpush1.msra.mxu0 0.0
    %1823 = vmatprep.subr.mxu0 0.0
    %1824 = vmatpush1.msra.mxu0 0.0
    %1825 = vmatprep.subr.mxu0 0.0
    %1826 = vmatpush1.msra.mxu0 0.0
    %1827 = vmatprep.mubr.f32.mxu0 0.0
    %1828 = vmatmul.mubr.f32.gmra.mrb[0].mxu0 %v1753
    %v1829 = vpop.f32.mrb[0].mxu0
    %v1830 = vadd.f32 0.0, %v1829
    %v1831 = vpop.f32.mrb[0].mxu0
    %1832 = vdwg.mxu0
    %1833 = vmatprep.subr.mxu0 0.0
    %1834 = vmatpush1.msra.mxu0 %v1218
    %1835 = vmatprep.subr.mxu0 0.0
    %1836 = vmatpush1.msra.mxu0 %v1219
    %1837 = vmatprep.subr.mxu0 0.0
    %1838 = vmatpush1.msra.mxu0 %v1220
    %1839 = vmatprep.subr.mxu0 0.0
    %1840 = vmatpush1.msra.mxu0 %v1221
    %1841 = vmatprep.subr.mxu0 0.0
    %1842 = vmatpush1.msra.mxu0 %v1222
    %1843 = vmatprep.subr.mxu0 0.0
    %1844 = vmatpush1.msra.mxu0 %v1223
    %1845 = vmatprep.subr.mxu0 0.0
    %1846 = vmatpush1.msra.mxu0 %v1224
    %1847 = vmatprep.subr.mxu0 0.0
    %1848 = vmatpush1.msra.mxu0 %v1225
    %1849 = vmatprep.subr.mxu0 0.0
    %1850 = vmatpush1.msra.mxu0 %v1226
    %1851 = vmatprep.subr.mxu0 0.0
    %1852 = vmatpush1.msra.mxu0 %v1227
    %1853 = vmatprep.subr.mxu0 0.0
    %1854 = vmatpush1.msra.mxu0 %v1228
    %1855 = vmatprep.subr.mxu0 0.0
    %1856 = vmatpush1.msra.mxu0 %v1229
    %1857 = vmatprep.subr.mxu0 0.0
    %1858 = vmatpush1.msra.mxu0 %v1230
    %1859 = vmatprep.subr.mxu0 0.0
    %1860 = vmatpush1.msra.mxu0 %v1231
    %1861 = vmatprep.subr.mxu0 0.0
    %1862 = vmatpush1.msra.mxu0 %v1232
    %1863 = vmatprep.subr.mxu0 0.0
    %1864 = vmatpush1.msra.mxu0 %v1233
    %1865 = vmatprep.subr.mxu0 0.0
    %1866 = vmatpush1.msra.mxu0 0.0
    %1867 = vmatprep.subr.mxu0 0.0
    %1868 = vmatpush1.msra.mxu0 0.0
    %1869 = vmatprep.subr.mxu0 0.0
    %1870 = vmatpush1.msra.mxu0 0.0
    %1871 = vmatprep.subr.mxu0 0.0
    %1872 = vmatpush1.msra.mxu0 0.0
    %1873 = vmatprep.subr.mxu0 0.0
    %1874 = vmatpush1.msra.mxu0 0.0
    %1875 = vmatprep.subr.mxu0 0.0
    %1876 = vmatpush1.msra.mxu0 0.0
    %1877 = vmatprep.subr.mxu0 0.0
    %1878 = vmatpush1.msra.mxu0 0.0
    %1879 = vmatprep.subr.mxu0 0.0
    %1880 = vmatpush1.msra.mxu0 0.0
    %1881 = vmatprep.subr.mxu0 0.0
    %1882 = vmatpush1.msra.mxu0 0.0
    %1883 = vmatprep.subr.mxu0 0.0
    %1884 = vmatpush1.msra.mxu0 0.0
    %1885 = vmatprep.subr.mxu0 0.0
    %1886 = vmatpush1.msra.mxu0 0.0
    %1887 = vmatprep.subr.mxu0 0.0
    %1888 = vmatpush1.msra.mxu0 0.0
    %1889 = vmatprep.subr.mxu0 0.0
    %1890 = vmatpush1.msra.mxu0 0.0
    %1891 = vmatprep.subr.mxu0 0.0
    %1892 = vmatpush1.msra.mxu0 0.0
    %1893 = vmatprep.subr.mxu0 0.0
    %1894 = vmatpush1.msra.mxu0 0.0
    %1895 = vmatprep.subr.mxu0 0.0
    %1896 = vmatpush1.msra.mxu0 0.0
    %1897 = vmatprep.mubr.f32.mxu0 0.0
    %1898 = vmatmul.mubr.f32.gmra.mrb[0].mxu0 %v1760
    %v1899 = vpop.f32.mrb[0].mxu0
    %v1900 = vadd.f32 0.0, %v1899
    %v1901 = vpop.f32.mrb[0].mxu0
    %1902 = vdwg.mxu0
    %v1903 = vsel %vm728, %v1737, 0.0
    %1904 = vadd.xlane.f32.xlu0 %v1903
    %v1905 = vpop.xlane.xlu0 %1904
    %v1906 = vmax.f32 %v1905, 1e-05
    %v1907 = vrcp.pop %v1906
    %v1909 = vrot.slane %v1907, 1
    %v1912 = vmul.f32 %v1830, %v1907
    %v1913 = vmul.f32 %v1900, %v1909
    %1914 = vmatprep.subr.mxu0 0.0
    %1915 = vmatpush1.msra.mxu0 %v58
    %1916 = vmatprep.subr.mxu0 0.0
    %1917 = vmatpush1.msra.mxu0 %v59
    %1918 = vmatprep.subr.mxu0 0.0
    %1919 = vmatpush1.msra.mxu0 %v60
    %1920 = vmatprep.subr.mxu0 0.0
    %1921 = vmatpush1.msra.mxu0 %v61
    %1922 = vmatprep.subr.mxu0 0.0
    %1923 = vmatpush1.msra.mxu0 0.0
    %1924 = vmatprep.subr.mxu0 0.0
    %1925 = vmatpush1.msra.mxu0 0.0
    %1926 = vmatprep.subr.mxu0 0.0
    %1927 = vmatpush1.msra.mxu0 0.0
    %1928 = vmatprep.subr.mxu0 0.0
    %1929 = vmatpush1.msra.mxu0 0.0
    %1930 = vmatprep.subr.mxu0 0.0
    %1931 = vmatpush1.msra.mxu0 0.0
    %1932 = vmatprep.subr.mxu0 0.0
    %1933 = vmatpush1.msra.mxu0 0.0
    %1934 = vmatprep.subr.mxu0 0.0
    %1935 = vmatpush1.msra.mxu0 0.0
    %1936 = vmatprep.subr.mxu0 0.0
    %1937 = vmatpush1.msra.mxu0 0.0
    %1938 = vmatprep.subr.mxu0 0.0
    %1939 = vmatpush1.msra.mxu0 0.0
    %1940 = vmatprep.subr.mxu0 0.0
    %1941 = vmatpush1.msra.mxu0 0.0
    %1942 = vmatprep.subr.mxu0 0.0
    %1943 = vmatpush1.msra.mxu0 0.0
    %1944 = vmatprep.subr.mxu0 0.0
    %1945 = vmatpush1.msra.mxu0 0.0
    %1946 = vmatprep.subr.mxu0 0.0
    %1947 = vmatpush1.msra.mxu0 0.0
    %1948 = vmatprep.subr.mxu0 0.0
    %1949 = vmatpush1.msra.mxu0 0.0
    %1950 = vmatprep.subr.mxu0 0.0
    %1951 = vmatpush1.msra.mxu0 0.0
    %1952 = vmatprep.subr.mxu0 0.0
    %1953 = vmatpush1.msra.mxu0 0.0
    %1954 = vmatprep.subr.mxu0 0.0
    %1955 = vmatpush1.msra.mxu0 0.0
    %1956 = vmatprep.subr.mxu0 0.0
    %1957 = vmatpush1.msra.mxu0 0.0
    %1958 = vmatprep.subr.mxu0 0.0
    %1959 = vmatpush1.msra.mxu0 0.0
    %1960 = vmatprep.subr.mxu0 0.0
    %1961 = vmatpush1.msra.mxu0 0.0
    %1962 = vmatprep.subr.mxu0 0.0
    %1963 = vmatpush1.msra.mxu0 0.0
    %1964 = vmatprep.subr.mxu0 0.0
    %1965 = vmatpush1.msra.mxu0 0.0
    %1966 = vmatprep.subr.mxu0 0.0
    %1967 = vmatpush1.msra.mxu0 0.0
    %1968 = vmatprep.subr.mxu0 0.0
    %1969 = vmatpush1.msra.mxu0 0.0
    %1970 = vmatprep.subr.mxu0 0.0
    %1971 = vmatpush1.msra.mxu0 0.0
    %1972 = vmatprep.subr.mxu0 0.0
    %1973 = vmatpush1.msra.mxu0 0.0
    %1974 = vmatprep.subr.mxu0 0.0
    %1975 = vmatpush1.msra.mxu0 0.0
    %1976 = vmatprep.subr.mxu0 0.0
    %1977 = vmatpush1.msra.mxu0 0.0
    %1978 = vmatprep.mubr.f32.mxu0 0.0
    %1979 = vmatmul.mubr.f32.gmra.mrb[0].mxu0 %v1236
    %v1980 = vpop.f32.mrb[0].mxu0
    %v1981 = vadd.f32 0.0, %v1980
    %v1982 = vpop.f32.mrb[0].mxu0
    %1983 = vdwg.mxu0
    %v1986 = vrot.slane %v1913, 7
    %v1987 = vsel %vm724, %v1986, %v1912
    %v1988 = vsel %vm197, %v1987, 0
    %1990 = vmatprep.subr.mxu0 0.0
    %1991 = vmatpush1.msra.mxu0 %v54
    %1992 = vmatprep.subr.mxu0 0.0
    %1993 = vmatpush1.msra.mxu0 %v55
    %1994 = vmatprep.subr.mxu0 0.0
    %1995 = vmatpush1.msra.mxu0 %v56
    %1996 = vmatprep.subr.mxu0 0.0
    %1997 = vmatpush1.msra.mxu0 %v57
    %1998 = vmatprep.subr.mxu0 0.0
    %1999 = vmatpush1.msra.mxu0 0.0
    %2000 = vmatprep.subr.mxu0 0.0
    %2001 = vmatpush1.msra.mxu0 0.0
    %2002 = vmatprep.subr.mxu0 0.0
    %2003 = vmatpush1.msra.mxu0 0.0
    %2004 = vmatprep.subr.mxu0 0.0
    %2005 = vmatpush1.msra.mxu0 0.0
    %2006 = vmatprep.subr.mxu0 0.0
    %2007 = vmatpush1.msra.mxu0 0.0
    %2008 = vmatprep.subr.mxu0 0.0
    %2009 = vmatpush1.msra.mxu0 0.0
    %2010 = vmatprep.subr.mxu0 0.0
    %2011 = vmatpush1.msra.mxu0 0.0
    %2012 = vmatprep.subr.mxu0 0.0
    %2013 = vmatpush1.msra.mxu0 0.0
    %2014 = vmatprep.subr.mxu0 0.0
    %2015 = vmatpush1.msra.mxu0 0.0
    %2016 = vmatprep.subr.mxu0 0.0
    %2017 = vmatpush1.msra.mxu0 0.0
    %2018 = vmatprep.subr.mxu0 0.0
    %2019 = vmatpush1.msra.mxu0 0.0
    %2020 = vmatprep.subr.mxu0 0.0
    %2021 = vmatpush1.msra.mxu0 0.0
    %2022 = vmatprep.subr.mxu0 0.0
    %2023 = vmatpush1.msra.mxu0 0.0
    %2024 = vmatprep.subr.mxu0 0.0
    %2025 = vmatpush1.msra.mxu0 0.0
    %2026 = vmatprep.subr.mxu0 0.0
    %2027 = vmatpush1.msra.mxu0 0.0
    %2028 = vmatprep.subr.mxu0 0.0
    %2029 = vmatpush1.msra.mxu0 0.0
    %2030 = vmatprep.subr.mxu0 0.0
    %2031 = vmatpush1.msra.mxu0 0.0
    %2032 = vmatprep.subr.mxu0 0.0
    %2033 = vmatpush1.msra.mxu0 0.0
    %2034 = vmatprep.subr.mxu0 0.0
    %2035 = vmatpush1.msra.mxu0 0.0
    %2036 = vmatprep.subr.mxu0 0.0
    %2037 = vmatpush1.msra.mxu0 0.0
    %2038 = vmatprep.subr.mxu0 0.0
    %2039 = vmatpush1.msra.mxu0 0.0
    %2040 = vmatprep.subr.mxu0 0.0
    %2041 = vmatpush1.msra.mxu0 0.0
    %2042 = vmatprep.subr.mxu0 0.0
    %2043 = vmatpush1.msra.mxu0 0.0
    %2044 = vmatprep.subr.mxu0 0.0
    %2045 = vmatpush1.msra.mxu0 0.0
    %2046 = vmatprep.subr.mxu0 0.0
    %2047 = vmatpush1.msra.mxu0 0.0
    %2048 = vmatprep.subr.mxu0 0.0
    %2049 = vmatpush1.msra.mxu0 0.0
    %2050 = vmatprep.subr.mxu0 0.0
    %2051 = vmatpush1.msra.mxu0 0.0
    %2052 = vmatprep.subr.mxu0 0.0
    %2053 = vmatpush1.msra.mxu0 0.0
    %2054 = vmatprep.mubr.f32.mxu0 0.0
    %2055 = vmatmul.mubr.f32.gmra.mrb[0].mxu0 %v1988
    %v2056 = vpop.f32.mrb[0].mxu0
    %v2057 = vadd.f32 %v1981, %v2056
    %v2058 = vpop.f32.mrb[0].mxu0
    %2059 = vdwg.mxu0
    %v2060 = vadd.f32 %v2057, %v1067
    %v2061 = vxor.u32 %v2060, 2147483648
    %v2062 = vmul.f32 %v2061, 1.442695
    %v2063 = vpow.pop %v2062
    %v2064 = vadd.f32 %v2063, 1.0
    %v2065 = vrcp.pop %v2064
    %v2066 = vmul.f32 1.0, %v2065
    %v2067 = vtanh.pop %v2060
    %v2068 = vmul.f32 %v2066, %v1091
    %2070 = vrot.lane.b32.xlu0 %v2067, 64
    %v2071 = vpop.permute.xlu0 %2070
    %v2073 = vmul.f32 %v2066, %v2071
    %2075 = vrot.lane.b32.xlu0 %v2073, 32
    %v2076 = vpop.permute.xlu0 %2075
    %v2078 = vadd.f32 %v2068, %v2076
    %v2079 = vtanh.pop %v2078
    %2081 = vrot.lane.b32.xlu0 %v2079, 64
    %v2082 = vpop.permute.xlu0 %2081
    %v2084 = vmul.f32 %v2066, %v2082
    %2086 = vrot.lane.b32.xlu0 %v2084, 32
    %v2087 = vpop.permute.xlu0 %2086
    %s2089 = scalar_lea.vmem %s10, 2
    %2090 = vst.msk [vmem:[%s2089] sm:$0x3] %vm1102, %v2087
    %s2091 = scalar_lea.vmem %s0, 256
    %v2092 = vld [vmem:[%s2091] sm:$0xf]
    %v2093 = vld [vmem:[%s2091 + $0x4] sm:$0xf]
    %v2094 = vld [vmem:[%s2091 + $0x8] sm:$0xf]
    %v2095 = vld [vmem:[%s2091 + $0xc] sm:$0xf]
    %v2096 = vld [vmem:[%s2091 + $0x10] sm:$0xf]
    %v2097 = vld [vmem:[%s2091 + $0x14] sm:$0xf]
    %v2098 = vld [vmem:[%s2091 + $0x18] sm:$0xf]
    %v2099 = vld [vmem:[%s2091 + $0x1c] sm:$0xf]
    %v2100 = vld [vmem:[%s2091 + $0x20] sm:$0xf]
    %v2101 = vld [vmem:[%s2091 + $0x24] sm:$0xf]
    %v2102 = vld [vmem:[%s2091 + $0x28] sm:$0xf]
    %v2103 = vld [vmem:[%s2091 + $0x2c] sm:$0xf]
    %v2104 = vld [vmem:[%s2091 + $0x30] sm:$0xf]
    %v2105 = vld [vmem:[%s2091 + $0x34] sm:$0xf]
    %v2106 = vld [vmem:[%s2091 + $0x38] sm:$0xf]
    %v2107 = vld [vmem:[%s2091 + $0x3c] sm:$0xf]
    %v2108 = vld [vmem:[%s2091 + $0x40] sm:$0xf]
    %v2109 = vld [vmem:[%s2091 + $0x44] sm:$0xf]
    %v2110 = vld [vmem:[%s2091 + $0x48] sm:$0xf]
    %v2111 = vld [vmem:[%s2091 + $0x4c] sm:$0xf]
    %v2112 = vld [vmem:[%s2091 + $0x50] sm:$0xf]
    %v2113 = vld [vmem:[%s2091 + $0x54] sm:$0xf]
    %v2114 = vld [vmem:[%s2091 + $0x58] sm:$0xf]
    %v2115 = vld [vmem:[%s2091 + $0x5c] sm:$0xf]
    %v2116 = vld [vmem:[%s2091 + $0x60] sm:$0xf]
    %v2117 = vld [vmem:[%s2091 + $0x64] sm:$0xf]
    %v2118 = vld [vmem:[%s2091 + $0x68] sm:$0xf]
    %v2119 = vld [vmem:[%s2091 + $0x6c] sm:$0xf]
    %v2120 = vld [vmem:[%s2091 + $0x70] sm:$0xf]
    %v2121 = vld [vmem:[%s2091 + $0x74] sm:$0xf]
    %v2122 = vld [vmem:[%s2091 + $0x78] sm:$0xf]
    %v2123 = vld [vmem:[%s2091 + $0x7c] sm:$0xf]
    %v2124 = vunpack.c.l.bf16 %v2092
    %v2125 = vunpack.c.l.bf16 %v2093
    %v2126 = vunpack.c.l.bf16 %v2094
    %v2127 = vunpack.c.l.bf16 %v2095
    %v2128 = vunpack.c.l.bf16 %v2096
    %v2129 = vunpack.c.l.bf16 %v2097
    %v2130 = vunpack.c.l.bf16 %v2098
    %v2131 = vunpack.c.l.bf16 %v2099
    %v2132 = vunpack.c.l.bf16 %v2100
    %v2133 = vunpack.c.l.bf16 %v2101
    %v2134 = vunpack.c.l.bf16 %v2102
    %v2135 = vunpack.c.l.bf16 %v2103
    %v2136 = vunpack.c.l.bf16 %v2104
    %v2137 = vunpack.c.l.bf16 %v2105
    %v2138 = vunpack.c.l.bf16 %v2106
    %v2139 = vunpack.c.l.bf16 %v2107
    %v2140 = vunpack.c.l.bf16 %v2108
    %v2141 = vunpack.c.l.bf16 %v2109
    %v2142 = vunpack.c.l.bf16 %v2110
    %v2143 = vunpack.c.l.bf16 %v2111
    %v2144 = vunpack.c.l.bf16 %v2112
    %v2145 = vunpack.c.l.bf16 %v2113
    %v2146 = vunpack.c.l.bf16 %v2114
    %v2147 = vunpack.c.l.bf16 %v2115
    %v2148 = vunpack.c.l.bf16 %v2116
    %v2149 = vunpack.c.l.bf16 %v2117
    %v2150 = vunpack.c.l.bf16 %v2118
    %v2151 = vunpack.c.l.bf16 %v2119
    %v2152 = vunpack.c.l.bf16 %v2120
    %v2153 = vunpack.c.l.bf16 %v2121
    %v2154 = vunpack.c.l.bf16 %v2122
    %v2155 = vunpack.c.l.bf16 %v2123
    %s2156 = scalar_lea.vmem %s1, 256
    %v2157 = vld [vmem:[%s2156] sm:$0xf]
    %v2158 = vld [vmem:[%s2156 + $0x4] sm:$0xf]
    %v2159 = vld [vmem:[%s2156 + $0x8] sm:$0xf]
    %v2160 = vld [vmem:[%s2156 + $0xc] sm:$0xf]
    %v2161 = vld [vmem:[%s2156 + $0x10] sm:$0xf]
    %v2162 = vld [vmem:[%s2156 + $0x14] sm:$0xf]
    %v2163 = vld [vmem:[%s2156 + $0x18] sm:$0xf]
    %v2164 = vld [vmem:[%s2156 + $0x1c] sm:$0xf]
    %v2165 = vld [vmem:[%s2156 + $0x20] sm:$0xf]
    %v2166 = vld [vmem:[%s2156 + $0x24] sm:$0xf]
    %v2167 = vld [vmem:[%s2156 + $0x28] sm:$0xf]
    %v2168 = vld [vmem:[%s2156 + $0x2c] sm:$0xf]
    %v2169 = vld [vmem:[%s2156 + $0x30] sm:$0xf]
    %v2170 = vld [vmem:[%s2156 + $0x34] sm:$0xf]
    %v2171 = vld [vmem:[%s2156 + $0x38] sm:$0xf]
    %v2172 = vld [vmem:[%s2156 + $0x3c] sm:$0xf]
    %v2173 = vld [vmem:[%s2156 + $0x40] sm:$0xf]
    %v2174 = vld [vmem:[%s2156 + $0x44] sm:$0xf]
    %v2175 = vld [vmem:[%s2156 + $0x48] sm:$0xf]
    %v2176 = vld [vmem:[%s2156 + $0x4c] sm:$0xf]
    %v2177 = vld [vmem:[%s2156 + $0x50] sm:$0xf]
    %v2178 = vld [vmem:[%s2156 + $0x54] sm:$0xf]
    %v2179 = vld [vmem:[%s2156 + $0x58] sm:$0xf]
    %v2180 = vld [vmem:[%s2156 + $0x5c] sm:$0xf]
    %v2181 = vld [vmem:[%s2156 + $0x60] sm:$0xf]
    %v2182 = vld [vmem:[%s2156 + $0x64] sm:$0xf]
    %v2183 = vld [vmem:[%s2156 + $0x68] sm:$0xf]
    %v2184 = vld [vmem:[%s2156 + $0x6c] sm:$0xf]
    %v2185 = vld [vmem:[%s2156 + $0x70] sm:$0xf]
    %v2186 = vld [vmem:[%s2156 + $0x74] sm:$0xf]
    %v2187 = vld [vmem:[%s2156 + $0x78] sm:$0xf]
    %v2188 = vld [vmem:[%s2156 + $0x7c] sm:$0xf]
    %v2189 = vunpack.c.l.bf16 %v2157
    %v2190 = vunpack.c.l.bf16 %v2158
    %v2191 = vunpack.c.l.bf16 %v2159
    %v2192 = vunpack.c.l.bf16 %v2160
    %v2193 = vunpack.c.l.bf16 %v2161
    %v2194 = vunpack.c.l.bf16 %v2162
    %v2195 = vunpack.c.l.bf16 %v2163
    %v2196 = vunpack.c.l.bf16 %v2164
    %v2197 = vunpack.c.l.bf16 %v2165
    %v2198 = vunpack.c.l.bf16 %v2166
    %v2199 = vunpack.c.l.bf16 %v2167
    %v2200 = vunpack.c.l.bf16 %v2168
    %v2201 = vunpack.c.l.bf16 %v2169
    %v2202 = vunpack.c.l.bf16 %v2170
    %v2203 = vunpack.c.l.bf16 %v2171
    %v2204 = vunpack.c.l.bf16 %v2172
    %v2205 = vunpack.c.l.bf16 %v2173
    %v2206 = vunpack.c.l.bf16 %v2174
    %v2207 = vunpack.c.l.bf16 %v2175
    %v2208 = vunpack.c.l.bf16 %v2176
    %v2209 = vunpack.c.l.bf16 %v2177
    %v2210 = vunpack.c.l.bf16 %v2178
    %v2211 = vunpack.c.l.bf16 %v2179
    %v2212 = vunpack.c.l.bf16 %v2180
    %v2213 = vunpack.c.l.bf16 %v2181
    %v2214 = vunpack.c.l.bf16 %v2182
    %v2215 = vunpack.c.l.bf16 %v2183
    %v2216 = vunpack.c.l.bf16 %v2184
    %v2217 = vunpack.c.l.bf16 %v2185
    %v2218 = vunpack.c.l.bf16 %v2186
    %v2219 = vunpack.c.l.bf16 %v2187
    %v2220 = vunpack.c.l.bf16 %v2188
    %s2221 = scalar_lea.vmem %s2, 4
    %v2222 = vld [vmem:[%s2221] sm:$0x3]
    %v2223 = vsel %vm197, %v2087, 0
    %2225 = vmatprep.subr.mxu0 0.0
    %2226 = vmatpush1.msra.mxu0 %v49
    %2227 = vmatprep.subr.mxu0 0.0
    %2228 = vmatpush1.msra.mxu0 %v50
    %2229 = vmatprep.subr.mxu0 0.0
    %2230 = vmatpush1.msra.mxu0 %v51
    %2231 = vmatprep.subr.mxu0 0.0
    %2232 = vmatpush1.msra.mxu0 %v52
    %2233 = vmatprep.subr.mxu0 0.0
    %2234 = vmatpush1.msra.mxu0 0.0
    %2235 = vmatprep.subr.mxu0 0.0
    %2236 = vmatpush1.msra.mxu0 0.0
    %2237 = vmatprep.subr.mxu0 0.0
    %2238 = vmatpush1.msra.mxu0 0.0
    %2239 = vmatprep.subr.mxu0 0.0
    %2240 = vmatpush1.msra.mxu0 0.0
    %2241 = vmatprep.subr.mxu0 0.0
    %2242 = vmatpush1.msra.mxu0 0.0
    %2243 = vmatprep.subr.mxu0 0.0
    %2244 = vmatpush1.msra.mxu0 0.0
    %2245 = vmatprep.subr.mxu0 0.0
    %2246 = vmatpush1.msra.mxu0 0.0
    %2247 = vmatprep.subr.mxu0 0.0
    %2248 = vmatpush1.msra.mxu0 0.0
    %2249 = vmatprep.subr.mxu0 0.0
    %2250 = vmatpush1.msra.mxu0 0.0
    %2251 = vmatprep.subr.mxu0 0.0
    %2252 = vmatpush1.msra.mxu0 0.0
    %2253 = vmatprep.subr.mxu0 0.0
    %2254 = vmatpush1.msra.mxu0 0.0
    %2255 = vmatprep.subr.mxu0 0.0
    %2256 = vmatpush1.msra.mxu0 0.0
    %2257 = vmatprep.subr.mxu0 0.0
    %2258 = vmatpush1.msra.mxu0 0.0
    %2259 = vmatprep.subr.mxu0 0.0
    %2260 = vmatpush1.msra.mxu0 0.0
    %2261 = vmatprep.subr.mxu0 0.0
    %2262 = vmatpush1.msra.mxu0 0.0
    %2263 = vmatprep.subr.mxu0 0.0
    %2264 = vmatpush1.msra.mxu0 0.0
    %2265 = vmatprep.subr.mxu0 0.0
    %2266 = vmatpush1.msra.mxu0 0.0
    %2267 = vmatprep.subr.mxu0 0.0
    %2268 = vmatpush1.msra.mxu0 0.0
    %2269 = vmatprep.subr.mxu0 0.0
    %2270 = vmatpush1.msra.mxu0 0.0
    %2271 = vmatprep.subr.mxu0 0.0
    %2272 = vmatpush1.msra.mxu0 0.0
    %2273 = vmatprep.subr.mxu0 0.0
    %2274 = vmatpush1.msra.mxu0 0.0
    %2275 = vmatprep.subr.mxu0 0.0
    %2276 = vmatpush1.msra.mxu0 0.0
    %2277 = vmatprep.subr.mxu0 0.0
    %2278 = vmatpush1.msra.mxu0 0.0
    %2279 = vmatprep.subr.mxu0 0.0
    %2280 = vmatpush1.msra.mxu0 0.0
    %2281 = vmatprep.subr.mxu0 0.0
    %2282 = vmatpush1.msra.mxu0 0.0
    %2283 = vmatprep.subr.mxu0 0.0
    %2284 = vmatpush1.msra.mxu0 0.0
    %2285 = vmatprep.subr.mxu0 0.0
    %2286 = vmatpush1.msra.mxu0 0.0
    %2287 = vmatprep.subr.mxu0 0.0
    %2288 = vmatpush1.msra.mxu0 0.0
    %2289 = vmatprep.mubr.f32.mxu0 0.0
    %2290 = vmatmul.mubr.f32.gmra.mrb[0].mxu0 %v2223
    %v2291 = vpop.f32.mrb[0].mxu0
    %v2292 = vadd.f32 0.0, %v2291
    %v2293 = vpop.f32.mrb[0].mxu0
    %2294 = vdwg.mxu0
    %v2297 = vunpack.c.l.s4 1966171168
    %v2298 = vunpack.c.0.s8 %v2297
    %v2299 = vlaneseq
    %v2300 = vshrl.u32 %v2299, 7
    %v2301 = vsub.s32 %v2298, %v2300
    %v2302 = vrot.slane %v2292, %v2301
    %v2303 = vcombine.high %v2302, %v2302
    %v2305 = vunpack.c.l.s4 1966171168
    %v2306 = vunpack.c.0.s8 %v2305
    %v2307 = vlaneseq
    %v2308 = vshrl.u32 %v2307, 7
    %v2309 = vsub.s32 %v2306, %v2308
    %v2310 = vrot.slane %v2302, %v2309
    %v2312 = vunpack.c.l.s4 1966171168
    %v2313 = vunpack.c.0.s8 %v2312
    %v2314 = vlaneseq
    %v2315 = vshrl.u32 %v2314, 7
    %v2316 = vsub.s32 %v2313, %v2315
    %v2317 = vrot.slane %v2303, %v2316
    %v2318 = vlaneseq
    %v2319 = vshrl.u32 %v2318, 7
    %v2320 = vsub.s32 0, %v2319
    %v2321 = vrot.slane %v2310, %v2320
    %v2322 = vlaneseq
    %v2323 = vshrl.u32 %v2322, 7
    %v2324 = vsub.s32 0, %v2323
    %v2325 = vrot.slane %v2317, %v2324
    %v2328 = vadd.f32 %v2321, %v2124
    %v2329 = vadd.f32 %v2321, %v2125
    %v2330 = vadd.f32 %v2321, %v2126
    %v2331 = vadd.f32 %v2321, %v2127
    %v2332 = vadd.f32 %v2321, %v2128
    %v2333 = vadd.f32 %v2321, %v2129
    %v2334 = vadd.f32 %v2321, %v2130
    %v2335 = vadd.f32 %v2321, %v2131
    %v2336 = vadd.f32 %v2321, %v2132
    %v2337 = vadd.f32 %v2321, %v2133
    %v2338 = vadd.f32 %v2321, %v2134
    %v2339 = vadd.f32 %v2321, %v2135
    %v2340 = vadd.f32 %v2321, %v2136
    %v2341 = vadd.f32 %v2321, %v2137
    %v2342 = vadd.f32 %v2321, %v2138
    %v2343 = vadd.f32 %v2321, %v2139
    %v2344 = vadd.f32 %v2325, %v2140
    %v2345 = vadd.f32 %v2325, %v2141
    %v2346 = vadd.f32 %v2325, %v2142
    %v2347 = vadd.f32 %v2325, %v2143
    %v2348 = vadd.f32 %v2325, %v2144
    %v2349 = vadd.f32 %v2325, %v2145
    %v2350 = vadd.f32 %v2325, %v2146
    %v2351 = vadd.f32 %v2325, %v2147
    %v2352 = vadd.f32 %v2325, %v2148
    %v2353 = vadd.f32 %v2325, %v2149
    %v2354 = vadd.f32 %v2325, %v2150
    %v2355 = vadd.f32 %v2325, %v2151
    %v2356 = vadd.f32 %v2325, %v2152
    %v2357 = vadd.f32 %v2325, %v2153
    %v2358 = vadd.f32 %v2325, %v2154
    %v2359 = vadd.f32 %v2325, %v2155
    %v2360 = vtanh.pop %v2328
    %v2361 = vtanh.pop %v2329
    %v2362 = vtanh.pop %v2330
    %v2363 = vtanh.pop %v2331
    %v2364 = vtanh.pop %v2332
    %v2365 = vtanh.pop %v2333
    %v2366 = vtanh.pop %v2334
    %v2367 = vtanh.pop %v2335
    %v2368 = vtanh.pop %v2336
    %v2369 = vtanh.pop %v2337
    %v2370 = vtanh.pop %v2338
    %v2371 = vtanh.pop %v2339
    %v2372 = vtanh.pop %v2340
    %v2373 = vtanh.pop %v2341
    %v2374 = vtanh.pop %v2342
    %v2375 = vtanh.pop %v2343
    %v2376 = vtanh.pop %v2344
    %v2377 = vtanh.pop %v2345
    %v2378 = vtanh.pop %v2346
    %v2379 = vtanh.pop %v2347
    %v2380 = vtanh.pop %v2348
    %v2381 = vtanh.pop %v2349
    %v2382 = vtanh.pop %v2350
    %v2383 = vtanh.pop %v2351
    %v2384 = vtanh.pop %v2352
    %v2385 = vtanh.pop %v2353
    %v2386 = vtanh.pop %v2354
    %v2387 = vtanh.pop %v2355
    %v2388 = vtanh.pop %v2356
    %v2389 = vtanh.pop %v2357
    %v2390 = vtanh.pop %v2358
    %v2391 = vtanh.pop %v2359
    %v2392 = vmul.f32 %v2360, %v372
    %v2393 = vmul.f32 %v2361, %v372
    %v2394 = vmul.f32 %v2362, %v372
    %v2395 = vmul.f32 %v2363, %v372
    %v2396 = vmul.f32 %v2364, %v372
    %v2397 = vmul.f32 %v2365, %v372
    %v2398 = vmul.f32 %v2366, %v372
    %v2399 = vmul.f32 %v2367, %v372
    %v2400 = vmul.f32 %v2368, %v372
    %v2401 = vmul.f32 %v2369, %v372
    %v2402 = vmul.f32 %v2370, %v372
    %v2403 = vmul.f32 %v2371, %v372
    %v2404 = vmul.f32 %v2372, %v372
    %v2405 = vmul.f32 %v2373, %v372
    %v2406 = vmul.f32 %v2374, %v372
    %v2407 = vmul.f32 %v2375, %v372
    %v2408 = vmul.f32 %v2376, %v372
    %v2409 = vmul.f32 %v2377, %v372
    %v2410 = vmul.f32 %v2378, %v372
    %v2411 = vmul.f32 %v2379, %v372
    %v2412 = vmul.f32 %v2380, %v372
    %v2413 = vmul.f32 %v2381, %v372
    %v2414 = vmul.f32 %v2382, %v372
    %v2415 = vmul.f32 %v2383, %v372
    %v2416 = vmul.f32 %v2384, %v372
    %v2417 = vmul.f32 %v2385, %v372
    %v2418 = vmul.f32 %v2386, %v372
    %v2419 = vmul.f32 %v2387, %v372
    %v2420 = vmul.f32 %v2388, %v372
    %v2421 = vmul.f32 %v2389, %v372
    %v2422 = vmul.f32 %v2390, %v372
    %v2423 = vmul.f32 %v2391, %v372
    %v2424 = vsel %vm197, %v2392, 0.0
    %2425 = vadd.xlane.f32.xlu0 %v2424
    %v2426 = vpop.xlane.xlu0 %2425
    %v2427 = vsel %vm197, %v2393, 0.0
    %2428 = vadd.xlane.f32.xlu0 %v2427
    %v2429 = vpop.xlane.xlu0 %2428
    %v2430 = vsel %vm197, %v2394, 0.0
    %2431 = vadd.xlane.f32.xlu0 %v2430
    %v2432 = vpop.xlane.xlu0 %2431
    %v2433 = vsel %vm197, %v2395, 0.0
    %2434 = vadd.xlane.f32.xlu0 %v2433
    %v2435 = vpop.xlane.xlu0 %2434
    %v2436 = vsel %vm197, %v2396, 0.0
    %2437 = vadd.xlane.f32.xlu0 %v2436
    %v2438 = vpop.xlane.xlu0 %2437
    %v2439 = vsel %vm197, %v2397, 0.0
    %2440 = vadd.xlane.f32.xlu0 %v2439
    %v2441 = vpop.xlane.xlu0 %2440
    %v2442 = vsel %vm197, %v2398, 0.0
    %2443 = vadd.xlane.f32.xlu0 %v2442
    %v2444 = vpop.xlane.xlu0 %2443
    %v2445 = vsel %vm197, %v2399, 0.0
    %2446 = vadd.xlane.f32.xlu0 %v2445
    %v2447 = vpop.xlane.xlu0 %2446
    %v2448 = vsel %vm197, %v2400, 0.0
    %2449 = vadd.xlane.f32.xlu0 %v2448
    %v2450 = vpop.xlane.xlu0 %2449
    %v2451 = vsel %vm197, %v2401, 0.0
    %2452 = vadd.xlane.f32.xlu0 %v2451
    %v2453 = vpop.xlane.xlu0 %2452
    %v2454 = vsel %vm197, %v2402, 0.0
    %2455 = vadd.xlane.f32.xlu0 %v2454
    %v2456 = vpop.xlane.xlu0 %2455
    %v2457 = vsel %vm197, %v2403, 0.0
    %2458 = vadd.xlane.f32.xlu0 %v2457
    %v2459 = vpop.xlane.xlu0 %2458
    %v2460 = vsel %vm197, %v2404, 0.0
    %2461 = vadd.xlane.f32.xlu0 %v2460
    %v2462 = vpop.xlane.xlu0 %2461
    %v2463 = vsel %vm197, %v2405, 0.0
    %2464 = vadd.xlane.f32.xlu0 %v2463
    %v2465 = vpop.xlane.xlu0 %2464
    %v2466 = vsel %vm197, %v2406, 0.0
    %2467 = vadd.xlane.f32.xlu0 %v2466
    %v2468 = vpop.xlane.xlu0 %2467
    %v2469 = vsel %vm197, %v2407, 0.0
    %2470 = vadd.xlane.f32.xlu0 %v2469
    %v2471 = vpop.xlane.xlu0 %2470
    %v2472 = vsel %vm197, %v2408, 0.0
    %2473 = vadd.xlane.f32.xlu0 %v2472
    %v2474 = vpop.xlane.xlu0 %2473
    %v2475 = vsel %vm197, %v2409, 0.0
    %2476 = vadd.xlane.f32.xlu0 %v2475
    %v2477 = vpop.xlane.xlu0 %2476
    %v2478 = vsel %vm197, %v2410, 0.0
    %2479 = vadd.xlane.f32.xlu0 %v2478
    %v2480 = vpop.xlane.xlu0 %2479
    %v2481 = vsel %vm197, %v2411, 0.0
    %2482 = vadd.xlane.f32.xlu0 %v2481
    %v2483 = vpop.xlane.xlu0 %2482
    %v2484 = vsel %vm197, %v2412, 0.0
    %2485 = vadd.xlane.f32.xlu0 %v2484
    %v2486 = vpop.xlane.xlu0 %2485
    %v2487 = vsel %vm197, %v2413, 0.0
    %2488 = vadd.xlane.f32.xlu0 %v2487
    %v2489 = vpop.xlane.xlu0 %2488
    %v2490 = vsel %vm197, %v2414, 0.0
    %2491 = vadd.xlane.f32.xlu0 %v2490
    %v2492 = vpop.xlane.xlu0 %2491
    %v2493 = vsel %vm197, %v2415, 0.0
    %2494 = vadd.xlane.f32.xlu0 %v2493
    %v2495 = vpop.xlane.xlu0 %2494
    %v2496 = vsel %vm197, %v2416, 0.0
    %2497 = vadd.xlane.f32.xlu0 %v2496
    %v2498 = vpop.xlane.xlu0 %2497
    %v2499 = vsel %vm197, %v2417, 0.0
    %2500 = vadd.xlane.f32.xlu0 %v2499
    %v2501 = vpop.xlane.xlu0 %2500
    %v2502 = vsel %vm197, %v2418, 0.0
    %2503 = vadd.xlane.f32.xlu0 %v2502
    %v2504 = vpop.xlane.xlu0 %2503
    %v2505 = vsel %vm197, %v2419, 0.0
    %2506 = vadd.xlane.f32.xlu0 %v2505
    %v2507 = vpop.xlane.xlu0 %2506
    %v2508 = vsel %vm197, %v2420, 0.0
    %2509 = vadd.xlane.f32.xlu0 %v2508
    %v2510 = vpop.xlane.xlu0 %2509
    %v2511 = vsel %vm197, %v2421, 0.0
    %2512 = vadd.xlane.f32.xlu0 %v2511
    %v2513 = vpop.xlane.xlu0 %2512
    %v2514 = vsel %vm197, %v2422, 0.0
    %2515 = vadd.xlane.f32.xlu0 %v2514
    %v2516 = vpop.xlane.xlu0 %2515
    %v2517 = vsel %vm197, %v2423, 0.0
    %2518 = vadd.xlane.f32.xlu0 %v2517
    %v2519 = vpop.xlane.xlu0 %2518
    %v2552 = vlaneseq
    %v2553 = vshrl.u32 %v2552, 7
    %v2554 = vsub.s32 %v64, %v2553
    %v2555 = vrot.slane %v2426, %v2554
    %v2556 = vlaneseq
    %v2557 = vshrl.u32 %v2556, 7
    %v2558 = vsub.s32 %v540, %v2557
    %v2559 = vrot.slane %v2429, %v2558
    %v2560 = vsel %vm545, %v2559, %v2555
    %v2561 = vlaneseq
    %v2562 = vshrl.u32 %v2561, 7
    %v2563 = vsub.s32 %v547, %v2562
    %v2564 = vrot.slane %v2432, %v2563
    %v2565 = vsel %vm552, %v2564, %v2560
    %v2566 = vlaneseq
    %v2567 = vshrl.u32 %v2566, 7
    %v2568 = vsub.s32 %v554, %v2567
    %v2569 = vrot.slane %v2435, %v2568
    %v2570 = vsel %vm559, %v2569, %v2565
    %v2571 = vlaneseq
    %v2572 = vshrl.u32 %v2571, 7
    %v2573 = vsub.s32 %v561, %v2572
    %v2574 = vrot.slane %v2438, %v2573
    %v2575 = vsel %vm566, %v2574, %v2570
    %v2576 = vlaneseq
    %v2577 = vshrl.u32 %v2576, 7
    %v2578 = vsub.s32 %v568, %v2577
    %v2579 = vrot.slane %v2441, %v2578
    %v2580 = vsel %vm573, %v2579, %v2575
    %v2581 = vlaneseq
    %v2582 = vshrl.u32 %v2581, 7
    %v2583 = vsub.s32 %v575, %v2582
    %v2584 = vrot.slane %v2444, %v2583
    %v2585 = vsel %vm580, %v2584, %v2580
    %v2586 = vlaneseq
    %v2587 = vshrl.u32 %v2586, 7
    %v2588 = vsub.s32 %v582, %v2587
    %v2589 = vrot.slane %v2447, %v2588
    %v2590 = vsel %vm587, %v2589, %v2585
    %v2591 = vlaneseq
    %v2592 = vshrl.u32 %v2591, 7
    %v2593 = vsub.s32 %v589, %v2592
    %v2594 = vrot.slane %v2450, %v2593
    %v2595 = vsel %vm594, %v2594, %v2590
    %v2596 = vlaneseq
    %v2597 = vshrl.u32 %v2596, 7
    %v2598 = vsub.s32 %v596, %v2597
    %v2599 = vrot.slane %v2453, %v2598
    %v2600 = vsel %vm601, %v2599, %v2595
    %v2601 = vlaneseq
    %v2602 = vshrl.u32 %v2601, 7
    %v2603 = vsub.s32 %v603, %v2602
    %v2604 = vrot.slane %v2456, %v2603
    %v2605 = vsel %vm608, %v2604, %v2600
    %v2606 = vlaneseq
    %v2607 = vshrl.u32 %v2606, 7
    %v2608 = vsub.s32 %v610, %v2607
    %v2609 = vrot.slane %v2459, %v2608
    %v2610 = vsel %vm615, %v2609, %v2605
    %v2611 = vlaneseq
    %v2612 = vshrl.u32 %v2611, 7
    %v2613 = vsub.s32 %v617, %v2612
    %v2614 = vrot.slane %v2462, %v2613
    %v2615 = vsel %vm622, %v2614, %v2610
    %v2616 = vlaneseq
    %v2617 = vshrl.u32 %v2616, 7
    %v2618 = vsub.s32 %v624, %v2617
    %v2619 = vrot.slane %v2465, %v2618
    %v2620 = vsel %vm629, %v2619, %v2615
    %v2621 = vlaneseq
    %v2622 = vshrl.u32 %v2621, 7
    %v2623 = vsub.s32 %v631, %v2622
    %v2624 = vrot.slane %v2468, %v2623
    %v2625 = vsel %vm636, %v2624, %v2620
    %v2626 = vlaneseq
    %v2627 = vshrl.u32 %v2626, 7
    %v2628 = vsub.s32 %v638, %v2627
    %v2629 = vrot.slane %v2471, %v2628
    %v2630 = vsel %vm643, %v2629, %v2625
    %v2631 = vlaneseq
    %v2632 = vshrl.u32 %v2631, 7
    %v2633 = vsub.s32 %v64, %v2632
    %v2634 = vrot.slane %v2474, %v2633
    %v2635 = vlaneseq
    %v2636 = vshrl.u32 %v2635, 7
    %v2637 = vsub.s32 %v540, %v2636
    %v2638 = vrot.slane %v2477, %v2637
    %v2639 = vsel %vm545, %v2638, %v2634
    %v2640 = vlaneseq
    %v2641 = vshrl.u32 %v2640, 7
    %v2642 = vsub.s32 %v547, %v2641
    %v2643 = vrot.slane %v2480, %v2642
    %v2644 = vsel %vm552, %v2643, %v2639
    %v2645 = vlaneseq
    %v2646 = vshrl.u32 %v2645, 7
    %v2647 = vsub.s32 %v554, %v2646
    %v2648 = vrot.slane %v2483, %v2647
    %v2649 = vsel %vm559, %v2648, %v2644
    %v2650 = vlaneseq
    %v2651 = vshrl.u32 %v2650, 7
    %v2652 = vsub.s32 %v561, %v2651
    %v2653 = vrot.slane %v2486, %v2652
    %v2654 = vsel %vm566, %v2653, %v2649
    %v2655 = vlaneseq
    %v2656 = vshrl.u32 %v2655, 7
    %v2657 = vsub.s32 %v568, %v2656
    %v2658 = vrot.slane %v2489, %v2657
    %v2659 = vsel %vm573, %v2658, %v2654
    %v2660 = vlaneseq
    %v2661 = vshrl.u32 %v2660, 7
    %v2662 = vsub.s32 %v575, %v2661
    %v2663 = vrot.slane %v2492, %v2662
    %v2664 = vsel %vm580, %v2663, %v2659
    %v2665 = vlaneseq
    %v2666 = vshrl.u32 %v2665, 7
    %v2667 = vsub.s32 %v582, %v2666
    %v2668 = vrot.slane %v2495, %v2667
    %v2669 = vsel %vm587, %v2668, %v2664
    %v2670 = vlaneseq
    %v2671 = vshrl.u32 %v2670, 7
    %v2672 = vsub.s32 %v589, %v2671
    %v2673 = vrot.slane %v2498, %v2672
    %v2674 = vsel %vm594, %v2673, %v2669
    %v2675 = vlaneseq
    %v2676 = vshrl.u32 %v2675, 7
    %v2677 = vsub.s32 %v596, %v2676
    %v2678 = vrot.slane %v2501, %v2677
    %v2679 = vsel %vm601, %v2678, %v2674
    %v2680 = vlaneseq
    %v2681 = vshrl.u32 %v2680, 7
    %v2682 = vsub.s32 %v603, %v2681
    %v2683 = vrot.slane %v2504, %v2682
    %v2684 = vsel %vm608, %v2683, %v2679
    %v2685 = vlaneseq
    %v2686 = vshrl.u32 %v2685, 7
    %v2687 = vsub.s32 %v610, %v2686
    %v2688 = vrot.slane %v2507, %v2687
    %v2689 = vsel %vm615, %v2688, %v2684
    %v2690 = vlaneseq
    %v2691 = vshrl.u32 %v2690, 7
    %v2692 = vsub.s32 %v617, %v2691
    %v2693 = vrot.slane %v2510, %v2692
    %v2694 = vsel %vm622, %v2693, %v2689
    %v2695 = vlaneseq
    %v2696 = vshrl.u32 %v2695, 7
    %v2697 = vsub.s32 %v624, %v2696
    %v2698 = vrot.slane %v2513, %v2697
    %v2699 = vsel %vm629, %v2698, %v2694
    %v2700 = vlaneseq
    %v2701 = vshrl.u32 %v2700, 7
    %v2702 = vsub.s32 %v631, %v2701
    %v2703 = vrot.slane %v2516, %v2702
    %v2704 = vsel %vm636, %v2703, %v2699
    %v2705 = vlaneseq
    %v2706 = vshrl.u32 %v2705, 7
    %v2707 = vsub.s32 %v638, %v2706
    %v2708 = vrot.slane %v2519, %v2707
    %v2709 = vsel %vm643, %v2708, %v2704
    %v2710 = vsel %vm724, %v2709, %v2630
    %v2712 = vsel %vm503, %v2710, -1e+30
    %v2713 = vsel %vm728, %v2712, -inf
    %2714 = vmax.xlane.f32.xlu0 %v2713
    %v2715 = vpop.xlane.xlu0 %2714
    %v2716 = vsub.f32 %v2712, %v2715
    %v2717 = vmul.f32 %v2716, 1.442695
    %v2718 = vpow.pop %v2717
    %v2719 = vsel %vm728, %v2718, 0.0
    %2720 = vadd.xlane.f32.xlu0 %v2719
    %v2721 = vpop.xlane.xlu0 %2720
    %v2722 = vrcp.pop %v2721
    %v2723 = vmul.f32 %v2718, %v2722
    %v2724 = vmul.f32 %v2723, %v2222
    %v2727 = vunpack.c.l.s4 1966171168
    %v2728 = vunpack.c.0.s8 %v2727
    %v2729 = vlaneseq
    %v2730 = vshrl.u32 %v2729, 7
    %v2731 = vsub.s32 %v2728, %v2730
    %v2732 = vrot.slane %v2724, %v2731
    %v2733 = vcombine.high %v2732, %v2732
    %v2735 = vunpack.c.l.s4 1966171168
    %v2736 = vunpack.c.0.s8 %v2735
    %v2737 = vlaneseq
    %v2738 = vshrl.u32 %v2737, 7
    %v2739 = vsub.s32 %v2736, %v2738
    %v2740 = vrot.slane %v2732, %v2739
    %v2742 = vunpack.c.l.s4 1966171168
    %v2743 = vunpack.c.0.s8 %v2742
    %v2744 = vlaneseq
    %v2745 = vshrl.u32 %v2744, 7
    %v2746 = vsub.s32 %v2743, %v2745
    %v2747 = vrot.slane %v2733, %v2746
    %2750 = vmatprep.subr.mxu0 0.0
    %2751 = vmatpush1.msra.mxu0 %v2189
    %2752 = vmatprep.subr.mxu0 0.0
    %2753 = vmatpush1.msra.mxu0 %v2190
    %2754 = vmatprep.subr.mxu0 0.0
    %2755 = vmatpush1.msra.mxu0 %v2191
    %2756 = vmatprep.subr.mxu0 0.0
    %2757 = vmatpush1.msra.mxu0 %v2192
    %2758 = vmatprep.subr.mxu0 0.0
    %2759 = vmatpush1.msra.mxu0 %v2193
    %2760 = vmatprep.subr.mxu0 0.0
    %2761 = vmatpush1.msra.mxu0 %v2194
    %2762 = vmatprep.subr.mxu0 0.0
    %2763 = vmatpush1.msra.mxu0 %v2195
    %2764 = vmatprep.subr.mxu0 0.0
    %2765 = vmatpush1.msra.mxu0 %v2196
    %2766 = vmatprep.subr.mxu0 0.0
    %2767 = vmatpush1.msra.mxu0 %v2197
    %2768 = vmatprep.subr.mxu0 0.0
    %2769 = vmatpush1.msra.mxu0 %v2198
    %2770 = vmatprep.subr.mxu0 0.0
    %2771 = vmatpush1.msra.mxu0 %v2199
    %2772 = vmatprep.subr.mxu0 0.0
    %2773 = vmatpush1.msra.mxu0 %v2200
    %2774 = vmatprep.subr.mxu0 0.0
    %2775 = vmatpush1.msra.mxu0 %v2201
    %2776 = vmatprep.subr.mxu0 0.0
    %2777 = vmatpush1.msra.mxu0 %v2202
    %2778 = vmatprep.subr.mxu0 0.0
    %2779 = vmatpush1.msra.mxu0 %v2203
    %2780 = vmatprep.subr.mxu0 0.0
    %2781 = vmatpush1.msra.mxu0 %v2204
    %2782 = vmatprep.subr.mxu0 0.0
    %2783 = vmatpush1.msra.mxu0 0.0
    %2784 = vmatprep.subr.mxu0 0.0
    %2785 = vmatpush1.msra.mxu0 0.0
    %2786 = vmatprep.subr.mxu0 0.0
    %2787 = vmatpush1.msra.mxu0 0.0
    %2788 = vmatprep.subr.mxu0 0.0
    %2789 = vmatpush1.msra.mxu0 0.0
    %2790 = vmatprep.subr.mxu0 0.0
    %2791 = vmatpush1.msra.mxu0 0.0
    %2792 = vmatprep.subr.mxu0 0.0
    %2793 = vmatpush1.msra.mxu0 0.0
    %2794 = vmatprep.subr.mxu0 0.0
    %2795 = vmatpush1.msra.mxu0 0.0
    %2796 = vmatprep.subr.mxu0 0.0
    %2797 = vmatpush1.msra.mxu0 0.0
    %2798 = vmatprep.subr.mxu0 0.0
    %2799 = vmatpush1.msra.mxu0 0.0
    %2800 = vmatprep.subr.mxu0 0.0
    %2801 = vmatpush1.msra.mxu0 0.0
    %2802 = vmatprep.subr.mxu0 0.0
    %2803 = vmatpush1.msra.mxu0 0.0
    %2804 = vmatprep.subr.mxu0 0.0
    %2805 = vmatpush1.msra.mxu0 0.0
    %2806 = vmatprep.subr.mxu0 0.0
    %2807 = vmatpush1.msra.mxu0 0.0
    %2808 = vmatprep.subr.mxu0 0.0
    %2809 = vmatpush1.msra.mxu0 0.0
    %2810 = vmatprep.subr.mxu0 0.0
    %2811 = vmatpush1.msra.mxu0 0.0
    %2812 = vmatprep.subr.mxu0 0.0
    %2813 = vmatpush1.msra.mxu0 0.0
    %2814 = vmatprep.mubr.f32.mxu0 0.0
    %2815 = vmatmul.mubr.f32.gmra.mrb[0].mxu0 %v2740
    %v2816 = vpop.f32.mrb[0].mxu0
    %v2817 = vadd.f32 0.0, %v2816
    %v2818 = vpop.f32.mrb[0].mxu0
    %2819 = vdwg.mxu0
    %2820 = vmatprep.subr.mxu0 0.0
    %2821 = vmatpush1.msra.mxu0 %v2205
    %2822 = vmatprep.subr.mxu0 0.0
    %2823 = vmatpush1.msra.mxu0 %v2206
    %2824 = vmatprep.subr.mxu0 0.0
    %2825 = vmatpush1.msra.mxu0 %v2207
    %2826 = vmatprep.subr.mxu0 0.0
    %2827 = vmatpush1.msra.mxu0 %v2208
    %2828 = vmatprep.subr.mxu0 0.0
    %2829 = vmatpush1.msra.mxu0 %v2209
    %2830 = vmatprep.subr.mxu0 0.0
    %2831 = vmatpush1.msra.mxu0 %v2210
    %2832 = vmatprep.subr.mxu0 0.0
    %2833 = vmatpush1.msra.mxu0 %v2211
    %2834 = vmatprep.subr.mxu0 0.0
    %2835 = vmatpush1.msra.mxu0 %v2212
    %2836 = vmatprep.subr.mxu0 0.0
    %2837 = vmatpush1.msra.mxu0 %v2213
    %2838 = vmatprep.subr.mxu0 0.0
    %2839 = vmatpush1.msra.mxu0 %v2214
    %2840 = vmatprep.subr.mxu0 0.0
    %2841 = vmatpush1.msra.mxu0 %v2215
    %2842 = vmatprep.subr.mxu0 0.0
    %2843 = vmatpush1.msra.mxu0 %v2216
    %2844 = vmatprep.subr.mxu0 0.0
    %2845 = vmatpush1.msra.mxu0 %v2217
    %2846 = vmatprep.subr.mxu0 0.0
    %2847 = vmatpush1.msra.mxu0 %v2218
    %2848 = vmatprep.subr.mxu0 0.0
    %2849 = vmatpush1.msra.mxu0 %v2219
    %2850 = vmatprep.subr.mxu0 0.0
    %2851 = vmatpush1.msra.mxu0 %v2220
    %2852 = vmatprep.subr.mxu0 0.0
    %2853 = vmatpush1.msra.mxu0 0.0
    %2854 = vmatprep.subr.mxu0 0.0
    %2855 = vmatpush1.msra.mxu0 0.0
    %2856 = vmatprep.subr.mxu0 0.0
    %2857 = vmatpush1.msra.mxu0 0.0
    %2858 = vmatprep.subr.mxu0 0.0
    %2859 = vmatpush1.msra.mxu0 0.0
    %2860 = vmatprep.subr.mxu0 0.0
    %2861 = vmatpush1.msra.mxu0 0.0
    %2862 = vmatprep.subr.mxu0 0.0
    %2863 = vmatpush1.msra.mxu0 0.0
    %2864 = vmatprep.subr.mxu0 0.0
    %2865 = vmatpush1.msra.mxu0 0.0
    %2866 = vmatprep.subr.mxu0 0.0
    %2867 = vmatpush1.msra.mxu0 0.0
    %2868 = vmatprep.subr.mxu0 0.0
    %2869 = vmatpush1.msra.mxu0 0.0
    %2870 = vmatprep.subr.mxu0 0.0
    %2871 = vmatpush1.msra.mxu0 0.0
    %2872 = vmatprep.subr.mxu0 0.0
    %2873 = vmatpush1.msra.mxu0 0.0
    %2874 = vmatprep.subr.mxu0 0.0
    %2875 = vmatpush1.msra.mxu0 0.0
    %2876 = vmatprep.subr.mxu0 0.0
    %2877 = vmatpush1.msra.mxu0 0.0
    %2878 = vmatprep.subr.mxu0 0.0
    %2879 = vmatpush1.msra.mxu0 0.0
    %2880 = vmatprep.subr.mxu0 0.0
    %2881 = vmatpush1.msra.mxu0 0.0
    %2882 = vmatprep.subr.mxu0 0.0
    %2883 = vmatpush1.msra.mxu0 0.0
    %2884 = vmatprep.mubr.f32.mxu0 0.0
    %2885 = vmatmul.mubr.f32.gmra.mrb[0].mxu0 %v2747
    %v2886 = vpop.f32.mrb[0].mxu0
    %v2887 = vadd.f32 0.0, %v2886
    %v2888 = vpop.f32.mrb[0].mxu0
    %2889 = vdwg.mxu0
    %v2890 = vsel %vm728, %v2724, 0.0
    %2891 = vadd.xlane.f32.xlu0 %v2890
    %v2892 = vpop.xlane.xlu0 %2891
    %v2893 = vmax.f32 %v2892, 1e-05
    %v2894 = vrcp.pop %v2893
    %v2896 = vrot.slane %v2894, 1
    %v2899 = vmul.f32 %v2817, %v2894
    %v2900 = vmul.f32 %v2887, %v2896
    %2901 = vmatprep.subr.mxu0 0.0
    %2902 = vmatpush1.msra.mxu0 %v58
    %2903 = vmatprep.subr.mxu0 0.0
    %2904 = vmatpush1.msra.mxu0 %v59
    %2905 = vmatprep.subr.mxu0 0.0
    %2906 = vmatpush1.msra.mxu0 %v60
    %2907 = vmatprep.subr.mxu0 0.0
    %2908 = vmatpush1.msra.mxu0 %v61
    %2909 = vmatprep.subr.mxu0 0.0
    %2910 = vmatpush1.msra.mxu0 0.0
    %2911 = vmatprep.subr.mxu0 0.0
    %2912 = vmatpush1.msra.mxu0 0.0
    %2913 = vmatprep.subr.mxu0 0.0
    %2914 = vmatpush1.msra.mxu0 0.0
    %2915 = vmatprep.subr.mxu0 0.0
    %2916 = vmatpush1.msra.mxu0 0.0
    %2917 = vmatprep.subr.mxu0 0.0
    %2918 = vmatpush1.msra.mxu0 0.0
    %2919 = vmatprep.subr.mxu0 0.0
    %2920 = vmatpush1.msra.mxu0 0.0
    %2921 = vmatprep.subr.mxu0 0.0
    %2922 = vmatpush1.msra.mxu0 0.0
    %2923 = vmatprep.subr.mxu0 0.0
    %2924 = vmatpush1.msra.mxu0 0.0
    %2925 = vmatprep.subr.mxu0 0.0
    %2926 = vmatpush1.msra.mxu0 0.0
    %2927 = vmatprep.subr.mxu0 0.0
    %2928 = vmatpush1.msra.mxu0 0.0
    %2929 = vmatprep.subr.mxu0 0.0
    %2930 = vmatpush1.msra.mxu0 0.0
    %2931 = vmatprep.subr.mxu0 0.0
    %2932 = vmatpush1.msra.mxu0 0.0
    %2933 = vmatprep.subr.mxu0 0.0
    %2934 = vmatpush1.msra.mxu0 0.0
    %2935 = vmatprep.subr.mxu0 0.0
    %2936 = vmatpush1.msra.mxu0 0.0
    %2937 = vmatprep.subr.mxu0 0.0
    %2938 = vmatpush1.msra.mxu0 0.0
    %2939 = vmatprep.subr.mxu0 0.0
    %2940 = vmatpush1.msra.mxu0 0.0
    %2941 = vmatprep.subr.mxu0 0.0
    %2942 = vmatpush1.msra.mxu0 0.0
    %2943 = vmatprep.subr.mxu0 0.0
    %2944 = vmatpush1.msra.mxu0 0.0
    %2945 = vmatprep.subr.mxu0 0.0
    %2946 = vmatpush1.msra.mxu0 0.0
    %2947 = vmatprep.subr.mxu0 0.0
    %2948 = vmatpush1.msra.mxu0 0.0
    %2949 = vmatprep.subr.mxu0 0.0
    %2950 = vmatpush1.msra.mxu0 0.0
    %2951 = vmatprep.subr.mxu0 0.0
    %2952 = vmatpush1.msra.mxu0 0.0
    %2953 = vmatprep.subr.mxu0 0.0
    %2954 = vmatpush1.msra.mxu0 0.0
    %2955 = vmatprep.subr.mxu0 0.0
    %2956 = vmatpush1.msra.mxu0 0.0
    %2957 = vmatprep.subr.mxu0 0.0
    %2958 = vmatpush1.msra.mxu0 0.0
    %2959 = vmatprep.subr.mxu0 0.0
    %2960 = vmatpush1.msra.mxu0 0.0
    %2961 = vmatprep.subr.mxu0 0.0
    %2962 = vmatpush1.msra.mxu0 0.0
    %2963 = vmatprep.subr.mxu0 0.0
    %2964 = vmatpush1.msra.mxu0 0.0
    %2965 = vmatprep.mubr.f32.mxu0 0.0
    %2966 = vmatmul.mubr.f32.gmra.mrb[0].mxu0 %v2223
    %v2967 = vpop.f32.mrb[0].mxu0
    %v2968 = vadd.f32 0.0, %v2967
    %v2969 = vpop.f32.mrb[0].mxu0
    %2970 = vdwg.mxu0
    %v2973 = vrot.slane %v2900, 7
    %v2974 = vsel %vm724, %v2973, %v2899
    %v2975 = vsel %vm197, %v2974, 0
    %2977 = vmatprep.subr.mxu0 0.0
    %2978 = vmatpush1.msra.mxu0 %v54
    %2979 = vmatprep.subr.mxu0 0.0
    %2980 = vmatpush1.msra.mxu0 %v55
    %2981 = vmatprep.subr.mxu0 0.0
    %2982 = vmatpush1.msra.mxu0 %v56
    %2983 = vmatprep.subr.mxu0 0.0
    %2984 = vmatpush1.msra.mxu0 %v57
    %2985 = vmatprep.subr.mxu0 0.0
    %2986 = vmatpush1.msra.mxu0 0.0
    %2987 = vmatprep.subr.mxu0 0.0
    %2988 = vmatpush1.msra.mxu0 0.0
    %2989 = vmatprep.subr.mxu0 0.0
    %2990 = vmatpush1.msra.mxu0 0.0
    %2991 = vmatprep.subr.mxu0 0.0
    %2992 = vmatpush1.msra.mxu0 0.0
    %2993 = vmatprep.subr.mxu0 0.0
    %2994 = vmatpush1.msra.mxu0 0.0
    %2995 = vmatprep.subr.mxu0 0.0
    %2996 = vmatpush1.msra.mxu0 0.0
    %2997 = vmatprep.subr.mxu0 0.0
    %2998 = vmatpush1.msra.mxu0 0.0
    %2999 = vmatprep.subr.mxu0 0.0
    %3000 = vmatpush1.msra.mxu0 0.0
    %3001 = vmatprep.subr.mxu0 0.0
    %3002 = vmatpush1.msra.mxu0 0.0
    %3003 = vmatprep.subr.mxu0 0.0
    %3004 = vmatpush1.msra.mxu0 0.0
    %3005 = vmatprep.subr.mxu0 0.0
    %3006 = vmatpush1.msra.mxu0 0.0
    %3007 = vmatprep.subr.mxu0 0.0
    %3008 = vmatpush1.msra.mxu0 0.0
    %3009 = vmatprep.subr.mxu0 0.0
    %3010 = vmatpush1.msra.mxu0 0.0
    %3011 = vmatprep.subr.mxu0 0.0
    %3012 = vmatpush1.msra.mxu0 0.0
    %3013 = vmatprep.subr.mxu0 0.0
    %3014 = vmatpush1.msra.mxu0 0.0
    %3015 = vmatprep.subr.mxu0 0.0
    %3016 = vmatpush1.msra.mxu0 0.0
    %3017 = vmatprep.subr.mxu0 0.0
    %3018 = vmatpush1.msra.mxu0 0.0
    %3019 = vmatprep.subr.mxu0 0.0
    %3020 = vmatpush1.msra.mxu0 0.0
    %3021 = vmatprep.subr.mxu0 0.0
    %3022 = vmatpush1.msra.mxu0 0.0
    %3023 = vmatprep.subr.mxu0 0.0
    %3024 = vmatpush1.msra.mxu0 0.0
    %3025 = vmatprep.subr.mxu0 0.0
    %3026 = vmatpush1.msra.mxu0 0.0
    %3027 = vmatprep.subr.mxu0 0.0
    %3028 = vmatpush1.msra.mxu0 0.0
    %3029 = vmatprep.subr.mxu0 0.0
    %3030 = vmatpush1.msra.mxu0 0.0
    %3031 = vmatprep.subr.mxu0 0.0
    %3032 = vmatpush1.msra.mxu0 0.0
    %3033 = vmatprep.subr.mxu0 0.0
    %3034 = vmatpush1.msra.mxu0 0.0
    %3035 = vmatprep.subr.mxu0 0.0
    %3036 = vmatpush1.msra.mxu0 0.0
    %3037 = vmatprep.subr.mxu0 0.0
    %3038 = vmatpush1.msra.mxu0 0.0
    %3039 = vmatprep.subr.mxu0 0.0
    %3040 = vmatpush1.msra.mxu0 0.0
    %3041 = vmatprep.mubr.f32.mxu0 0.0
    %3042 = vmatmul.mubr.f32.gmra.mrb[0].mxu0 %v2975
    %v3043 = vpop.f32.mrb[0].mxu0
    %v3044 = vadd.f32 %v2968, %v3043
    %v3045 = vpop.f32.mrb[0].mxu0
    %3046 = vdwg.mxu0
    %v3047 = vadd.f32 %v3044, %v1067
    %v3048 = vxor.u32 %v3047, 2147483648
    %v3049 = vmul.f32 %v3048, 1.442695
    %v3050 = vpow.pop %v3049
    %v3051 = vadd.f32 %v3050, 1.0
    %v3052 = vrcp.pop %v3051
    %v3053 = vmul.f32 1.0, %v3052
    %v3054 = vtanh.pop %v3047
    %v3055 = vmul.f32 %v3053, %v2078
    %3057 = vrot.lane.b32.xlu0 %v3054, 64
    %v3058 = vpop.permute.xlu0 %3057
    %v3060 = vmul.f32 %v3053, %v3058
    %3062 = vrot.lane.b32.xlu0 %v3060, 32
    %v3063 = vpop.permute.xlu0 %3062
    %v3065 = vadd.f32 %v3055, %v3063
    %v3066 = vtanh.pop %v3065
    %3068 = vrot.lane.b32.xlu0 %v3066, 64
    %v3069 = vpop.permute.xlu0 %3068
    %v3071 = vmul.f32 %v3053, %v3069
    %3073 = vrot.lane.b32.xlu0 %v3071, 32
    %v3074 = vpop.permute.xlu0 %3073
    %s3076 = scalar_lea.vmem %s10, 4
    %3077 = vst.msk [vmem:[%s3076] sm:$0x3] %vm1102, %v3074
    %s3078 = scalar_lea.vmem %s0, 384
    %v3079 = vld [vmem:[%s3078] sm:$0xf]
    %v3080 = vld [vmem:[%s3078 + $0x4] sm:$0xf]
    %v3081 = vld [vmem:[%s3078 + $0x8] sm:$0xf]
    %v3082 = vld [vmem:[%s3078 + $0xc] sm:$0xf]
    %v3083 = vld [vmem:[%s3078 + $0x10] sm:$0xf]
    %v3084 = vld [vmem:[%s3078 + $0x14] sm:$0xf]
    %v3085 = vld [vmem:[%s3078 + $0x18] sm:$0xf]
    %v3086 = vld [vmem:[%s3078 + $0x1c] sm:$0xf]
    %v3087 = vld [vmem:[%s3078 + $0x20] sm:$0xf]
    %v3088 = vld [vmem:[%s3078 + $0x24] sm:$0xf]
    %v3089 = vld [vmem:[%s3078 + $0x28] sm:$0xf]
    %v3090 = vld [vmem:[%s3078 + $0x2c] sm:$0xf]
    %v3091 = vld [vmem:[%s3078 + $0x30] sm:$0xf]
    %v3092 = vld [vmem:[%s3078 + $0x34] sm:$0xf]
    %v3093 = vld [vmem:[%s3078 + $0x38] sm:$0xf]
    %v3094 = vld [vmem:[%s3078 + $0x3c] sm:$0xf]
    %v3095 = vld [vmem:[%s3078 + $0x40] sm:$0xf]
    %v3096 = vld [vmem:[%s3078 + $0x44] sm:$0xf]
    %v3097 = vld [vmem:[%s3078 + $0x48] sm:$0xf]
    %v3098 = vld [vmem:[%s3078 + $0x4c] sm:$0xf]
    %v3099 = vld [vmem:[%s3078 + $0x50] sm:$0xf]
    %v3100 = vld [vmem:[%s3078 + $0x54] sm:$0xf]
    %v3101 = vld [vmem:[%s3078 + $0x58] sm:$0xf]
    %v3102 = vld [vmem:[%s3078 + $0x5c] sm:$0xf]
    %v3103 = vld [vmem:[%s3078 + $0x60] sm:$0xf]
    %v3104 = vld [vmem:[%s3078 + $0x64] sm:$0xf]
    %v3105 = vld [vmem:[%s3078 + $0x68] sm:$0xf]
    %v3106 = vld [vmem:[%s3078 + $0x6c] sm:$0xf]
    %v3107 = vld [vmem:[%s3078 + $0x70] sm:$0xf]
    %v3108 = vld [vmem:[%s3078 + $0x74] sm:$0xf]
    %v3109 = vld [vmem:[%s3078 + $0x78] sm:$0xf]
    %v3110 = vld [vmem:[%s3078 + $0x7c] sm:$0xf]
    %v3111 = vunpack.c.l.bf16 %v3079
    %v3112 = vunpack.c.l.bf16 %v3080
    %v3113 = vunpack.c.l.bf16 %v3081
    %v3114 = vunpack.c.l.bf16 %v3082
    %v3115 = vunpack.c.l.bf16 %v3083
    %v3116 = vunpack.c.l.bf16 %v3084
    %v3117 = vunpack.c.l.bf16 %v3085
    %v3118 = vunpack.c.l.bf16 %v3086
    %v3119 = vunpack.c.l.bf16 %v3087
    %v3120 = vunpack.c.l.bf16 %v3088
    %v3121 = vunpack.c.l.bf16 %v3089
    %v3122 = vunpack.c.l.bf16 %v3090
    %v3123 = vunpack.c.l.bf16 %v3091
    %v3124 = vunpack.c.l.bf16 %v3092
    %v3125 = vunpack.c.l.bf16 %v3093
    %v3126 = vunpack.c.l.bf16 %v3094
    %v3127 = vunpack.c.l.bf16 %v3095
    %v3128 = vunpack.c.l.bf16 %v3096
    %v3129 = vunpack.c.l.bf16 %v3097
    %v3130 = vunpack.c.l.bf16 %v3098
    %v3131 = vunpack.c.l.bf16 %v3099
    %v3132 = vunpack.c.l.bf16 %v3100
    %v3133 = vunpack.c.l.bf16 %v3101
    %v3134 = vunpack.c.l.bf16 %v3102
    %v3135 = vunpack.c.l.bf16 %v3103
    %v3136 = vunpack.c.l.bf16 %v3104
    %v3137 = vunpack.c.l.bf16 %v3105
    %v3138 = vunpack.c.l.bf16 %v3106
    %v3139 = vunpack.c.l.bf16 %v3107
    %v3140 = vunpack.c.l.bf16 %v3108
    %v3141 = vunpack.c.l.bf16 %v3109
    %v3142 = vunpack.c.l.bf16 %v3110
    %s3143 = scalar_lea.vmem %s1, 384
    %v3144 = vld [vmem:[%s3143] sm:$0xf]
    %v3145 = vld [vmem:[%s3143 + $0x4] sm:$0xf]
    %v3146 = vld [vmem:[%s3143 + $0x8] sm:$0xf]
    %v3147 = vld [vmem:[%s3143 + $0xc] sm:$0xf]
    %v3148 = vld [vmem:[%s3143 + $0x10] sm:$0xf]
    %v3149 = vld [vmem:[%s3143 + $0x14] sm:$0xf]
    %v3150 = vld [vmem:[%s3143 + $0x18] sm:$0xf]
    %v3151 = vld [vmem:[%s3143 + $0x1c] sm:$0xf]
    %v3152 = vld [vmem:[%s3143 + $0x20] sm:$0xf]
    %v3153 = vld [vmem:[%s3143 + $0x24] sm:$0xf]
    %v3154 = vld [vmem:[%s3143 + $0x28] sm:$0xf]
    %v3155 = vld [vmem:[%s3143 + $0x2c] sm:$0xf]
    %v3156 = vld [vmem:[%s3143 + $0x30] sm:$0xf]
    %v3157 = vld [vmem:[%s3143 + $0x34] sm:$0xf]
    %v3158 = vld [vmem:[%s3143 + $0x38] sm:$0xf]
    %v3159 = vld [vmem:[%s3143 + $0x3c] sm:$0xf]
    %v3160 = vld [vmem:[%s3143 + $0x40] sm:$0xf]
    %v3161 = vld [vmem:[%s3143 + $0x44] sm:$0xf]
    %v3162 = vld [vmem:[%s3143 + $0x48] sm:$0xf]
    %v3163 = vld [vmem:[%s3143 + $0x4c] sm:$0xf]
    %v3164 = vld [vmem:[%s3143 + $0x50] sm:$0xf]
    %v3165 = vld [vmem:[%s3143 + $0x54] sm:$0xf]
    %v3166 = vld [vmem:[%s3143 + $0x58] sm:$0xf]
    %v3167 = vld [vmem:[%s3143 + $0x5c] sm:$0xf]
    %v3168 = vld [vmem:[%s3143 + $0x60] sm:$0xf]
    %v3169 = vld [vmem:[%s3143 + $0x64] sm:$0xf]
    %v3170 = vld [vmem:[%s3143 + $0x68] sm:$0xf]
    %v3171 = vld [vmem:[%s3143 + $0x6c] sm:$0xf]
    %v3172 = vld [vmem:[%s3143 + $0x70] sm:$0xf]
    %v3173 = vld [vmem:[%s3143 + $0x74] sm:$0xf]
    %v3174 = vld [vmem:[%s3143 + $0x78] sm:$0xf]
    %v3175 = vld [vmem:[%s3143 + $0x7c] sm:$0xf]
    %v3176 = vunpack.c.l.bf16 %v3144
    %v3177 = vunpack.c.l.bf16 %v3145
    %v3178 = vunpack.c.l.bf16 %v3146
    %v3179 = vunpack.c.l.bf16 %v3147
    %v3180 = vunpack.c.l.bf16 %v3148
    %v3181 = vunpack.c.l.bf16 %v3149
    %v3182 = vunpack.c.l.bf16 %v3150
    %v3183 = vunpack.c.l.bf16 %v3151
    %v3184 = vunpack.c.l.bf16 %v3152
    %v3185 = vunpack.c.l.bf16 %v3153
    %v3186 = vunpack.c.l.bf16 %v3154
    %v3187 = vunpack.c.l.bf16 %v3155
    %v3188 = vunpack.c.l.bf16 %v3156
    %v3189 = vunpack.c.l.bf16 %v3157
    %v3190 = vunpack.c.l.bf16 %v3158
    %v3191 = vunpack.c.l.bf16 %v3159
    %v3192 = vunpack.c.l.bf16 %v3160
    %v3193 = vunpack.c.l.bf16 %v3161
    %v3194 = vunpack.c.l.bf16 %v3162
    %v3195 = vunpack.c.l.bf16 %v3163
    %v3196 = vunpack.c.l.bf16 %v3164
    %v3197 = vunpack.c.l.bf16 %v3165
    %v3198 = vunpack.c.l.bf16 %v3166
    %v3199 = vunpack.c.l.bf16 %v3167
    %v3200 = vunpack.c.l.bf16 %v3168
    %v3201 = vunpack.c.l.bf16 %v3169
    %v3202 = vunpack.c.l.bf16 %v3170
    %v3203 = vunpack.c.l.bf16 %v3171
    %v3204 = vunpack.c.l.bf16 %v3172
    %v3205 = vunpack.c.l.bf16 %v3173
    %v3206 = vunpack.c.l.bf16 %v3174
    %v3207 = vunpack.c.l.bf16 %v3175
    %s3208 = scalar_lea.vmem %s2, 6
    %v3209 = vld [vmem:[%s3208] sm:$0x3]
    %v3210 = vsel %vm197, %v3074, 0
    %3212 = vmatprep.subr.mxu0 0.0
    %3213 = vmatpush1.msra.mxu0 %v49
    %3214 = vmatprep.subr.mxu0 0.0
    %3215 = vmatpush1.msra.mxu0 %v50
    %3216 = vmatprep.subr.mxu0 0.0
    %3217 = vmatpush1.msra.mxu0 %v51
    %3218 = vmatprep.subr.mxu0 0.0
    %3219 = vmatpush1.msra.mxu0 %v52
    %3220 = vmatprep.subr.mxu0 0.0
    %3221 = vmatpush1.msra.mxu0 0.0
    %3222 = vmatprep.subr.mxu0 0.0
    %3223 = vmatpush1.msra.mxu0 0.0
    %3224 = vmatprep.subr.mxu0 0.0
    %3225 = vmatpush1.msra.mxu0 0.0
    %3226 = vmatprep.subr.mxu0 0.0
    %3227 = vmatpush1.msra.mxu0 0.0
    %3228 = vmatprep.subr.mxu0 0.0
    %3229 = vmatpush1.msra.mxu0 0.0
    %3230 = vmatprep.subr.mxu0 0.0
    %3231 = vmatpush1.msra.mxu0 0.0
    %3232 = vmatprep.subr.mxu0 0.0
    %3233 = vmatpush1.msra.mxu0 0.0
    %3234 = vmatprep.subr.mxu0 0.0
    %3235 = vmatpush1.msra.mxu0 0.0
    %3236 = vmatprep.subr.mxu0 0.0
    %3237 = vmatpush1.msra.mxu0 0.0
    %3238 = vmatprep.subr.mxu0 0.0
    %3239 = vmatpush1.msra.mxu0 0.0
    %3240 = vmatprep.subr.mxu0 0.0
    %3241 = vmatpush1.msra.mxu0 0.0
    %3242 = vmatprep.subr.mxu0 0.0
    %3243 = vmatpush1.msra.mxu0 0.0
    %3244 = vmatprep.subr.mxu0 0.0
    %3245 = vmatpush1.msra.mxu0 0.0
    %3246 = vmatprep.subr.mxu0 0.0
    %3247 = vmatpush1.msra.mxu0 0.0
    %3248 = vmatprep.subr.mxu0 0.0
    %3249 = vmatpush1.msra.mxu0 0.0
    %3250 = vmatprep.subr.mxu0 0.0
    %3251 = vmatpush1.msra.mxu0 0.0
    %3252 = vmatprep.subr.mxu0 0.0
    %3253 = vmatpush1.msra.mxu0 0.0
    %3254 = vmatprep.subr.mxu0 0.0
    %3255 = vmatpush1.msra.mxu0 0.0
    %3256 = vmatprep.subr.mxu0 0.0
    %3257 = vmatpush1.msra.mxu0 0.0
    %3258 = vmatprep.subr.mxu0 0.0
    %3259 = vmatpush1.msra.mxu0 0.0
    %3260 = vmatprep.subr.mxu0 0.0
    %3261 = vmatpush1.msra.mxu0 0.0
    %3262 = vmatprep.subr.mxu0 0.0
    %3263 = vmatpush1.msra.mxu0 0.0
    %3264 = vmatprep.subr.mxu0 0.0
    %3265 = vmatpush1.msra.mxu0 0.0
    %3266 = vmatprep.subr.mxu0 0.0
    %3267 = vmatpush1.msra.mxu0 0.0
    %3268 = vmatprep.subr.mxu0 0.0
    %3269 = vmatpush1.msra.mxu0 0.0
    %3270 = vmatprep.subr.mxu0 0.0
    %3271 = vmatpush1.msra.mxu0 0.0
    %3272 = vmatprep.subr.mxu0 0.0
    %3273 = vmatpush1.msra.mxu0 0.0
    %3274 = vmatprep.subr.mxu0 0.0
    %3275 = vmatpush1.msra.mxu0 0.0
    %3276 = vmatprep.mubr.f32.mxu0 0.0
    %3277 = vmatmul.mubr.f32.gmra.mrb[0].mxu0 %v3210
    %v3278 = vpop.f32.mrb[0].mxu0
    %v3279 = vadd.f32 0.0, %v3278
    %v3280 = vpop.f32.mrb[0].mxu0
    %3281 = vdwg.mxu0
    %v3284 = vunpack.c.l.s4 1966171168
    %v3285 = vunpack.c.0.s8 %v3284
    %v3286 = vlaneseq
    %v3287 = vshrl.u32 %v3286, 7
    %v3288 = vsub.s32 %v3285, %v3287
    %v3289 = vrot.slane %v3279, %v3288
    %v3290 = vcombine.high %v3289, %v3289
    %v3292 = vunpack.c.l.s4 1966171168
    %v3293 = vunpack.c.0.s8 %v3292
    %v3294 = vlaneseq
    %v3295 = vshrl.u32 %v3294, 7
    %v3296 = vsub.s32 %v3293, %v3295
    %v3297 = vrot.slane %v3289, %v3296
    %v3299 = vunpack.c.l.s4 1966171168
    %v3300 = vunpack.c.0.s8 %v3299
    %v3301 = vlaneseq
    %v3302 = vshrl.u32 %v3301, 7
    %v3303 = vsub.s32 %v3300, %v3302
    %v3304 = vrot.slane %v3290, %v3303
    %v3305 = vlaneseq
    %v3306 = vshrl.u32 %v3305, 7
    %v3307 = vsub.s32 0, %v3306
    %v3308 = vrot.slane %v3297, %v3307
    %v3309 = vlaneseq
    %v3310 = vshrl.u32 %v3309, 7
    %v3311 = vsub.s32 0, %v3310
    %v3312 = vrot.slane %v3304, %v3311
    %v3315 = vadd.f32 %v3308, %v3111
    %v3316 = vadd.f32 %v3308, %v3112
    %v3317 = vadd.f32 %v3308, %v3113
    %v3318 = vadd.f32 %v3308, %v3114
    %v3319 = vadd.f32 %v3308, %v3115
    %v3320 = vadd.f32 %v3308, %v3116
    %v3321 = vadd.f32 %v3308, %v3117
    %v3322 = vadd.f32 %v3308, %v3118
    %v3323 = vadd.f32 %v3308, %v3119
    %v3324 = vadd.f32 %v3308, %v3120
    %v3325 = vadd.f32 %v3308, %v3121
    %v3326 = vadd.f32 %v3308, %v3122
    %v3327 = vadd.f32 %v3308, %v3123
    %v3328 = vadd.f32 %v3308, %v3124
    %v3329 = vadd.f32 %v3308, %v3125
    %v3330 = vadd.f32 %v3308, %v3126
    %v3331 = vadd.f32 %v3312, %v3127
    %v3332 = vadd.f32 %v3312, %v3128
    %v3333 = vadd.f32 %v3312, %v3129
    %v3334 = vadd.f32 %v3312, %v3130
    %v3335 = vadd.f32 %v3312, %v3131
    %v3336 = vadd.f32 %v3312, %v3132
    %v3337 = vadd.f32 %v3312, %v3133
    %v3338 = vadd.f32 %v3312, %v3134
    %v3339 = vadd.f32 %v3312, %v3135
    %v3340 = vadd.f32 %v3312, %v3136
    %v3341 = vadd.f32 %v3312, %v3137
    %v3342 = vadd.f32 %v3312, %v3138
    %v3343 = vadd.f32 %v3312, %v3139
    %v3344 = vadd.f32 %v3312, %v3140
    %v3345 = vadd.f32 %v3312, %v3141
    %v3346 = vadd.f32 %v3312, %v3142
    %v3347 = vtanh.pop %v3315
    %v3348 = vtanh.pop %v3316
    %v3349 = vtanh.pop %v3317
    %v3350 = vtanh.pop %v3318
    %v3351 = vtanh.pop %v3319
    %v3352 = vtanh.pop %v3320
    %v3353 = vtanh.pop %v3321
    %v3354 = vtanh.pop %v3322
    %v3355 = vtanh.pop %v3323
    %v3356 = vtanh.pop %v3324
    %v3357 = vtanh.pop %v3325
    %v3358 = vtanh.pop %v3326
    %v3359 = vtanh.pop %v3327
    %v3360 = vtanh.pop %v3328
    %v3361 = vtanh.pop %v3329
    %v3362 = vtanh.pop %v3330
    %v3363 = vtanh.pop %v3331
    %v3364 = vtanh.pop %v3332
    %v3365 = vtanh.pop %v3333
    %v3366 = vtanh.pop %v3334
    %v3367 = vtanh.pop %v3335
    %v3368 = vtanh.pop %v3336
    %v3369 = vtanh.pop %v3337
    %v3370 = vtanh.pop %v3338
    %v3371 = vtanh.pop %v3339
    %v3372 = vtanh.pop %v3340
    %v3373 = vtanh.pop %v3341
    %v3374 = vtanh.pop %v3342
    %v3375 = vtanh.pop %v3343
    %v3376 = vtanh.pop %v3344
    %v3377 = vtanh.pop %v3345
    %v3378 = vtanh.pop %v3346
    %v3379 = vmul.f32 %v3347, %v372
    %v3380 = vmul.f32 %v3348, %v372
    %v3381 = vmul.f32 %v3349, %v372
    %v3382 = vmul.f32 %v3350, %v372
    %v3383 = vmul.f32 %v3351, %v372
    %v3384 = vmul.f32 %v3352, %v372
    %v3385 = vmul.f32 %v3353, %v372
    %v3386 = vmul.f32 %v3354, %v372
    %v3387 = vmul.f32 %v3355, %v372
    %v3388 = vmul.f32 %v3356, %v372
    %v3389 = vmul.f32 %v3357, %v372
    %v3390 = vmul.f32 %v3358, %v372
    %v3391 = vmul.f32 %v3359, %v372
    %v3392 = vmul.f32 %v3360, %v372
    %v3393 = vmul.f32 %v3361, %v372
    %v3394 = vmul.f32 %v3362, %v372
    %v3395 = vmul.f32 %v3363, %v372
    %v3396 = vmul.f32 %v3364, %v372
    %v3397 = vmul.f32 %v3365, %v372
    %v3398 = vmul.f32 %v3366, %v372
    %v3399 = vmul.f32 %v3367, %v372
    %v3400 = vmul.f32 %v3368, %v372
    %v3401 = vmul.f32 %v3369, %v372
    %v3402 = vmul.f32 %v3370, %v372
    %v3403 = vmul.f32 %v3371, %v372
    %v3404 = vmul.f32 %v3372, %v372
    %v3405 = vmul.f32 %v3373, %v372
    %v3406 = vmul.f32 %v3374, %v372
    %v3407 = vmul.f32 %v3375, %v372
    %v3408 = vmul.f32 %v3376, %v372
    %v3409 = vmul.f32 %v3377, %v372
    %v3410 = vmul.f32 %v3378, %v372
    %v3411 = vsel %vm197, %v3379, 0.0
    %3412 = vadd.xlane.f32.xlu0 %v3411
    %v3413 = vpop.xlane.xlu0 %3412
    %v3414 = vsel %vm197, %v3380, 0.0
    %3415 = vadd.xlane.f32.xlu0 %v3414
    %v3416 = vpop.xlane.xlu0 %3415
    %v3417 = vsel %vm197, %v3381, 0.0
    %3418 = vadd.xlane.f32.xlu0 %v3417
    %v3419 = vpop.xlane.xlu0 %3418
    %v3420 = vsel %vm197, %v3382, 0.0
    %3421 = vadd.xlane.f32.xlu0 %v3420
    %v3422 = vpop.xlane.xlu0 %3421
    %v3423 = vsel %vm197, %v3383, 0.0
    %3424 = vadd.xlane.f32.xlu0 %v3423
    %v3425 = vpop.xlane.xlu0 %3424
    %v3426 = vsel %vm197, %v3384, 0.0
    %3427 = vadd.xlane.f32.xlu0 %v3426
    %v3428 = vpop.xlane.xlu0 %3427
    %v3429 = vsel %vm197, %v3385, 0.0
    %3430 = vadd.xlane.f32.xlu0 %v3429
    %v3431 = vpop.xlane.xlu0 %3430
    %v3432 = vsel %vm197, %v3386, 0.0
    %3433 = vadd.xlane.f32.xlu0 %v3432
    %v3434 = vpop.xlane.xlu0 %3433
    %v3435 = vsel %vm197, %v3387, 0.0
    %3436 = vadd.xlane.f32.xlu0 %v3435
    %v3437 = vpop.xlane.xlu0 %3436
    %v3438 = vsel %vm197, %v3388, 0.0
    %3439 = vadd.xlane.f32.xlu0 %v3438
    %v3440 = vpop.xlane.xlu0 %3439
    %v3441 = vsel %vm197, %v3389, 0.0
    %3442 = vadd.xlane.f32.xlu0 %v3441
    %v3443 = vpop.xlane.xlu0 %3442
    %v3444 = vsel %vm197, %v3390, 0.0
    %3445 = vadd.xlane.f32.xlu0 %v3444
    %v3446 = vpop.xlane.xlu0 %3445
    %v3447 = vsel %vm197, %v3391, 0.0
    %3448 = vadd.xlane.f32.xlu0 %v3447
    %v3449 = vpop.xlane.xlu0 %3448
    %v3450 = vsel %vm197, %v3392, 0.0
    %3451 = vadd.xlane.f32.xlu0 %v3450
    %v3452 = vpop.xlane.xlu0 %3451
    %v3453 = vsel %vm197, %v3393, 0.0
    %3454 = vadd.xlane.f32.xlu0 %v3453
    %v3455 = vpop.xlane.xlu0 %3454
    %v3456 = vsel %vm197, %v3394, 0.0
    %3457 = vadd.xlane.f32.xlu0 %v3456
    %v3458 = vpop.xlane.xlu0 %3457
    %v3459 = vsel %vm197, %v3395, 0.0
    %3460 = vadd.xlane.f32.xlu0 %v3459
    %v3461 = vpop.xlane.xlu0 %3460
    %v3462 = vsel %vm197, %v3396, 0.0
    %3463 = vadd.xlane.f32.xlu0 %v3462
    %v3464 = vpop.xlane.xlu0 %3463
    %v3465 = vsel %vm197, %v3397, 0.0
    %3466 = vadd.xlane.f32.xlu0 %v3465
    %v3467 = vpop.xlane.xlu0 %3466
    %v3468 = vsel %vm197, %v3398, 0.0
    %3469 = vadd.xlane.f32.xlu0 %v3468
    %v3470 = vpop.xlane.xlu0 %3469
    %v3471 = vsel %vm197, %v3399, 0.0
    %3472 = vadd.xlane.f32.xlu0 %v3471
    %v3473 = vpop.xlane.xlu0 %3472
    %v3474 = vsel %vm197, %v3400, 0.0
    %3475 = vadd.xlane.f32.xlu0 %v3474
    %v3476 = vpop.xlane.xlu0 %3475
    %v3477 = vsel %vm197, %v3401, 0.0
    %3478 = vadd.xlane.f32.xlu0 %v3477
    %v3479 = vpop.xlane.xlu0 %3478
    %v3480 = vsel %vm197, %v3402, 0.0
    %3481 = vadd.xlane.f32.xlu0 %v3480
    %v3482 = vpop.xlane.xlu0 %3481
    %v3483 = vsel %vm197, %v3403, 0.0
    %3484 = vadd.xlane.f32.xlu0 %v3483
    %v3485 = vpop.xlane.xlu0 %3484
    %v3486 = vsel %vm197, %v3404, 0.0
    %3487 = vadd.xlane.f32.xlu0 %v3486
    %v3488 = vpop.xlane.xlu0 %3487
    %v3489 = vsel %vm197, %v3405, 0.0
    %3490 = vadd.xlane.f32.xlu0 %v3489
    %v3491 = vpop.xlane.xlu0 %3490
    %v3492 = vsel %vm197, %v3406, 0.0
    %3493 = vadd.xlane.f32.xlu0 %v3492
    %v3494 = vpop.xlane.xlu0 %3493
    %v3495 = vsel %vm197, %v3407, 0.0
    %3496 = vadd.xlane.f32.xlu0 %v3495
    %v3497 = vpop.xlane.xlu0 %3496
    %v3498 = vsel %vm197, %v3408, 0.0
    %3499 = vadd.xlane.f32.xlu0 %v3498
    %v3500 = vpop.xlane.xlu0 %3499
    %v3501 = vsel %vm197, %v3409, 0.0
    %3502 = vadd.xlane.f32.xlu0 %v3501
    %v3503 = vpop.xlane.xlu0 %3502
    %v3504 = vsel %vm197, %v3410, 0.0
    %3505 = vadd.xlane.f32.xlu0 %v3504
    %v3506 = vpop.xlane.xlu0 %3505
    %v3539 = vlaneseq
    %v3540 = vshrl.u32 %v3539, 7
    %v3541 = vsub.s32 %v64, %v3540
    %v3542 = vrot.slane %v3413, %v3541
    %v3543 = vlaneseq
    %v3544 = vshrl.u32 %v3543, 7
    %v3545 = vsub.s32 %v540, %v3544
    %v3546 = vrot.slane %v3416, %v3545
    %v3547 = vsel %vm545, %v3546, %v3542
    %v3548 = vlaneseq
    %v3549 = vshrl.u32 %v3548, 7
    %v3550 = vsub.s32 %v547, %v3549
    %v3551 = vrot.slane %v3419, %v3550
    %v3552 = vsel %vm552, %v3551, %v3547
    %v3553 = vlaneseq
    %v3554 = vshrl.u32 %v3553, 7
    %v3555 = vsub.s32 %v554, %v3554
    %v3556 = vrot.slane %v3422, %v3555
    %v3557 = vsel %vm559, %v3556, %v3552
    %v3558 = vlaneseq
    %v3559 = vshrl.u32 %v3558, 7
    %v3560 = vsub.s32 %v561, %v3559
    %v3561 = vrot.slane %v3425, %v3560
    %v3562 = vsel %vm566, %v3561, %v3557
    %v3563 = vlaneseq
    %v3564 = vshrl.u32 %v3563, 7
    %v3565 = vsub.s32 %v568, %v3564
    %v3566 = vrot.slane %v3428, %v3565
    %v3567 = vsel %vm573, %v3566, %v3562
    %v3568 = vlaneseq
    %v3569 = vshrl.u32 %v3568, 7
    %v3570 = vsub.s32 %v575, %v3569
    %v3571 = vrot.slane %v3431, %v3570
    %v3572 = vsel %vm580, %v3571, %v3567
    %v3573 = vlaneseq
    %v3574 = vshrl.u32 %v3573, 7
    %v3575 = vsub.s32 %v582, %v3574
    %v3576 = vrot.slane %v3434, %v3575
    %v3577 = vsel %vm587, %v3576, %v3572
    %v3578 = vlaneseq
    %v3579 = vshrl.u32 %v3578, 7
    %v3580 = vsub.s32 %v589, %v3579
    %v3581 = vrot.slane %v3437, %v3580
    %v3582 = vsel %vm594, %v3581, %v3577
    %v3583 = vlaneseq
    %v3584 = vshrl.u32 %v3583, 7
    %v3585 = vsub.s32 %v596, %v3584
    %v3586 = vrot.slane %v3440, %v3585
    %v3587 = vsel %vm601, %v3586, %v3582
    %v3588 = vlaneseq
    %v3589 = vshrl.u32 %v3588, 7
    %v3590 = vsub.s32 %v603, %v3589
    %v3591 = vrot.slane %v3443, %v3590
    %v3592 = vsel %vm608, %v3591, %v3587
    %v3593 = vlaneseq
    %v3594 = vshrl.u32 %v3593, 7
    %v3595 = vsub.s32 %v610, %v3594
    %v3596 = vrot.slane %v3446, %v3595
    %v3597 = vsel %vm615, %v3596, %v3592
    %v3598 = vlaneseq
    %v3599 = vshrl.u32 %v3598, 7
    %v3600 = vsub.s32 %v617, %v3599
    %v3601 = vrot.slane %v3449, %v3600
    %v3602 = vsel %vm622, %v3601, %v3597
    %v3603 = vlaneseq
    %v3604 = vshrl.u32 %v3603, 7
    %v3605 = vsub.s32 %v624, %v3604
    %v3606 = vrot.slane %v3452, %v3605
    %v3607 = vsel %vm629, %v3606, %v3602
    %v3608 = vlaneseq
    %v3609 = vshrl.u32 %v3608, 7
    %v3610 = vsub.s32 %v631, %v3609
    %v3611 = vrot.slane %v3455, %v3610
    %v3612 = vsel %vm636, %v3611, %v3607
    %v3613 = vlaneseq
    %v3614 = vshrl.u32 %v3613, 7
    %v3615 = vsub.s32 %v638, %v3614
    %v3616 = vrot.slane %v3458, %v3615
    %v3617 = vsel %vm643, %v3616, %v3612
    %v3618 = vlaneseq
    %v3619 = vshrl.u32 %v3618, 7
    %v3620 = vsub.s32 %v64, %v3619
    %v3621 = vrot.slane %v3461, %v3620
    %v3622 = vlaneseq
    %v3623 = vshrl.u32 %v3622, 7
    %v3624 = vsub.s32 %v540, %v3623
    %v3625 = vrot.slane %v3464, %v3624
    %v3626 = vsel %vm545, %v3625, %v3621
    %v3627 = vlaneseq
    %v3628 = vshrl.u32 %v3627, 7
    %v3629 = vsub.s32 %v547, %v3628
    %v3630 = vrot.slane %v3467, %v3629
    %v3631 = vsel %vm552, %v3630, %v3626
    %v3632 = vlaneseq
    %v3633 = vshrl.u32 %v3632, 7
    %v3634 = vsub.s32 %v554, %v3633
    %v3635 = vrot.slane %v3470, %v3634
    %v3636 = vsel %vm559, %v3635, %v3631
    %v3637 = vlaneseq
    %v3638 = vshrl.u32 %v3637, 7
    %v3639 = vsub.s32 %v561, %v3638
    %v3640 = vrot.slane %v3473, %v3639
    %v3641 = vsel %vm566, %v3640, %v3636
    %v3642 = vlaneseq
    %v3643 = vshrl.u32 %v3642, 7
    %v3644 = vsub.s32 %v568, %v3643
    %v3645 = vrot.slane %v3476, %v3644
    %v3646 = vsel %vm573, %v3645, %v3641
    %v3647 = vlaneseq
    %v3648 = vshrl.u32 %v3647, 7
    %v3649 = vsub.s32 %v575, %v3648
    %v3650 = vrot.slane %v3479, %v3649
    %v3651 = vsel %vm580, %v3650, %v3646
    %v3652 = vlaneseq
    %v3653 = vshrl.u32 %v3652, 7
    %v3654 = vsub.s32 %v582, %v3653
    %v3655 = vrot.slane %v3482, %v3654
    %v3656 = vsel %vm587, %v3655, %v3651
    %v3657 = vlaneseq
    %v3658 = vshrl.u32 %v3657, 7
    %v3659 = vsub.s32 %v589, %v3658
    %v3660 = vrot.slane %v3485, %v3659
    %v3661 = vsel %vm594, %v3660, %v3656
    %v3662 = vlaneseq
    %v3663 = vshrl.u32 %v3662, 7
    %v3664 = vsub.s32 %v596, %v3663
    %v3665 = vrot.slane %v3488, %v3664
    %v3666 = vsel %vm601, %v3665, %v3661
    %v3667 = vlaneseq
    %v3668 = vshrl.u32 %v3667, 7
    %v3669 = vsub.s32 %v603, %v3668
    %v3670 = vrot.slane %v3491, %v3669
    %v3671 = vsel %vm608, %v3670, %v3666
    %v3672 = vlaneseq
    %v3673 = vshrl.u32 %v3672, 7
    %v3674 = vsub.s32 %v610, %v3673
    %v3675 = vrot.slane %v3494, %v3674
    %v3676 = vsel %vm615, %v3675, %v3671
    %v3677 = vlaneseq
    %v3678 = vshrl.u32 %v3677, 7
    %v3679 = vsub.s32 %v617, %v3678
    %v3680 = vrot.slane %v3497, %v3679
    %v3681 = vsel %vm622, %v3680, %v3676
    %v3682 = vlaneseq
    %v3683 = vshrl.u32 %v3682, 7
    %v3684 = vsub.s32 %v624, %v3683
    %v3685 = vrot.slane %v3500, %v3684
    %v3686 = vsel %vm629, %v3685, %v3681
    %v3687 = vlaneseq
    %v3688 = vshrl.u32 %v3687, 7
    %v3689 = vsub.s32 %v631, %v3688
    %v3690 = vrot.slane %v3503, %v3689
    %v3691 = vsel %vm636, %v3690, %v3686
    %v3692 = vlaneseq
    %v3693 = vshrl.u32 %v3692, 7
    %v3694 = vsub.s32 %v638, %v3693
    %v3695 = vrot.slane %v3506, %v3694
    %v3696 = vsel %vm643, %v3695, %v3691
    %v3697 = vsel %vm724, %v3696, %v3617
    %v3699 = vsel %vm503, %v3697, -1e+30
    %v3700 = vsel %vm728, %v3699, -inf
    %3701 = vmax.xlane.f32.xlu0 %v3700
    %v3702 = vpop.xlane.xlu0 %3701
    %v3703 = vsub.f32 %v3699, %v3702
    %v3704 = vmul.f32 %v3703, 1.442695
    %v3705 = vpow.pop %v3704
    %v3706 = vsel %vm728, %v3705, 0.0
    %3707 = vadd.xlane.f32.xlu0 %v3706
    %v3708 = vpop.xlane.xlu0 %3707
    %v3709 = vrcp.pop %v3708
    %v3710 = vmul.f32 %v3705, %v3709
    %v3711 = vmul.f32 %v3710, %v3209
    %v3714 = vunpack.c.l.s4 1966171168
    %v3715 = vunpack.c.0.s8 %v3714
    %v3716 = vlaneseq
    %v3717 = vshrl.u32 %v3716, 7
    %v3718 = vsub.s32 %v3715, %v3717
    %v3719 = vrot.slane %v3711, %v3718
    %v3720 = vcombine.high %v3719, %v3719
    %v3722 = vunpack.c.l.s4 1966171168
    %v3723 = vunpack.c.0.s8 %v3722
    %v3724 = vlaneseq
    %v3725 = vshrl.u32 %v3724, 7
    %v3726 = vsub.s32 %v3723, %v3725
    %v3727 = vrot.slane %v3719, %v3726
    %v3729 = vunpack.c.l.s4 1966171168
    %v3730 = vunpack.c.0.s8 %v3729
    %v3731 = vlaneseq
    %v3732 = vshrl.u32 %v3731, 7
    %v3733 = vsub.s32 %v3730, %v3732
    %v3734 = vrot.slane %v3720, %v3733
    %3737 = vmatprep.subr.mxu0 0.0
    %3738 = vmatpush1.msra.mxu0 %v3176
    %3739 = vmatprep.subr.mxu0 0.0
    %3740 = vmatpush1.msra.mxu0 %v3177
    %3741 = vmatprep.subr.mxu0 0.0
    %3742 = vmatpush1.msra.mxu0 %v3178
    %3743 = vmatprep.subr.mxu0 0.0
    %3744 = vmatpush1.msra.mxu0 %v3179
    %3745 = vmatprep.subr.mxu0 0.0
    %3746 = vmatpush1.msra.mxu0 %v3180
    %3747 = vmatprep.subr.mxu0 0.0
    %3748 = vmatpush1.msra.mxu0 %v3181
    %3749 = vmatprep.subr.mxu0 0.0
    %3750 = vmatpush1.msra.mxu0 %v3182
    %3751 = vmatprep.subr.mxu0 0.0
    %3752 = vmatpush1.msra.mxu0 %v3183
    %3753 = vmatprep.subr.mxu0 0.0
    %3754 = vmatpush1.msra.mxu0 %v3184
    %3755 = vmatprep.subr.mxu0 0.0
    %3756 = vmatpush1.msra.mxu0 %v3185
    %3757 = vmatprep.subr.mxu0 0.0
    %3758 = vmatpush1.msra.mxu0 %v3186
    %3759 = vmatprep.subr.mxu0 0.0
    %3760 = vmatpush1.msra.mxu0 %v3187
    %3761 = vmatprep.subr.mxu0 0.0
    %3762 = vmatpush1.msra.mxu0 %v3188
    %3763 = vmatprep.subr.mxu0 0.0
    %3764 = vmatpush1.msra.mxu0 %v3189
    %3765 = vmatprep.subr.mxu0 0.0
    %3766 = vmatpush1.msra.mxu0 %v3190
    %3767 = vmatprep.subr.mxu0 0.0
    %3768 = vmatpush1.msra.mxu0 %v3191
    %3769 = vmatprep.subr.mxu0 0.0
    %3770 = vmatpush1.msra.mxu0 0.0
    %3771 = vmatprep.subr.mxu0 0.0
    %3772 = vmatpush1.msra.mxu0 0.0
    %3773 = vmatprep.subr.mxu0 0.0
    %3774 = vmatpush1.msra.mxu0 0.0
    %3775 = vmatprep.subr.mxu0 0.0
    %3776 = vmatpush1.msra.mxu0 0.0
    %3777 = vmatprep.subr.mxu0 0.0
    %3778 = vmatpush1.msra.mxu0 0.0
    %3779 = vmatprep.subr.mxu0 0.0
    %3780 = vmatpush1.msra.mxu0 0.0
    %3781 = vmatprep.subr.mxu0 0.0
    %3782 = vmatpush1.msra.mxu0 0.0
    %3783 = vmatprep.subr.mxu0 0.0
    %3784 = vmatpush1.msra.mxu0 0.0
    %3785 = vmatprep.subr.mxu0 0.0
    %3786 = vmatpush1.msra.mxu0 0.0
    %3787 = vmatprep.subr.mxu0 0.0
    %3788 = vmatpush1.msra.mxu0 0.0
    %3789 = vmatprep.subr.mxu0 0.0
    %3790 = vmatpush1.msra.mxu0 0.0
    %3791 = vmatprep.subr.mxu0 0.0
    %3792 = vmatpush1.msra.mxu0 0.0
    %3793 = vmatprep.subr.mxu0 0.0
    %3794 = vmatpush1.msra.mxu0 0.0
    %3795 = vmatprep.subr.mxu0 0.0
    %3796 = vmatpush1.msra.mxu0 0.0
    %3797 = vmatprep.subr.mxu0 0.0
    %3798 = vmatpush1.msra.mxu0 0.0
    %3799 = vmatprep.subr.mxu0 0.0
    %3800 = vmatpush1.msra.mxu0 0.0
    %3801 = vmatprep.mubr.f32.mxu0 0.0
    %3802 = vmatmul.mubr.f32.gmra.mrb[0].mxu0 %v3727
    %v3803 = vpop.f32.mrb[0].mxu0
    %v3804 = vadd.f32 0.0, %v3803
    %v3805 = vpop.f32.mrb[0].mxu0
    %3806 = vdwg.mxu0
    %3807 = vmatprep.subr.mxu0 0.0
    %3808 = vmatpush1.msra.mxu0 %v3192
    %3809 = vmatprep.subr.mxu0 0.0
    %3810 = vmatpush1.msra.mxu0 %v3193
    %3811 = vmatprep.subr.mxu0 0.0
    %3812 = vmatpush1.msra.mxu0 %v3194
    %3813 = vmatprep.subr.mxu0 0.0
    %3814 = vmatpush1.msra.mxu0 %v3195
    %3815 = vmatprep.subr.mxu0 0.0
    %3816 = vmatpush1.msra.mxu0 %v3196
    %3817 = vmatprep.subr.mxu0 0.0
    %3818 = vmatpush1.msra.mxu0 %v3197
    %3819 = vmatprep.subr.mxu0 0.0
    %3820 = vmatpush1.msra.mxu0 %v3198
    %3821 = vmatprep.subr.mxu0 0.0
    %3822 = vmatpush1.msra.mxu0 %v3199
    %3823 = vmatprep.subr.mxu0 0.0
    %3824 = vmatpush1.msra.mxu0 %v3200
    %3825 = vmatprep.subr.mxu0 0.0
    %3826 = vmatpush1.msra.mxu0 %v3201
    %3827 = vmatprep.subr.mxu0 0.0
    %3828 = vmatpush1.msra.mxu0 %v3202
    %3829 = vmatprep.subr.mxu0 0.0
    %3830 = vmatpush1.msra.mxu0 %v3203
    %3831 = vmatprep.subr.mxu0 0.0
    %3832 = vmatpush1.msra.mxu0 %v3204
    %3833 = vmatprep.subr.mxu0 0.0
    %3834 = vmatpush1.msra.mxu0 %v3205
    %3835 = vmatprep.subr.mxu0 0.0
    %3836 = vmatpush1.msra.mxu0 %v3206
    %3837 = vmatprep.subr.mxu0 0.0
    %3838 = vmatpush1.msra.mxu0 %v3207
    %3839 = vmatprep.subr.mxu0 0.0
    %3840 = vmatpush1.msra.mxu0 0.0
    %3841 = vmatprep.subr.mxu0 0.0
    %3842 = vmatpush1.msra.mxu0 0.0
    %3843 = vmatprep.subr.mxu0 0.0
    %3844 = vmatpush1.msra.mxu0 0.0
    %3845 = vmatprep.subr.mxu0 0.0
    %3846 = vmatpush1.msra.mxu0 0.0
    %3847 = vmatprep.subr.mxu0 0.0
    %3848 = vmatpush1.msra.mxu0 0.0
    %3849 = vmatprep.subr.mxu0 0.0
    %3850 = vmatpush1.msra.mxu0 0.0
    %3851 = vmatprep.subr.mxu0 0.0
    %3852 = vmatpush1.msra.mxu0 0.0
    %3853 = vmatprep.subr.mxu0 0.0
    %3854 = vmatpush1.msra.mxu0 0.0
    %3855 = vmatprep.subr.mxu0 0.0
    %3856 = vmatpush1.msra.mxu0 0.0
    %3857 = vmatprep.subr.mxu0 0.0
    %3858 = vmatpush1.msra.mxu0 0.0
    %3859 = vmatprep.subr.mxu0 0.0
    %3860 = vmatpush1.msra.mxu0 0.0
    %3861 = vmatprep.subr.mxu0 0.0
    %3862 = vmatpush1.msra.mxu0 0.0
    %3863 = vmatprep.subr.mxu0 0.0
    %3864 = vmatpush1.msra.mxu0 0.0
    %3865 = vmatprep.subr.mxu0 0.0
    %3866 = vmatpush1.msra.mxu0 0.0
    %3867 = vmatprep.subr.mxu0 0.0
    %3868 = vmatpush1.msra.mxu0 0.0
    %3869 = vmatprep.subr.mxu0 0.0
    %3870 = vmatpush1.msra.mxu0 0.0
    %3871 = vmatprep.mubr.f32.mxu0 0.0
    %3872 = vmatmul.mubr.f32.gmra.mrb[0].mxu0 %v3734
    %v3873 = vpop.f32.mrb[0].mxu0
    %v3874 = vadd.f32 0.0, %v3873
    %v3875 = vpop.f32.mrb[0].mxu0
    %3876 = vdwg.mxu0
    %v3877 = vsel %vm728, %v3711, 0.0
    %3878 = vadd.xlane.f32.xlu0 %v3877
    %v3879 = vpop.xlane.xlu0 %3878
    %v3880 = vmax.f32 %v3879, 1e-05
    %v3881 = vrcp.pop %v3880
    %v3883 = vrot.slane %v3881, 1
    %v3886 = vmul.f32 %v3804, %v3881
    %v3887 = vmul.f32 %v3874, %v3883
    %3888 = vmatprep.subr.mxu0 0.0
    %3889 = vmatpush1.msra.mxu0 %v58
    %3890 = vmatprep.subr.mxu0 0.0
    %3891 = vmatpush1.msra.mxu0 %v59
    %3892 = vmatprep.subr.mxu0 0.0
    %3893 = vmatpush1.msra.mxu0 %v60
    %3894 = vmatprep.subr.mxu0 0.0
    %3895 = vmatpush1.msra.mxu0 %v61
    %3896 = vmatprep.subr.mxu0 0.0
    %3897 = vmatpush1.msra.mxu0 0.0
    %3898 = vmatprep.subr.mxu0 0.0
    %3899 = vmatpush1.msra.mxu0 0.0
    %3900 = vmatprep.subr.mxu0 0.0
    %3901 = vmatpush1.msra.mxu0 0.0
    %3902 = vmatprep.subr.mxu0 0.0
    %3903 = vmatpush1.msra.mxu0 0.0
    %3904 = vmatprep.subr.mxu0 0.0
    %3905 = vmatpush1.msra.mxu0 0.0
    %3906 = vmatprep.subr.mxu0 0.0
    %3907 = vmatpush1.msra.mxu0 0.0
    %3908 = vmatprep.subr.mxu0 0.0
    %3909 = vmatpush1.msra.mxu0 0.0
    %3910 = vmatprep.subr.mxu0 0.0
    %3911 = vmatpush1.msra.mxu0 0.0
    %3912 = vmatprep.subr.mxu0 0.0
    %3913 = vmatpush1.msra.mxu0 0.0
    %3914 = vmatprep.subr.mxu0 0.0
    %3915 = vmatpush1.msra.mxu0 0.0
    %3916 = vmatprep.subr.mxu0 0.0
    %3917 = vmatpush1.msra.mxu0 0.0
    %3918 = vmatprep.subr.mxu0 0.0
    %3919 = vmatpush1.msra.mxu0 0.0
    %3920 = vmatprep.subr.mxu0 0.0
    %3921 = vmatpush1.msra.mxu0 0.0
    %3922 = vmatprep.subr.mxu0 0.0
    %3923 = vmatpush1.msra.mxu0 0.0
    %3924 = vmatprep.subr.mxu0 0.0
    %3925 = vmatpush1.msra.mxu0 0.0
    %3926 = vmatprep.subr.mxu0 0.0
    %3927 = vmatpush1.msra.mxu0 0.0
    %3928 = vmatprep.subr.mxu0 0.0
    %3929 = vmatpush1.msra.mxu0 0.0
    %3930 = vmatprep.subr.mxu0 0.0
    %3931 = vmatpush1.msra.mxu0 0.0
    %3932 = vmatprep.subr.mxu0 0.0
    %3933 = vmatpush1.msra.mxu0 0.0
    %3934 = vmatprep.subr.mxu0 0.0
    %3935 = vmatpush1.msra.mxu0 0.0
    %3936 = vmatprep.subr.mxu0 0.0
    %3937 = vmatpush1.msra.mxu0 0.0
    %3938 = vmatprep.subr.mxu0 0.0
    %3939 = vmatpush1.msra.mxu0 0.0
    %3940 = vmatprep.subr.mxu0 0.0
    %3941 = vmatpush1.msra.mxu0 0.0
    %3942 = vmatprep.subr.mxu0 0.0
    %3943 = vmatpush1.msra.mxu0 0.0
    %3944 = vmatprep.subr.mxu0 0.0
    %3945 = vmatpush1.msra.mxu0 0.0
    %3946 = vmatprep.subr.mxu0 0.0
    %3947 = vmatpush1.msra.mxu0 0.0
    %3948 = vmatprep.subr.mxu0 0.0
    %3949 = vmatpush1.msra.mxu0 0.0
    %3950 = vmatprep.subr.mxu0 0.0
    %3951 = vmatpush1.msra.mxu0 0.0
    %3952 = vmatprep.mubr.f32.mxu0 0.0
    %3953 = vmatmul.mubr.f32.gmra.mrb[0].mxu0 %v3210
    %v3954 = vpop.f32.mrb[0].mxu0
    %v3955 = vadd.f32 0.0, %v3954
    %v3956 = vpop.f32.mrb[0].mxu0
    %3957 = vdwg.mxu0
    %v3960 = vrot.slane %v3887, 7
    %v3961 = vsel %vm724, %v3960, %v3886
    %v3962 = vsel %vm197, %v3961, 0
    %3964 = vmatprep.subr.mxu0 0.0
    %3965 = vmatpush1.msra.mxu0 %v54
    %3966 = vmatprep.subr.mxu0 0.0
    %3967 = vmatpush1.msra.mxu0 %v55
    %3968 = vmatprep.subr.mxu0 0.0
    %3969 = vmatpush1.msra.mxu0 %v56
    %3970 = vmatprep.subr.mxu0 0.0
    %3971 = vmatpush1.msra.mxu0 %v57
    %3972 = vmatprep.subr.mxu0 0.0
    %3973 = vmatpush1.msra.mxu0 0.0
    %3974 = vmatprep.subr.mxu0 0.0
    %3975 = vmatpush1.msra.mxu0 0.0
    %3976 = vmatprep.subr.mxu0 0.0
    %3977 = vmatpush1.msra.mxu0 0.0
    %3978 = vmatprep.subr.mxu0 0.0
    %3979 = vmatpush1.msra.mxu0 0.0
    %3980 = vmatprep.subr.mxu0 0.0
    %3981 = vmatpush1.msra.mxu0 0.0
    %3982 = vmatprep.subr.mxu0 0.0
    %3983 = vmatpush1.msra.mxu0 0.0
    %3984 = vmatprep.subr.mxu0 0.0
    %3985 = vmatpush1.msra.mxu0 0.0
    %3986 = vmatprep.subr.mxu0 0.0
    %3987 = vmatpush1.msra.mxu0 0.0
    %3988 = vmatprep.subr.mxu0 0.0
    %3989 = vmatpush1.msra.mxu0 0.0
    %3990 = vmatprep.subr.mxu0 0.0
    %3991 = vmatpush1.msra.mxu0 0.0
    %3992 = vmatprep.subr.mxu0 0.0
    %3993 = vmatpush1.msra.mxu0 0.0
    %3994 = vmatprep.subr.mxu0 0.0
    %3995 = vmatpush1.msra.mxu0 0.0
    %3996 = vmatprep.subr.mxu0 0.0
    %3997 = vmatpush1.msra.mxu0 0.0
    %3998 = vmatprep.subr.mxu0 0.0
    %3999 = vmatpush1.msra.mxu0 0.0
    %4000 = vmatprep.subr.mxu0 0.0
    %4001 = vmatpush1.msra.mxu0 0.0
    %4002 = vmatprep.subr.mxu0 0.0
    %4003 = vmatpush1.msra.mxu0 0.0
    %4004 = vmatprep.subr.mxu0 0.0
    %4005 = vmatpush1.msra.mxu0 0.0
    %4006 = vmatprep.subr.mxu0 0.0
    %4007 = vmatpush1.msra.mxu0 0.0
    %4008 = vmatprep.subr.mxu0 0.0
    %4009 = vmatpush1.msra.mxu0 0.0
    %4010 = vmatprep.subr.mxu0 0.0
    %4011 = vmatpush1.msra.mxu0 0.0
    %4012 = vmatprep.subr.mxu0 0.0
    %4013 = vmatpush1.msra.mxu0 0.0
    %4014 = vmatprep.subr.mxu0 0.0
    %4015 = vmatpush1.msra.mxu0 0.0
    %4016 = vmatprep.subr.mxu0 0.0
    %4017 = vmatpush1.msra.mxu0 0.0
    %4018 = vmatprep.subr.mxu0 0.0
    %4019 = vmatpush1.msra.mxu0 0.0
    %4020 = vmatprep.subr.mxu0 0.0
    %4021 = vmatpush1.msra.mxu0 0.0
    %4022 = vmatprep.subr.mxu0 0.0
    %4023 = vmatpush1.msra.mxu0 0.0
    %4024 = vmatprep.subr.mxu0 0.0
    %4025 = vmatpush1.msra.mxu0 0.0
    %4026 = vmatprep.subr.mxu0 0.0
    %4027 = vmatpush1.msra.mxu0 0.0
    %4028 = vmatprep.mubr.f32.mxu0 0.0
    %4029 = vmatmul.mubr.f32.gmra.mrb[0].mxu0 %v3962
    %v4030 = vpop.f32.mrb[0].mxu0
    %v4031 = vadd.f32 %v3955, %v4030
    %v4032 = vpop.f32.mrb[0].mxu0
    %4033 = vdwg.mxu0
    %v4034 = vadd.f32 %v4031, %v1067
    %v4035 = vxor.u32 %v4034, 2147483648
    %v4036 = vmul.f32 %v4035, 1.442695
    %v4037 = vpow.pop %v4036
    %v4038 = vadd.f32 %v4037, 1.0
    %v4039 = vrcp.pop %v4038
    %v4040 = vmul.f32 1.0, %v4039
    %v4041 = vtanh.pop %v4034
    %v4042 = vmul.f32 %v4040, %v3065
    %4044 = vrot.lane.b32.xlu0 %v4041, 64
    %v4045 = vpop.permute.xlu0 %4044
    %v4047 = vmul.f32 %v4040, %v4045
    %4049 = vrot.lane.b32.xlu0 %v4047, 32
    %v4050 = vpop.permute.xlu0 %4049
    %v4052 = vadd.f32 %v4042, %v4050
    %v4053 = vtanh.pop %v4052
    %4055 = vrot.lane.b32.xlu0 %v4053, 64
    %v4056 = vpop.permute.xlu0 %4055
    %v4058 = vmul.f32 %v4040, %v4056
    %4060 = vrot.lane.b32.xlu0 %v4058, 32
    %v4061 = vpop.permute.xlu0 %4060
    %s4063 = scalar_lea.vmem %s10, 6
    %4064 = vst.msk [vmem:[%s4063] sm:$0x3] %vm1102, %v4061
    %4065 = vst.msk [vmem:[#allocation2] sm:$0x3] %vm1102, %v4061
    %4067 = vrot.lane.b32.xlu0 %v4052, 96
    %v4068 = vpop.permute.xlu0 %4067
    %4070 = vst.msk [vmem:[#allocation3] sm:$0x3] %vm1102, %v4068
    // Predicated region
    $region46: #{mictranet_forward.4} parent=1 // pred_check
      %p4071 = pneg %p40
    $region47: #{mictranet_forward.4} parent=1 // pred_check_branch
      %4073 = sbr.rel (%p4071) target = $region49
    $region48: #{mictranet_forward.4} parent=1 // pred_region
      %4074 = vst.msk [vmem:[#allocation4] sm:$0x3] %vm1102, %v4061
      %4075 = vst.msk [vmem:[#allocation6] sm:$0x3] %vm1102, %v4068
    $region49: #{mictranet_forward.4} parent=1 // pred_fallthru
      _
    // Predicated region
    $region50: #{mictranet_forward.4} parent=1 // pred_check
      _
    $region51: #{mictranet_forward.4} parent=1 // pred_check_branch
      %4077 = sbr.rel (0) target = $region53
    $region52: #{mictranet_forward.4} parent=1 // pred_region
      _
    $region53: #{mictranet_forward.4} parent=1 // pred_fallthru
      _
    // Predicated region
    $region54: #{mictranet_forward.4} parent=1 // pred_check
      _
    $region55: #{mictranet_forward.4} parent=1 // pred_check_branch
      %4079 = sbr.rel (0) target = $region57
    $region56: #{mictranet_forward.4} parent=1 // pred_region
      %s4081 = ssub.s32 32, 32
      %4082 = vsyncadd [#allocation5], %s4081
      %s4084 = sshll.u32 [#allocation4], 4
      %s4085 = int_to_ptr.vmem [resolvable:$true] %s4084
      %4087 = dma.vmem_to_hbm [thread:$0]  %s4085, 32, %s11, [#allocation5]
    $region57: #{mictranet_forward.4} parent=1 // pred_fallthru
      _
    // Predicated region
    $region58: #{mictranet_forward.4} parent=1 // pred_check
      _
    $region59: #{mictranet_forward.4} parent=1 // pred_check_branch
      %4089 = sbr.rel (0) target = $region61
    $region60: #{mictranet_forward.4} parent=1 // pred_region
      %s4091 = ssub.s32 32, 32
      %4092 = vsyncadd [#allocation7], %s4091
      %s4094 = sshll.u32 [#allocation6], 4
      %s4095 = int_to_ptr.vmem [resolvable:$true] %s4094
      %4097 = dma.vmem_to_hbm [thread:$0]  %s4095, 32, %s12, [#allocation7]
    $region61: #{mictranet_forward.4} parent=1 // pred_fallthru
      _
    // Predicated region
    $region62: #{mictranet_forward.4} parent=1 // pred_check
      _
    $region63: #{mictranet_forward.4} parent=1 // pred_check_branch
      %4099 = sbr.rel (0) target = $region65
    $region64: #{mictranet_forward.4} parent=1 // pred_region
      _
    $region65: #{mictranet_forward.4} parent=1 // pred_fallthru
      _
    // Predicated region
    $region66: #{mictranet_forward.4} parent=1 // pred_check
      _
    $region67: #{mictranet_forward.4} parent=1 // pred_check_branch
      %4101 = sbr.rel (0) target = $region69
    $region68: #{mictranet_forward.4} parent=1 // pred_region
      %4102 = dma.done [#allocation5], 32
    $region69: #{mictranet_forward.4} parent=1 // pred_fallthru
      _
    // Predicated region
    $region70: #{mictranet_forward.4} parent=1 // pred_check
      _
    $region71: #{mictranet_forward.4} parent=1 // pred_check_branch
      %4104 = sbr.rel (0) target = $region73
    $region72: #{mictranet_forward.4} parent=1 // pred_region
      %4105 = dma.done [#allocation7], 32
    $region73: #{mictranet_forward.4} parent=1 // pred_fallthru
      _
    %4106 = vsyncpa [#allocation5], 1
    %4107 = vsyncpa [#allocation7], 1

</llo_original>
